<compile_context>
chip_gen: v6e
topology: v6e:2x2x1
jax: 0.10.0
libtpu: 0.0.40
codegen_flags: <defaults>
</compile_context>

<pallas_src>
import jax
import jax.numpy as jnp
from jax.experimental import pallas as pl
from jax.experimental.pallas import tpu as pltpu

IN_DIM = 28 * 28          # 784
HID = 1200                # true hidden width (PyTorch)
HID_PAD = 1280            # padded to a multiple of 128 lanes
OUT = 10                  # true output width
OUT_PAD = 128             # padded to one full lane register


def _mlp_kernel(x_ref, w1_ref, b1_ref, w2_ref, b2_ref, w3_ref, b3_ref, o_ref):
    # Three MXU matmuls (bf16 operands, f32 accumulation) with f32 VPU
    # epilogues (bias + ReLU) in between. Weights are VMEM-resident across
    # the whole batch grid; only the x / out tiles change per grid step.
    x = x_ref[...].astype(jnp.bfloat16)

    h1 = jnp.dot(x, w1_ref[...], preferred_element_type=jnp.float32) + b1_ref[...]
    h1 = jnp.maximum(h1, 0.0)
    # dropout(p=0.8) is identity in eval mode

    h2 = jnp.dot(h1.astype(jnp.bfloat16), w2_ref[...],
                 preferred_element_type=jnp.float32) + b2_ref[...]
    h2 = jnp.maximum(h2, 0.0)
    # dropout(p=0.8) is identity in eval mode

    out = jnp.dot(h2.astype(jnp.bfloat16), w3_ref[...],
                  preferred_element_type=jnp.float32) + b3_ref[...]
    o_ref[...] = out.astype(o_ref.dtype)


def _round_up(x, m):
    return ((x + m - 1) // m) * m


def _pad_to(a, shape):
    return jnp.pad(a, [(0, s - d) for d, s in zip(a.shape, shape)])


def prepare_params(params):
    """Zero-pad params to lane-aligned widths; weights -> bf16, biases stay f32."""
    w1, b1, w2, b2, w3, b3 = params
    w1p = _pad_to(w1, (IN_DIM, HID_PAD)).astype(jnp.bfloat16)
    b1p = _pad_to(b1, (1, HID_PAD)).astype(jnp.float32)
    w2p = _pad_to(w2, (HID_PAD, HID_PAD)).astype(jnp.bfloat16)
    b2p = _pad_to(b2, (1, HID_PAD)).astype(jnp.float32)
    w3p = _pad_to(w3, (HID_PAD, OUT_PAD)).astype(jnp.bfloat16)
    b3p = _pad_to(b3, (1, OUT_PAD)).astype(jnp.float32)
    return w1p, b1p, w2p, b2p, w3p, b3p


def teacher_net_forward(x, params, *, tm=256):
    """x: (B, 1, 28, 28) or (B, 784) float32. Returns (B, 10) logits."""
    w1, b1, w2, b2, w3, b3 = prepare_params(params)

    x2d = x.reshape(-1, IN_DIM).astype(jnp.float32)  # == x.view(-1, 784)
    B = x2d.shape[0]

    # Batch tile: multiple of 8 sublanes, capped at `tm`; pad B up to a
    # whole number of tiles (zero rows, sliced off below).
    tm = min(tm, _round_up(B, 8))
    b_pad = _round_up(B, tm)
    if b_pad != B:
        x2d = jnp.pad(x2d, ((0, b_pad - B), (0, 0)))

    out = pl.pallas_call(
        _mlp_kernel,
        out_shape=jax.ShapeDtypeStruct((b_pad, OUT_PAD), jnp.float32),
        grid=(b_pad // tm,),
        in_specs=[
            pl.BlockSpec((tm, IN_DIM), lambda i: (i, 0)),          # x tile
            pl.BlockSpec((IN_DIM, HID_PAD), lambda i: (0, 0)),     # w1 (resident)
            pl.BlockSpec((1, HID_PAD), lambda i: (0, 0)),          # b1
            pl.BlockSpec((HID_PAD, HID_PAD), lambda i: (0, 0)),    # w2 (resident)
            pl.BlockSpec((1, HID_PAD), lambda i: (0, 0)),          # b2
            pl.BlockSpec((HID_PAD, OUT_PAD), lambda i: (0, 0)),    # w3 (resident)
            pl.BlockSpec((1, OUT_PAD), lambda i: (0, 0)),          # b3
        ],
        out_specs=pl.BlockSpec((tm, OUT_PAD), lambda i: (i, 0)),
        compiler_params=pltpu.CompilerParams(
            dimension_semantics=("parallel",),
            vmem_limit_bytes=48 * 1024 * 1024,
        ),
    )(x2d, w1, b1, w2, b2, w3, b3)

    return out[:B, :OUT]


def init_params(key):
    """Deterministic init matching nn.Linear shapes.

    PyTorch Linear stores weight as (out, in); we keep the transposed (in, out)
    layout so the kernel does x @ W directly. Biases are kept 2D (1, out).
    Stored in f32 at true (unpadded) widths; prepare_params pads/casts.
    """
    k1, k2, k3, k4, k5, k6 = jax.random.split(key, 6)

    def lin(kw, kb, fan_in, fan_out):
        bound = 1.0 / jnp.sqrt(fan_in)
        w = jax.random.uniform(kw, (fan_in, fan_out), jnp.float32, -bound, bound)
        b = jax.random.uniform(kb, (1, fan_out), jnp.float32, -bound, bound)
        return w, b

    w1, b1 = lin(k1, k2, IN_DIM, HID)
    w2, b2 = lin(k3, k4, HID, HID)
    w3, b3 = lin(k5, k6, HID, OUT)
    return (w1, b1, w2, b2, w3, b3)


def reference_forward(x, params):
    w1, b1, w2, b2, w3, b3 = params
    x2d = x.reshape(-1, IN_DIM).astype(jnp.float32)
    h1 = jnp.maximum(x2d @ w1 + b1, 0.0)
    h2 = jnp.maximum(h1 @ w2 + b2, 0.0)
    return h2 @ w3 + b3


if __name__ == "__main__":
    key = jax.random.PRNGKey(0)
    kx, kp = jax.random.split(key)

    # Small MNIST-shaped batch (NCHW, as PyTorch would feed it).
    x = jax.random.normal(kx, (8, 1, 28, 28), dtype=jnp.float32)
    params = init_params(kp)

    out = teacher_net_forward(x, params)
    out = jax.block_until_ready(out)

    ref = reference_forward(x, params)
    assert out.shape == (8, 10)
    max_err = float(jnp.max(jnp.abs(out - ref)))
    # Tolerance loosened vs f32 reference because weights are bf16 in-kernel.
    assert jnp.allclose(out, ref, atol=5e-2, rtol=5e-2), (
        f"mismatch vs JAX reference (max abs err {max_err})")

    print("KERNEL_OK")
</pallas_src>

<mosaic_0001>
module attributes {stable_mosaic.version = 11 : i64} {
  func.func @_mlp_kernel(%arg0: i32, %arg1: memref<8x784xf32, #tpu.memory_space<vmem>>, %arg2: memref<784x1280xbf16, #tpu.memory_space<vmem>>, %arg3: memref<1x1280xf32, #tpu.memory_space<vmem>>, %arg4: memref<1280x1280xbf16, #tpu.memory_space<vmem>>, %arg5: memref<1x1280xf32, #tpu.memory_space<vmem>>, %arg6: memref<1280x128xbf16, #tpu.memory_space<vmem>>, %arg7: memref<1x128xf32, #tpu.memory_space<vmem>>, %arg8: memref<8x128xf32, #tpu.memory_space<vmem>>) attributes {dimension_semantics = [#tpu.dimension_semantics<parallel>], iteration_bounds = array<i64: 1>, scalar_prefetch = 0 : i64, scratch_operands = 0 : i64, tpu.core_type = #tpu.core_type<tc>, window_params = [{transform_indices = @transform_0, window_bounds = array<i64: 8, 784>}, {pipeline_mode = #tpu.pipeline_mode<synchronous>, transform_indices = @transform_1, window_bounds = array<i64: 784, 1280>}, {pipeline_mode = #tpu.pipeline_mode<synchronous>, transform_indices = @transform_2, window_bounds = array<i64: 1, 1280>}, {pipeline_mode = #tpu.pipeline_mode<synchronous>, transform_indices = @transform_3, window_bounds = array<i64: 1280, 1280>}, {pipeline_mode = #tpu.pipeline_mode<synchronous>, transform_indices = @transform_4, window_bounds = array<i64: 1, 1280>}, {pipeline_mode = #tpu.pipeline_mode<synchronous>, transform_indices = @transform_5, window_bounds = array<i64: 1280, 128>}, {pipeline_mode = #tpu.pipeline_mode<synchronous>, transform_indices = @transform_6, window_bounds = array<i64: 1, 128>}, {transform_indices = @transform_7, window_bounds = array<i64: 8, 128>}]} {
    %c0 = arith.constant 0 : index
    %c0_0 = arith.constant 0 : index
    %0 = vector.load %arg1[%c0, %c0_0] : memref<8x784xf32, #tpu.memory_space<vmem>>, vector<8x784xf32>
    %1 = arith.truncf %0 : vector<8x784xf32> to vector<8x784xbf16>
    %c0_1 = arith.constant 0 : index
    %c0_2 = arith.constant 0 : index
    %2 = vector.load %arg2[%c0_1, %c0_2] : memref<784x1280xbf16, #tpu.memory_space<vmem>>, vector<784x1280xbf16>
    %cst = arith.constant dense<0.000000e+00> : vector<8x1280xf32>
    %3 = tpu.matmul %1, %2, %cst {dimension_numbers = #tpu.dot_dimension_numbers<[1], [0], [0], [1], [0, 0, 1, 1], [], []>} : vector<8x784xbf16>, vector<784x1280xbf16>, vector<8x1280xf32> -> vector<8x1280xf32>
    %c0_3 = arith.constant 0 : index
    %c0_4 = arith.constant 0 : index
    %4 = vector.load %arg3[%c0_3, %c0_4] : memref<1x1280xf32, #tpu.memory_space<vmem>>, vector<1x1280xf32>
    %5 = vector.broadcast %4 : vector<1x1280xf32> to vector<8x1280xf32>
    %6 = arith.addf %3, %5 : vector<8x1280xf32>
    %cst_5 = arith.constant 0.000000e+00 : f32
    %7 = vector.broadcast %cst_5 : f32 to vector<8x1280xf32>
    %8 = arith.maximumf %6, %7 : vector<8x1280xf32>
    %9 = arith.truncf %8 : vector<8x1280xf32> to vector<8x1280xbf16>
    %c0_6 = arith.constant 0 : index
    %c0_7 = arith.constant 0 : index
    %10 = vector.load %arg4[%c0_6, %c0_7] : memref<1280x1280xbf16, #tpu.memory_space<vmem>>, vector<1280x1280xbf16>
    %cst_8 = arith.constant dense<0.000000e+00> : vector<8x1280xf32>
    %11 = tpu.matmul %9, %10, %cst_8 {dimension_numbers = #tpu.dot_dimension_numbers<[1], [0], [0], [1], [0, 0, 1, 1], [], []>} : vector<8x1280xbf16>, vector<1280x1280xbf16>, vector<8x1280xf32> -> vector<8x1280xf32>
    %c0_9 = arith.constant 0 : index
    %c0_10 = arith.constant 0 : index
    %12 = vector.load %arg5[%c0_9, %c0_10] : memref<1x1280xf32, #tpu.memory_space<vmem>>, vector<1x1280xf32>
    %13 = vector.broadcast %12 : vector<1x1280xf32> to vector<8x1280xf32>
    %14 = arith.addf %11, %13 : vector<8x1280xf32>
    %cst_11 = arith.constant 0.000000e+00 : f32
    %15 = vector.broadcast %cst_11 : f32 to vector<8x1280xf32>
    %16 = arith.maximumf %14, %15 : vector<8x1280xf32>
    %17 = arith.truncf %16 : vector<8x1280xf32> to vector<8x1280xbf16>
    %c0_12 = arith.constant 0 : index
    %c0_13 = arith.constant 0 : index
    %18 = vector.load %arg6[%c0_12, %c0_13] : memref<1280x128xbf16, #tpu.memory_space<vmem>>, vector<1280x128xbf16>
    %cst_14 = arith.constant dense<0.000000e+00> : vector<8x128xf32>
    %19 = tpu.matmul %17, %18, %cst_14 {dimension_numbers = #tpu.dot_dimension_numbers<[1], [0], [0], [1], [0, 0, 1, 1], [], []>} : vector<8x1280xbf16>, vector<1280x128xbf16>, vector<8x128xf32> -> vector<8x128xf32>
    %c0_15 = arith.constant 0 : index
    %c0_16 = arith.constant 0 : index
    %20 = vector.load %arg7[%c0_15, %c0_16] : memref<1x128xf32, #tpu.memory_space<vmem>>, vector<1x128xf32>
    %21 = vector.broadcast %20 : vector<1x128xf32> to vector<8x128xf32>
    %22 = arith.addf %19, %21 : vector<8x128xf32>
    %c0_17 = arith.constant 0 : index
    %c0_18 = arith.constant 0 : index
    %23 = vector.load %arg8[%c0_17, %c0_18] : memref<8x128xf32, #tpu.memory_space<vmem>>, vector<8x128xf32>
    tpu.vector_store %arg8[%c0_17, %c0_18], %22 {strides = array<i32>} : memref<8x128xf32, #tpu.memory_space<vmem>>, vector<8x128xf32>,
    return
  }
  func.func @transform_0(%arg0: i32) -> (i32, i32) {
    %c0_i32 = arith.constant 0 : i32
    %c0_i32_0 = arith.constant 0 : i32
    return %arg0, %c0_i32 : i32, i32
  }
  func.func @transform_1(%arg0: i32) -> (i32, i32) {
    %c0_i32 = arith.constant 0 : i32
    %c0_i32_0 = arith.constant 0 : i32
    %c0_i32_1 = arith.constant 0 : i32
    return %c0_i32, %c0_i32_0 : i32, i32
  }
  func.func @transform_2(%arg0: i32) -> (i32, i32) {
    %c0_i32 = arith.constant 0 : i32
    %c0_i32_0 = arith.constant 0 : i32
    %c0_i32_1 = arith.constant 0 : i32
    return %c0_i32, %c0_i32_0 : i32, i32
  }
  func.func @transform_3(%arg0: i32) -> (i32, i32) {
    %c0_i32 = arith.constant 0 : i32
    %c0_i32_0 = arith.constant 0 : i32
    %c0_i32_1 = arith.constant 0 : i32
    return %c0_i32, %c0_i32_0 : i32, i32
  }
  func.func @transform_4(%arg0: i32) -> (i32, i32) {
    %c0_i32 = arith.constant 0 : i32
    %c0_i32_0 = arith.constant 0 : i32
    %c0_i32_1 = arith.constant 0 : i32
    return %c0_i32, %c0_i32_0 : i32, i32
  }
  func.func @transform_5(%arg0: i32) -> (i32, i32) {
    %c0_i32 = arith.constant 0 : i32
    %c0_i32_0 = arith.constant 0 : i32
    %c0_i32_1 = arith.constant 0 : i32
    return %c0_i32, %c0_i32_0 : i32, i32
  }
  func.func @transform_6(%arg0: i32) -> (i32, i32) {
    %c0_i32 = arith.constant 0 : i32
    %c0_i32_0 = arith.constant 0 : i32
    %c0_i32_1 = arith.constant 0 : i32
    return %c0_i32, %c0_i32_0 : i32, i32
  }
  func.func @transform_7(%arg0: i32) -> (i32, i32) {
    %c0_i32 = arith.constant 0 : i32
    %c0_i32_0 = arith.constant 0 : i32
    return %arg0, %c0_i32 : i32, i32
  }
}

</mosaic_0001>

<llo_original>
// kernel: tpu_custom_call.1
$region0: #{tpu_custom_call.1}
  #allocation0 [shape = 'u32[]', space=smem, size = 0x4, offset = 0x4, fixed_abs, tag = 'smem constant byte address 0x4 - core index']
  #allocation1 [shape = 'u32[144,128]{1,0:T(1,128)}', space=vmem, size = 0x12000, scoped, tag = 'internal scratch']
  %s0 = inlined_call_operand.hbm [shape: f32[8,784], index: 0, kind: input, shape index: {}]
  %s1 = inlined_call_operand.hbm [shape: bf16[784,1280], index: 1, kind: input, shape index: {}]
  %s2 = inlined_call_operand.hbm [shape: f32[1,1280], index: 2, kind: input, shape index: {}]
  %s3 = inlined_call_operand.hbm [shape: bf16[1280,1280], index: 3, kind: input, shape index: {}]
  %s4 = inlined_call_operand.hbm [shape: f32[1,1280], index: 4, kind: input, shape index: {}]
  %s5 = inlined_call_operand.hbm [shape: bf16[1280,128], index: 5, kind: input, shape index: {}]
  %s6 = inlined_call_operand.hbm [shape: f32[1,128], index: 6, kind: input, shape index: {}]
  %s7 = inlined_call_operand.hbm [shape: f32[8,128], index: 7, kind: output, shape index: {}]
  %s8 = sld [smem:[#allocation0]]
  $region66: #{tpu_custom_call.1} parent=0
    _
  %s10 = ssub.s32 1, %s8
  %s11 = scalar_select 0, %s10, %s8
  $region1: #{tpu_custom_call.1} parent=0
    #allocation2 [shape = 'u8[28672]{0}', space=vmem, size = 0x7000, scoped, tag = 'input window, operand 0, single buffered']
    #allocation3 [shape = 's32[1]{0}', space=sflag, size = 0x4, scoped, tag = 'scoped memory for tpu_custom_call.1']
    #allocation4 [shape = 's32[1]{0}', space=sflag, size = 0x4, scoped, tag = 'scoped memory for tpu_custom_call.1']
    #allocation5 [shape = 'u8[2007040]{0}', space=vmem, size = 0x1ea000, scoped, tag = 'input window, operand 1, single buffered']
    #allocation6 [shape = 's32[1]{0}', space=sflag, size = 0x4, scoped, tag = 'scoped memory for tpu_custom_call.1']
    #allocation7 [shape = 'u8[5120]{0}', space=vmem, size = 0x1400, scoped, tag = 'input window, operand 2, single buffered']
    #allocation8 [shape = 'u8[3276800]{0}', space=vmem, size = 0x320000, scoped, tag = 'input window, operand 3, single buffered']
    #allocation9 [shape = 's32[1]{0}', space=sflag, size = 0x4, scoped, tag = 'scoped memory for tpu_custom_call.1']
    #allocation10 [shape = 'u8[5120]{0}', space=vmem, size = 0x1400, scoped, tag = 'input window, operand 4, single buffered']
    #allocation11 [shape = 'u8[327680]{0}', space=vmem, size = 0x50000, scoped, tag = 'input window, operand 5, single buffered']
    #allocation12 [shape = 's32[1]{0}', space=sflag, size = 0x4, scoped, tag = 'scoped memory for tpu_custom_call.1']
    #allocation13 [shape = 'u8[512]{0}', space=vmem, size = 0x400, scoped, tag = 'input window, operand 6, single buffered']
    #allocation14 [shape = 'u8[4096]{0}', space=vmem, size = 0x1000, scoped, tag = 'output window, operand 0, single buffered']
    %12 = vsyncpa [#allocation3], 0
    %13 = vsyncpa [#allocation6], 0
    %14 = vsyncpa [#allocation9], 0
    %15 = vsyncpa [#allocation12], 0
    %16 = vsyncpa [#allocation4], 0
    // Predicated region
    $region2: #{tpu_custom_call.1} parent=1 // pred_check
      _
    $region3: #{tpu_custom_call.1} parent=1 // pred_check_branch
      %18 = sbr.rel (0) target = $region5
    $region4: #{tpu_custom_call.1} parent=1 // pred_region
      %s20 = ssub.s32 896, 896
      %21 = vsyncadd [#allocation3], %s20
      %s23 = sshll.u32 [#allocation2], 4
      %s24 = int_to_ptr.vmem [resolvable:$true] %s23
      %26 = dma.hbm_to_vmem [thread:$0]  %s0, 896, %s24, [#allocation3]
    $region5: #{tpu_custom_call.1} parent=1 // pred_fallthru
      _
    // Predicated region
    $region6: #{tpu_custom_call.1} parent=1 // pred_check
      _
    $region7: #{tpu_custom_call.1} parent=1 // pred_check_branch
      %28 = sbr.rel (0) target = $region9
    $region8: #{tpu_custom_call.1} parent=1 // pred_region
      %s30 = ssub.s32 62720, 62720
      %31 = vsyncadd [#allocation6], %s30
      %s32 = sshll.u32 [#allocation5], 4
      %s33 = int_to_ptr.vmem [resolvable:$true] %s32
      %38 = dma.hbm_to_vmem [thread:$0]  %s1, 62720, %s33, [#allocation6], 640, 640, 40
    $region9: #{tpu_custom_call.1} parent=1 // pred_fallthru
      _
    // Predicated region
    $region10: #{tpu_custom_call.1} parent=1 // pred_check
      _
    $region11: #{tpu_custom_call.1} parent=1 // pred_check_branch
      %40 = sbr.rel (0) target = $region13
    $region12: #{tpu_custom_call.1} parent=1 // pred_region
      %s42 = ssub.s32 160, 160
      %43 = vsyncadd [#allocation6], %s42
      %s45 = sshll.u32 [#allocation7], 4
      %s46 = int_to_ptr.vmem [resolvable:$true] %s45
      %48 = dma.hbm_to_vmem [thread:$0]  %s2, 160, %s46, [#allocation6]
    $region13: #{tpu_custom_call.1} parent=1 // pred_fallthru
      _
    // Predicated region
    $region14: #{tpu_custom_call.1} parent=1 // pred_check
      _
    $region15: #{tpu_custom_call.1} parent=1 // pred_check_branch
      %50 = sbr.rel (0) target = $region17
    $region16: #{tpu_custom_call.1} parent=1 // pred_region
      %s52 = ssub.s32 102400, 102400
      %53 = vsyncadd [#allocation9], %s52
      %s54 = sshll.u32 [#allocation8], 4
      %s55 = int_to_ptr.vmem [resolvable:$true] %s54
      %60 = dma.hbm_to_vmem [thread:$0]  %s3, 102400, %s55, [#allocation9], 640, 640, 40
    $region17: #{tpu_custom_call.1} parent=1 // pred_fallthru
      _
    // Predicated region
    $region18: #{tpu_custom_call.1} parent=1 // pred_check
      _
    $region19: #{tpu_custom_call.1} parent=1 // pred_check_branch
      %62 = sbr.rel (0) target = $region21
    $region20: #{tpu_custom_call.1} parent=1 // pred_region
      %s64 = ssub.s32 160, 160
      %65 = vsyncadd [#allocation9], %s64
      %s67 = sshll.u32 [#allocation10], 4
      %s68 = int_to_ptr.vmem [resolvable:$true] %s67
      %70 = dma.hbm_to_vmem [thread:$0]  %s4, 160, %s68, [#allocation9]
    $region21: #{tpu_custom_call.1} parent=1 // pred_fallthru
      _
    // Predicated region
    $region22: #{tpu_custom_call.1} parent=1 // pred_check
      _
    $region23: #{tpu_custom_call.1} parent=1 // pred_check_branch
      %72 = sbr.rel (0) target = $region25
    $region24: #{tpu_custom_call.1} parent=1 // pred_region
      %s74 = ssub.s32 10240, 10240
      %75 = vsyncadd [#allocation12], %s74
      %s76 = sshll.u32 [#allocation11], 4
      %s77 = int_to_ptr.vmem [resolvable:$true] %s76
      %82 = dma.hbm_to_vmem [thread:$0]  %s5, 10240, %s77, [#allocation12], 64, 64, 4
    $region25: #{tpu_custom_call.1} parent=1 // pred_fallthru
      _
    // Predicated region
    $region26: #{tpu_custom_call.1} parent=1 // pred_check
      _
    $region27: #{tpu_custom_call.1} parent=1 // pred_check_branch
      %84 = sbr.rel (0) target = $region29
    $region28: #{tpu_custom_call.1} parent=1 // pred_region
      %s86 = ssub.s32 16, 16
      %87 = vsyncadd [#allocation12], %s86
      %s89 = sshll.u32 [#allocation13], 4
      %s90 = int_to_ptr.vmem [resolvable:$true] %s89
      %92 = dma.hbm_to_vmem [thread:$0]  %s6, 16, %s90, [#allocation12]
    $region29: #{tpu_custom_call.1} parent=1 // pred_fallthru
      _
    // Predicated region
    $region30: #{tpu_custom_call.1} parent=1 // pred_check
      _
    $region31: #{tpu_custom_call.1} parent=1 // pred_check_branch
      %94 = sbr.rel (0) target = $region33
    $region32: #{tpu_custom_call.1} parent=1 // pred_region
      %95 = dma.done [#allocation3], 896
    $region33: #{tpu_custom_call.1} parent=1 // pred_fallthru
      _
    // Predicated region
    $region34: #{tpu_custom_call.1} parent=1 // pred_check
      _
    $region35: #{tpu_custom_call.1} parent=1 // pred_check_branch
      %97 = sbr.rel (0) target = $region37
    $region36: #{tpu_custom_call.1} parent=1 // pred_region
      %98 = dma.done [#allocation6], 62720
    $region37: #{tpu_custom_call.1} parent=1 // pred_fallthru
      _
    // Predicated region
    $region38: #{tpu_custom_call.1} parent=1 // pred_check
      _
    $region39: #{tpu_custom_call.1} parent=1 // pred_check_branch
      %100 = sbr.rel (0) target = $region41
    $region40: #{tpu_custom_call.1} parent=1 // pred_region
      %101 = dma.done [#allocation6], 160
    $region41: #{tpu_custom_call.1} parent=1 // pred_fallthru
      _
    // Predicated region
    $region42: #{tpu_custom_call.1} parent=1 // pred_check
      _
    $region43: #{tpu_custom_call.1} parent=1 // pred_check_branch
      %103 = sbr.rel (0) target = $region45
    $region44: #{tpu_custom_call.1} parent=1 // pred_region
      %104 = dma.done [#allocation9], 102400
    $region45: #{tpu_custom_call.1} parent=1 // pred_fallthru
      _
    // Predicated region
    $region46: #{tpu_custom_call.1} parent=1 // pred_check
      _
    $region47: #{tpu_custom_call.1} parent=1 // pred_check_branch
      %106 = sbr.rel (0) target = $region49
    $region48: #{tpu_custom_call.1} parent=1 // pred_region
      %107 = dma.done [#allocation9], 160
    $region49: #{tpu_custom_call.1} parent=1 // pred_fallthru
      _
    // Predicated region
    $region50: #{tpu_custom_call.1} parent=1 // pred_check
      _
    $region51: #{tpu_custom_call.1} parent=1 // pred_check_branch
      %109 = sbr.rel (0) target = $region53
    $region52: #{tpu_custom_call.1} parent=1 // pred_region
      %110 = dma.done [#allocation12], 10240
    $region53: #{tpu_custom_call.1} parent=1 // pred_fallthru
      _
    // Predicated region
    $region54: #{tpu_custom_call.1} parent=1 // pred_check
      _
    $region55: #{tpu_custom_call.1} parent=1 // pred_check_branch
      %112 = sbr.rel (0) target = $region57
    $region56: #{tpu_custom_call.1} parent=1 // pred_region
      %113 = dma.done [#allocation12], 16
    $region57: #{tpu_custom_call.1} parent=1 // pred_fallthru
      _
    %v115 = vld [vmem:[#allocation2] sm:$0xff]
    %v116 = vld [vmem:[#allocation2 + $0x8] sm:$0xff]
    %v117 = vld [vmem:[#allocation2 + $0x10] sm:$0xff]
    %v118 = vld [vmem:[#allocation2 + $0x18] sm:$0xff]
    %v119 = vld [vmem:[#allocation2 + $0x20] sm:$0xff]
    %v120 = vld [vmem:[#allocation2 + $0x28] sm:$0xff]
    %v121 = vld [vmem:[#allocation2 + $0x30] sm:$0xff]
    %v122 = vpack.c.bf16 %v115, %v115
    %v123 = vpack.c.bf16 %v116, %v116
    %v124 = vpack.c.bf16 %v117, %v117
    %v125 = vpack.c.bf16 %v118, %v118
    %v126 = vpack.c.bf16 %v119, %v119
    %v127 = vpack.c.bf16 %v120, %v120
    %v128 = vpack.c.bf16 %v121, %v121
    %v129 = vld [vmem:[#allocation5] sm:$0xff]
    %v130 = vld [vmem:[#allocation5 + $0x8] sm:$0xff]
    %v131 = vld [vmem:[#allocation5 + $0x10] sm:$0xff]
    %v132 = vld [vmem:[#allocation5 + $0x18] sm:$0xff]
    %v133 = vld [vmem:[#allocation5 + $0x20] sm:$0xff]
    %v134 = vld [vmem:[#allocation5 + $0x28] sm:$0xff]
    %v135 = vld [vmem:[#allocation5 + $0x30] sm:$0xff]
    %v136 = vld [vmem:[#allocation5 + $0x38] sm:$0xff]
    %v137 = vld [vmem:[#allocation5 + $0x40] sm:$0xff]
    %v138 = vld [vmem:[#allocation5 + $0x48] sm:$0xff]
    %v139 = vld [vmem:[#allocation5 + $0x50] sm:$0xff]
    %v140 = vld [vmem:[#allocation5 + $0x58] sm:$0xff]
    %v141 = vld [vmem:[#allocation5 + $0x60] sm:$0xff]
    %v142 = vld [vmem:[#allocation5 + $0x68] sm:$0xff]
    %v143 = vld [vmem:[#allocation5 + $0x70] sm:$0xff]
    %v144 = vld [vmem:[#allocation5 + $0x78] sm:$0xff]
    %v145 = vld [vmem:[#allocation5 + $0x80] sm:$0xff]
    %v146 = vld [vmem:[#allocation5 + $0x88] sm:$0xff]
    %v147 = vld [vmem:[#allocation5 + $0x90] sm:$0xff]
    %v148 = vld [vmem:[#allocation5 + $0x98] sm:$0xff]
    %v149 = vld [vmem:[#allocation5 + $0xa0] sm:$0xff]
    %v150 = vld [vmem:[#allocation5 + $0xa8] sm:$0xff]
    %v151 = vld [vmem:[#allocation5 + $0xb0] sm:$0xff]
    %v152 = vld [vmem:[#allocation5 + $0xb8] sm:$0xff]
    %v153 = vld [vmem:[#allocation5 + $0xc0] sm:$0xff]
    %v154 = vld [vmem:[#allocation5 + $0xc8] sm:$0xff]
    %v155 = vld [vmem:[#allocation5 + $0xd0] sm:$0xff]
    %v156 = vld [vmem:[#allocation5 + $0xd8] sm:$0xff]
    %v157 = vld [vmem:[#allocation5 + $0xe0] sm:$0xff]
    %v158 = vld [vmem:[#allocation5 + $0xe8] sm:$0xff]
    %v159 = vld [vmem:[#allocation5 + $0xf0] sm:$0xff]
    %v160 = vld [vmem:[#allocation5 + $0xf8] sm:$0xff]
    %v161 = vld [vmem:[#allocation5 + $0x100] sm:$0xff]
    %v162 = vld [vmem:[#allocation5 + $0x108] sm:$0xff]
    %v163 = vld [vmem:[#allocation5 + $0x110] sm:$0xff]
    %v164 = vld [vmem:[#allocation5 + $0x118] sm:$0xff]
    %v165 = vld [vmem:[#allocation5 + $0x120] sm:$0xff]
    %v166 = vld [vmem:[#allocation5 + $0x128] sm:$0xff]
    %v167 = vld [vmem:[#allocation5 + $0x130] sm:$0xff]
    %v168 = vld [vmem:[#allocation5 + $0x138] sm:$0xff]
    %v169 = vld [vmem:[#allocation5 + $0x140] sm:$0xff]
    %v170 = vld [vmem:[#allocation5 + $0x148] sm:$0xff]
    %v171 = vld [vmem:[#allocation5 + $0x150] sm:$0xff]
    %v172 = vld [vmem:[#allocation5 + $0x158] sm:$0xff]
    %v173 = vld [vmem:[#allocation5 + $0x160] sm:$0xff]
    %v174 = vld [vmem:[#allocation5 + $0x168] sm:$0xff]
    %v175 = vld [vmem:[#allocation5 + $0x170] sm:$0xff]
    %v176 = vld [vmem:[#allocation5 + $0x178] sm:$0xff]
    %v177 = vld [vmem:[#allocation5 + $0x180] sm:$0xff]
    %v178 = vld [vmem:[#allocation5 + $0x188] sm:$0xff]
    %v179 = vld [vmem:[#allocation5 + $0x190] sm:$0xff]
    %v180 = vld [vmem:[#allocation5 + $0x198] sm:$0xff]
    %v181 = vld [vmem:[#allocation5 + $0x1a0] sm:$0xff]
    %v182 = vld [vmem:[#allocation5 + $0x1a8] sm:$0xff]
    %v183 = vld [vmem:[#allocation5 + $0x1b0] sm:$0xff]
    %v184 = vld [vmem:[#allocation5 + $0x1b8] sm:$0xff]
    %v185 = vld [vmem:[#allocation5 + $0x1c0] sm:$0xff]
    %v186 = vld [vmem:[#allocation5 + $0x1c8] sm:$0xff]
    %v187 = vld [vmem:[#allocation5 + $0x1d0] sm:$0xff]
    %v188 = vld [vmem:[#allocation5 + $0x1d8] sm:$0xff]
    %v189 = vld [vmem:[#allocation5 + $0x1e0] sm:$0xff]
    %v190 = vld [vmem:[#allocation5 + $0x1e8] sm:$0xff]
    %v191 = vld [vmem:[#allocation5 + $0x1f0] sm:$0xff]
    %v192 = vld [vmem:[#allocation5 + $0x1f8] sm:$0xff]
    %v193 = vld [vmem:[#allocation5 + $0x200] sm:$0xff]
    %v194 = vld [vmem:[#allocation5 + $0x208] sm:$0xff]
    %v195 = vld [vmem:[#allocation5 + $0x210] sm:$0xff]
    %v196 = vld [vmem:[#allocation5 + $0x218] sm:$0xff]
    %v197 = vld [vmem:[#allocation5 + $0x220] sm:$0xff]
    %v198 = vld [vmem:[#allocation5 + $0x228] sm:$0xff]
    %v199 = vld [vmem:[#allocation5 + $0x230] sm:$0xff]
    %v200 = vld [vmem:[#allocation5 + $0x238] sm:$0xff]
    %v201 = vld [vmem:[#allocation5 + $0x240] sm:$0xff]
    %v202 = vld [vmem:[#allocation5 + $0x248] sm:$0xff]
    %v203 = vld [vmem:[#allocation5 + $0x250] sm:$0xff]
    %v204 = vld [vmem:[#allocation5 + $0x258] sm:$0xff]
    %v205 = vld [vmem:[#allocation5 + $0x260] sm:$0xff]
    %v206 = vld [vmem:[#allocation5 + $0x268] sm:$0xff]
    %v207 = vld [vmem:[#allocation5 + $0x270] sm:$0xff]
    %v208 = vld [vmem:[#allocation5 + $0x278] sm:$0xff]
    %v209 = vld [vmem:[#allocation5 + $0x280] sm:$0xff]
    %v210 = vld [vmem:[#allocation5 + $0x288] sm:$0xff]
    %v211 = vld [vmem:[#allocation5 + $0x290] sm:$0xff]
    %v212 = vld [vmem:[#allocation5 + $0x298] sm:$0xff]
    %v213 = vld [vmem:[#allocation5 + $0x2a0] sm:$0xff]
    %v214 = vld [vmem:[#allocation5 + $0x2a8] sm:$0xff]
    %v215 = vld [vmem:[#allocation5 + $0x2b0] sm:$0xff]
    %v216 = vld [vmem:[#allocation5 + $0x2b8] sm:$0xff]
    %v217 = vld [vmem:[#allocation5 + $0x2c0] sm:$0xff]
    %v218 = vld [vmem:[#allocation5 + $0x2c8] sm:$0xff]
    %v219 = vld [vmem:[#allocation5 + $0x2d0] sm:$0xff]
    %v220 = vld [vmem:[#allocation5 + $0x2d8] sm:$0xff]
    %v221 = vld [vmem:[#allocation5 + $0x2e0] sm:$0xff]
    %v222 = vld [vmem:[#allocation5 + $0x2e8] sm:$0xff]
    %v223 = vld [vmem:[#allocation5 + $0x2f0] sm:$0xff]
    %v224 = vld [vmem:[#allocation5 + $0x2f8] sm:$0xff]
    %v225 = vld [vmem:[#allocation5 + $0x300] sm:$0xff]
    %v226 = vld [vmem:[#allocation5 + $0x308] sm:$0xff]
    %v227 = vld [vmem:[#allocation5 + $0x310] sm:$0xff]
    %v228 = vld [vmem:[#allocation5 + $0x318] sm:$0xff]
    %v229 = vld [vmem:[#allocation5 + $0x320] sm:$0xff]
    %v230 = vld [vmem:[#allocation5 + $0x328] sm:$0xff]
    %v231 = vld [vmem:[#allocation5 + $0x330] sm:$0xff]
    %v232 = vld [vmem:[#allocation5 + $0x338] sm:$0xff]
    %v233 = vld [vmem:[#allocation5 + $0x340] sm:$0xff]
    %v234 = vld [vmem:[#allocation5 + $0x348] sm:$0xff]
    %v235 = vld [vmem:[#allocation5 + $0x350] sm:$0xff]
    %v236 = vld [vmem:[#allocation5 + $0x358] sm:$0xff]
    %v237 = vld [vmem:[#allocation5 + $0x360] sm:$0xff]
    %v238 = vld [vmem:[#allocation5 + $0x368] sm:$0xff]
    %v239 = vld [vmem:[#allocation5 + $0x370] sm:$0xff]
    %v240 = vld [vmem:[#allocation5 + $0x378] sm:$0xff]
    %v241 = vld [vmem:[#allocation5 + $0x380] sm:$0xff]
    %v242 = vld [vmem:[#allocation5 + $0x388] sm:$0xff]
    %v243 = vld [vmem:[#allocation5 + $0x390] sm:$0xff]
    %v244 = vld [vmem:[#allocation5 + $0x398] sm:$0xff]
    %v245 = vld [vmem:[#allocation5 + $0x3a0] sm:$0xff]
    %v246 = vld [vmem:[#allocation5 + $0x3a8] sm:$0xff]
    %v247 = vld [vmem:[#allocation5 + $0x3b0] sm:$0xff]
    %v248 = vld [vmem:[#allocation5 + $0x3b8] sm:$0xff]
    %v249 = vld [vmem:[#allocation5 + $0x3c0] sm:$0xff]
    %v250 = vld [vmem:[#allocation5 + $0x3c8] sm:$0xff]
    %v251 = vld [vmem:[#allocation5 + $0x3d0] sm:$0xff]
    %v252 = vld [vmem:[#allocation5 + $0x3d8] sm:$0xff]
    %v253 = vld [vmem:[#allocation5 + $0x3e0] sm:$0xff]
    %v254 = vld [vmem:[#allocation5 + $0x3e8] sm:$0xff]
    %v255 = vld [vmem:[#allocation5 + $0x3f0] sm:$0xff]
    %v256 = vld [vmem:[#allocation5 + $0x3f8] sm:$0xff]
    %v257 = vld [vmem:[#allocation5 + $0x400] sm:$0xff]
    %v258 = vld [vmem:[#allocation5 + $0x408] sm:$0xff]
    %v259 = vld [vmem:[#allocation5 + $0x410] sm:$0xff]
    %v260 = vld [vmem:[#allocation5 + $0x418] sm:$0xff]
    %v261 = vld [vmem:[#allocation5 + $0x420] sm:$0xff]
    %v262 = vld [vmem:[#allocation5 + $0x428] sm:$0xff]
    %v263 = vld [vmem:[#allocation5 + $0x430] sm:$0xff]
    %v264 = vld [vmem:[#allocation5 + $0x438] sm:$0xff]
    %v265 = vld [vmem:[#allocation5 + $0x440] sm:$0xff]
    %v266 = vld [vmem:[#allocation5 + $0x448] sm:$0xff]
    %v267 = vld [vmem:[#allocation5 + $0x450] sm:$0xff]
    %v268 = vld [vmem:[#allocation5 + $0x458] sm:$0xff]
    %v269 = vld [vmem:[#allocation5 + $0x460] sm:$0xff]
    %v270 = vld [vmem:[#allocation5 + $0x468] sm:$0xff]
    %v271 = vld [vmem:[#allocation5 + $0x470] sm:$0xff]
    %v272 = vld [vmem:[#allocation5 + $0x478] sm:$0xff]
    %v273 = vld [vmem:[#allocation5 + $0x480] sm:$0xff]
    %v274 = vld [vmem:[#allocation5 + $0x488] sm:$0xff]
    %v275 = vld [vmem:[#allocation5 + $0x490] sm:$0xff]
    %v276 = vld [vmem:[#allocation5 + $0x498] sm:$0xff]
    %v277 = vld [vmem:[#allocation5 + $0x4a0] sm:$0xff]
    %v278 = vld [vmem:[#allocation5 + $0x4a8] sm:$0xff]
    %v279 = vld [vmem:[#allocation5 + $0x4b0] sm:$0xff]
    %v280 = vld [vmem:[#allocation5 + $0x4b8] sm:$0xff]
    %v281 = vld [vmem:[#allocation5 + $0x4c0] sm:$0xff]
    %v282 = vld [vmem:[#allocation5 + $0x4c8] sm:$0xff]
    %v283 = vld [vmem:[#allocation5 + $0x4d0] sm:$0xff]
    %v284 = vld [vmem:[#allocation5 + $0x4d8] sm:$0xff]
    %v285 = vld [vmem:[#allocation5 + $0x4e0] sm:$0xff]
    %v286 = vld [vmem:[#allocation5 + $0x4e8] sm:$0xff]
    %v287 = vld [vmem:[#allocation5 + $0x4f0] sm:$0xff]
    %v288 = vld [vmem:[#allocation5 + $0x4f8] sm:$0xff]
    %v289 = vld [vmem:[#allocation5 + $0x500] sm:$0xff]
    %v290 = vld [vmem:[#allocation5 + $0x508] sm:$0xff]
    %v291 = vld [vmem:[#allocation5 + $0x510] sm:$0xff]
    %v292 = vld [vmem:[#allocation5 + $0x518] sm:$0xff]
    %v293 = vld [vmem:[#allocation5 + $0x520] sm:$0xff]
    %v294 = vld [vmem:[#allocation5 + $0x528] sm:$0xff]
    %v295 = vld [vmem:[#allocation5 + $0x530] sm:$0xff]
    %v296 = vld [vmem:[#allocation5 + $0x538] sm:$0xff]
    %v297 = vld [vmem:[#allocation5 + $0x540] sm:$0xff]
    %v298 = vld [vmem:[#allocation5 + $0x548] sm:$0xff]
    %v299 = vld [vmem:[#allocation5 + $0x550] sm:$0xff]
    %v300 = vld [vmem:[#allocation5 + $0x558] sm:$0xff]
    %v301 = vld [vmem:[#allocation5 + $0x560] sm:$0xff]
    %v302 = vld [vmem:[#allocation5 + $0x568] sm:$0xff]
    %v303 = vld [vmem:[#allocation5 + $0x570] sm:$0xff]
    %v304 = vld [vmem:[#allocation5 + $0x578] sm:$0xff]
    %v305 = vld [vmem:[#allocation5 + $0x580] sm:$0xff]
    %v306 = vld [vmem:[#allocation5 + $0x588] sm:$0xff]
    %v307 = vld [vmem:[#allocation5 + $0x590] sm:$0xff]
    %v308 = vld [vmem:[#allocation5 + $0x598] sm:$0xff]
    %v309 = vld [vmem:[#allocation5 + $0x5a0] sm:$0xff]
    %v310 = vld [vmem:[#allocation5 + $0x5a8] sm:$0xff]
    %v311 = vld [vmem:[#allocation5 + $0x5b0] sm:$0xff]
    %v312 = vld [vmem:[#allocation5 + $0x5b8] sm:$0xff]
    %v313 = vld [vmem:[#allocation5 + $0x5c0] sm:$0xff]
    %v314 = vld [vmem:[#allocation5 + $0x5c8] sm:$0xff]
    %v315 = vld [vmem:[#allocation5 + $0x5d0] sm:$0xff]
    %v316 = vld [vmem:[#allocation5 + $0x5d8] sm:$0xff]
    %v317 = vld [vmem:[#allocation5 + $0x5e0] sm:$0xff]
    %v318 = vld [vmem:[#allocation5 + $0x5e8] sm:$0xff]
    %v319 = vld [vmem:[#allocation5 + $0x5f0] sm:$0xff]
    %v320 = vld [vmem:[#allocation5 + $0x5f8] sm:$0xff]
    %v321 = vld [vmem:[#allocation5 + $0x600] sm:$0xff]
    %v322 = vld [vmem:[#allocation5 + $0x608] sm:$0xff]
    %v323 = vld [vmem:[#allocation5 + $0x610] sm:$0xff]
    %v324 = vld [vmem:[#allocation5 + $0x618] sm:$0xff]
    %v325 = vld [vmem:[#allocation5 + $0x620] sm:$0xff]
    %v326 = vld [vmem:[#allocation5 + $0x628] sm:$0xff]
    %v327 = vld [vmem:[#allocation5 + $0x630] sm:$0xff]
    %v328 = vld [vmem:[#allocation5 + $0x638] sm:$0xff]
    %v329 = vld [vmem:[#allocation5 + $0x640] sm:$0xff]
    %v330 = vld [vmem:[#allocation5 + $0x648] sm:$0xff]
    %v331 = vld [vmem:[#allocation5 + $0x650] sm:$0xff]
    %v332 = vld [vmem:[#allocation5 + $0x658] sm:$0xff]
    %v333 = vld [vmem:[#allocation5 + $0x660] sm:$0xff]
    %v334 = vld [vmem:[#allocation5 + $0x668] sm:$0xff]
    %v335 = vld [vmem:[#allocation5 + $0x670] sm:$0xff]
    %v336 = vld [vmem:[#allocation5 + $0x678] sm:$0xff]
    %v337 = vld [vmem:[#allocation5 + $0x680] sm:$0xff]
    %v338 = vld [vmem:[#allocation5 + $0x688] sm:$0xff]
    %v339 = vld [vmem:[#allocation5 + $0x690] sm:$0xff]
    %v340 = vld [vmem:[#allocation5 + $0x698] sm:$0xff]
    %v341 = vld [vmem:[#allocation5 + $0x6a0] sm:$0xff]
    %v342 = vld [vmem:[#allocation5 + $0x6a8] sm:$0xff]
    %v343 = vld [vmem:[#allocation5 + $0x6b0] sm:$0xff]
    %v344 = vld [vmem:[#allocation5 + $0x6b8] sm:$0xff]
    %v345 = vld [vmem:[#allocation5 + $0x6c0] sm:$0xff]
    %v346 = vld [vmem:[#allocation5 + $0x6c8] sm:$0xff]
    %v347 = vld [vmem:[#allocation5 + $0x6d0] sm:$0xff]
    %v348 = vld [vmem:[#allocation5 + $0x6d8] sm:$0xff]
    %v349 = vld [vmem:[#allocation5 + $0x6e0] sm:$0xff]
    %v350 = vld [vmem:[#allocation5 + $0x6e8] sm:$0xff]
    %v351 = vld [vmem:[#allocation5 + $0x6f0] sm:$0xff]
    %v352 = vld [vmem:[#allocation5 + $0x6f8] sm:$0xff]
    %v353 = vld [vmem:[#allocation5 + $0x700] sm:$0xff]
    %v354 = vld [vmem:[#allocation5 + $0x708] sm:$0xff]
    %v355 = vld [vmem:[#allocation5 + $0x710] sm:$0xff]
    %v356 = vld [vmem:[#allocation5 + $0x718] sm:$0xff]
    %v357 = vld [vmem:[#allocation5 + $0x720] sm:$0xff]
    %v358 = vld [vmem:[#allocation5 + $0x728] sm:$0xff]
    %v359 = vld [vmem:[#allocation5 + $0x730] sm:$0xff]
    %v360 = vld [vmem:[#allocation5 + $0x738] sm:$0xff]
    %v361 = vld [vmem:[#allocation5 + $0x740] sm:$0xff]
    %v362 = vld [vmem:[#allocation5 + $0x748] sm:$0xff]
    %v363 = vld [vmem:[#allocation5 + $0x750] sm:$0xff]
    %v364 = vld [vmem:[#allocation5 + $0x758] sm:$0xff]
    %v365 = vld [vmem:[#allocation5 + $0x760] sm:$0xff]
    %v366 = vld [vmem:[#allocation5 + $0x768] sm:$0xff]
    %v367 = vld [vmem:[#allocation5 + $0x770] sm:$0xff]
    %v368 = vld [vmem:[#allocation5 + $0x778] sm:$0xff]
    %v369 = vld [vmem:[#allocation5 + $0x780] sm:$0xff]
    %v370 = vld [vmem:[#allocation5 + $0x788] sm:$0xff]
    %v371 = vld [vmem:[#allocation5 + $0x790] sm:$0xff]
    %v372 = vld [vmem:[#allocation5 + $0x798] sm:$0xff]
    %v373 = vld [vmem:[#allocation5 + $0x7a0] sm:$0xff]
    %v374 = vld [vmem:[#allocation5 + $0x7a8] sm:$0xff]
    %v375 = vld [vmem:[#allocation5 + $0x7b0] sm:$0xff]
    %v376 = vld [vmem:[#allocation5 + $0x7b8] sm:$0xff]
    %v377 = vld [vmem:[#allocation5 + $0x7c0] sm:$0xff]
    %v378 = vld [vmem:[#allocation5 + $0x7c8] sm:$0xff]
    %v379 = vld [vmem:[#allocation5 + $0x7d0] sm:$0xff]
    %v380 = vld [vmem:[#allocation5 + $0x7d8] sm:$0xff]
    %v381 = vld [vmem:[#allocation5 + $0x7e0] sm:$0xff]
    %v382 = vld [vmem:[#allocation5 + $0x7e8] sm:$0xff]
    %v383 = vld [vmem:[#allocation5 + $0x7f0] sm:$0xff]
    %v384 = vld [vmem:[#allocation5 + $0x7f8] sm:$0xff]
    %v385 = vld [vmem:[#allocation5 + $0x800] sm:$0xff]
    %v386 = vld [vmem:[#allocation5 + $0x808] sm:$0xff]
    %v387 = vld [vmem:[#allocation5 + $0x810] sm:$0xff]
    %v388 = vld [vmem:[#allocation5 + $0x818] sm:$0xff]
    %v389 = vld [vmem:[#allocation5 + $0x820] sm:$0xff]
    %v390 = vld [vmem:[#allocation5 + $0x828] sm:$0xff]
    %v391 = vld [vmem:[#allocation5 + $0x830] sm:$0xff]
    %v392 = vld [vmem:[#allocation5 + $0x838] sm:$0xff]
    %v393 = vld [vmem:[#allocation5 + $0x840] sm:$0xff]
    %v394 = vld [vmem:[#allocation5 + $0x848] sm:$0xff]
    %v395 = vld [vmem:[#allocation5 + $0x850] sm:$0xff]
    %v396 = vld [vmem:[#allocation5 + $0x858] sm:$0xff]
    %v397 = vld [vmem:[#allocation5 + $0x860] sm:$0xff]
    %v398 = vld [vmem:[#allocation5 + $0x868] sm:$0xff]
    %v399 = vld [vmem:[#allocation5 + $0x870] sm:$0xff]
    %v400 = vld [vmem:[#allocation5 + $0x878] sm:$0xff]
    %v401 = vld [vmem:[#allocation5 + $0x880] sm:$0xff]
    %v402 = vld [vmem:[#allocation5 + $0x888] sm:$0xff]
    %v403 = vld [vmem:[#allocation5 + $0x890] sm:$0xff]
    %v404 = vld [vmem:[#allocation5 + $0x898] sm:$0xff]
    %v405 = vld [vmem:[#allocation5 + $0x8a0] sm:$0xff]
    %v406 = vld [vmem:[#allocation5 + $0x8a8] sm:$0xff]
    %v407 = vld [vmem:[#allocation5 + $0x8b0] sm:$0xff]
    %v408 = vld [vmem:[#allocation5 + $0x8b8] sm:$0xff]
    %v409 = vld [vmem:[#allocation5 + $0x8c0] sm:$0xff]
    %v410 = vld [vmem:[#allocation5 + $0x8c8] sm:$0xff]
    %v411 = vld [vmem:[#allocation5 + $0x8d0] sm:$0xff]
    %v412 = vld [vmem:[#allocation5 + $0x8d8] sm:$0xff]
    %v413 = vld [vmem:[#allocation5 + $0x8e0] sm:$0xff]
    %v414 = vld [vmem:[#allocation5 + $0x8e8] sm:$0xff]
    %v415 = vld [vmem:[#allocation5 + $0x8f0] sm:$0xff]
    %v416 = vld [vmem:[#allocation5 + $0x8f8] sm:$0xff]
    %v417 = vld [vmem:[#allocation5 + $0x900] sm:$0xff]
    %v418 = vld [vmem:[#allocation5 + $0x908] sm:$0xff]
    %v419 = vld [vmem:[#allocation5 + $0x910] sm:$0xff]
    %v420 = vld [vmem:[#allocation5 + $0x918] sm:$0xff]
    %v421 = vld [vmem:[#allocation5 + $0x920] sm:$0xff]
    %v422 = vld [vmem:[#allocation5 + $0x928] sm:$0xff]
    %v423 = vld [vmem:[#allocation5 + $0x930] sm:$0xff]
    %v424 = vld [vmem:[#allocation5 + $0x938] sm:$0xff]
    %v425 = vld [vmem:[#allocation5 + $0x940] sm:$0xff]
    %v426 = vld [vmem:[#allocation5 + $0x948] sm:$0xff]
    %v427 = vld [vmem:[#allocation5 + $0x950] sm:$0xff]
    %v428 = vld [vmem:[#allocation5 + $0x958] sm:$0xff]
    %v429 = vld [vmem:[#allocation5 + $0x960] sm:$0xff]
    %v430 = vld [vmem:[#allocation5 + $0x968] sm:$0xff]
    %v431 = vld [vmem:[#allocation5 + $0x970] sm:$0xff]
    %v432 = vld [vmem:[#allocation5 + $0x978] sm:$0xff]
    %v433 = vld [vmem:[#allocation5 + $0x980] sm:$0xff]
    %v434 = vld [vmem:[#allocation5 + $0x988] sm:$0xff]
    %v435 = vld [vmem:[#allocation5 + $0x990] sm:$0xff]
    %v436 = vld [vmem:[#allocation5 + $0x998] sm:$0xff]
    %v437 = vld [vmem:[#allocation5 + $0x9a0] sm:$0xff]
    %v438 = vld [vmem:[#allocation5 + $0x9a8] sm:$0xff]
    %v439 = vld [vmem:[#allocation5 + $0x9b0] sm:$0xff]
    %v440 = vld [vmem:[#allocation5 + $0x9b8] sm:$0xff]
    %v441 = vld [vmem:[#allocation5 + $0x9c0] sm:$0xff]
    %v442 = vld [vmem:[#allocation5 + $0x9c8] sm:$0xff]
    %v443 = vld [vmem:[#allocation5 + $0x9d0] sm:$0xff]
    %v444 = vld [vmem:[#allocation5 + $0x9d8] sm:$0xff]
    %v445 = vld [vmem:[#allocation5 + $0x9e0] sm:$0xff]
    %v446 = vld [vmem:[#allocation5 + $0x9e8] sm:$0xff]
    %v447 = vld [vmem:[#allocation5 + $0x9f0] sm:$0xff]
    %v448 = vld [vmem:[#allocation5 + $0x9f8] sm:$0xff]
    %v449 = vld [vmem:[#allocation5 + $0xa00] sm:$0xff]
    %v450 = vld [vmem:[#allocation5 + $0xa08] sm:$0xff]
    %v451 = vld [vmem:[#allocation5 + $0xa10] sm:$0xff]
    %v452 = vld [vmem:[#allocation5 + $0xa18] sm:$0xff]
    %v453 = vld [vmem:[#allocation5 + $0xa20] sm:$0xff]
    %v454 = vld [vmem:[#allocation5 + $0xa28] sm:$0xff]
    %v455 = vld [vmem:[#allocation5 + $0xa30] sm:$0xff]
    %v456 = vld [vmem:[#allocation5 + $0xa38] sm:$0xff]
    %v457 = vld [vmem:[#allocation5 + $0xa40] sm:$0xff]
    %v458 = vld [vmem:[#allocation5 + $0xa48] sm:$0xff]
    %v459 = vld [vmem:[#allocation5 + $0xa50] sm:$0xff]
    %v460 = vld [vmem:[#allocation5 + $0xa58] sm:$0xff]
    %v461 = vld [vmem:[#allocation5 + $0xa60] sm:$0xff]
    %v462 = vld [vmem:[#allocation5 + $0xa68] sm:$0xff]
    %v463 = vld [vmem:[#allocation5 + $0xa70] sm:$0xff]
    %v464 = vld [vmem:[#allocation5 + $0xa78] sm:$0xff]
    %v465 = vld [vmem:[#allocation5 + $0xa80] sm:$0xff]
    %v466 = vld [vmem:[#allocation5 + $0xa88] sm:$0xff]
    %v467 = vld [vmem:[#allocation5 + $0xa90] sm:$0xff]
    %v468 = vld [vmem:[#allocation5 + $0xa98] sm:$0xff]
    %v469 = vld [vmem:[#allocation5 + $0xaa0] sm:$0xff]
    %v470 = vld [vmem:[#allocation5 + $0xaa8] sm:$0xff]
    %v471 = vld [vmem:[#allocation5 + $0xab0] sm:$0xff]
    %v472 = vld [vmem:[#allocation5 + $0xab8] sm:$0xff]
    %v473 = vld [vmem:[#allocation5 + $0xac0] sm:$0xff]
    %v474 = vld [vmem:[#allocation5 + $0xac8] sm:$0xff]
    %v475 = vld [vmem:[#allocation5 + $0xad0] sm:$0xff]
    %v476 = vld [vmem:[#allocation5 + $0xad8] sm:$0xff]
    %v477 = vld [vmem:[#allocation5 + $0xae0] sm:$0xff]
    %v478 = vld [vmem:[#allocation5 + $0xae8] sm:$0xff]
    %v479 = vld [vmem:[#allocation5 + $0xaf0] sm:$0xff]
    %v480 = vld [vmem:[#allocation5 + $0xaf8] sm:$0xff]
    %v481 = vld [vmem:[#allocation5 + $0xb00] sm:$0xff]
    %v482 = vld [vmem:[#allocation5 + $0xb08] sm:$0xff]
    %v483 = vld [vmem:[#allocation5 + $0xb10] sm:$0xff]
    %v484 = vld [vmem:[#allocation5 + $0xb18] sm:$0xff]
    %v485 = vld [vmem:[#allocation5 + $0xb20] sm:$0xff]
    %v486 = vld [vmem:[#allocation5 + $0xb28] sm:$0xff]
    %v487 = vld [vmem:[#allocation5 + $0xb30] sm:$0xff]
    %v488 = vld [vmem:[#allocation5 + $0xb38] sm:$0xff]
    %v489 = vld [vmem:[#allocation5 + $0xb40] sm:$0xff]
    %v490 = vld [vmem:[#allocation5 + $0xb48] sm:$0xff]
    %v491 = vld [vmem:[#allocation5 + $0xb50] sm:$0xff]
    %v492 = vld [vmem:[#allocation5 + $0xb58] sm:$0xff]
    %v493 = vld [vmem:[#allocation5 + $0xb60] sm:$0xff]
    %v494 = vld [vmem:[#allocation5 + $0xb68] sm:$0xff]
    %v495 = vld [vmem:[#allocation5 + $0xb70] sm:$0xff]
    %v496 = vld [vmem:[#allocation5 + $0xb78] sm:$0xff]
    %v497 = vld [vmem:[#allocation5 + $0xb80] sm:$0xff]
    %v498 = vld [vmem:[#allocation5 + $0xb88] sm:$0xff]
    %v499 = vld [vmem:[#allocation5 + $0xb90] sm:$0xff]
    %v500 = vld [vmem:[#allocation5 + $0xb98] sm:$0xff]
    %v501 = vld [vmem:[#allocation5 + $0xba0] sm:$0xff]
    %v502 = vld [vmem:[#allocation5 + $0xba8] sm:$0xff]
    %v503 = vld [vmem:[#allocation5 + $0xbb0] sm:$0xff]
    %v504 = vld [vmem:[#allocation5 + $0xbb8] sm:$0xff]
    %v505 = vld [vmem:[#allocation5 + $0xbc0] sm:$0xff]
    %v506 = vld [vmem:[#allocation5 + $0xbc8] sm:$0xff]
    %v507 = vld [vmem:[#allocation5 + $0xbd0] sm:$0xff]
    %v508 = vld [vmem:[#allocation5 + $0xbd8] sm:$0xff]
    %v509 = vld [vmem:[#allocation5 + $0xbe0] sm:$0xff]
    %v510 = vld [vmem:[#allocation5 + $0xbe8] sm:$0xff]
    %v511 = vld [vmem:[#allocation5 + $0xbf0] sm:$0xff]
    %v512 = vld [vmem:[#allocation5 + $0xbf8] sm:$0xff]
    %v513 = vld [vmem:[#allocation5 + $0xc00] sm:$0xff]
    %v514 = vld [vmem:[#allocation5 + $0xc08] sm:$0xff]
    %v515 = vld [vmem:[#allocation5 + $0xc10] sm:$0xff]
    %v516 = vld [vmem:[#allocation5 + $0xc18] sm:$0xff]
    %v517 = vld [vmem:[#allocation5 + $0xc20] sm:$0xff]
    %v518 = vld [vmem:[#allocation5 + $0xc28] sm:$0xff]
    %v519 = vld [vmem:[#allocation5 + $0xc30] sm:$0xff]
    %v520 = vld [vmem:[#allocation5 + $0xc38] sm:$0xff]
    %v521 = vld [vmem:[#allocation5 + $0xc40] sm:$0xff]
    %v522 = vld [vmem:[#allocation5 + $0xc48] sm:$0xff]
    %v523 = vld [vmem:[#allocation5 + $0xc50] sm:$0xff]
    %v524 = vld [vmem:[#allocation5 + $0xc58] sm:$0xff]
    %v525 = vld [vmem:[#allocation5 + $0xc60] sm:$0xff]
    %v526 = vld [vmem:[#allocation5 + $0xc68] sm:$0xff]
    %v527 = vld [vmem:[#allocation5 + $0xc70] sm:$0xff]
    %v528 = vld [vmem:[#allocation5 + $0xc78] sm:$0xff]
    %v529 = vld [vmem:[#allocation5 + $0xc80] sm:$0xff]
    %v530 = vld [vmem:[#allocation5 + $0xc88] sm:$0xff]
    %v531 = vld [vmem:[#allocation5 + $0xc90] sm:$0xff]
    %v532 = vld [vmem:[#allocation5 + $0xc98] sm:$0xff]
    %v533 = vld [vmem:[#allocation5 + $0xca0] sm:$0xff]
    %v534 = vld [vmem:[#allocation5 + $0xca8] sm:$0xff]
    %v535 = vld [vmem:[#allocation5 + $0xcb0] sm:$0xff]
    %v536 = vld [vmem:[#allocation5 + $0xcb8] sm:$0xff]
    %v537 = vld [vmem:[#allocation5 + $0xcc0] sm:$0xff]
    %v538 = vld [vmem:[#allocation5 + $0xcc8] sm:$0xff]
    %v539 = vld [vmem:[#allocation5 + $0xcd0] sm:$0xff]
    %v540 = vld [vmem:[#allocation5 + $0xcd8] sm:$0xff]
    %v541 = vld [vmem:[#allocation5 + $0xce0] sm:$0xff]
    %v542 = vld [vmem:[#allocation5 + $0xce8] sm:$0xff]
    %v543 = vld [vmem:[#allocation5 + $0xcf0] sm:$0xff]
    %v544 = vld [vmem:[#allocation5 + $0xcf8] sm:$0xff]
    %v545 = vld [vmem:[#allocation5 + $0xd00] sm:$0xff]
    %v546 = vld [vmem:[#allocation5 + $0xd08] sm:$0xff]
    %v547 = vld [vmem:[#allocation5 + $0xd10] sm:$0xff]
    %v548 = vld [vmem:[#allocation5 + $0xd18] sm:$0xff]
    %v549 = vld [vmem:[#allocation5 + $0xd20] sm:$0xff]
    %v550 = vld [vmem:[#allocation5 + $0xd28] sm:$0xff]
    %v551 = vld [vmem:[#allocation5 + $0xd30] sm:$0xff]
    %v552 = vld [vmem:[#allocation5 + $0xd38] sm:$0xff]
    %v553 = vld [vmem:[#allocation5 + $0xd40] sm:$0xff]
    %v554 = vld [vmem:[#allocation5 + $0xd48] sm:$0xff]
    %v555 = vld [vmem:[#allocation5 + $0xd50] sm:$0xff]
    %v556 = vld [vmem:[#allocation5 + $0xd58] sm:$0xff]
    %v557 = vld [vmem:[#allocation5 + $0xd60] sm:$0xff]
    %v558 = vld [vmem:[#allocation5 + $0xd68] sm:$0xff]
    %v559 = vld [vmem:[#allocation5 + $0xd70] sm:$0xff]
    %v560 = vld [vmem:[#allocation5 + $0xd78] sm:$0xff]
    %v561 = vld [vmem:[#allocation5 + $0xd80] sm:$0xff]
    %v562 = vld [vmem:[#allocation5 + $0xd88] sm:$0xff]
    %v563 = vld [vmem:[#allocation5 + $0xd90] sm:$0xff]
    %v564 = vld [vmem:[#allocation5 + $0xd98] sm:$0xff]
    %v565 = vld [vmem:[#allocation5 + $0xda0] sm:$0xff]
    %v566 = vld [vmem:[#allocation5 + $0xda8] sm:$0xff]
    %v567 = vld [vmem:[#allocation5 + $0xdb0] sm:$0xff]
    %v568 = vld [vmem:[#allocation5 + $0xdb8] sm:$0xff]
    %v569 = vld [vmem:[#allocation5 + $0xdc0] sm:$0xff]
    %v570 = vld [vmem:[#allocation5 + $0xdc8] sm:$0xff]
    %v571 = vld [vmem:[#allocation5 + $0xdd0] sm:$0xff]
    %v572 = vld [vmem:[#allocation5 + $0xdd8] sm:$0xff]
    %v573 = vld [vmem:[#allocation5 + $0xde0] sm:$0xff]
    %v574 = vld [vmem:[#allocation5 + $0xde8] sm:$0xff]
    %v575 = vld [vmem:[#allocation5 + $0xdf0] sm:$0xff]
    %v576 = vld [vmem:[#allocation5 + $0xdf8] sm:$0xff]
    %v577 = vld [vmem:[#allocation5 + $0xe00] sm:$0xff]
    %v578 = vld [vmem:[#allocation5 + $0xe08] sm:$0xff]
    %v579 = vld [vmem:[#allocation5 + $0xe10] sm:$0xff]
    %v580 = vld [vmem:[#allocation5 + $0xe18] sm:$0xff]
    %v581 = vld [vmem:[#allocation5 + $0xe20] sm:$0xff]
    %v582 = vld [vmem:[#allocation5 + $0xe28] sm:$0xff]
    %v583 = vld [vmem:[#allocation5 + $0xe30] sm:$0xff]
    %v584 = vld [vmem:[#allocation5 + $0xe38] sm:$0xff]
    %v585 = vld [vmem:[#allocation5 + $0xe40] sm:$0xff]
    %v586 = vld [vmem:[#allocation5 + $0xe48] sm:$0xff]
    %v587 = vld [vmem:[#allocation5 + $0xe50] sm:$0xff]
    %v588 = vld [vmem:[#allocation5 + $0xe58] sm:$0xff]
    %v589 = vld [vmem:[#allocation5 + $0xe60] sm:$0xff]
    %v590 = vld [vmem:[#allocation5 + $0xe68] sm:$0xff]
    %v591 = vld [vmem:[#allocation5 + $0xe70] sm:$0xff]
    %v592 = vld [vmem:[#allocation5 + $0xe78] sm:$0xff]
    %v593 = vld [vmem:[#allocation5 + $0xe80] sm:$0xff]
    %v594 = vld [vmem:[#allocation5 + $0xe88] sm:$0xff]
    %v595 = vld [vmem:[#allocation5 + $0xe90] sm:$0xff]
    %v596 = vld [vmem:[#allocation5 + $0xe98] sm:$0xff]
    %v597 = vld [vmem:[#allocation5 + $0xea0] sm:$0xff]
    %v598 = vld [vmem:[#allocation5 + $0xea8] sm:$0xff]
    %v599 = vld [vmem:[#allocation5 + $0xeb0] sm:$0xff]
    %v600 = vld [vmem:[#allocation5 + $0xeb8] sm:$0xff]
    %v601 = vld [vmem:[#allocation5 + $0xec0] sm:$0xff]
    %v602 = vld [vmem:[#allocation5 + $0xec8] sm:$0xff]
    %v603 = vld [vmem:[#allocation5 + $0xed0] sm:$0xff]
    %v604 = vld [vmem:[#allocation5 + $0xed8] sm:$0xff]
    %v605 = vld [vmem:[#allocation5 + $0xee0] sm:$0xff]
    %v606 = vld [vmem:[#allocation5 + $0xee8] sm:$0xff]
    %v607 = vld [vmem:[#allocation5 + $0xef0] sm:$0xff]
    %v608 = vld [vmem:[#allocation5 + $0xef8] sm:$0xff]
    %v609 = vld [vmem:[#allocation5 + $0xf00] sm:$0xff]
    %v610 = vld [vmem:[#allocation5 + $0xf08] sm:$0xff]
    %v611 = vld [vmem:[#allocation5 + $0xf10] sm:$0xff]
    %v612 = vld [vmem:[#allocation5 + $0xf18] sm:$0xff]
    %v613 = vld [vmem:[#allocation5 + $0xf20] sm:$0xff]
    %v614 = vld [vmem:[#allocation5 + $0xf28] sm:$0xff]
    %v615 = vld [vmem:[#allocation5 + $0xf30] sm:$0xff]
    %v616 = vld [vmem:[#allocation5 + $0xf38] sm:$0xff]
    %v617 = vld [vmem:[#allocation5 + $0xf40] sm:$0xff]
    %v618 = vld [vmem:[#allocation5 + $0xf48] sm:$0xff]
    %v619 = vld [vmem:[#allocation7] sm:$0xff]
    %v620 = vld [vmem:[#allocation7 + $0x8] sm:$0x3]
    %v623 = vlaneseq
    %v624 = vshrl.u32 %v623, 7
    %v625 = vsub.s32 0, %v624
    %v626 = vrot.slane %v619, %v625
    %v627 = vlaneseq
    %v628 = vshrl.u32 %v627, 7
    %v629 = vsub.s32 1, %v628
    %v630 = vrot.slane %v619, %v629
    %v631 = vlaneseq
    %v632 = vshrl.u32 %v631, 7
    %v633 = vsub.s32 2, %v632
    %v634 = vrot.slane %v619, %v633
    %v635 = vlaneseq
    %v636 = vshrl.u32 %v635, 7
    %v637 = vsub.s32 3, %v636
    %v638 = vrot.slane %v619, %v637
    %v639 = vlaneseq
    %v640 = vshrl.u32 %v639, 7
    %v641 = vsub.s32 4, %v640
    %v642 = vrot.slane %v619, %v641
    %v643 = vlaneseq
    %v644 = vshrl.u32 %v643, 7
    %v645 = vsub.s32 5, %v644
    %v646 = vrot.slane %v619, %v645
    %v647 = vlaneseq
    %v648 = vshrl.u32 %v647, 7
    %v649 = vsub.s32 6, %v648
    %v650 = vrot.slane %v619, %v649
    %v651 = vlaneseq
    %v652 = vshrl.u32 %v651, 7
    %v653 = vsub.s32 7, %v652
    %v654 = vrot.slane %v619, %v653
    %v655 = vlaneseq
    %v656 = vshrl.u32 %v655, 7
    %v657 = vsub.s32 0, %v656
    %v658 = vrot.slane %v620, %v657
    %v659 = vlaneseq
    %v660 = vshrl.u32 %v659, 7
    %v661 = vsub.s32 1, %v660
    %v662 = vrot.slane %v620, %v661
    %v1163 = vunpack.c.l.b16 %v129
    %v1164 = vunpack.c.h.b16 %v129
    %v1165 = vunpack.c.l.b16 %v130
    %v1166 = vunpack.c.h.b16 %v130
    %v1167 = vunpack.c.l.b16 %v131
    %v1168 = vunpack.c.h.b16 %v131
    %v1169 = vunpack.c.l.b16 %v132
    %v1170 = vunpack.c.h.b16 %v132
    %v1171 = vunpack.c.l.b16 %v133
    %v1172 = vunpack.c.h.b16 %v133
    %v1173 = vunpack.c.l.b16 %v134
    %v1174 = vunpack.c.h.b16 %v134
    %v1175 = vunpack.c.l.b16 %v135
    %v1176 = vunpack.c.h.b16 %v135
    %v1177 = vunpack.c.l.b16 %v136
    %v1178 = vunpack.c.h.b16 %v136
    %v1179 = vunpack.c.l.b16 %v137
    %v1180 = vunpack.c.h.b16 %v137
    %v1181 = vunpack.c.l.b16 %v138
    %v1182 = vunpack.c.h.b16 %v138
    %v1183 = vunpack.c.l.b16 %v139
    %v1184 = vunpack.c.h.b16 %v139
    %v1185 = vunpack.c.l.b16 %v140
    %v1186 = vunpack.c.h.b16 %v140
    %v1187 = vunpack.c.l.b16 %v141
    %v1188 = vunpack.c.h.b16 %v141
    %v1189 = vunpack.c.l.b16 %v142
    %v1190 = vunpack.c.h.b16 %v142
    %v1191 = vunpack.c.l.b16 %v143
    %v1192 = vunpack.c.h.b16 %v143
    %v1193 = vunpack.c.l.b16 %v144
    %v1194 = vunpack.c.h.b16 %v144
    %v1195 = vunpack.c.l.b16 %v145
    %v1196 = vunpack.c.h.b16 %v145
    %v1197 = vunpack.c.l.b16 %v146
    %v1198 = vunpack.c.h.b16 %v146
    %v1199 = vunpack.c.l.b16 %v147
    %v1200 = vunpack.c.h.b16 %v147
    %v1201 = vunpack.c.l.b16 %v148
    %v1202 = vunpack.c.h.b16 %v148
    %v1203 = vunpack.c.l.b16 %v149
    %v1204 = vunpack.c.h.b16 %v149
    %v1205 = vunpack.c.l.b16 %v150
    %v1206 = vunpack.c.h.b16 %v150
    %v1207 = vunpack.c.l.b16 %v151
    %v1208 = vunpack.c.h.b16 %v151
    %v1209 = vunpack.c.l.b16 %v152
    %v1210 = vunpack.c.h.b16 %v152
    %v1211 = vunpack.c.l.b16 %v153
    %v1212 = vunpack.c.h.b16 %v153
    %v1213 = vunpack.c.l.b16 %v154
    %v1214 = vunpack.c.h.b16 %v154
    %v1215 = vunpack.c.l.b16 %v155
    %v1216 = vunpack.c.h.b16 %v155
    %v1217 = vunpack.c.l.b16 %v156
    %v1218 = vunpack.c.h.b16 %v156
    %v1219 = vunpack.c.l.b16 %v157
    %v1220 = vunpack.c.h.b16 %v157
    %v1221 = vunpack.c.l.b16 %v158
    %v1222 = vunpack.c.h.b16 %v158
    %v1223 = vunpack.c.l.b16 %v159
    %v1224 = vunpack.c.h.b16 %v159
    %v1225 = vunpack.c.l.b16 %v160
    %v1226 = vunpack.c.h.b16 %v160
    %v1227 = vunpack.c.l.b16 %v161
    %v1228 = vunpack.c.h.b16 %v161
    %v1229 = vunpack.c.l.b16 %v162
    %v1230 = vunpack.c.h.b16 %v162
    %v1231 = vunpack.c.l.b16 %v163
    %v1232 = vunpack.c.h.b16 %v163
    %v1233 = vunpack.c.l.b16 %v164
    %v1234 = vunpack.c.h.b16 %v164
    %v1235 = vunpack.c.l.b16 %v165
    %v1236 = vunpack.c.h.b16 %v165
    %v1237 = vunpack.c.l.b16 %v166
    %v1238 = vunpack.c.h.b16 %v166
    %v1239 = vunpack.c.l.b16 %v167
    %v1240 = vunpack.c.h.b16 %v167
    %v1241 = vunpack.c.l.b16 %v168
    %v1242 = vunpack.c.h.b16 %v168
    %v1243 = vunpack.c.l.b16 %v169
    %v1244 = vunpack.c.h.b16 %v169
    %v1245 = vunpack.c.l.b16 %v170
    %v1246 = vunpack.c.h.b16 %v170
    %v1247 = vunpack.c.l.b16 %v171
    %v1248 = vunpack.c.h.b16 %v171
    %v1249 = vunpack.c.l.b16 %v172
    %v1250 = vunpack.c.h.b16 %v172
    %v1251 = vunpack.c.l.b16 %v173
    %v1252 = vunpack.c.h.b16 %v173
    %v1253 = vunpack.c.l.b16 %v174
    %v1254 = vunpack.c.h.b16 %v174
    %v1255 = vunpack.c.l.b16 %v175
    %v1256 = vunpack.c.h.b16 %v175
    %v1257 = vunpack.c.l.b16 %v176
    %v1258 = vunpack.c.h.b16 %v176
    %v1259 = vunpack.c.l.b16 %v177
    %v1260 = vunpack.c.h.b16 %v177
    %v1261 = vunpack.c.l.b16 %v178
    %v1262 = vunpack.c.h.b16 %v178
    %v1263 = vunpack.c.l.b16 %v179
    %v1264 = vunpack.c.h.b16 %v179
    %v1265 = vunpack.c.l.b16 %v180
    %v1266 = vunpack.c.h.b16 %v180
    %v1267 = vunpack.c.l.b16 %v181
    %v1268 = vunpack.c.h.b16 %v181
    %v1269 = vunpack.c.l.b16 %v182
    %v1270 = vunpack.c.h.b16 %v182
    %v1271 = vunpack.c.l.b16 %v183
    %v1272 = vunpack.c.h.b16 %v183
    %v1273 = vunpack.c.l.b16 %v184
    %v1274 = vunpack.c.h.b16 %v184
    %v1275 = vunpack.c.l.b16 %v185
    %v1276 = vunpack.c.h.b16 %v185
    %v1277 = vunpack.c.l.b16 %v186
    %v1278 = vunpack.c.h.b16 %v186
    %v1279 = vunpack.c.l.b16 %v187
    %v1280 = vunpack.c.h.b16 %v187
    %v1281 = vunpack.c.l.b16 %v188
    %v1282 = vunpack.c.h.b16 %v188
    %v1283 = vunpack.c.l.b16 %v189
    %v1284 = vunpack.c.h.b16 %v189
    %v1285 = vunpack.c.l.b16 %v190
    %v1286 = vunpack.c.h.b16 %v190
    %v1287 = vunpack.c.l.b16 %v191
    %v1288 = vunpack.c.h.b16 %v191
    %v1289 = vunpack.c.l.b16 %v192
    %v1290 = vunpack.c.h.b16 %v192
    %v1291 = vunpack.c.l.b16 %v193
    %v1292 = vunpack.c.h.b16 %v193
    %v1293 = vunpack.c.l.b16 %v194
    %v1294 = vunpack.c.h.b16 %v194
    %v1295 = vunpack.c.l.b16 %v195
    %v1296 = vunpack.c.h.b16 %v195
    %v1297 = vunpack.c.l.b16 %v196
    %v1298 = vunpack.c.h.b16 %v196
    %v1299 = vunpack.c.l.b16 %v197
    %v1300 = vunpack.c.h.b16 %v197
    %v1301 = vunpack.c.l.b16 %v198
    %v1302 = vunpack.c.h.b16 %v198
    %v1303 = vunpack.c.l.b16 %v199
    %v1304 = vunpack.c.h.b16 %v199
    %v1305 = vunpack.c.l.b16 %v200
    %v1306 = vunpack.c.h.b16 %v200
    %v1307 = vunpack.c.l.b16 %v201
    %v1308 = vunpack.c.h.b16 %v201
    %v1309 = vunpack.c.l.b16 %v202
    %v1310 = vunpack.c.h.b16 %v202
    %v1311 = vunpack.c.l.b16 %v203
    %v1312 = vunpack.c.h.b16 %v203
    %v1313 = vunpack.c.l.b16 %v204
    %v1314 = vunpack.c.h.b16 %v204
    %v1315 = vunpack.c.l.b16 %v205
    %v1316 = vunpack.c.h.b16 %v205
    %v1317 = vunpack.c.l.b16 %v206
    %v1318 = vunpack.c.h.b16 %v206
    %v1319 = vunpack.c.l.b16 %v207
    %v1320 = vunpack.c.h.b16 %v207
    %v1321 = vunpack.c.l.b16 %v208
    %v1322 = vunpack.c.h.b16 %v208
    %v1323 = vunpack.c.l.b16 %v209
    %v1324 = vunpack.c.h.b16 %v209
    %v1325 = vunpack.c.l.b16 %v210
    %v1326 = vunpack.c.h.b16 %v210
    %v1327 = vunpack.c.l.b16 %v211
    %v1328 = vunpack.c.h.b16 %v211
    %v1329 = vunpack.c.l.b16 %v212
    %v1330 = vunpack.c.h.b16 %v212
    %v1331 = vunpack.c.l.b16 %v213
    %v1332 = vunpack.c.h.b16 %v213
    %v1333 = vunpack.c.l.b16 %v214
    %v1334 = vunpack.c.h.b16 %v214
    %v1335 = vunpack.c.l.b16 %v215
    %v1336 = vunpack.c.h.b16 %v215
    %v1337 = vunpack.c.l.b16 %v216
    %v1338 = vunpack.c.h.b16 %v216
    %v1339 = vunpack.c.l.b16 %v217
    %v1340 = vunpack.c.h.b16 %v217
    %v1341 = vunpack.c.l.b16 %v218
    %v1342 = vunpack.c.h.b16 %v218
    %v1343 = vunpack.c.l.b16 %v219
    %v1344 = vunpack.c.h.b16 %v219
    %v1345 = vunpack.c.l.b16 %v220
    %v1346 = vunpack.c.h.b16 %v220
    %v1347 = vunpack.c.l.b16 %v221
    %v1348 = vunpack.c.h.b16 %v221
    %v1349 = vunpack.c.l.b16 %v222
    %v1350 = vunpack.c.h.b16 %v222
    %v1351 = vunpack.c.l.b16 %v223
    %v1352 = vunpack.c.h.b16 %v223
    %v1353 = vunpack.c.l.b16 %v224
    %v1354 = vunpack.c.h.b16 %v224
    %v1355 = vunpack.c.l.b16 %v225
    %v1356 = vunpack.c.h.b16 %v225
    %v1357 = vunpack.c.l.b16 %v226
    %v1358 = vunpack.c.h.b16 %v226
    %v1359 = vunpack.c.l.b16 %v227
    %v1360 = vunpack.c.h.b16 %v227
    %v1361 = vunpack.c.l.b16 %v228
    %v1362 = vunpack.c.h.b16 %v228
    %v1363 = vunpack.c.l.b16 %v229
    %v1364 = vunpack.c.h.b16 %v229
    %v1365 = vunpack.c.l.b16 %v230
    %v1366 = vunpack.c.h.b16 %v230
    %v1367 = vunpack.c.l.b16 %v231
    %v1368 = vunpack.c.h.b16 %v231
    %v1369 = vunpack.c.l.b16 %v232
    %v1370 = vunpack.c.h.b16 %v232
    %v1371 = vunpack.c.l.b16 %v233
    %v1372 = vunpack.c.h.b16 %v233
    %v1373 = vunpack.c.l.b16 %v234
    %v1374 = vunpack.c.h.b16 %v234
    %v1375 = vunpack.c.l.b16 %v235
    %v1376 = vunpack.c.h.b16 %v235
    %v1377 = vunpack.c.l.b16 %v236
    %v1378 = vunpack.c.h.b16 %v236
    %v1379 = vunpack.c.l.b16 %v237
    %v1380 = vunpack.c.h.b16 %v237
    %v1381 = vunpack.c.l.b16 %v238
    %v1382 = vunpack.c.h.b16 %v238
    %v1383 = vunpack.c.l.b16 %v239
    %v1384 = vunpack.c.h.b16 %v239
    %v1385 = vunpack.c.l.b16 %v240
    %v1386 = vunpack.c.h.b16 %v240
    %v1387 = vunpack.c.l.b16 %v241
    %v1388 = vunpack.c.h.b16 %v241
    %v1389 = vunpack.c.l.b16 %v242
    %v1390 = vunpack.c.h.b16 %v242
    %v1391 = vunpack.c.l.b16 %v243
    %v1392 = vunpack.c.h.b16 %v243
    %v1393 = vunpack.c.l.b16 %v244
    %v1394 = vunpack.c.h.b16 %v244
    %v1395 = vunpack.c.l.b16 %v245
    %v1396 = vunpack.c.h.b16 %v245
    %v1397 = vunpack.c.l.b16 %v246
    %v1398 = vunpack.c.h.b16 %v246
    %v1399 = vunpack.c.l.b16 %v247
    %v1400 = vunpack.c.h.b16 %v247
    %v1401 = vunpack.c.l.b16 %v248
    %v1402 = vunpack.c.h.b16 %v248
    %v1403 = vunpack.c.l.b16 %v249
    %v1404 = vunpack.c.h.b16 %v249
    %v1405 = vunpack.c.l.b16 %v250
    %v1406 = vunpack.c.h.b16 %v250
    %v1407 = vunpack.c.l.b16 %v251
    %v1408 = vunpack.c.h.b16 %v251
    %v1409 = vunpack.c.l.b16 %v252
    %v1410 = vunpack.c.h.b16 %v252
    %v1411 = vunpack.c.l.b16 %v253
    %v1412 = vunpack.c.h.b16 %v253
    %v1413 = vunpack.c.l.b16 %v254
    %v1414 = vunpack.c.h.b16 %v254
    %v1415 = vunpack.c.l.b16 %v255
    %v1416 = vunpack.c.h.b16 %v255
    %v1417 = vunpack.c.l.b16 %v256
    %v1418 = vunpack.c.h.b16 %v256
    %v1419 = vunpack.c.l.b16 %v257
    %v1420 = vunpack.c.h.b16 %v257
    %v1421 = vunpack.c.l.b16 %v258
    %v1422 = vunpack.c.h.b16 %v258
    %v1423 = vunpack.c.l.b16 %v259
    %v1424 = vunpack.c.h.b16 %v259
    %v1425 = vunpack.c.l.b16 %v260
    %v1426 = vunpack.c.h.b16 %v260
    %v1427 = vunpack.c.l.b16 %v261
    %v1428 = vunpack.c.h.b16 %v261
    %v1429 = vunpack.c.l.b16 %v262
    %v1430 = vunpack.c.h.b16 %v262
    %v1431 = vunpack.c.l.b16 %v263
    %v1432 = vunpack.c.h.b16 %v263
    %v1433 = vunpack.c.l.b16 %v264
    %v1434 = vunpack.c.h.b16 %v264
    %v1435 = vunpack.c.l.b16 %v265
    %v1436 = vunpack.c.h.b16 %v265
    %v1437 = vunpack.c.l.b16 %v266
    %v1438 = vunpack.c.h.b16 %v266
    %v1439 = vunpack.c.l.b16 %v267
    %v1440 = vunpack.c.h.b16 %v267
    %v1441 = vunpack.c.l.b16 %v268
    %v1442 = vunpack.c.h.b16 %v268
    %v1443 = vunpack.c.l.b16 %v269
    %v1444 = vunpack.c.h.b16 %v269
    %v1445 = vunpack.c.l.b16 %v270
    %v1446 = vunpack.c.h.b16 %v270
    %v1447 = vunpack.c.l.b16 %v271
    %v1448 = vunpack.c.h.b16 %v271
    %v1449 = vunpack.c.l.b16 %v272
    %v1450 = vunpack.c.h.b16 %v272
    %v1451 = vunpack.c.l.b16 %v273
    %v1452 = vunpack.c.h.b16 %v273
    %v1453 = vunpack.c.l.b16 %v274
    %v1454 = vunpack.c.h.b16 %v274
    %v1455 = vunpack.c.l.b16 %v275
    %v1456 = vunpack.c.h.b16 %v275
    %v1457 = vunpack.c.l.b16 %v276
    %v1458 = vunpack.c.h.b16 %v276
    %v1459 = vunpack.c.l.b16 %v277
    %v1460 = vunpack.c.h.b16 %v277
    %v1461 = vunpack.c.l.b16 %v278
    %v1462 = vunpack.c.h.b16 %v278
    %v1463 = vunpack.c.l.b16 %v279
    %v1464 = vunpack.c.h.b16 %v279
    %v1465 = vunpack.c.l.b16 %v280
    %v1466 = vunpack.c.h.b16 %v280
    %v1467 = vunpack.c.l.b16 %v281
    %v1468 = vunpack.c.h.b16 %v281
    %v1469 = vunpack.c.l.b16 %v282
    %v1470 = vunpack.c.h.b16 %v282
    %v1471 = vunpack.c.l.b16 %v283
    %v1472 = vunpack.c.h.b16 %v283
    %v1473 = vunpack.c.l.b16 %v284
    %v1474 = vunpack.c.h.b16 %v284
    %v1475 = vunpack.c.l.b16 %v285
    %v1476 = vunpack.c.h.b16 %v285
    %v1477 = vunpack.c.l.b16 %v286
    %v1478 = vunpack.c.h.b16 %v286
    %v1479 = vunpack.c.l.b16 %v287
    %v1480 = vunpack.c.h.b16 %v287
    %v1481 = vunpack.c.l.b16 %v288
    %v1482 = vunpack.c.h.b16 %v288
    %v1483 = vunpack.c.l.b16 %v289
    %v1484 = vunpack.c.h.b16 %v289
    %v1485 = vunpack.c.l.b16 %v290
    %v1486 = vunpack.c.h.b16 %v290
    %v1487 = vunpack.c.l.b16 %v291
    %v1488 = vunpack.c.h.b16 %v291
    %v1489 = vunpack.c.l.b16 %v292
    %v1490 = vunpack.c.h.b16 %v292
    %v1491 = vunpack.c.l.b16 %v293
    %v1492 = vunpack.c.h.b16 %v293
    %v1493 = vunpack.c.l.b16 %v294
    %v1494 = vunpack.c.h.b16 %v294
    %v1495 = vunpack.c.l.b16 %v295
    %v1496 = vunpack.c.h.b16 %v295
    %v1497 = vunpack.c.l.b16 %v296
    %v1498 = vunpack.c.h.b16 %v296
    %v1499 = vunpack.c.l.b16 %v297
    %v1500 = vunpack.c.h.b16 %v297
    %v1501 = vunpack.c.l.b16 %v298
    %v1502 = vunpack.c.h.b16 %v298
    %v1503 = vunpack.c.l.b16 %v299
    %v1504 = vunpack.c.h.b16 %v299
    %v1505 = vunpack.c.l.b16 %v300
    %v1506 = vunpack.c.h.b16 %v300
    %v1507 = vunpack.c.l.b16 %v301
    %v1508 = vunpack.c.h.b16 %v301
    %v1509 = vunpack.c.l.b16 %v302
    %v1510 = vunpack.c.h.b16 %v302
    %v1511 = vunpack.c.l.b16 %v303
    %v1512 = vunpack.c.h.b16 %v303
    %v1513 = vunpack.c.l.b16 %v304
    %v1514 = vunpack.c.h.b16 %v304
    %v1515 = vunpack.c.l.b16 %v305
    %v1516 = vunpack.c.h.b16 %v305
    %v1517 = vunpack.c.l.b16 %v306
    %v1518 = vunpack.c.h.b16 %v306
    %v1519 = vunpack.c.l.b16 %v307
    %v1520 = vunpack.c.h.b16 %v307
    %v1521 = vunpack.c.l.b16 %v308
    %v1522 = vunpack.c.h.b16 %v308
    %v1523 = vunpack.c.l.b16 %v309
    %v1524 = vunpack.c.h.b16 %v309
    %v1525 = vunpack.c.l.b16 %v310
    %v1526 = vunpack.c.h.b16 %v310
    %v1527 = vunpack.c.l.b16 %v311
    %v1528 = vunpack.c.h.b16 %v311
    %v1529 = vunpack.c.l.b16 %v312
    %v1530 = vunpack.c.h.b16 %v312
    %v1531 = vunpack.c.l.b16 %v313
    %v1532 = vunpack.c.h.b16 %v313
    %v1533 = vunpack.c.l.b16 %v314
    %v1534 = vunpack.c.h.b16 %v314
    %v1535 = vunpack.c.l.b16 %v315
    %v1536 = vunpack.c.h.b16 %v315
    %v1537 = vunpack.c.l.b16 %v316
    %v1538 = vunpack.c.h.b16 %v316
    %v1539 = vunpack.c.l.b16 %v317
    %v1540 = vunpack.c.h.b16 %v317
    %v1541 = vunpack.c.l.b16 %v318
    %v1542 = vunpack.c.h.b16 %v318
    %v1543 = vunpack.c.l.b16 %v319
    %v1544 = vunpack.c.h.b16 %v319
    %v1545 = vunpack.c.l.b16 %v320
    %v1546 = vunpack.c.h.b16 %v320
    %v1547 = vunpack.c.l.b16 %v321
    %v1548 = vunpack.c.h.b16 %v321
    %v1549 = vunpack.c.l.b16 %v322
    %v1550 = vunpack.c.h.b16 %v322
    %v1551 = vunpack.c.l.b16 %v323
    %v1552 = vunpack.c.h.b16 %v323
    %v1553 = vunpack.c.l.b16 %v324
    %v1554 = vunpack.c.h.b16 %v324
    %v1555 = vunpack.c.l.b16 %v325
    %v1556 = vunpack.c.h.b16 %v325
    %v1557 = vunpack.c.l.b16 %v326
    %v1558 = vunpack.c.h.b16 %v326
    %v1559 = vunpack.c.l.b16 %v327
    %v1560 = vunpack.c.h.b16 %v327
    %v1561 = vunpack.c.l.b16 %v328
    %v1562 = vunpack.c.h.b16 %v328
    %v1563 = vunpack.c.l.b16 %v329
    %v1564 = vunpack.c.h.b16 %v329
    %v1565 = vunpack.c.l.b16 %v330
    %v1566 = vunpack.c.h.b16 %v330
    %v1567 = vunpack.c.l.b16 %v331
    %v1568 = vunpack.c.h.b16 %v331
    %v1569 = vunpack.c.l.b16 %v332
    %v1570 = vunpack.c.h.b16 %v332
    %v1571 = vunpack.c.l.b16 %v333
    %v1572 = vunpack.c.h.b16 %v333
    %v1573 = vunpack.c.l.b16 %v334
    %v1574 = vunpack.c.h.b16 %v334
    %v1575 = vunpack.c.l.b16 %v335
    %v1576 = vunpack.c.h.b16 %v335
    %v1577 = vunpack.c.l.b16 %v336
    %v1578 = vunpack.c.h.b16 %v336
    %v1579 = vunpack.c.l.b16 %v337
    %v1580 = vunpack.c.h.b16 %v337
    %v1581 = vunpack.c.l.b16 %v338
    %v1582 = vunpack.c.h.b16 %v338
    %v1583 = vunpack.c.l.b16 %v339
    %v1584 = vunpack.c.h.b16 %v339
    %v1585 = vunpack.c.l.b16 %v340
    %v1586 = vunpack.c.h.b16 %v340
    %v1587 = vunpack.c.l.b16 %v341
    %v1588 = vunpack.c.h.b16 %v341
    %v1589 = vunpack.c.l.b16 %v342
    %v1590 = vunpack.c.h.b16 %v342
    %v1591 = vunpack.c.l.b16 %v343
    %v1592 = vunpack.c.h.b16 %v343
    %v1593 = vunpack.c.l.b16 %v344
    %v1594 = vunpack.c.h.b16 %v344
    %v1595 = vunpack.c.l.b16 %v345
    %v1596 = vunpack.c.h.b16 %v345
    %v1597 = vunpack.c.l.b16 %v346
    %v1598 = vunpack.c.h.b16 %v346
    %v1599 = vunpack.c.l.b16 %v347
    %v1600 = vunpack.c.h.b16 %v347
    %v1601 = vunpack.c.l.b16 %v348
    %v1602 = vunpack.c.h.b16 %v348
    %v1603 = vunpack.c.l.b16 %v349
    %v1604 = vunpack.c.h.b16 %v349
    %v1605 = vunpack.c.l.b16 %v350
    %v1606 = vunpack.c.h.b16 %v350
    %v1607 = vunpack.c.l.b16 %v351
    %v1608 = vunpack.c.h.b16 %v351
    %v1609 = vunpack.c.l.b16 %v352
    %v1610 = vunpack.c.h.b16 %v352
    %v1611 = vunpack.c.l.b16 %v353
    %v1612 = vunpack.c.h.b16 %v353
    %v1613 = vunpack.c.l.b16 %v354
    %v1614 = vunpack.c.h.b16 %v354
    %v1615 = vunpack.c.l.b16 %v355
    %v1616 = vunpack.c.h.b16 %v355
    %v1617 = vunpack.c.l.b16 %v356
    %v1618 = vunpack.c.h.b16 %v356
    %v1619 = vunpack.c.l.b16 %v357
    %v1620 = vunpack.c.h.b16 %v357
    %v1621 = vunpack.c.l.b16 %v358
    %v1622 = vunpack.c.h.b16 %v358
    %v1623 = vunpack.c.l.b16 %v359
    %v1624 = vunpack.c.h.b16 %v359
    %v1625 = vunpack.c.l.b16 %v360
    %v1626 = vunpack.c.h.b16 %v360
    %v1627 = vunpack.c.l.b16 %v361
    %v1628 = vunpack.c.h.b16 %v361
    %v1629 = vunpack.c.l.b16 %v362
    %v1630 = vunpack.c.h.b16 %v362
    %v1631 = vunpack.c.l.b16 %v363
    %v1632 = vunpack.c.h.b16 %v363
    %v1633 = vunpack.c.l.b16 %v364
    %v1634 = vunpack.c.h.b16 %v364
    %v1635 = vunpack.c.l.b16 %v365
    %v1636 = vunpack.c.h.b16 %v365
    %v1637 = vunpack.c.l.b16 %v366
    %v1638 = vunpack.c.h.b16 %v366
    %v1639 = vunpack.c.l.b16 %v367
    %v1640 = vunpack.c.h.b16 %v367
    %v1641 = vunpack.c.l.b16 %v368
    %v1642 = vunpack.c.h.b16 %v368
    %v1643 = vunpack.c.l.b16 %v369
    %v1644 = vunpack.c.h.b16 %v369
    %v1645 = vunpack.c.l.b16 %v370
    %v1646 = vunpack.c.h.b16 %v370
    %v1647 = vunpack.c.l.b16 %v371
    %v1648 = vunpack.c.h.b16 %v371
    %v1649 = vunpack.c.l.b16 %v372
    %v1650 = vunpack.c.h.b16 %v372
    %v1651 = vunpack.c.l.b16 %v373
    %v1652 = vunpack.c.h.b16 %v373
    %v1653 = vunpack.c.l.b16 %v374
    %v1654 = vunpack.c.h.b16 %v374
    %v1655 = vunpack.c.l.b16 %v375
    %v1656 = vunpack.c.h.b16 %v375
    %v1657 = vunpack.c.l.b16 %v376
    %v1658 = vunpack.c.h.b16 %v376
    %v1659 = vunpack.c.l.b16 %v377
    %v1660 = vunpack.c.h.b16 %v377
    %v1661 = vunpack.c.l.b16 %v378
    %v1662 = vunpack.c.h.b16 %v378
    %v1663 = vunpack.c.l.b16 %v379
    %v1664 = vunpack.c.h.b16 %v379
    %v1665 = vunpack.c.l.b16 %v380
    %v1666 = vunpack.c.h.b16 %v380
    %v1667 = vunpack.c.l.b16 %v381
    %v1668 = vunpack.c.h.b16 %v381
    %v1669 = vunpack.c.l.b16 %v382
    %v1670 = vunpack.c.h.b16 %v382
    %v1671 = vunpack.c.l.b16 %v383
    %v1672 = vunpack.c.h.b16 %v383
    %v1673 = vunpack.c.l.b16 %v384
    %v1674 = vunpack.c.h.b16 %v384
    %v1675 = vunpack.c.l.b16 %v385
    %v1676 = vunpack.c.h.b16 %v385
    %v1677 = vunpack.c.l.b16 %v386
    %v1678 = vunpack.c.h.b16 %v386
    %v1679 = vunpack.c.l.b16 %v387
    %v1680 = vunpack.c.h.b16 %v387
    %v1681 = vunpack.c.l.b16 %v388
    %v1682 = vunpack.c.h.b16 %v388
    %v1683 = vunpack.c.l.b16 %v389
    %v1684 = vunpack.c.h.b16 %v389
    %v1685 = vunpack.c.l.b16 %v390
    %v1686 = vunpack.c.h.b16 %v390
    %v1687 = vunpack.c.l.b16 %v391
    %v1688 = vunpack.c.h.b16 %v391
    %v1689 = vunpack.c.l.b16 %v392
    %v1690 = vunpack.c.h.b16 %v392
    %v1691 = vunpack.c.l.b16 %v393
    %v1692 = vunpack.c.h.b16 %v393
    %v1693 = vunpack.c.l.b16 %v394
    %v1694 = vunpack.c.h.b16 %v394
    %v1695 = vunpack.c.l.b16 %v395
    %v1696 = vunpack.c.h.b16 %v395
    %v1697 = vunpack.c.l.b16 %v396
    %v1698 = vunpack.c.h.b16 %v396
    %v1699 = vunpack.c.l.b16 %v397
    %v1700 = vunpack.c.h.b16 %v397
    %v1701 = vunpack.c.l.b16 %v398
    %v1702 = vunpack.c.h.b16 %v398
    %v1703 = vunpack.c.l.b16 %v399
    %v1704 = vunpack.c.h.b16 %v399
    %v1705 = vunpack.c.l.b16 %v400
    %v1706 = vunpack.c.h.b16 %v400
    %v1707 = vunpack.c.l.b16 %v401
    %v1708 = vunpack.c.h.b16 %v401
    %v1709 = vunpack.c.l.b16 %v402
    %v1710 = vunpack.c.h.b16 %v402
    %v1711 = vunpack.c.l.b16 %v403
    %v1712 = vunpack.c.h.b16 %v403
    %v1713 = vunpack.c.l.b16 %v404
    %v1714 = vunpack.c.h.b16 %v404
    %v1715 = vunpack.c.l.b16 %v405
    %v1716 = vunpack.c.h.b16 %v405
    %v1717 = vunpack.c.l.b16 %v406
    %v1718 = vunpack.c.h.b16 %v406
    %v1719 = vunpack.c.l.b16 %v407
    %v1720 = vunpack.c.h.b16 %v407
    %v1721 = vunpack.c.l.b16 %v408
    %v1722 = vunpack.c.h.b16 %v408
    %v1723 = vunpack.c.l.b16 %v409
    %v1724 = vunpack.c.h.b16 %v409
    %v1725 = vunpack.c.l.b16 %v410
    %v1726 = vunpack.c.h.b16 %v410
    %v1727 = vunpack.c.l.b16 %v411
    %v1728 = vunpack.c.h.b16 %v411
    %v1729 = vunpack.c.l.b16 %v412
    %v1730 = vunpack.c.h.b16 %v412
    %v1731 = vunpack.c.l.b16 %v413
    %v1732 = vunpack.c.h.b16 %v413
    %v1733 = vunpack.c.l.b16 %v414
    %v1734 = vunpack.c.h.b16 %v414
    %v1735 = vunpack.c.l.b16 %v415
    %v1736 = vunpack.c.h.b16 %v415
    %v1737 = vunpack.c.l.b16 %v416
    %v1738 = vunpack.c.h.b16 %v416
    %v1739 = vunpack.c.l.b16 %v417
    %v1740 = vunpack.c.h.b16 %v417
    %v1741 = vunpack.c.l.b16 %v418
    %v1742 = vunpack.c.h.b16 %v418
    %v1743 = vunpack.c.l.b16 %v419
    %v1744 = vunpack.c.h.b16 %v419
    %v1745 = vunpack.c.l.b16 %v420
    %v1746 = vunpack.c.h.b16 %v420
    %v1747 = vunpack.c.l.b16 %v421
    %v1748 = vunpack.c.h.b16 %v421
    %v1749 = vunpack.c.l.b16 %v422
    %v1750 = vunpack.c.h.b16 %v422
    %v1751 = vunpack.c.l.b16 %v423
    %v1752 = vunpack.c.h.b16 %v423
    %v1753 = vunpack.c.l.b16 %v424
    %v1754 = vunpack.c.h.b16 %v424
    %v1755 = vunpack.c.l.b16 %v425
    %v1756 = vunpack.c.h.b16 %v425
    %v1757 = vunpack.c.l.b16 %v426
    %v1758 = vunpack.c.h.b16 %v426
    %v1759 = vunpack.c.l.b16 %v427
    %v1760 = vunpack.c.h.b16 %v427
    %v1761 = vunpack.c.l.b16 %v428
    %v1762 = vunpack.c.h.b16 %v428
    %v1763 = vunpack.c.l.b16 %v429
    %v1764 = vunpack.c.h.b16 %v429
    %v1765 = vunpack.c.l.b16 %v430
    %v1766 = vunpack.c.h.b16 %v430
    %v1767 = vunpack.c.l.b16 %v431
    %v1768 = vunpack.c.h.b16 %v431
    %v1769 = vunpack.c.l.b16 %v432
    %v1770 = vunpack.c.h.b16 %v432
    %v1771 = vunpack.c.l.b16 %v433
    %v1772 = vunpack.c.h.b16 %v433
    %v1773 = vunpack.c.l.b16 %v434
    %v1774 = vunpack.c.h.b16 %v434
    %v1775 = vunpack.c.l.b16 %v435
    %v1776 = vunpack.c.h.b16 %v435
    %v1777 = vunpack.c.l.b16 %v436
    %v1778 = vunpack.c.h.b16 %v436
    %v1779 = vunpack.c.l.b16 %v437
    %v1780 = vunpack.c.h.b16 %v437
    %v1781 = vunpack.c.l.b16 %v438
    %v1782 = vunpack.c.h.b16 %v438
    %v1783 = vunpack.c.l.b16 %v439
    %v1784 = vunpack.c.h.b16 %v439
    %v1785 = vunpack.c.l.b16 %v440
    %v1786 = vunpack.c.h.b16 %v440
    %v1787 = vunpack.c.l.b16 %v441
    %v1788 = vunpack.c.h.b16 %v441
    %v1789 = vunpack.c.l.b16 %v442
    %v1790 = vunpack.c.h.b16 %v442
    %v1791 = vunpack.c.l.b16 %v443
    %v1792 = vunpack.c.h.b16 %v443
    %v1793 = vunpack.c.l.b16 %v444
    %v1794 = vunpack.c.h.b16 %v444
    %v1795 = vunpack.c.l.b16 %v445
    %v1796 = vunpack.c.h.b16 %v445
    %v1797 = vunpack.c.l.b16 %v446
    %v1798 = vunpack.c.h.b16 %v446
    %v1799 = vunpack.c.l.b16 %v447
    %v1800 = vunpack.c.h.b16 %v447
    %v1801 = vunpack.c.l.b16 %v448
    %v1802 = vunpack.c.h.b16 %v448
    %v1803 = vunpack.c.l.b16 %v449
    %v1804 = vunpack.c.h.b16 %v449
    %v1805 = vunpack.c.l.b16 %v450
    %v1806 = vunpack.c.h.b16 %v450
    %v1807 = vunpack.c.l.b16 %v451
    %v1808 = vunpack.c.h.b16 %v451
    %v1809 = vunpack.c.l.b16 %v452
    %v1810 = vunpack.c.h.b16 %v452
    %v1811 = vunpack.c.l.b16 %v453
    %v1812 = vunpack.c.h.b16 %v453
    %v1813 = vunpack.c.l.b16 %v454
    %v1814 = vunpack.c.h.b16 %v454
    %v1815 = vunpack.c.l.b16 %v455
    %v1816 = vunpack.c.h.b16 %v455
    %v1817 = vunpack.c.l.b16 %v456
    %v1818 = vunpack.c.h.b16 %v456
    %v1819 = vunpack.c.l.b16 %v457
    %v1820 = vunpack.c.h.b16 %v457
    %v1821 = vunpack.c.l.b16 %v458
    %v1822 = vunpack.c.h.b16 %v458
    %v1823 = vunpack.c.l.b16 %v459
    %v1824 = vunpack.c.h.b16 %v459
    %v1825 = vunpack.c.l.b16 %v460
    %v1826 = vunpack.c.h.b16 %v460
    %v1827 = vunpack.c.l.b16 %v461
    %v1828 = vunpack.c.h.b16 %v461
    %v1829 = vunpack.c.l.b16 %v462
    %v1830 = vunpack.c.h.b16 %v462
    %v1831 = vunpack.c.l.b16 %v463
    %v1832 = vunpack.c.h.b16 %v463
    %v1833 = vunpack.c.l.b16 %v464
    %v1834 = vunpack.c.h.b16 %v464
    %v1835 = vunpack.c.l.b16 %v465
    %v1836 = vunpack.c.h.b16 %v465
    %v1837 = vunpack.c.l.b16 %v466
    %v1838 = vunpack.c.h.b16 %v466
    %v1839 = vunpack.c.l.b16 %v467
    %v1840 = vunpack.c.h.b16 %v467
    %v1841 = vunpack.c.l.b16 %v468
    %v1842 = vunpack.c.h.b16 %v468
    %v1843 = vunpack.c.l.b16 %v469
    %v1844 = vunpack.c.h.b16 %v469
    %v1845 = vunpack.c.l.b16 %v470
    %v1846 = vunpack.c.h.b16 %v470
    %v1847 = vunpack.c.l.b16 %v471
    %v1848 = vunpack.c.h.b16 %v471
    %v1849 = vunpack.c.l.b16 %v472
    %v1850 = vunpack.c.h.b16 %v472
    %v1851 = vunpack.c.l.b16 %v473
    %v1852 = vunpack.c.h.b16 %v473
    %v1853 = vunpack.c.l.b16 %v474
    %v1854 = vunpack.c.h.b16 %v474
    %v1855 = vunpack.c.l.b16 %v475
    %v1856 = vunpack.c.h.b16 %v475
    %v1857 = vunpack.c.l.b16 %v476
    %v1858 = vunpack.c.h.b16 %v476
    %v1859 = vunpack.c.l.b16 %v477
    %v1860 = vunpack.c.h.b16 %v477
    %v1861 = vunpack.c.l.b16 %v478
    %v1862 = vunpack.c.h.b16 %v478
    %v1863 = vunpack.c.l.b16 %v479
    %v1864 = vunpack.c.h.b16 %v479
    %v1865 = vunpack.c.l.b16 %v480
    %v1866 = vunpack.c.h.b16 %v480
    %v1867 = vunpack.c.l.b16 %v481
    %v1868 = vunpack.c.h.b16 %v481
    %v1869 = vunpack.c.l.b16 %v482
    %v1870 = vunpack.c.h.b16 %v482
    %v1871 = vunpack.c.l.b16 %v483
    %v1872 = vunpack.c.h.b16 %v483
    %v1873 = vunpack.c.l.b16 %v484
    %v1874 = vunpack.c.h.b16 %v484
    %v1875 = vunpack.c.l.b16 %v485
    %v1876 = vunpack.c.h.b16 %v485
    %v1877 = vunpack.c.l.b16 %v486
    %v1878 = vunpack.c.h.b16 %v486
    %v1879 = vunpack.c.l.b16 %v487
    %v1880 = vunpack.c.h.b16 %v487
    %v1881 = vunpack.c.l.b16 %v488
    %v1882 = vunpack.c.h.b16 %v488
    %v1883 = vunpack.c.l.b16 %v489
    %v1884 = vunpack.c.h.b16 %v489
    %v1885 = vunpack.c.l.b16 %v490
    %v1886 = vunpack.c.h.b16 %v490
    %v1887 = vunpack.c.l.b16 %v491
    %v1888 = vunpack.c.h.b16 %v491
    %v1889 = vunpack.c.l.b16 %v492
    %v1890 = vunpack.c.h.b16 %v492
    %v1891 = vunpack.c.l.b16 %v493
    %v1892 = vunpack.c.h.b16 %v493
    %v1893 = vunpack.c.l.b16 %v494
    %v1894 = vunpack.c.h.b16 %v494
    %v1895 = vunpack.c.l.b16 %v495
    %v1896 = vunpack.c.h.b16 %v495
    %v1897 = vunpack.c.l.b16 %v496
    %v1898 = vunpack.c.h.b16 %v496
    %v1899 = vunpack.c.l.b16 %v497
    %v1900 = vunpack.c.h.b16 %v497
    %v1901 = vunpack.c.l.b16 %v498
    %v1902 = vunpack.c.h.b16 %v498
    %v1903 = vunpack.c.l.b16 %v499
    %v1904 = vunpack.c.h.b16 %v499
    %v1905 = vunpack.c.l.b16 %v500
    %v1906 = vunpack.c.h.b16 %v500
    %v1907 = vunpack.c.l.b16 %v501
    %v1908 = vunpack.c.h.b16 %v501
    %v1909 = vunpack.c.l.b16 %v502
    %v1910 = vunpack.c.h.b16 %v502
    %v1911 = vunpack.c.l.b16 %v503
    %v1912 = vunpack.c.h.b16 %v503
    %v1913 = vunpack.c.l.b16 %v504
    %v1914 = vunpack.c.h.b16 %v504
    %v1915 = vunpack.c.l.b16 %v505
    %v1916 = vunpack.c.h.b16 %v505
    %v1917 = vunpack.c.l.b16 %v506
    %v1918 = vunpack.c.h.b16 %v506
    %v1919 = vunpack.c.l.b16 %v507
    %v1920 = vunpack.c.h.b16 %v507
    %v1921 = vunpack.c.l.b16 %v508
    %v1922 = vunpack.c.h.b16 %v508
    %v1923 = vunpack.c.l.b16 %v509
    %v1924 = vunpack.c.h.b16 %v509
    %v1925 = vunpack.c.l.b16 %v510
    %v1926 = vunpack.c.h.b16 %v510
    %v1927 = vunpack.c.l.b16 %v511
    %v1928 = vunpack.c.h.b16 %v511
    %v1929 = vunpack.c.l.b16 %v512
    %v1930 = vunpack.c.h.b16 %v512
    %v1931 = vunpack.c.l.b16 %v513
    %v1932 = vunpack.c.h.b16 %v513
    %v1933 = vunpack.c.l.b16 %v514
    %v1934 = vunpack.c.h.b16 %v514
    %v1935 = vunpack.c.l.b16 %v515
    %v1936 = vunpack.c.h.b16 %v515
    %v1937 = vunpack.c.l.b16 %v516
    %v1938 = vunpack.c.h.b16 %v516
    %v1939 = vunpack.c.l.b16 %v517
    %v1940 = vunpack.c.h.b16 %v517
    %v1941 = vunpack.c.l.b16 %v518
    %v1942 = vunpack.c.h.b16 %v518
    %v1943 = vunpack.c.l.b16 %v519
    %v1944 = vunpack.c.h.b16 %v519
    %v1945 = vunpack.c.l.b16 %v520
    %v1946 = vunpack.c.h.b16 %v520
    %v1947 = vunpack.c.l.b16 %v521
    %v1948 = vunpack.c.h.b16 %v521
    %v1949 = vunpack.c.l.b16 %v522
    %v1950 = vunpack.c.h.b16 %v522
    %v1951 = vunpack.c.l.b16 %v523
    %v1952 = vunpack.c.h.b16 %v523
    %v1953 = vunpack.c.l.b16 %v524
    %v1954 = vunpack.c.h.b16 %v524
    %v1955 = vunpack.c.l.b16 %v525
    %v1956 = vunpack.c.h.b16 %v525
    %v1957 = vunpack.c.l.b16 %v526
    %v1958 = vunpack.c.h.b16 %v526
    %v1959 = vunpack.c.l.b16 %v527
    %v1960 = vunpack.c.h.b16 %v527
    %v1961 = vunpack.c.l.b16 %v528
    %v1962 = vunpack.c.h.b16 %v528
    %v1963 = vunpack.c.l.b16 %v529
    %v1964 = vunpack.c.h.b16 %v529
    %v1965 = vunpack.c.l.b16 %v530
    %v1966 = vunpack.c.h.b16 %v530
    %v1967 = vunpack.c.l.b16 %v531
    %v1968 = vunpack.c.h.b16 %v531
    %v1969 = vunpack.c.l.b16 %v532
    %v1970 = vunpack.c.h.b16 %v532
    %v1971 = vunpack.c.l.b16 %v533
    %v1972 = vunpack.c.h.b16 %v533
    %v1973 = vunpack.c.l.b16 %v534
    %v1974 = vunpack.c.h.b16 %v534
    %v1975 = vunpack.c.l.b16 %v535
    %v1976 = vunpack.c.h.b16 %v535
    %v1977 = vunpack.c.l.b16 %v536
    %v1978 = vunpack.c.h.b16 %v536
    %v1979 = vunpack.c.l.b16 %v537
    %v1980 = vunpack.c.h.b16 %v537
    %v1981 = vunpack.c.l.b16 %v538
    %v1982 = vunpack.c.h.b16 %v538
    %v1983 = vunpack.c.l.b16 %v539
    %v1984 = vunpack.c.h.b16 %v539
    %v1985 = vunpack.c.l.b16 %v540
    %v1986 = vunpack.c.h.b16 %v540
    %v1987 = vunpack.c.l.b16 %v541
    %v1988 = vunpack.c.h.b16 %v541
    %v1989 = vunpack.c.l.b16 %v542
    %v1990 = vunpack.c.h.b16 %v542
    %v1991 = vunpack.c.l.b16 %v543
    %v1992 = vunpack.c.h.b16 %v543
    %v1993 = vunpack.c.l.b16 %v544
    %v1994 = vunpack.c.h.b16 %v544
    %v1995 = vunpack.c.l.b16 %v545
    %v1996 = vunpack.c.h.b16 %v545
    %v1997 = vunpack.c.l.b16 %v546
    %v1998 = vunpack.c.h.b16 %v546
    %v1999 = vunpack.c.l.b16 %v547
    %v2000 = vunpack.c.h.b16 %v547
    %v2001 = vunpack.c.l.b16 %v548
    %v2002 = vunpack.c.h.b16 %v548
    %v2003 = vunpack.c.l.b16 %v549
    %v2004 = vunpack.c.h.b16 %v549
    %v2005 = vunpack.c.l.b16 %v550
    %v2006 = vunpack.c.h.b16 %v550
    %v2007 = vunpack.c.l.b16 %v551
    %v2008 = vunpack.c.h.b16 %v551
    %v2009 = vunpack.c.l.b16 %v552
    %v2010 = vunpack.c.h.b16 %v552
    %v2011 = vunpack.c.l.b16 %v553
    %v2012 = vunpack.c.h.b16 %v553
    %v2013 = vunpack.c.l.b16 %v554
    %v2014 = vunpack.c.h.b16 %v554
    %v2015 = vunpack.c.l.b16 %v555
    %v2016 = vunpack.c.h.b16 %v555
    %v2017 = vunpack.c.l.b16 %v556
    %v2018 = vunpack.c.h.b16 %v556
    %v2019 = vunpack.c.l.b16 %v557
    %v2020 = vunpack.c.h.b16 %v557
    %v2021 = vunpack.c.l.b16 %v558
    %v2022 = vunpack.c.h.b16 %v558
    %v2023 = vunpack.c.l.b16 %v559
    %v2024 = vunpack.c.h.b16 %v559
    %v2025 = vunpack.c.l.b16 %v560
    %v2026 = vunpack.c.h.b16 %v560
    %v2027 = vunpack.c.l.b16 %v561
    %v2028 = vunpack.c.h.b16 %v561
    %v2029 = vunpack.c.l.b16 %v562
    %v2030 = vunpack.c.h.b16 %v562
    %v2031 = vunpack.c.l.b16 %v563
    %v2032 = vunpack.c.h.b16 %v563
    %v2033 = vunpack.c.l.b16 %v564
    %v2034 = vunpack.c.h.b16 %v564
    %v2035 = vunpack.c.l.b16 %v565
    %v2036 = vunpack.c.h.b16 %v565
    %v2037 = vunpack.c.l.b16 %v566
    %v2038 = vunpack.c.h.b16 %v566
    %v2039 = vunpack.c.l.b16 %v567
    %v2040 = vunpack.c.h.b16 %v567
    %v2041 = vunpack.c.l.b16 %v568
    %v2042 = vunpack.c.h.b16 %v568
    %v2043 = vunpack.c.l.b16 %v569
    %v2044 = vunpack.c.h.b16 %v569
    %v2045 = vunpack.c.l.b16 %v570
    %v2046 = vunpack.c.h.b16 %v570
    %v2047 = vunpack.c.l.b16 %v571
    %v2048 = vunpack.c.h.b16 %v571
    %v2049 = vunpack.c.l.b16 %v572
    %v2050 = vunpack.c.h.b16 %v572
    %v2051 = vunpack.c.l.b16 %v573
    %v2052 = vunpack.c.h.b16 %v573
    %v2053 = vunpack.c.l.b16 %v574
    %v2054 = vunpack.c.h.b16 %v574
    %v2055 = vunpack.c.l.b16 %v575
    %v2056 = vunpack.c.h.b16 %v575
    %v2057 = vunpack.c.l.b16 %v576
    %v2058 = vunpack.c.h.b16 %v576
    %v2059 = vunpack.c.l.b16 %v577
    %v2060 = vunpack.c.h.b16 %v577
    %v2061 = vunpack.c.l.b16 %v578
    %v2062 = vunpack.c.h.b16 %v578
    %v2063 = vunpack.c.l.b16 %v579
    %v2064 = vunpack.c.h.b16 %v579
    %v2065 = vunpack.c.l.b16 %v580
    %v2066 = vunpack.c.h.b16 %v580
    %v2067 = vunpack.c.l.b16 %v581
    %v2068 = vunpack.c.h.b16 %v581
    %v2069 = vunpack.c.l.b16 %v582
    %v2070 = vunpack.c.h.b16 %v582
    %v2071 = vunpack.c.l.b16 %v583
    %v2072 = vunpack.c.h.b16 %v583
    %v2073 = vunpack.c.l.b16 %v584
    %v2074 = vunpack.c.h.b16 %v584
    %v2075 = vunpack.c.l.b16 %v585
    %v2076 = vunpack.c.h.b16 %v585
    %v2077 = vunpack.c.l.b16 %v586
    %v2078 = vunpack.c.h.b16 %v586
    %v2079 = vunpack.c.l.b16 %v587
    %v2080 = vunpack.c.h.b16 %v587
    %v2081 = vunpack.c.l.b16 %v588
    %v2082 = vunpack.c.h.b16 %v588
    %v2083 = vunpack.c.l.b16 %v589
    %v2084 = vunpack.c.h.b16 %v589
    %v2085 = vunpack.c.l.b16 %v590
    %v2086 = vunpack.c.h.b16 %v590
    %v2087 = vunpack.c.l.b16 %v591
    %v2088 = vunpack.c.h.b16 %v591
    %v2089 = vunpack.c.l.b16 %v592
    %v2090 = vunpack.c.h.b16 %v592
    %v2091 = vunpack.c.l.b16 %v593
    %v2092 = vunpack.c.h.b16 %v593
    %v2093 = vunpack.c.l.b16 %v594
    %v2094 = vunpack.c.h.b16 %v594
    %v2095 = vunpack.c.l.b16 %v595
    %v2096 = vunpack.c.h.b16 %v595
    %v2097 = vunpack.c.l.b16 %v596
    %v2098 = vunpack.c.h.b16 %v596
    %v2099 = vunpack.c.l.b16 %v597
    %v2100 = vunpack.c.h.b16 %v597
    %v2101 = vunpack.c.l.b16 %v598
    %v2102 = vunpack.c.h.b16 %v598
    %v2103 = vunpack.c.l.b16 %v599
    %v2104 = vunpack.c.h.b16 %v599
    %v2105 = vunpack.c.l.b16 %v600
    %v2106 = vunpack.c.h.b16 %v600
    %v2107 = vunpack.c.l.b16 %v601
    %v2108 = vunpack.c.h.b16 %v601
    %v2109 = vunpack.c.l.b16 %v602
    %v2110 = vunpack.c.h.b16 %v602
    %v2111 = vunpack.c.l.b16 %v603
    %v2112 = vunpack.c.h.b16 %v603
    %v2113 = vunpack.c.l.b16 %v604
    %v2114 = vunpack.c.h.b16 %v604
    %v2115 = vunpack.c.l.b16 %v605
    %v2116 = vunpack.c.h.b16 %v605
    %v2117 = vunpack.c.l.b16 %v606
    %v2118 = vunpack.c.h.b16 %v606
    %v2119 = vunpack.c.l.b16 %v607
    %v2120 = vunpack.c.h.b16 %v607
    %v2121 = vunpack.c.l.b16 %v608
    %v2122 = vunpack.c.h.b16 %v608
    %v2123 = vunpack.c.l.b16 %v609
    %v2124 = vunpack.c.h.b16 %v609
    %v2125 = vunpack.c.l.b16 %v610
    %v2126 = vunpack.c.h.b16 %v610
    %v2127 = vunpack.c.l.b16 %v611
    %v2128 = vunpack.c.h.b16 %v611
    %v2129 = vunpack.c.l.b16 %v612
    %v2130 = vunpack.c.h.b16 %v612
    %v2131 = vunpack.c.l.b16 %v613
    %v2132 = vunpack.c.h.b16 %v613
    %v2133 = vunpack.c.l.b16 %v614
    %v2134 = vunpack.c.h.b16 %v614
    %v2135 = vunpack.c.l.b16 %v615
    %v2136 = vunpack.c.h.b16 %v615
    %v2137 = vunpack.c.l.b16 %v616
    %v2138 = vunpack.c.h.b16 %v616
    %v2139 = vunpack.c.l.b16 %v617
    %v2140 = vunpack.c.h.b16 %v617
    %v2141 = vunpack.c.l.b16 %v618
    %v2142 = vunpack.c.h.b16 %v618
    %v2143 = vpack.c.b16 %v1173, %v1163
    %v2144 = vpack.c.b16 %v1174, %v1164
    %v2145 = vpack.c.b16 %v1175, %v1165
    %v2146 = vpack.c.b16 %v1176, %v1166
    %v2147 = vpack.c.b16 %v1177, %v1167
    %v2148 = vpack.c.b16 %v1178, %v1168
    %v2149 = vpack.c.b16 %v1179, %v1169
    %v2150 = vpack.c.b16 %v1180, %v1170
    %v2151 = vpack.c.b16 %v1181, %v1171
    %v2152 = vpack.c.b16 %v1182, %v1172
    %v2153 = vpack.c.b16 %v1193, %v1183
    %v2154 = vpack.c.b16 %v1194, %v1184
    %v2155 = vpack.c.b16 %v1195, %v1185
    %v2156 = vpack.c.b16 %v1196, %v1186
    %v2157 = vpack.c.b16 %v1197, %v1187
    %v2158 = vpack.c.b16 %v1198, %v1188
    %v2159 = vpack.c.b16 %v1199, %v1189
    %v2160 = vpack.c.b16 %v1200, %v1190
    %v2161 = vpack.c.b16 %v1201, %v1191
    %v2162 = vpack.c.b16 %v1202, %v1192
    %v2163 = vpack.c.b16 %v1213, %v1203
    %v2164 = vpack.c.b16 %v1214, %v1204
    %v2165 = vpack.c.b16 %v1215, %v1205
    %v2166 = vpack.c.b16 %v1216, %v1206
    %v2167 = vpack.c.b16 %v1217, %v1207
    %v2168 = vpack.c.b16 %v1218, %v1208
    %v2169 = vpack.c.b16 %v1219, %v1209
    %v2170 = vpack.c.b16 %v1220, %v1210
    %v2171 = vpack.c.b16 %v1221, %v1211
    %v2172 = vpack.c.b16 %v1222, %v1212
    %v2173 = vpack.c.b16 %v1233, %v1223
    %v2174 = vpack.c.b16 %v1234, %v1224
    %v2175 = vpack.c.b16 %v1235, %v1225
    %v2176 = vpack.c.b16 %v1236, %v1226
    %v2177 = vpack.c.b16 %v1237, %v1227
    %v2178 = vpack.c.b16 %v1238, %v1228
    %v2179 = vpack.c.b16 %v1239, %v1229
    %v2180 = vpack.c.b16 %v1240, %v1230
    %v2181 = vpack.c.b16 %v1241, %v1231
    %v2182 = vpack.c.b16 %v1242, %v1232
    %v2183 = vpack.c.b16 %v1253, %v1243
    %v2184 = vpack.c.b16 %v1254, %v1244
    %v2185 = vpack.c.b16 %v1255, %v1245
    %v2186 = vpack.c.b16 %v1256, %v1246
    %v2187 = vpack.c.b16 %v1257, %v1247
    %v2188 = vpack.c.b16 %v1258, %v1248
    %v2189 = vpack.c.b16 %v1259, %v1249
    %v2190 = vpack.c.b16 %v1260, %v1250
    %v2191 = vpack.c.b16 %v1261, %v1251
    %v2192 = vpack.c.b16 %v1262, %v1252
    %v2193 = vpack.c.b16 %v1273, %v1263
    %v2194 = vpack.c.b16 %v1274, %v1264
    %v2195 = vpack.c.b16 %v1275, %v1265
    %v2196 = vpack.c.b16 %v1276, %v1266
    %v2197 = vpack.c.b16 %v1277, %v1267
    %v2198 = vpack.c.b16 %v1278, %v1268
    %v2199 = vpack.c.b16 %v1279, %v1269
    %v2200 = vpack.c.b16 %v1280, %v1270
    %v2201 = vpack.c.b16 %v1281, %v1271
    %v2202 = vpack.c.b16 %v1282, %v1272
    %v2203 = vpack.c.b16 %v1293, %v1283
    %v2204 = vpack.c.b16 %v1294, %v1284
    %v2205 = vpack.c.b16 %v1295, %v1285
    %v2206 = vpack.c.b16 %v1296, %v1286
    %v2207 = vpack.c.b16 %v1297, %v1287
    %v2208 = vpack.c.b16 %v1298, %v1288
    %v2209 = vpack.c.b16 %v1299, %v1289
    %v2210 = vpack.c.b16 %v1300, %v1290
    %v2211 = vpack.c.b16 %v1301, %v1291
    %v2212 = vpack.c.b16 %v1302, %v1292
    %v2213 = vpack.c.b16 %v1313, %v1303
    %v2214 = vpack.c.b16 %v1314, %v1304
    %v2215 = vpack.c.b16 %v1315, %v1305
    %v2216 = vpack.c.b16 %v1316, %v1306
    %v2217 = vpack.c.b16 %v1317, %v1307
    %v2218 = vpack.c.b16 %v1318, %v1308
    %v2219 = vpack.c.b16 %v1319, %v1309
    %v2220 = vpack.c.b16 %v1320, %v1310
    %v2221 = vpack.c.b16 %v1321, %v1311
    %v2222 = vpack.c.b16 %v1322, %v1312
    %v2223 = vpack.c.b16 %v1333, %v1323
    %v2224 = vpack.c.b16 %v1334, %v1324
    %v2225 = vpack.c.b16 %v1335, %v1325
    %v2226 = vpack.c.b16 %v1336, %v1326
    %v2227 = vpack.c.b16 %v1337, %v1327
    %v2228 = vpack.c.b16 %v1338, %v1328
    %v2229 = vpack.c.b16 %v1339, %v1329
    %v2230 = vpack.c.b16 %v1340, %v1330
    %v2231 = vpack.c.b16 %v1341, %v1331
    %v2232 = vpack.c.b16 %v1342, %v1332
    %v2233 = vpack.c.b16 %v1353, %v1343
    %v2234 = vpack.c.b16 %v1354, %v1344
    %v2235 = vpack.c.b16 %v1355, %v1345
    %v2236 = vpack.c.b16 %v1356, %v1346
    %v2237 = vpack.c.b16 %v1357, %v1347
    %v2238 = vpack.c.b16 %v1358, %v1348
    %v2239 = vpack.c.b16 %v1359, %v1349
    %v2240 = vpack.c.b16 %v1360, %v1350
    %v2241 = vpack.c.b16 %v1361, %v1351
    %v2242 = vpack.c.b16 %v1362, %v1352
    %v2243 = vpack.c.b16 %v1373, %v1363
    %v2244 = vpack.c.b16 %v1374, %v1364
    %v2245 = vpack.c.b16 %v1375, %v1365
    %v2246 = vpack.c.b16 %v1376, %v1366
    %v2247 = vpack.c.b16 %v1377, %v1367
    %v2248 = vpack.c.b16 %v1378, %v1368
    %v2249 = vpack.c.b16 %v1379, %v1369
    %v2250 = vpack.c.b16 %v1380, %v1370
    %v2251 = vpack.c.b16 %v1381, %v1371
    %v2252 = vpack.c.b16 %v1382, %v1372
    %v2253 = vpack.c.b16 %v1393, %v1383
    %v2254 = vpack.c.b16 %v1394, %v1384
    %v2255 = vpack.c.b16 %v1395, %v1385
    %v2256 = vpack.c.b16 %v1396, %v1386
    %v2257 = vpack.c.b16 %v1397, %v1387
    %v2258 = vpack.c.b16 %v1398, %v1388
    %v2259 = vpack.c.b16 %v1399, %v1389
    %v2260 = vpack.c.b16 %v1400, %v1390
    %v2261 = vpack.c.b16 %v1401, %v1391
    %v2262 = vpack.c.b16 %v1402, %v1392
    %v2263 = vpack.c.b16 %v1413, %v1403
    %v2264 = vpack.c.b16 %v1414, %v1404
    %v2265 = vpack.c.b16 %v1415, %v1405
    %v2266 = vpack.c.b16 %v1416, %v1406
    %v2267 = vpack.c.b16 %v1417, %v1407
    %v2268 = vpack.c.b16 %v1418, %v1408
    %v2269 = vpack.c.b16 %v1419, %v1409
    %v2270 = vpack.c.b16 %v1420, %v1410
    %v2271 = vpack.c.b16 %v1421, %v1411
    %v2272 = vpack.c.b16 %v1422, %v1412
    %v2273 = vpack.c.b16 %v1433, %v1423
    %v2274 = vpack.c.b16 %v1434, %v1424
    %v2275 = vpack.c.b16 %v1435, %v1425
    %v2276 = vpack.c.b16 %v1436, %v1426
    %v2277 = vpack.c.b16 %v1437, %v1427
    %v2278 = vpack.c.b16 %v1438, %v1428
    %v2279 = vpack.c.b16 %v1439, %v1429
    %v2280 = vpack.c.b16 %v1440, %v1430
    %v2281 = vpack.c.b16 %v1441, %v1431
    %v2282 = vpack.c.b16 %v1442, %v1432
    %v2283 = vpack.c.b16 %v1453, %v1443
    %v2284 = vpack.c.b16 %v1454, %v1444
    %v2285 = vpack.c.b16 %v1455, %v1445
    %v2286 = vpack.c.b16 %v1456, %v1446
    %v2287 = vpack.c.b16 %v1457, %v1447
    %v2288 = vpack.c.b16 %v1458, %v1448
    %v2289 = vpack.c.b16 %v1459, %v1449
    %v2290 = vpack.c.b16 %v1460, %v1450
    %v2291 = vpack.c.b16 %v1461, %v1451
    %v2292 = vpack.c.b16 %v1462, %v1452
    %v2293 = vpack.c.b16 %v1473, %v1463
    %v2294 = vpack.c.b16 %v1474, %v1464
    %v2295 = vpack.c.b16 %v1475, %v1465
    %v2296 = vpack.c.b16 %v1476, %v1466
    %v2297 = vpack.c.b16 %v1477, %v1467
    %v2298 = vpack.c.b16 %v1478, %v1468
    %v2299 = vpack.c.b16 %v1479, %v1469
    %v2300 = vpack.c.b16 %v1480, %v1470
    %v2301 = vpack.c.b16 %v1481, %v1471
    %v2302 = vpack.c.b16 %v1482, %v1472
    %v2303 = vpack.c.b16 %v1493, %v1483
    %v2304 = vpack.c.b16 %v1494, %v1484
    %v2305 = vpack.c.b16 %v1495, %v1485
    %v2306 = vpack.c.b16 %v1496, %v1486
    %v2307 = vpack.c.b16 %v1497, %v1487
    %v2308 = vpack.c.b16 %v1498, %v1488
    %v2309 = vpack.c.b16 %v1499, %v1489
    %v2310 = vpack.c.b16 %v1500, %v1490
    %v2311 = vpack.c.b16 %v1501, %v1491
    %v2312 = vpack.c.b16 %v1502, %v1492
    %v2313 = vpack.c.b16 %v1513, %v1503
    %v2314 = vpack.c.b16 %v1514, %v1504
    %v2315 = vpack.c.b16 %v1515, %v1505
    %v2316 = vpack.c.b16 %v1516, %v1506
    %v2317 = vpack.c.b16 %v1517, %v1507
    %v2318 = vpack.c.b16 %v1518, %v1508
    %v2319 = vpack.c.b16 %v1519, %v1509
    %v2320 = vpack.c.b16 %v1520, %v1510
    %v2321 = vpack.c.b16 %v1521, %v1511
    %v2322 = vpack.c.b16 %v1522, %v1512
    %v2323 = vpack.c.b16 %v1533, %v1523
    %v2324 = vpack.c.b16 %v1534, %v1524
    %v2325 = vpack.c.b16 %v1535, %v1525
    %v2326 = vpack.c.b16 %v1536, %v1526
    %v2327 = vpack.c.b16 %v1537, %v1527
    %v2328 = vpack.c.b16 %v1538, %v1528
    %v2329 = vpack.c.b16 %v1539, %v1529
    %v2330 = vpack.c.b16 %v1540, %v1530
    %v2331 = vpack.c.b16 %v1541, %v1531
    %v2332 = vpack.c.b16 %v1542, %v1532
    %v2333 = vpack.c.b16 %v1553, %v1543
    %v2334 = vpack.c.b16 %v1554, %v1544
    %v2335 = vpack.c.b16 %v1555, %v1545
    %v2336 = vpack.c.b16 %v1556, %v1546
    %v2337 = vpack.c.b16 %v1557, %v1547
    %v2338 = vpack.c.b16 %v1558, %v1548
    %v2339 = vpack.c.b16 %v1559, %v1549
    %v2340 = vpack.c.b16 %v1560, %v1550
    %v2341 = vpack.c.b16 %v1561, %v1551
    %v2342 = vpack.c.b16 %v1562, %v1552
    %v2343 = vpack.c.b16 %v1573, %v1563
    %v2344 = vpack.c.b16 %v1574, %v1564
    %v2345 = vpack.c.b16 %v1575, %v1565
    %v2346 = vpack.c.b16 %v1576, %v1566
    %v2347 = vpack.c.b16 %v1577, %v1567
    %v2348 = vpack.c.b16 %v1578, %v1568
    %v2349 = vpack.c.b16 %v1579, %v1569
    %v2350 = vpack.c.b16 %v1580, %v1570
    %v2351 = vpack.c.b16 %v1581, %v1571
    %v2352 = vpack.c.b16 %v1582, %v1572
    %v2353 = vpack.c.b16 %v1593, %v1583
    %v2354 = vpack.c.b16 %v1594, %v1584
    %v2355 = vpack.c.b16 %v1595, %v1585
    %v2356 = vpack.c.b16 %v1596, %v1586
    %v2357 = vpack.c.b16 %v1597, %v1587
    %v2358 = vpack.c.b16 %v1598, %v1588
    %v2359 = vpack.c.b16 %v1599, %v1589
    %v2360 = vpack.c.b16 %v1600, %v1590
    %v2361 = vpack.c.b16 %v1601, %v1591
    %v2362 = vpack.c.b16 %v1602, %v1592
    %v2363 = vpack.c.b16 %v1613, %v1603
    %v2364 = vpack.c.b16 %v1614, %v1604
    %v2365 = vpack.c.b16 %v1615, %v1605
    %v2366 = vpack.c.b16 %v1616, %v1606
    %v2367 = vpack.c.b16 %v1617, %v1607
    %v2368 = vpack.c.b16 %v1618, %v1608
    %v2369 = vpack.c.b16 %v1619, %v1609
    %v2370 = vpack.c.b16 %v1620, %v1610
    %v2371 = vpack.c.b16 %v1621, %v1611
    %v2372 = vpack.c.b16 %v1622, %v1612
    %v2373 = vpack.c.b16 %v1633, %v1623
    %v2374 = vpack.c.b16 %v1634, %v1624
    %v2375 = vpack.c.b16 %v1635, %v1625
    %v2376 = vpack.c.b16 %v1636, %v1626
    %v2377 = vpack.c.b16 %v1637, %v1627
    %v2378 = vpack.c.b16 %v1638, %v1628
    %v2379 = vpack.c.b16 %v1639, %v1629
    %v2380 = vpack.c.b16 %v1640, %v1630
    %v2381 = vpack.c.b16 %v1641, %v1631
    %v2382 = vpack.c.b16 %v1642, %v1632
    %v2383 = vpack.c.b16 %v1653, %v1643
    %v2384 = vpack.c.b16 %v1654, %v1644
    %v2385 = vpack.c.b16 %v1655, %v1645
    %v2386 = vpack.c.b16 %v1656, %v1646
    %v2387 = vpack.c.b16 %v1657, %v1647
    %v2388 = vpack.c.b16 %v1658, %v1648
    %v2389 = vpack.c.b16 %v1659, %v1649
    %v2390 = vpack.c.b16 %v1660, %v1650
    %v2391 = vpack.c.b16 %v1661, %v1651
    %v2392 = vpack.c.b16 %v1662, %v1652
    %v2393 = vpack.c.b16 %v1673, %v1663
    %v2394 = vpack.c.b16 %v1674, %v1664
    %v2395 = vpack.c.b16 %v1675, %v1665
    %v2396 = vpack.c.b16 %v1676, %v1666
    %v2397 = vpack.c.b16 %v1677, %v1667
    %v2398 = vpack.c.b16 %v1678, %v1668
    %v2399 = vpack.c.b16 %v1679, %v1669
    %v2400 = vpack.c.b16 %v1680, %v1670
    %v2401 = vpack.c.b16 %v1681, %v1671
    %v2402 = vpack.c.b16 %v1682, %v1672
    %v2403 = vpack.c.b16 %v1693, %v1683
    %v2404 = vpack.c.b16 %v1694, %v1684
    %v2405 = vpack.c.b16 %v1695, %v1685
    %v2406 = vpack.c.b16 %v1696, %v1686
    %v2407 = vpack.c.b16 %v1697, %v1687
    %v2408 = vpack.c.b16 %v1698, %v1688
    %v2409 = vpack.c.b16 %v1699, %v1689
    %v2410 = vpack.c.b16 %v1700, %v1690
    %v2411 = vpack.c.b16 %v1701, %v1691
    %v2412 = vpack.c.b16 %v1702, %v1692
    %v2413 = vpack.c.b16 %v1713, %v1703
    %v2414 = vpack.c.b16 %v1714, %v1704
    %v2415 = vpack.c.b16 %v1715, %v1705
    %v2416 = vpack.c.b16 %v1716, %v1706
    %v2417 = vpack.c.b16 %v1717, %v1707
    %v2418 = vpack.c.b16 %v1718, %v1708
    %v2419 = vpack.c.b16 %v1719, %v1709
    %v2420 = vpack.c.b16 %v1720, %v1710
    %v2421 = vpack.c.b16 %v1721, %v1711
    %v2422 = vpack.c.b16 %v1722, %v1712
    %v2423 = vpack.c.b16 %v1733, %v1723
    %v2424 = vpack.c.b16 %v1734, %v1724
    %v2425 = vpack.c.b16 %v1735, %v1725
    %v2426 = vpack.c.b16 %v1736, %v1726
    %v2427 = vpack.c.b16 %v1737, %v1727
    %v2428 = vpack.c.b16 %v1738, %v1728
    %v2429 = vpack.c.b16 %v1739, %v1729
    %v2430 = vpack.c.b16 %v1740, %v1730
    %v2431 = vpack.c.b16 %v1741, %v1731
    %v2432 = vpack.c.b16 %v1742, %v1732
    %v2433 = vpack.c.b16 %v1753, %v1743
    %v2434 = vpack.c.b16 %v1754, %v1744
    %v2435 = vpack.c.b16 %v1755, %v1745
    %v2436 = vpack.c.b16 %v1756, %v1746
    %v2437 = vpack.c.b16 %v1757, %v1747
    %v2438 = vpack.c.b16 %v1758, %v1748
    %v2439 = vpack.c.b16 %v1759, %v1749
    %v2440 = vpack.c.b16 %v1760, %v1750
    %v2441 = vpack.c.b16 %v1761, %v1751
    %v2442 = vpack.c.b16 %v1762, %v1752
    %v2443 = vpack.c.b16 %v1773, %v1763
    %v2444 = vpack.c.b16 %v1774, %v1764
    %v2445 = vpack.c.b16 %v1775, %v1765
    %v2446 = vpack.c.b16 %v1776, %v1766
    %v2447 = vpack.c.b16 %v1777, %v1767
    %v2448 = vpack.c.b16 %v1778, %v1768
    %v2449 = vpack.c.b16 %v1779, %v1769
    %v2450 = vpack.c.b16 %v1780, %v1770
    %v2451 = vpack.c.b16 %v1781, %v1771
    %v2452 = vpack.c.b16 %v1782, %v1772
    %v2453 = vpack.c.b16 %v1793, %v1783
    %v2454 = vpack.c.b16 %v1794, %v1784
    %v2455 = vpack.c.b16 %v1795, %v1785
    %v2456 = vpack.c.b16 %v1796, %v1786
    %v2457 = vpack.c.b16 %v1797, %v1787
    %v2458 = vpack.c.b16 %v1798, %v1788
    %v2459 = vpack.c.b16 %v1799, %v1789
    %v2460 = vpack.c.b16 %v1800, %v1790
    %v2461 = vpack.c.b16 %v1801, %v1791
    %v2462 = vpack.c.b16 %v1802, %v1792
    %v2463 = vpack.c.b16 %v1813, %v1803
    %v2464 = vpack.c.b16 %v1814, %v1804
    %v2465 = vpack.c.b16 %v1815, %v1805
    %v2466 = vpack.c.b16 %v1816, %v1806
    %v2467 = vpack.c.b16 %v1817, %v1807
    %v2468 = vpack.c.b16 %v1818, %v1808
    %v2469 = vpack.c.b16 %v1819, %v1809
    %v2470 = vpack.c.b16 %v1820, %v1810
    %v2471 = vpack.c.b16 %v1821, %v1811
    %v2472 = vpack.c.b16 %v1822, %v1812
    %v2473 = vpack.c.b16 %v1833, %v1823
    %v2474 = vpack.c.b16 %v1834, %v1824
    %v2475 = vpack.c.b16 %v1835, %v1825
    %v2476 = vpack.c.b16 %v1836, %v1826
    %v2477 = vpack.c.b16 %v1837, %v1827
    %v2478 = vpack.c.b16 %v1838, %v1828
    %v2479 = vpack.c.b16 %v1839, %v1829
    %v2480 = vpack.c.b16 %v1840, %v1830
    %v2481 = vpack.c.b16 %v1841, %v1831
    %v2482 = vpack.c.b16 %v1842, %v1832
    %v2483 = vpack.c.b16 %v1853, %v1843
    %v2484 = vpack.c.b16 %v1854, %v1844
    %v2485 = vpack.c.b16 %v1855, %v1845
    %v2486 = vpack.c.b16 %v1856, %v1846
    %v2487 = vpack.c.b16 %v1857, %v1847
    %v2488 = vpack.c.b16 %v1858, %v1848
    %v2489 = vpack.c.b16 %v1859, %v1849
    %v2490 = vpack.c.b16 %v1860, %v1850
    %v2491 = vpack.c.b16 %v1861, %v1851
    %v2492 = vpack.c.b16 %v1862, %v1852
    %v2493 = vpack.c.b16 %v1873, %v1863
    %v2494 = vpack.c.b16 %v1874, %v1864
    %v2495 = vpack.c.b16 %v1875, %v1865
    %v2496 = vpack.c.b16 %v1876, %v1866
    %v2497 = vpack.c.b16 %v1877, %v1867
    %v2498 = vpack.c.b16 %v1878, %v1868
    %v2499 = vpack.c.b16 %v1879, %v1869
    %v2500 = vpack.c.b16 %v1880, %v1870
    %v2501 = vpack.c.b16 %v1881, %v1871
    %v2502 = vpack.c.b16 %v1882, %v1872
    %v2503 = vpack.c.b16 %v1893, %v1883
    %v2504 = vpack.c.b16 %v1894, %v1884
    %v2505 = vpack.c.b16 %v1895, %v1885
    %v2506 = vpack.c.b16 %v1896, %v1886
    %v2507 = vpack.c.b16 %v1897, %v1887
    %v2508 = vpack.c.b16 %v1898, %v1888
    %v2509 = vpack.c.b16 %v1899, %v1889
    %v2510 = vpack.c.b16 %v1900, %v1890
    %v2511 = vpack.c.b16 %v1901, %v1891
    %v2512 = vpack.c.b16 %v1902, %v1892
    %v2513 = vpack.c.b16 %v1913, %v1903
    %v2514 = vpack.c.b16 %v1914, %v1904
    %v2515 = vpack.c.b16 %v1915, %v1905
    %v2516 = vpack.c.b16 %v1916, %v1906
    %v2517 = vpack.c.b16 %v1917, %v1907
    %v2518 = vpack.c.b16 %v1918, %v1908
    %v2519 = vpack.c.b16 %v1919, %v1909
    %v2520 = vpack.c.b16 %v1920, %v1910
    %v2521 = vpack.c.b16 %v1921, %v1911
    %v2522 = vpack.c.b16 %v1922, %v1912
    %v2523 = vpack.c.b16 %v1933, %v1923
    %v2524 = vpack.c.b16 %v1934, %v1924
    %v2525 = vpack.c.b16 %v1935, %v1925
    %v2526 = vpack.c.b16 %v1936, %v1926
    %v2527 = vpack.c.b16 %v1937, %v1927
    %v2528 = vpack.c.b16 %v1938, %v1928
    %v2529 = vpack.c.b16 %v1939, %v1929
    %v2530 = vpack.c.b16 %v1940, %v1930
    %v2531 = vpack.c.b16 %v1941, %v1931
    %v2532 = vpack.c.b16 %v1942, %v1932
    %v2533 = vpack.c.b16 %v1953, %v1943
    %v2534 = vpack.c.b16 %v1954, %v1944
    %v2535 = vpack.c.b16 %v1955, %v1945
    %v2536 = vpack.c.b16 %v1956, %v1946
    %v2537 = vpack.c.b16 %v1957, %v1947
    %v2538 = vpack.c.b16 %v1958, %v1948
    %v2539 = vpack.c.b16 %v1959, %v1949
    %v2540 = vpack.c.b16 %v1960, %v1950
    %v2541 = vpack.c.b16 %v1961, %v1951
    %v2542 = vpack.c.b16 %v1962, %v1952
    %v2543 = vpack.c.b16 %v1973, %v1963
    %v2544 = vpack.c.b16 %v1974, %v1964
    %v2545 = vpack.c.b16 %v1975, %v1965
    %v2546 = vpack.c.b16 %v1976, %v1966
    %v2547 = vpack.c.b16 %v1977, %v1967
    %v2548 = vpack.c.b16 %v1978, %v1968
    %v2549 = vpack.c.b16 %v1979, %v1969
    %v2550 = vpack.c.b16 %v1980, %v1970
    %v2551 = vpack.c.b16 %v1981, %v1971
    %v2552 = vpack.c.b16 %v1982, %v1972
    %v2553 = vpack.c.b16 %v1993, %v1983
    %v2554 = vpack.c.b16 %v1994, %v1984
    %v2555 = vpack.c.b16 %v1995, %v1985
    %v2556 = vpack.c.b16 %v1996, %v1986
    %v2557 = vpack.c.b16 %v1997, %v1987
    %v2558 = vpack.c.b16 %v1998, %v1988
    %v2559 = vpack.c.b16 %v1999, %v1989
    %v2560 = vpack.c.b16 %v2000, %v1990
    %v2561 = vpack.c.b16 %v2001, %v1991
    %v2562 = vpack.c.b16 %v2002, %v1992
    %v2563 = vpack.c.b16 %v2013, %v2003
    %v2564 = vpack.c.b16 %v2014, %v2004
    %v2565 = vpack.c.b16 %v2015, %v2005
    %v2566 = vpack.c.b16 %v2016, %v2006
    %v2567 = vpack.c.b16 %v2017, %v2007
    %v2568 = vpack.c.b16 %v2018, %v2008
    %v2569 = vpack.c.b16 %v2019, %v2009
    %v2570 = vpack.c.b16 %v2020, %v2010
    %v2571 = vpack.c.b16 %v2021, %v2011
    %v2572 = vpack.c.b16 %v2022, %v2012
    %v2573 = vpack.c.b16 %v2033, %v2023
    %v2574 = vpack.c.b16 %v2034, %v2024
    %v2575 = vpack.c.b16 %v2035, %v2025
    %v2576 = vpack.c.b16 %v2036, %v2026
    %v2577 = vpack.c.b16 %v2037, %v2027
    %v2578 = vpack.c.b16 %v2038, %v2028
    %v2579 = vpack.c.b16 %v2039, %v2029
    %v2580 = vpack.c.b16 %v2040, %v2030
    %v2581 = vpack.c.b16 %v2041, %v2031
    %v2582 = vpack.c.b16 %v2042, %v2032
    %v2583 = vpack.c.b16 %v2053, %v2043
    %v2584 = vpack.c.b16 %v2054, %v2044
    %v2585 = vpack.c.b16 %v2055, %v2045
    %v2586 = vpack.c.b16 %v2056, %v2046
    %v2587 = vpack.c.b16 %v2057, %v2047
    %v2588 = vpack.c.b16 %v2058, %v2048
    %v2589 = vpack.c.b16 %v2059, %v2049
    %v2590 = vpack.c.b16 %v2060, %v2050
    %v2591 = vpack.c.b16 %v2061, %v2051
    %v2592 = vpack.c.b16 %v2062, %v2052
    %v2593 = vpack.c.b16 %v2073, %v2063
    %v2594 = vpack.c.b16 %v2074, %v2064
    %v2595 = vpack.c.b16 %v2075, %v2065
    %v2596 = vpack.c.b16 %v2076, %v2066
    %v2597 = vpack.c.b16 %v2077, %v2067
    %v2598 = vpack.c.b16 %v2078, %v2068
    %v2599 = vpack.c.b16 %v2079, %v2069
    %v2600 = vpack.c.b16 %v2080, %v2070
    %v2601 = vpack.c.b16 %v2081, %v2071
    %v2602 = vpack.c.b16 %v2082, %v2072
    %v2603 = vpack.c.b16 %v2093, %v2083
    %v2604 = vpack.c.b16 %v2094, %v2084
    %v2605 = vpack.c.b16 %v2095, %v2085
    %v2606 = vpack.c.b16 %v2096, %v2086
    %v2607 = vpack.c.b16 %v2097, %v2087
    %v2608 = vpack.c.b16 %v2098, %v2088
    %v2609 = vpack.c.b16 %v2099, %v2089
    %v2610 = vpack.c.b16 %v2100, %v2090
    %v2611 = vpack.c.b16 %v2101, %v2091
    %v2612 = vpack.c.b16 %v2102, %v2092
    %v2613 = vpack.c.b16 %v2113, %v2103
    %v2614 = vpack.c.b16 %v2114, %v2104
    %v2615 = vpack.c.b16 %v2115, %v2105
    %v2616 = vpack.c.b16 %v2116, %v2106
    %v2617 = vpack.c.b16 %v2117, %v2107
    %v2618 = vpack.c.b16 %v2118, %v2108
    %v2619 = vpack.c.b16 %v2119, %v2109
    %v2620 = vpack.c.b16 %v2120, %v2110
    %v2621 = vpack.c.b16 %v2121, %v2111
    %v2622 = vpack.c.b16 %v2122, %v2112
    %v2623 = vpack.c.b16 %v2133, %v2123
    %v2624 = vpack.c.b16 %v2134, %v2124
    %v2625 = vpack.c.b16 %v2135, %v2125
    %v2626 = vpack.c.b16 %v2136, %v2126
    %v2627 = vpack.c.b16 %v2137, %v2127
    %v2628 = vpack.c.b16 %v2138, %v2128
    %v2629 = vpack.c.b16 %v2139, %v2129
    %v2630 = vpack.c.b16 %v2140, %v2130
    %v2631 = vpack.c.b16 %v2141, %v2131
    %v2632 = vpack.c.b16 %v2142, %v2132
    %vm3123 = vcmask 130048
    %v3125 = vsel %vm3123, %v128, 0
    %3127 = vmatprep.subr.bf16.mxu0 %v2214
    %3128 = vmatpush1.bf16.msra.mxu0 %v2213
    %3129 = vmatprep.subr.bf16.mxu0 %v2204
    %3130 = vmatpush1.bf16.msra.mxu0 %v2203
    %3131 = vmatprep.subr.bf16.mxu0 %v2194
    %3132 = vmatpush1.bf16.msra.mxu0 %v2193
    %3133 = vmatprep.subr.bf16.mxu0 %v2184
    %3134 = vmatpush1.bf16.msra.mxu0 %v2183
    %3135 = vmatprep.subr.bf16.mxu0 %v2174
    %3136 = vmatpush1.bf16.msra.mxu0 %v2173
    %3137 = vmatprep.subr.bf16.mxu0 %v2164
    %3138 = vmatpush1.bf16.msra.mxu0 %v2163
    %3139 = vmatprep.subr.bf16.mxu0 %v2154
    %3140 = vmatpush1.bf16.msra.mxu0 %v2153
    %3141 = vmatprep.subr.bf16.mxu0 %v2144
    %3142 = vmatpush1.bf16.msra.mxu0 %v2143
    %3143 = vmatprep.subr.bf16.mxu0 %v2294
    %3144 = vmatpush2.bf16.msra.mxu0 %v2293
    %3145 = vmatprep.subr.bf16.mxu0 %v2284
    %3146 = vmatpush2.bf16.msra.mxu0 %v2283
    %3147 = vmatprep.subr.bf16.mxu0 %v2274
    %3148 = vmatpush2.bf16.msra.mxu0 %v2273
    %3149 = vmatprep.subr.bf16.mxu0 %v2264
    %3150 = vmatpush2.bf16.msra.mxu0 %v2263
    %3151 = vmatprep.subr.bf16.mxu0 %v2254
    %3152 = vmatpush2.bf16.msra.mxu0 %v2253
    %3153 = vmatprep.subr.bf16.mxu0 %v2244
    %3154 = vmatpush2.bf16.msra.mxu0 %v2243
    %3155 = vmatprep.subr.bf16.mxu0 %v2234
    %3156 = vmatpush2.bf16.msra.mxu0 %v2233
    %3157 = vmatprep.subr.bf16.mxu0 %v2224
    %3158 = vmatpush2.bf16.msra.mxu0 %v2223
    %3159 = vmatprep.mubr.bf16.mxu0 %v123
    %3160 = vmatmul.mubr.bf16.gmra.mxu0 %v122
    %v3161 = vpop.f32.mrf.mxu0
    %v3162 = vadd.f32 %v626, %v3161
    %v3163 = vpop.f32.mrf.mxu0
    %v3164 = vadd.f32 %v630, %v3163
    %v3165 = vpop.f32.mrf.mxu0
    %v3166 = vpop.f32.mrf.mxu0
    %3167 = vdwg.mxu0
    %3168 = vmatprep.subr.bf16.mxu0 %v2374
    %3169 = vmatpush1.bf16.msra.mxu0 %v2373
    %3170 = vmatprep.subr.bf16.mxu0 %v2364
    %3171 = vmatpush1.bf16.msra.mxu0 %v2363
    %3172 = vmatprep.subr.bf16.mxu0 %v2354
    %3173 = vmatpush1.bf16.msra.mxu0 %v2353
    %3174 = vmatprep.subr.bf16.mxu0 %v2344
    %3175 = vmatpush1.bf16.msra.mxu0 %v2343
    %3176 = vmatprep.subr.bf16.mxu0 %v2334
    %3177 = vmatpush1.bf16.msra.mxu0 %v2333
    %3178 = vmatprep.subr.bf16.mxu0 %v2324
    %3179 = vmatpush1.bf16.msra.mxu0 %v2323
    %3180 = vmatprep.subr.bf16.mxu0 %v2314
    %3181 = vmatpush1.bf16.msra.mxu0 %v2313
    %3182 = vmatprep.subr.bf16.mxu0 %v2304
    %3183 = vmatpush1.bf16.msra.mxu0 %v2303
    %3184 = vmatprep.subr.bf16.mxu0 %v2454
    %3185 = vmatpush2.bf16.msra.mxu0 %v2453
    %3186 = vmatprep.subr.bf16.mxu0 %v2444
    %3187 = vmatpush2.bf16.msra.mxu0 %v2443
    %3188 = vmatprep.subr.bf16.mxu0 %v2434
    %3189 = vmatpush2.bf16.msra.mxu0 %v2433
    %3190 = vmatprep.subr.bf16.mxu0 %v2424
    %3191 = vmatpush2.bf16.msra.mxu0 %v2423
    %3192 = vmatprep.subr.bf16.mxu0 %v2414
    %3193 = vmatpush2.bf16.msra.mxu0 %v2413
    %3194 = vmatprep.subr.bf16.mxu0 %v2404
    %3195 = vmatpush2.bf16.msra.mxu0 %v2403
    %3196 = vmatprep.subr.bf16.mxu0 %v2394
    %3197 = vmatpush2.bf16.msra.mxu0 %v2393
    %3198 = vmatprep.subr.bf16.mxu0 %v2384
    %3199 = vmatpush2.bf16.msra.mxu0 %v2383
    %3200 = vmatprep.mubr.bf16.mxu0 %v125
    %3201 = vmatmul.mubr.bf16.gmra.mxu0 %v124
    %v3202 = vpop.f32.mrf.mxu0
    %v3203 = vadd.f32 %v3162, %v3202
    %v3204 = vpop.f32.mrf.mxu0
    %v3205 = vadd.f32 %v3164, %v3204
    %v3206 = vpop.f32.mrf.mxu0
    %v3207 = vpop.f32.mrf.mxu0
    %3208 = vdwg.mxu0
    %3209 = vmatprep.subr.bf16.mxu0 %v2534
    %3210 = vmatpush1.bf16.msra.mxu0 %v2533
    %3211 = vmatprep.subr.bf16.mxu0 %v2524
    %3212 = vmatpush1.bf16.msra.mxu0 %v2523
    %3213 = vmatprep.subr.bf16.mxu0 %v2514
    %3214 = vmatpush1.bf16.msra.mxu0 %v2513
    %3215 = vmatprep.subr.bf16.mxu0 %v2504
    %3216 = vmatpush1.bf16.msra.mxu0 %v2503
    %3217 = vmatprep.subr.bf16.mxu0 %v2494
    %3218 = vmatpush1.bf16.msra.mxu0 %v2493
    %3219 = vmatprep.subr.bf16.mxu0 %v2484
    %3220 = vmatpush1.bf16.msra.mxu0 %v2483
    %3221 = vmatprep.subr.bf16.mxu0 %v2474
    %3222 = vmatpush1.bf16.msra.mxu0 %v2473
    %3223 = vmatprep.subr.bf16.mxu0 %v2464
    %3224 = vmatpush1.bf16.msra.mxu0 %v2463
    %3225 = vmatprep.subr.bf16.mxu0 %v2614
    %3226 = vmatpush2.bf16.msra.mxu0 %v2613
    %3227 = vmatprep.subr.bf16.mxu0 %v2604
    %3228 = vmatpush2.bf16.msra.mxu0 %v2603
    %3229 = vmatprep.subr.bf16.mxu0 %v2594
    %3230 = vmatpush2.bf16.msra.mxu0 %v2593
    %3231 = vmatprep.subr.bf16.mxu0 %v2584
    %3232 = vmatpush2.bf16.msra.mxu0 %v2583
    %3233 = vmatprep.subr.bf16.mxu0 %v2574
    %3234 = vmatpush2.bf16.msra.mxu0 %v2573
    %3235 = vmatprep.subr.bf16.mxu0 %v2564
    %3236 = vmatpush2.bf16.msra.mxu0 %v2563
    %3237 = vmatprep.subr.bf16.mxu0 %v2554
    %3238 = vmatpush2.bf16.msra.mxu0 %v2553
    %3239 = vmatprep.subr.bf16.mxu0 %v2544
    %3240 = vmatpush2.bf16.msra.mxu0 %v2543
    %3241 = vmatprep.mubr.bf16.mxu0 %v127
    %3242 = vmatmul.mubr.bf16.gmra.mxu0 %v126
    %v3243 = vpop.f32.mrf.mxu0
    %v3244 = vadd.f32 %v3203, %v3243
    %v3245 = vpop.f32.mrf.mxu0
    %v3246 = vadd.f32 %v3205, %v3245
    %v3247 = vpop.f32.mrf.mxu0
    %v3248 = vpop.f32.mrf.mxu0
    %3249 = vdwg.mxu0
    %3250 = vmatprep.subr.bf16.mxu0 0
    %3251 = vmatpush1.bf16.msra.mxu0 0
    %3252 = vmatprep.subr.bf16.mxu0 0
    %3253 = vmatpush1.bf16.msra.mxu0 0
    %3254 = vmatprep.subr.bf16.mxu0 0
    %3255 = vmatpush1.bf16.msra.mxu0 0
    %3256 = vmatprep.subr.bf16.mxu0 0
    %3257 = vmatpush1.bf16.msra.mxu0 0
    %3258 = vmatprep.subr.bf16.mxu0 0
    %3259 = vmatpush1.bf16.msra.mxu0 0
    %3260 = vmatprep.subr.bf16.mxu0 0
    %3261 = vmatpush1.bf16.msra.mxu0 0
    %3262 = vmatprep.subr.bf16.mxu0 0
    %3263 = vmatpush1.bf16.msra.mxu0 0
    %3264 = vmatprep.subr.bf16.mxu0 %v2624
    %3265 = vmatpush1.bf16.msra.mxu0 %v2623
    %3266 = vmatprep.subr.bf16.mxu0 0
    %3267 = vmatpush2.bf16.msra.mxu0 0
    %3268 = vmatprep.subr.bf16.mxu0 0
    %3269 = vmatpush2.bf16.msra.mxu0 0
    %3270 = vmatprep.subr.bf16.mxu0 0
    %3271 = vmatpush2.bf16.msra.mxu0 0
    %3272 = vmatprep.subr.bf16.mxu0 0
    %3273 = vmatpush2.bf16.msra.mxu0 0
    %3274 = vmatprep.subr.bf16.mxu0 0
    %3275 = vmatpush2.bf16.msra.mxu0 0
    %3276 = vmatprep.subr.bf16.mxu0 0
    %3277 = vmatpush2.bf16.msra.mxu0 0
    %3278 = vmatprep.subr.bf16.mxu0 0
    %3279 = vmatpush2.bf16.msra.mxu0 0
    %3280 = vmatprep.subr.bf16.mxu0 0
    %3281 = vmatpush2.bf16.msra.mxu0 0
    %3282 = vmatprep.mubr.bf16.mxu0 0
    %3283 = vmatmul.mubr.bf16.gmra.mxu0 %v3125
    %v3284 = vpop.f32.mrf.mxu0
    %v3285 = vadd.f32 %v3244, %v3284
    %v3286 = vpop.f32.mrf.mxu0
    %v3287 = vadd.f32 %v3246, %v3286
    %v3288 = vpop.f32.mrf.mxu0
    %v3289 = vpop.f32.mrf.mxu0
    %3290 = vdwg.mxu0
    %3291 = vmatprep.subr.bf16.mxu0 %v2216
    %3292 = vmatpush1.bf16.msra.mxu0 %v2215
    %3293 = vmatprep.subr.bf16.mxu0 %v2206
    %3294 = vmatpush1.bf16.msra.mxu0 %v2205
    %3295 = vmatprep.subr.bf16.mxu0 %v2196
    %3296 = vmatpush1.bf16.msra.mxu0 %v2195
    %3297 = vmatprep.subr.bf16.mxu0 %v2186
    %3298 = vmatpush1.bf16.msra.mxu0 %v2185
    %3299 = vmatprep.subr.bf16.mxu0 %v2176
    %3300 = vmatpush1.bf16.msra.mxu0 %v2175
    %3301 = vmatprep.subr.bf16.mxu0 %v2166
    %3302 = vmatpush1.bf16.msra.mxu0 %v2165
    %3303 = vmatprep.subr.bf16.mxu0 %v2156
    %3304 = vmatpush1.bf16.msra.mxu0 %v2155
    %3305 = vmatprep.subr.bf16.mxu0 %v2146
    %3306 = vmatpush1.bf16.msra.mxu0 %v2145
    %3307 = vmatprep.subr.bf16.mxu0 %v2296
    %3308 = vmatpush2.bf16.msra.mxu0 %v2295
    %3309 = vmatprep.subr.bf16.mxu0 %v2286
    %3310 = vmatpush2.bf16.msra.mxu0 %v2285
    %3311 = vmatprep.subr.bf16.mxu0 %v2276
    %3312 = vmatpush2.bf16.msra.mxu0 %v2275
    %3313 = vmatprep.subr.bf16.mxu0 %v2266
    %3314 = vmatpush2.bf16.msra.mxu0 %v2265
    %3315 = vmatprep.subr.bf16.mxu0 %v2256
    %3316 = vmatpush2.bf16.msra.mxu0 %v2255
    %3317 = vmatprep.subr.bf16.mxu0 %v2246
    %3318 = vmatpush2.bf16.msra.mxu0 %v2245
    %3319 = vmatprep.subr.bf16.mxu0 %v2236
    %3320 = vmatpush2.bf16.msra.mxu0 %v2235
    %3321 = vmatprep.subr.bf16.mxu0 %v2226
    %3322 = vmatpush2.bf16.msra.mxu0 %v2225
    %3323 = vmatprep.mubr.bf16.mxu0 %v123
    %3324 = vmatmul.mubr.bf16.gmra.mxu0 %v122
    %v3325 = vpop.f32.mrf.mxu0
    %v3326 = vadd.f32 %v634, %v3325
    %v3327 = vpop.f32.mrf.mxu0
    %v3328 = vadd.f32 %v638, %v3327
    %v3329 = vpop.f32.mrf.mxu0
    %v3330 = vpop.f32.mrf.mxu0
    %3331 = vdwg.mxu0
    %3332 = vmatprep.subr.bf16.mxu0 %v2376
    %3333 = vmatpush1.bf16.msra.mxu0 %v2375
    %3334 = vmatprep.subr.bf16.mxu0 %v2366
    %3335 = vmatpush1.bf16.msra.mxu0 %v2365
    %3336 = vmatprep.subr.bf16.mxu0 %v2356
    %3337 = vmatpush1.bf16.msra.mxu0 %v2355
    %3338 = vmatprep.subr.bf16.mxu0 %v2346
    %3339 = vmatpush1.bf16.msra.mxu0 %v2345
    %3340 = vmatprep.subr.bf16.mxu0 %v2336
    %3341 = vmatpush1.bf16.msra.mxu0 %v2335
    %3342 = vmatprep.subr.bf16.mxu0 %v2326
    %3343 = vmatpush1.bf16.msra.mxu0 %v2325
    %3344 = vmatprep.subr.bf16.mxu0 %v2316
    %3345 = vmatpush1.bf16.msra.mxu0 %v2315
    %3346 = vmatprep.subr.bf16.mxu0 %v2306
    %3347 = vmatpush1.bf16.msra.mxu0 %v2305
    %3348 = vmatprep.subr.bf16.mxu0 %v2456
    %3349 = vmatpush2.bf16.msra.mxu0 %v2455
    %3350 = vmatprep.subr.bf16.mxu0 %v2446
    %3351 = vmatpush2.bf16.msra.mxu0 %v2445
    %3352 = vmatprep.subr.bf16.mxu0 %v2436
    %3353 = vmatpush2.bf16.msra.mxu0 %v2435
    %3354 = vmatprep.subr.bf16.mxu0 %v2426
    %3355 = vmatpush2.bf16.msra.mxu0 %v2425
    %3356 = vmatprep.subr.bf16.mxu0 %v2416
    %3357 = vmatpush2.bf16.msra.mxu0 %v2415
    %3358 = vmatprep.subr.bf16.mxu0 %v2406
    %3359 = vmatpush2.bf16.msra.mxu0 %v2405
    %3360 = vmatprep.subr.bf16.mxu0 %v2396
    %3361 = vmatpush2.bf16.msra.mxu0 %v2395
    %3362 = vmatprep.subr.bf16.mxu0 %v2386
    %3363 = vmatpush2.bf16.msra.mxu0 %v2385
    %3364 = vmatprep.mubr.bf16.mxu0 %v125
    %3365 = vmatmul.mubr.bf16.gmra.mxu0 %v124
    %v3366 = vpop.f32.mrf.mxu0
    %v3367 = vadd.f32 %v3326, %v3366
    %v3368 = vpop.f32.mrf.mxu0
    %v3369 = vadd.f32 %v3328, %v3368
    %v3370 = vpop.f32.mrf.mxu0
    %v3371 = vpop.f32.mrf.mxu0
    %3372 = vdwg.mxu0
    %3373 = vmatprep.subr.bf16.mxu0 %v2536
    %3374 = vmatpush1.bf16.msra.mxu0 %v2535
    %3375 = vmatprep.subr.bf16.mxu0 %v2526
    %3376 = vmatpush1.bf16.msra.mxu0 %v2525
    %3377 = vmatprep.subr.bf16.mxu0 %v2516
    %3378 = vmatpush1.bf16.msra.mxu0 %v2515
    %3379 = vmatprep.subr.bf16.mxu0 %v2506
    %3380 = vmatpush1.bf16.msra.mxu0 %v2505
    %3381 = vmatprep.subr.bf16.mxu0 %v2496
    %3382 = vmatpush1.bf16.msra.mxu0 %v2495
    %3383 = vmatprep.subr.bf16.mxu0 %v2486
    %3384 = vmatpush1.bf16.msra.mxu0 %v2485
    %3385 = vmatprep.subr.bf16.mxu0 %v2476
    %3386 = vmatpush1.bf16.msra.mxu0 %v2475
    %3387 = vmatprep.subr.bf16.mxu0 %v2466
    %3388 = vmatpush1.bf16.msra.mxu0 %v2465
    %3389 = vmatprep.subr.bf16.mxu0 %v2616
    %3390 = vmatpush2.bf16.msra.mxu0 %v2615
    %3391 = vmatprep.subr.bf16.mxu0 %v2606
    %3392 = vmatpush2.bf16.msra.mxu0 %v2605
    %3393 = vmatprep.subr.bf16.mxu0 %v2596
    %3394 = vmatpush2.bf16.msra.mxu0 %v2595
    %3395 = vmatprep.subr.bf16.mxu0 %v2586
    %3396 = vmatpush2.bf16.msra.mxu0 %v2585
    %3397 = vmatprep.subr.bf16.mxu0 %v2576
    %3398 = vmatpush2.bf16.msra.mxu0 %v2575
    %3399 = vmatprep.subr.bf16.mxu0 %v2566
    %3400 = vmatpush2.bf16.msra.mxu0 %v2565
    %3401 = vmatprep.subr.bf16.mxu0 %v2556
    %3402 = vmatpush2.bf16.msra.mxu0 %v2555
    %3403 = vmatprep.subr.bf16.mxu0 %v2546
    %3404 = vmatpush2.bf16.msra.mxu0 %v2545
    %3405 = vmatprep.mubr.bf16.mxu0 %v127
    %3406 = vmatmul.mubr.bf16.gmra.mxu0 %v126
    %v3407 = vpop.f32.mrf.mxu0
    %v3408 = vadd.f32 %v3367, %v3407
    %v3409 = vpop.f32.mrf.mxu0
    %v3410 = vadd.f32 %v3369, %v3409
    %v3411 = vpop.f32.mrf.mxu0
    %v3412 = vpop.f32.mrf.mxu0
    %3413 = vdwg.mxu0
    %3414 = vmatprep.subr.bf16.mxu0 0
    %3415 = vmatpush1.bf16.msra.mxu0 0
    %3416 = vmatprep.subr.bf16.mxu0 0
    %3417 = vmatpush1.bf16.msra.mxu0 0
    %3418 = vmatprep.subr.bf16.mxu0 0
    %3419 = vmatpush1.bf16.msra.mxu0 0
    %3420 = vmatprep.subr.bf16.mxu0 0
    %3421 = vmatpush1.bf16.msra.mxu0 0
    %3422 = vmatprep.subr.bf16.mxu0 0
    %3423 = vmatpush1.bf16.msra.mxu0 0
    %3424 = vmatprep.subr.bf16.mxu0 0
    %3425 = vmatpush1.bf16.msra.mxu0 0
    %3426 = vmatprep.subr.bf16.mxu0 0
    %3427 = vmatpush1.bf16.msra.mxu0 0
    %3428 = vmatprep.subr.bf16.mxu0 %v2626
    %3429 = vmatpush1.bf16.msra.mxu0 %v2625
    %3430 = vmatprep.subr.bf16.mxu0 0
    %3431 = vmatpush2.bf16.msra.mxu0 0
    %3432 = vmatprep.subr.bf16.mxu0 0
    %3433 = vmatpush2.bf16.msra.mxu0 0
    %3434 = vmatprep.subr.bf16.mxu0 0
    %3435 = vmatpush2.bf16.msra.mxu0 0
    %3436 = vmatprep.subr.bf16.mxu0 0
    %3437 = vmatpush2.bf16.msra.mxu0 0
    %3438 = vmatprep.subr.bf16.mxu0 0
    %3439 = vmatpush2.bf16.msra.mxu0 0
    %3440 = vmatprep.subr.bf16.mxu0 0
    %3441 = vmatpush2.bf16.msra.mxu0 0
    %3442 = vmatprep.subr.bf16.mxu0 0
    %3443 = vmatpush2.bf16.msra.mxu0 0
    %3444 = vmatprep.subr.bf16.mxu0 0
    %3445 = vmatpush2.bf16.msra.mxu0 0
    %3446 = vmatprep.mubr.bf16.mxu0 0
    %3447 = vmatmul.mubr.bf16.gmra.mxu0 %v3125
    %v3448 = vpop.f32.mrf.mxu0
    %v3449 = vadd.f32 %v3408, %v3448
    %v3450 = vpop.f32.mrf.mxu0
    %v3451 = vadd.f32 %v3410, %v3450
    %v3452 = vpop.f32.mrf.mxu0
    %v3453 = vpop.f32.mrf.mxu0
    %3454 = vdwg.mxu0
    %3455 = vmatprep.subr.bf16.mxu0 %v2218
    %3456 = vmatpush1.bf16.msra.mxu0 %v2217
    %3457 = vmatprep.subr.bf16.mxu0 %v2208
    %3458 = vmatpush1.bf16.msra.mxu0 %v2207
    %3459 = vmatprep.subr.bf16.mxu0 %v2198
    %3460 = vmatpush1.bf16.msra.mxu0 %v2197
    %3461 = vmatprep.subr.bf16.mxu0 %v2188
    %3462 = vmatpush1.bf16.msra.mxu0 %v2187
    %3463 = vmatprep.subr.bf16.mxu0 %v2178
    %3464 = vmatpush1.bf16.msra.mxu0 %v2177
    %3465 = vmatprep.subr.bf16.mxu0 %v2168
    %3466 = vmatpush1.bf16.msra.mxu0 %v2167
    %3467 = vmatprep.subr.bf16.mxu0 %v2158
    %3468 = vmatpush1.bf16.msra.mxu0 %v2157
    %3469 = vmatprep.subr.bf16.mxu0 %v2148
    %3470 = vmatpush1.bf16.msra.mxu0 %v2147
    %3471 = vmatprep.subr.bf16.mxu0 %v2298
    %3472 = vmatpush2.bf16.msra.mxu0 %v2297
    %3473 = vmatprep.subr.bf16.mxu0 %v2288
    %3474 = vmatpush2.bf16.msra.mxu0 %v2287
    %3475 = vmatprep.subr.bf16.mxu0 %v2278
    %3476 = vmatpush2.bf16.msra.mxu0 %v2277
    %3477 = vmatprep.subr.bf16.mxu0 %v2268
    %3478 = vmatpush2.bf16.msra.mxu0 %v2267
    %3479 = vmatprep.subr.bf16.mxu0 %v2258
    %3480 = vmatpush2.bf16.msra.mxu0 %v2257
    %3481 = vmatprep.subr.bf16.mxu0 %v2248
    %3482 = vmatpush2.bf16.msra.mxu0 %v2247
    %3483 = vmatprep.subr.bf16.mxu0 %v2238
    %3484 = vmatpush2.bf16.msra.mxu0 %v2237
    %3485 = vmatprep.subr.bf16.mxu0 %v2228
    %3486 = vmatpush2.bf16.msra.mxu0 %v2227
    %3487 = vmatprep.mubr.bf16.mxu0 %v123
    %3488 = vmatmul.mubr.bf16.gmra.mxu0 %v122
    %v3489 = vpop.f32.mrf.mxu0
    %v3490 = vadd.f32 %v642, %v3489
    %v3491 = vpop.f32.mrf.mxu0
    %v3492 = vadd.f32 %v646, %v3491
    %v3493 = vpop.f32.mrf.mxu0
    %v3494 = vpop.f32.mrf.mxu0
    %3495 = vdwg.mxu0
    %3496 = vmatprep.subr.bf16.mxu0 %v2378
    %3497 = vmatpush1.bf16.msra.mxu0 %v2377
    %3498 = vmatprep.subr.bf16.mxu0 %v2368
    %3499 = vmatpush1.bf16.msra.mxu0 %v2367
    %3500 = vmatprep.subr.bf16.mxu0 %v2358
    %3501 = vmatpush1.bf16.msra.mxu0 %v2357
    %3502 = vmatprep.subr.bf16.mxu0 %v2348
    %3503 = vmatpush1.bf16.msra.mxu0 %v2347
    %3504 = vmatprep.subr.bf16.mxu0 %v2338
    %3505 = vmatpush1.bf16.msra.mxu0 %v2337
    %3506 = vmatprep.subr.bf16.mxu0 %v2328
    %3507 = vmatpush1.bf16.msra.mxu0 %v2327
    %3508 = vmatprep.subr.bf16.mxu0 %v2318
    %3509 = vmatpush1.bf16.msra.mxu0 %v2317
    %3510 = vmatprep.subr.bf16.mxu0 %v2308
    %3511 = vmatpush1.bf16.msra.mxu0 %v2307
    %3512 = vmatprep.subr.bf16.mxu0 %v2458
    %3513 = vmatpush2.bf16.msra.mxu0 %v2457
    %3514 = vmatprep.subr.bf16.mxu0 %v2448
    %3515 = vmatpush2.bf16.msra.mxu0 %v2447
    %3516 = vmatprep.subr.bf16.mxu0 %v2438
    %3517 = vmatpush2.bf16.msra.mxu0 %v2437
    %3518 = vmatprep.subr.bf16.mxu0 %v2428
    %3519 = vmatpush2.bf16.msra.mxu0 %v2427
    %3520 = vmatprep.subr.bf16.mxu0 %v2418
    %3521 = vmatpush2.bf16.msra.mxu0 %v2417
    %3522 = vmatprep.subr.bf16.mxu0 %v2408
    %3523 = vmatpush2.bf16.msra.mxu0 %v2407
    %3524 = vmatprep.subr.bf16.mxu0 %v2398
    %3525 = vmatpush2.bf16.msra.mxu0 %v2397
    %3526 = vmatprep.subr.bf16.mxu0 %v2388
    %3527 = vmatpush2.bf16.msra.mxu0 %v2387
    %3528 = vmatprep.mubr.bf16.mxu0 %v125
    %3529 = vmatmul.mubr.bf16.gmra.mxu0 %v124
    %v3530 = vpop.f32.mrf.mxu0
    %v3531 = vadd.f32 %v3490, %v3530
    %v3532 = vpop.f32.mrf.mxu0
    %v3533 = vadd.f32 %v3492, %v3532
    %v3534 = vpop.f32.mrf.mxu0
    %v3535 = vpop.f32.mrf.mxu0
    %3536 = vdwg.mxu0
    %3537 = vmatprep.subr.bf16.mxu0 %v2538
    %3538 = vmatpush1.bf16.msra.mxu0 %v2537
    %3539 = vmatprep.subr.bf16.mxu0 %v2528
    %3540 = vmatpush1.bf16.msra.mxu0 %v2527
    %3541 = vmatprep.subr.bf16.mxu0 %v2518
    %3542 = vmatpush1.bf16.msra.mxu0 %v2517
    %3543 = vmatprep.subr.bf16.mxu0 %v2508
    %3544 = vmatpush1.bf16.msra.mxu0 %v2507
    %3545 = vmatprep.subr.bf16.mxu0 %v2498
    %3546 = vmatpush1.bf16.msra.mxu0 %v2497
    %3547 = vmatprep.subr.bf16.mxu0 %v2488
    %3548 = vmatpush1.bf16.msra.mxu0 %v2487
    %3549 = vmatprep.subr.bf16.mxu0 %v2478
    %3550 = vmatpush1.bf16.msra.mxu0 %v2477
    %3551 = vmatprep.subr.bf16.mxu0 %v2468
    %3552 = vmatpush1.bf16.msra.mxu0 %v2467
    %3553 = vmatprep.subr.bf16.mxu0 %v2618
    %3554 = vmatpush2.bf16.msra.mxu0 %v2617
    %3555 = vmatprep.subr.bf16.mxu0 %v2608
    %3556 = vmatpush2.bf16.msra.mxu0 %v2607
    %3557 = vmatprep.subr.bf16.mxu0 %v2598
    %3558 = vmatpush2.bf16.msra.mxu0 %v2597
    %3559 = vmatprep.subr.bf16.mxu0 %v2588
    %3560 = vmatpush2.bf16.msra.mxu0 %v2587
    %3561 = vmatprep.subr.bf16.mxu0 %v2578
    %3562 = vmatpush2.bf16.msra.mxu0 %v2577
    %3563 = vmatprep.subr.bf16.mxu0 %v2568
    %3564 = vmatpush2.bf16.msra.mxu0 %v2567
    %3565 = vmatprep.subr.bf16.mxu0 %v2558
    %3566 = vmatpush2.bf16.msra.mxu0 %v2557
    %3567 = vmatprep.subr.bf16.mxu0 %v2548
    %3568 = vmatpush2.bf16.msra.mxu0 %v2547
    %3569 = vmatprep.mubr.bf16.mxu0 %v127
    %3570 = vmatmul.mubr.bf16.gmra.mxu0 %v126
    %v3571 = vpop.f32.mrf.mxu0
    %v3572 = vadd.f32 %v3531, %v3571
    %v3573 = vpop.f32.mrf.mxu0
    %v3574 = vadd.f32 %v3533, %v3573
    %v3575 = vpop.f32.mrf.mxu0
    %v3576 = vpop.f32.mrf.mxu0
    %3577 = vdwg.mxu0
    %3578 = vmatprep.subr.bf16.mxu0 0
    %3579 = vmatpush1.bf16.msra.mxu0 0
    %3580 = vmatprep.subr.bf16.mxu0 0
    %3581 = vmatpush1.bf16.msra.mxu0 0
    %3582 = vmatprep.subr.bf16.mxu0 0
    %3583 = vmatpush1.bf16.msra.mxu0 0
    %3584 = vmatprep.subr.bf16.mxu0 0
    %3585 = vmatpush1.bf16.msra.mxu0 0
    %3586 = vmatprep.subr.bf16.mxu0 0
    %3587 = vmatpush1.bf16.msra.mxu0 0
    %3588 = vmatprep.subr.bf16.mxu0 0
    %3589 = vmatpush1.bf16.msra.mxu0 0
    %3590 = vmatprep.subr.bf16.mxu0 0
    %3591 = vmatpush1.bf16.msra.mxu0 0
    %3592 = vmatprep.subr.bf16.mxu0 %v2628
    %3593 = vmatpush1.bf16.msra.mxu0 %v2627
    %3594 = vmatprep.subr.bf16.mxu0 0
    %3595 = vmatpush2.bf16.msra.mxu0 0
    %3596 = vmatprep.subr.bf16.mxu0 0
    %3597 = vmatpush2.bf16.msra.mxu0 0
    %3598 = vmatprep.subr.bf16.mxu0 0
    %3599 = vmatpush2.bf16.msra.mxu0 0
    %3600 = vmatprep.subr.bf16.mxu0 0
    %3601 = vmatpush2.bf16.msra.mxu0 0
    %3602 = vmatprep.subr.bf16.mxu0 0
    %3603 = vmatpush2.bf16.msra.mxu0 0
    %3604 = vmatprep.subr.bf16.mxu0 0
    %3605 = vmatpush2.bf16.msra.mxu0 0
    %3606 = vmatprep.subr.bf16.mxu0 0
    %3607 = vmatpush2.bf16.msra.mxu0 0
    %3608 = vmatprep.subr.bf16.mxu0 0
    %3609 = vmatpush2.bf16.msra.mxu0 0
    %3610 = vmatprep.mubr.bf16.mxu0 0
    %3611 = vmatmul.mubr.bf16.gmra.mxu0 %v3125
    %v3612 = vpop.f32.mrf.mxu0
    %v3613 = vadd.f32 %v3572, %v3612
    %v3614 = vpop.f32.mrf.mxu0
    %v3615 = vadd.f32 %v3574, %v3614
    %v3616 = vpop.f32.mrf.mxu0
    %v3617 = vpop.f32.mrf.mxu0
    %3618 = vdwg.mxu0
    %3619 = vmatprep.subr.bf16.mxu0 %v2220
    %3620 = vmatpush1.bf16.msra.mxu0 %v2219
    %3621 = vmatprep.subr.bf16.mxu0 %v2210
    %3622 = vmatpush1.bf16.msra.mxu0 %v2209
    %3623 = vmatprep.subr.bf16.mxu0 %v2200
    %3624 = vmatpush1.bf16.msra.mxu0 %v2199
    %3625 = vmatprep.subr.bf16.mxu0 %v2190
    %3626 = vmatpush1.bf16.msra.mxu0 %v2189
    %3627 = vmatprep.subr.bf16.mxu0 %v2180
    %3628 = vmatpush1.bf16.msra.mxu0 %v2179
    %3629 = vmatprep.subr.bf16.mxu0 %v2170
    %3630 = vmatpush1.bf16.msra.mxu0 %v2169
    %3631 = vmatprep.subr.bf16.mxu0 %v2160
    %3632 = vmatpush1.bf16.msra.mxu0 %v2159
    %3633 = vmatprep.subr.bf16.mxu0 %v2150
    %3634 = vmatpush1.bf16.msra.mxu0 %v2149
    %3635 = vmatprep.subr.bf16.mxu0 %v2300
    %3636 = vmatpush2.bf16.msra.mxu0 %v2299
    %3637 = vmatprep.subr.bf16.mxu0 %v2290
    %3638 = vmatpush2.bf16.msra.mxu0 %v2289
    %3639 = vmatprep.subr.bf16.mxu0 %v2280
    %3640 = vmatpush2.bf16.msra.mxu0 %v2279
    %3641 = vmatprep.subr.bf16.mxu0 %v2270
    %3642 = vmatpush2.bf16.msra.mxu0 %v2269
    %3643 = vmatprep.subr.bf16.mxu0 %v2260
    %3644 = vmatpush2.bf16.msra.mxu0 %v2259
    %3645 = vmatprep.subr.bf16.mxu0 %v2250
    %3646 = vmatpush2.bf16.msra.mxu0 %v2249
    %3647 = vmatprep.subr.bf16.mxu0 %v2240
    %3648 = vmatpush2.bf16.msra.mxu0 %v2239
    %3649 = vmatprep.subr.bf16.mxu0 %v2230
    %3650 = vmatpush2.bf16.msra.mxu0 %v2229
    %3651 = vmatprep.mubr.bf16.mxu0 %v123
    %3652 = vmatmul.mubr.bf16.gmra.mxu0 %v122
    %v3653 = vpop.f32.mrf.mxu0
    %v3654 = vadd.f32 %v650, %v3653
    %v3655 = vpop.f32.mrf.mxu0
    %v3656 = vadd.f32 %v654, %v3655
    %v3657 = vpop.f32.mrf.mxu0
    %v3658 = vpop.f32.mrf.mxu0
    %3659 = vdwg.mxu0
    %3660 = vmatprep.subr.bf16.mxu0 %v2380
    %3661 = vmatpush1.bf16.msra.mxu0 %v2379
    %3662 = vmatprep.subr.bf16.mxu0 %v2370
    %3663 = vmatpush1.bf16.msra.mxu0 %v2369
    %3664 = vmatprep.subr.bf16.mxu0 %v2360
    %3665 = vmatpush1.bf16.msra.mxu0 %v2359
    %3666 = vmatprep.subr.bf16.mxu0 %v2350
    %3667 = vmatpush1.bf16.msra.mxu0 %v2349
    %3668 = vmatprep.subr.bf16.mxu0 %v2340
    %3669 = vmatpush1.bf16.msra.mxu0 %v2339
    %3670 = vmatprep.subr.bf16.mxu0 %v2330
    %3671 = vmatpush1.bf16.msra.mxu0 %v2329
    %3672 = vmatprep.subr.bf16.mxu0 %v2320
    %3673 = vmatpush1.bf16.msra.mxu0 %v2319
    %3674 = vmatprep.subr.bf16.mxu0 %v2310
    %3675 = vmatpush1.bf16.msra.mxu0 %v2309
    %3676 = vmatprep.subr.bf16.mxu0 %v2460
    %3677 = vmatpush2.bf16.msra.mxu0 %v2459
    %3678 = vmatprep.subr.bf16.mxu0 %v2450
    %3679 = vmatpush2.bf16.msra.mxu0 %v2449
    %3680 = vmatprep.subr.bf16.mxu0 %v2440
    %3681 = vmatpush2.bf16.msra.mxu0 %v2439
    %3682 = vmatprep.subr.bf16.mxu0 %v2430
    %3683 = vmatpush2.bf16.msra.mxu0 %v2429
    %3684 = vmatprep.subr.bf16.mxu0 %v2420
    %3685 = vmatpush2.bf16.msra.mxu0 %v2419
    %3686 = vmatprep.subr.bf16.mxu0 %v2410
    %3687 = vmatpush2.bf16.msra.mxu0 %v2409
    %3688 = vmatprep.subr.bf16.mxu0 %v2400
    %3689 = vmatpush2.bf16.msra.mxu0 %v2399
    %3690 = vmatprep.subr.bf16.mxu0 %v2390
    %3691 = vmatpush2.bf16.msra.mxu0 %v2389
    %3692 = vmatprep.mubr.bf16.mxu0 %v125
    %3693 = vmatmul.mubr.bf16.gmra.mxu0 %v124
    %v3694 = vpop.f32.mrf.mxu0
    %v3695 = vadd.f32 %v3654, %v3694
    %v3696 = vpop.f32.mrf.mxu0
    %v3697 = vadd.f32 %v3656, %v3696
    %v3698 = vpop.f32.mrf.mxu0
    %v3699 = vpop.f32.mrf.mxu0
    %3700 = vdwg.mxu0
    %3701 = vmatprep.subr.bf16.mxu0 %v2540
    %3702 = vmatpush1.bf16.msra.mxu0 %v2539
    %3703 = vmatprep.subr.bf16.mxu0 %v2530
    %3704 = vmatpush1.bf16.msra.mxu0 %v2529
    %3705 = vmatprep.subr.bf16.mxu0 %v2520
    %3706 = vmatpush1.bf16.msra.mxu0 %v2519
    %3707 = vmatprep.subr.bf16.mxu0 %v2510
    %3708 = vmatpush1.bf16.msra.mxu0 %v2509
    %3709 = vmatprep.subr.bf16.mxu0 %v2500
    %3710 = vmatpush1.bf16.msra.mxu0 %v2499
    %3711 = vmatprep.subr.bf16.mxu0 %v2490
    %3712 = vmatpush1.bf16.msra.mxu0 %v2489
    %3713 = vmatprep.subr.bf16.mxu0 %v2480
    %3714 = vmatpush1.bf16.msra.mxu0 %v2479
    %3715 = vmatprep.subr.bf16.mxu0 %v2470
    %3716 = vmatpush1.bf16.msra.mxu0 %v2469
    %3717 = vmatprep.subr.bf16.mxu0 %v2620
    %3718 = vmatpush2.bf16.msra.mxu0 %v2619
    %3719 = vmatprep.subr.bf16.mxu0 %v2610
    %3720 = vmatpush2.bf16.msra.mxu0 %v2609
    %3721 = vmatprep.subr.bf16.mxu0 %v2600
    %3722 = vmatpush2.bf16.msra.mxu0 %v2599
    %3723 = vmatprep.subr.bf16.mxu0 %v2590
    %3724 = vmatpush2.bf16.msra.mxu0 %v2589
    %3725 = vmatprep.subr.bf16.mxu0 %v2580
    %3726 = vmatpush2.bf16.msra.mxu0 %v2579
    %3727 = vmatprep.subr.bf16.mxu0 %v2570
    %3728 = vmatpush2.bf16.msra.mxu0 %v2569
    %3729 = vmatprep.subr.bf16.mxu0 %v2560
    %3730 = vmatpush2.bf16.msra.mxu0 %v2559
    %3731 = vmatprep.subr.bf16.mxu0 %v2550
    %3732 = vmatpush2.bf16.msra.mxu0 %v2549
    %3733 = vmatprep.mubr.bf16.mxu0 %v127
    %3734 = vmatmul.mubr.bf16.gmra.mxu0 %v126
    %v3735 = vpop.f32.mrf.mxu0
    %v3736 = vadd.f32 %v3695, %v3735
    %v3737 = vpop.f32.mrf.mxu0
    %v3738 = vadd.f32 %v3697, %v3737
    %v3739 = vpop.f32.mrf.mxu0
    %v3740 = vpop.f32.mrf.mxu0
    %3741 = vdwg.mxu0
    %3742 = vmatprep.subr.bf16.mxu0 0
    %3743 = vmatpush1.bf16.msra.mxu0 0
    %3744 = vmatprep.subr.bf16.mxu0 0
    %3745 = vmatpush1.bf16.msra.mxu0 0
    %3746 = vmatprep.subr.bf16.mxu0 0
    %3747 = vmatpush1.bf16.msra.mxu0 0
    %3748 = vmatprep.subr.bf16.mxu0 0
    %3749 = vmatpush1.bf16.msra.mxu0 0
    %3750 = vmatprep.subr.bf16.mxu0 0
    %3751 = vmatpush1.bf16.msra.mxu0 0
    %3752 = vmatprep.subr.bf16.mxu0 0
    %3753 = vmatpush1.bf16.msra.mxu0 0
    %3754 = vmatprep.subr.bf16.mxu0 0
    %3755 = vmatpush1.bf16.msra.mxu0 0
    %3756 = vmatprep.subr.bf16.mxu0 %v2630
    %3757 = vmatpush1.bf16.msra.mxu0 %v2629
    %3758 = vmatprep.subr.bf16.mxu0 0
    %3759 = vmatpush2.bf16.msra.mxu0 0
    %3760 = vmatprep.subr.bf16.mxu0 0
    %3761 = vmatpush2.bf16.msra.mxu0 0
    %3762 = vmatprep.subr.bf16.mxu0 0
    %3763 = vmatpush2.bf16.msra.mxu0 0
    %3764 = vmatprep.subr.bf16.mxu0 0
    %3765 = vmatpush2.bf16.msra.mxu0 0
    %3766 = vmatprep.subr.bf16.mxu0 0
    %3767 = vmatpush2.bf16.msra.mxu0 0
    %3768 = vmatprep.subr.bf16.mxu0 0
    %3769 = vmatpush2.bf16.msra.mxu0 0
    %3770 = vmatprep.subr.bf16.mxu0 0
    %3771 = vmatpush2.bf16.msra.mxu0 0
    %3772 = vmatprep.subr.bf16.mxu0 0
    %3773 = vmatpush2.bf16.msra.mxu0 0
    %3774 = vmatprep.mubr.bf16.mxu0 0
    %3775 = vmatmul.mubr.bf16.gmra.mxu0 %v3125
    %v3776 = vpop.f32.mrf.mxu0
    %v3777 = vadd.f32 %v3736, %v3776
    %v3778 = vpop.f32.mrf.mxu0
    %v3779 = vadd.f32 %v3738, %v3778
    %v3780 = vpop.f32.mrf.mxu0
    %v3781 = vpop.f32.mrf.mxu0
    %3782 = vdwg.mxu0
    %3783 = vmatprep.subr.bf16.mxu0 %v2222
    %3784 = vmatpush1.bf16.msra.mxu0 %v2221
    %3785 = vmatprep.subr.bf16.mxu0 %v2212
    %3786 = vmatpush1.bf16.msra.mxu0 %v2211
    %3787 = vmatprep.subr.bf16.mxu0 %v2202
    %3788 = vmatpush1.bf16.msra.mxu0 %v2201
    %3789 = vmatprep.subr.bf16.mxu0 %v2192
    %3790 = vmatpush1.bf16.msra.mxu0 %v2191
    %3791 = vmatprep.subr.bf16.mxu0 %v2182
    %3792 = vmatpush1.bf16.msra.mxu0 %v2181
    %3793 = vmatprep.subr.bf16.mxu0 %v2172
    %3794 = vmatpush1.bf16.msra.mxu0 %v2171
    %3795 = vmatprep.subr.bf16.mxu0 %v2162
    %3796 = vmatpush1.bf16.msra.mxu0 %v2161
    %3797 = vmatprep.subr.bf16.mxu0 %v2152
    %3798 = vmatpush1.bf16.msra.mxu0 %v2151
    %3799 = vmatprep.subr.bf16.mxu0 %v2302
    %3800 = vmatpush2.bf16.msra.mxu0 %v2301
    %3801 = vmatprep.subr.bf16.mxu0 %v2292
    %3802 = vmatpush2.bf16.msra.mxu0 %v2291
    %3803 = vmatprep.subr.bf16.mxu0 %v2282
    %3804 = vmatpush2.bf16.msra.mxu0 %v2281
    %3805 = vmatprep.subr.bf16.mxu0 %v2272
    %3806 = vmatpush2.bf16.msra.mxu0 %v2271
    %3807 = vmatprep.subr.bf16.mxu0 %v2262
    %3808 = vmatpush2.bf16.msra.mxu0 %v2261
    %3809 = vmatprep.subr.bf16.mxu0 %v2252
    %3810 = vmatpush2.bf16.msra.mxu0 %v2251
    %3811 = vmatprep.subr.bf16.mxu0 %v2242
    %3812 = vmatpush2.bf16.msra.mxu0 %v2241
    %3813 = vmatprep.subr.bf16.mxu0 %v2232
    %3814 = vmatpush2.bf16.msra.mxu0 %v2231
    %3815 = vmatprep.mubr.bf16.mxu0 %v123
    %3816 = vmatmul.mubr.bf16.gmra.mxu0 %v122
    %v3817 = vpop.f32.mrf.mxu0
    %v3818 = vadd.f32 %v658, %v3817
    %v3819 = vpop.f32.mrf.mxu0
    %v3820 = vadd.f32 %v662, %v3819
    %v3821 = vpop.f32.mrf.mxu0
    %v3822 = vpop.f32.mrf.mxu0
    %3823 = vdwg.mxu0
    %3824 = vmatprep.subr.bf16.mxu0 %v2382
    %3825 = vmatpush1.bf16.msra.mxu0 %v2381
    %3826 = vmatprep.subr.bf16.mxu0 %v2372
    %3827 = vmatpush1.bf16.msra.mxu0 %v2371
    %3828 = vmatprep.subr.bf16.mxu0 %v2362
    %3829 = vmatpush1.bf16.msra.mxu0 %v2361
    %3830 = vmatprep.subr.bf16.mxu0 %v2352
    %3831 = vmatpush1.bf16.msra.mxu0 %v2351
    %3832 = vmatprep.subr.bf16.mxu0 %v2342
    %3833 = vmatpush1.bf16.msra.mxu0 %v2341
    %3834 = vmatprep.subr.bf16.mxu0 %v2332
    %3835 = vmatpush1.bf16.msra.mxu0 %v2331
    %3836 = vmatprep.subr.bf16.mxu0 %v2322
    %3837 = vmatpush1.bf16.msra.mxu0 %v2321
    %3838 = vmatprep.subr.bf16.mxu0 %v2312
    %3839 = vmatpush1.bf16.msra.mxu0 %v2311
    %3840 = vmatprep.subr.bf16.mxu0 %v2462
    %3841 = vmatpush2.bf16.msra.mxu0 %v2461
    %3842 = vmatprep.subr.bf16.mxu0 %v2452
    %3843 = vmatpush2.bf16.msra.mxu0 %v2451
    %3844 = vmatprep.subr.bf16.mxu0 %v2442
    %3845 = vmatpush2.bf16.msra.mxu0 %v2441
    %3846 = vmatprep.subr.bf16.mxu0 %v2432
    %3847 = vmatpush2.bf16.msra.mxu0 %v2431
    %3848 = vmatprep.subr.bf16.mxu0 %v2422
    %3849 = vmatpush2.bf16.msra.mxu0 %v2421
    %3850 = vmatprep.subr.bf16.mxu0 %v2412
    %3851 = vmatpush2.bf16.msra.mxu0 %v2411
    %3852 = vmatprep.subr.bf16.mxu0 %v2402
    %3853 = vmatpush2.bf16.msra.mxu0 %v2401
    %3854 = vmatprep.subr.bf16.mxu0 %v2392
    %3855 = vmatpush2.bf16.msra.mxu0 %v2391
    %3856 = vmatprep.mubr.bf16.mxu0 %v125
    %3857 = vmatmul.mubr.bf16.gmra.mxu0 %v124
    %v3858 = vpop.f32.mrf.mxu0
    %v3859 = vadd.f32 %v3818, %v3858
    %v3860 = vpop.f32.mrf.mxu0
    %v3861 = vadd.f32 %v3820, %v3860
    %v3862 = vpop.f32.mrf.mxu0
    %v3863 = vpop.f32.mrf.mxu0
    %3864 = vdwg.mxu0
    %3865 = vmatprep.subr.bf16.mxu0 %v2542
    %3866 = vmatpush1.bf16.msra.mxu0 %v2541
    %3867 = vmatprep.subr.bf16.mxu0 %v2532
    %3868 = vmatpush1.bf16.msra.mxu0 %v2531
    %3869 = vmatprep.subr.bf16.mxu0 %v2522
    %3870 = vmatpush1.bf16.msra.mxu0 %v2521
    %3871 = vmatprep.subr.bf16.mxu0 %v2512
    %3872 = vmatpush1.bf16.msra.mxu0 %v2511
    %3873 = vmatprep.subr.bf16.mxu0 %v2502
    %3874 = vmatpush1.bf16.msra.mxu0 %v2501
    %3875 = vmatprep.subr.bf16.mxu0 %v2492
    %3876 = vmatpush1.bf16.msra.mxu0 %v2491
    %3877 = vmatprep.subr.bf16.mxu0 %v2482
    %3878 = vmatpush1.bf16.msra.mxu0 %v2481
    %3879 = vmatprep.subr.bf16.mxu0 %v2472
    %3880 = vmatpush1.bf16.msra.mxu0 %v2471
    %3881 = vmatprep.subr.bf16.mxu0 %v2622
    %3882 = vmatpush2.bf16.msra.mxu0 %v2621
    %3883 = vmatprep.subr.bf16.mxu0 %v2612
    %3884 = vmatpush2.bf16.msra.mxu0 %v2611
    %3885 = vmatprep.subr.bf16.mxu0 %v2602
    %3886 = vmatpush2.bf16.msra.mxu0 %v2601
    %3887 = vmatprep.subr.bf16.mxu0 %v2592
    %3888 = vmatpush2.bf16.msra.mxu0 %v2591
    %3889 = vmatprep.subr.bf16.mxu0 %v2582
    %3890 = vmatpush2.bf16.msra.mxu0 %v2581
    %3891 = vmatprep.subr.bf16.mxu0 %v2572
    %3892 = vmatpush2.bf16.msra.mxu0 %v2571
    %3893 = vmatprep.subr.bf16.mxu0 %v2562
    %3894 = vmatpush2.bf16.msra.mxu0 %v2561
    %3895 = vmatprep.subr.bf16.mxu0 %v2552
    %3896 = vmatpush2.bf16.msra.mxu0 %v2551
    %3897 = vmatprep.mubr.bf16.mxu0 %v127
    %3898 = vmatmul.mubr.bf16.gmra.mxu0 %v126
    %v3899 = vpop.f32.mrf.mxu0
    %v3900 = vadd.f32 %v3859, %v3899
    %v3901 = vpop.f32.mrf.mxu0
    %v3902 = vadd.f32 %v3861, %v3901
    %v3903 = vpop.f32.mrf.mxu0
    %v3904 = vpop.f32.mrf.mxu0
    %3905 = vdwg.mxu0
    %3906 = vmatprep.subr.bf16.mxu0 0
    %3907 = vmatpush1.bf16.msra.mxu0 0
    %3908 = vmatprep.subr.bf16.mxu0 0
    %3909 = vmatpush1.bf16.msra.mxu0 0
    %3910 = vmatprep.subr.bf16.mxu0 0
    %3911 = vmatpush1.bf16.msra.mxu0 0
    %3912 = vmatprep.subr.bf16.mxu0 0
    %3913 = vmatpush1.bf16.msra.mxu0 0
    %3914 = vmatprep.subr.bf16.mxu0 0
    %3915 = vmatpush1.bf16.msra.mxu0 0
    %3916 = vmatprep.subr.bf16.mxu0 0
    %3917 = vmatpush1.bf16.msra.mxu0 0
    %3918 = vmatprep.subr.bf16.mxu0 0
    %3919 = vmatpush1.bf16.msra.mxu0 0
    %3920 = vmatprep.subr.bf16.mxu0 %v2632
    %3921 = vmatpush1.bf16.msra.mxu0 %v2631
    %3922 = vmatprep.subr.bf16.mxu0 0
    %3923 = vmatpush2.bf16.msra.mxu0 0
    %3924 = vmatprep.subr.bf16.mxu0 0
    %3925 = vmatpush2.bf16.msra.mxu0 0
    %3926 = vmatprep.subr.bf16.mxu0 0
    %3927 = vmatpush2.bf16.msra.mxu0 0
    %3928 = vmatprep.subr.bf16.mxu0 0
    %3929 = vmatpush2.bf16.msra.mxu0 0
    %3930 = vmatprep.subr.bf16.mxu0 0
    %3931 = vmatpush2.bf16.msra.mxu0 0
    %3932 = vmatprep.subr.bf16.mxu0 0
    %3933 = vmatpush2.bf16.msra.mxu0 0
    %3934 = vmatprep.subr.bf16.mxu0 0
    %3935 = vmatpush2.bf16.msra.mxu0 0
    %3936 = vmatprep.subr.bf16.mxu0 0
    %3937 = vmatpush2.bf16.msra.mxu0 0
    %3938 = vmatprep.mubr.bf16.mxu0 0
    %3939 = vmatmul.mubr.bf16.gmra.mxu0 %v3125
    %v3940 = vpop.f32.mrf.mxu0
    %v3941 = vadd.f32 %v3900, %v3940
    %v3942 = vpop.f32.mrf.mxu0
    %v3943 = vadd.f32 %v3902, %v3942
    %v3944 = vpop.f32.mrf.mxu0
    %v3945 = vpop.f32.mrf.mxu0
    %3946 = vdwg.mxu0
    %v3947 = vmax.f32 %v3285, 0.0
    %v3948 = vmax.f32 %v3287, 0.0
    %v3949 = vmax.f32 %v3449, 0.0
    %v3950 = vmax.f32 %v3451, 0.0
    %v3951 = vmax.f32 %v3613, 0.0
    %v3952 = vmax.f32 %v3615, 0.0
    %v3953 = vmax.f32 %v3777, 0.0
    %v3954 = vmax.f32 %v3779, 0.0
    %v3955 = vmax.f32 %v3941, 0.0
    %v3956 = vmax.f32 %v3943, 0.0
    %v3957 = vpack.c.bf16 %v3947, %v3947
    %v3958 = vpack.c.bf16 %v3948, %v3948
    %v3959 = vpack.c.bf16 %v3949, %v3949
    %v3960 = vpack.c.bf16 %v3950, %v3950
    %v3961 = vpack.c.bf16 %v3951, %v3951
    %v3962 = vpack.c.bf16 %v3952, %v3952
    %v3963 = vpack.c.bf16 %v3953, %v3953
    %v3964 = vpack.c.bf16 %v3954, %v3954
    %v3965 = vpack.c.bf16 %v3955, %v3955
    %v3966 = vpack.c.bf16 %v3956, %v3956
    %v3967 = vld [vmem:[#allocation8] sm:$0xff]
    %v3968 = vld [vmem:[#allocation8 + $0x8] sm:$0xff]
    %v3969 = vld [vmem:[#allocation8 + $0x10] sm:$0xff]
    %v3970 = vld [vmem:[#allocation8 + $0x18] sm:$0xff]
    %v3971 = vld [vmem:[#allocation8 + $0x20] sm:$0xff]
    %v3972 = vld [vmem:[#allocation8 + $0x28] sm:$0xff]
    %v3973 = vld [vmem:[#allocation8 + $0x30] sm:$0xff]
    %v3974 = vld [vmem:[#allocation8 + $0x38] sm:$0xff]
    %v3975 = vld [vmem:[#allocation8 + $0x40] sm:$0xff]
    %v3976 = vld [vmem:[#allocation8 + $0x48] sm:$0xff]
    %v3977 = vld [vmem:[#allocation8 + $0x50] sm:$0xff]
    %v3978 = vld [vmem:[#allocation8 + $0x58] sm:$0xff]
    %v3979 = vld [vmem:[#allocation8 + $0x60] sm:$0xff]
    %v3980 = vld [vmem:[#allocation8 + $0x68] sm:$0xff]
    %v3981 = vld [vmem:[#allocation8 + $0x70] sm:$0xff]
    %v3982 = vld [vmem:[#allocation8 + $0x78] sm:$0xff]
    %v3983 = vld [vmem:[#allocation8 + $0x80] sm:$0xff]
    %v3984 = vld [vmem:[#allocation8 + $0x88] sm:$0xff]
    %v3985 = vld [vmem:[#allocation8 + $0x90] sm:$0xff]
    %v3986 = vld [vmem:[#allocation8 + $0x98] sm:$0xff]
    %v3987 = vld [vmem:[#allocation8 + $0xa0] sm:$0xff]
    %v3988 = vld [vmem:[#allocation8 + $0xa8] sm:$0xff]
    %v3989 = vld [vmem:[#allocation8 + $0xb0] sm:$0xff]
    %v3990 = vld [vmem:[#allocation8 + $0xb8] sm:$0xff]
    %v3991 = vld [vmem:[#allocation8 + $0xc0] sm:$0xff]
    %v3992 = vld [vmem:[#allocation8 + $0xc8] sm:$0xff]
    %v3993 = vld [vmem:[#allocation8 + $0xd0] sm:$0xff]
    %v3994 = vld [vmem:[#allocation8 + $0xd8] sm:$0xff]
    %v3995 = vld [vmem:[#allocation8 + $0xe0] sm:$0xff]
    %v3996 = vld [vmem:[#allocation8 + $0xe8] sm:$0xff]
    %v3997 = vld [vmem:[#allocation8 + $0xf0] sm:$0xff]
    %v3998 = vld [vmem:[#allocation8 + $0xf8] sm:$0xff]
    %v3999 = vld [vmem:[#allocation8 + $0x100] sm:$0xff]
    %v4000 = vld [vmem:[#allocation8 + $0x108] sm:$0xff]
    %v4001 = vld [vmem:[#allocation8 + $0x110] sm:$0xff]
    %v4002 = vld [vmem:[#allocation8 + $0x118] sm:$0xff]
    %v4003 = vld [vmem:[#allocation8 + $0x120] sm:$0xff]
    %v4004 = vld [vmem:[#allocation8 + $0x128] sm:$0xff]
    %v4005 = vld [vmem:[#allocation8 + $0x130] sm:$0xff]
    %v4006 = vld [vmem:[#allocation8 + $0x138] sm:$0xff]
    %v4007 = vld [vmem:[#allocation8 + $0x140] sm:$0xff]
    %v4008 = vld [vmem:[#allocation8 + $0x148] sm:$0xff]
    %v4009 = vld [vmem:[#allocation8 + $0x150] sm:$0xff]
    %v4010 = vld [vmem:[#allocation8 + $0x158] sm:$0xff]
    %v4011 = vld [vmem:[#allocation8 + $0x160] sm:$0xff]
    %v4012 = vld [vmem:[#allocation8 + $0x168] sm:$0xff]
    %v4013 = vld [vmem:[#allocation8 + $0x170] sm:$0xff]
    %v4014 = vld [vmem:[#allocation8 + $0x178] sm:$0xff]
    %v4015 = vld [vmem:[#allocation8 + $0x180] sm:$0xff]
    %v4016 = vld [vmem:[#allocation8 + $0x188] sm:$0xff]
    %v4017 = vld [vmem:[#allocation8 + $0x190] sm:$0xff]
    %v4018 = vld [vmem:[#allocation8 + $0x198] sm:$0xff]
    %v4019 = vld [vmem:[#allocation8 + $0x1a0] sm:$0xff]
    %v4020 = vld [vmem:[#allocation8 + $0x1a8] sm:$0xff]
    %v4021 = vld [vmem:[#allocation8 + $0x1b0] sm:$0xff]
    %v4022 = vld [vmem:[#allocation8 + $0x1b8] sm:$0xff]
    %v4023 = vld [vmem:[#allocation8 + $0x1c0] sm:$0xff]
    %v4024 = vld [vmem:[#allocation8 + $0x1c8] sm:$0xff]
    %v4025 = vld [vmem:[#allocation8 + $0x1d0] sm:$0xff]
    %v4026 = vld [vmem:[#allocation8 + $0x1d8] sm:$0xff]
    %v4027 = vld [vmem:[#allocation8 + $0x1e0] sm:$0xff]
    %v4028 = vld [vmem:[#allocation8 + $0x1e8] sm:$0xff]
    %v4029 = vld [vmem:[#allocation8 + $0x1f0] sm:$0xff]
    %v4030 = vld [vmem:[#allocation8 + $0x1f8] sm:$0xff]
    %v4031 = vld [vmem:[#allocation8 + $0x200] sm:$0xff]
    %v4032 = vld [vmem:[#allocation8 + $0x208] sm:$0xff]
    %v4033 = vld [vmem:[#allocation8 + $0x210] sm:$0xff]
    %v4034 = vld [vmem:[#allocation8 + $0x218] sm:$0xff]
    %v4035 = vld [vmem:[#allocation8 + $0x220] sm:$0xff]
    %v4036 = vld [vmem:[#allocation8 + $0x228] sm:$0xff]
    %v4037 = vld [vmem:[#allocation8 + $0x230] sm:$0xff]
    %v4038 = vld [vmem:[#allocation8 + $0x238] sm:$0xff]
    %v4039 = vld [vmem:[#allocation8 + $0x240] sm:$0xff]
    %v4040 = vld [vmem:[#allocation8 + $0x248] sm:$0xff]
    %v4041 = vld [vmem:[#allocation8 + $0x250] sm:$0xff]
    %v4042 = vld [vmem:[#allocation8 + $0x258] sm:$0xff]
    %v4043 = vld [vmem:[#allocation8 + $0x260] sm:$0xff]
    %v4044 = vld [vmem:[#allocation8 + $0x268] sm:$0xff]
    %v4045 = vld [vmem:[#allocation8 + $0x270] sm:$0xff]
    %v4046 = vld [vmem:[#allocation8 + $0x278] sm:$0xff]
    %v4047 = vld [vmem:[#allocation8 + $0x280] sm:$0xff]
    %v4048 = vld [vmem:[#allocation8 + $0x288] sm:$0xff]
    %v4049 = vld [vmem:[#allocation8 + $0x290] sm:$0xff]
    %v4050 = vld [vmem:[#allocation8 + $0x298] sm:$0xff]
    %v4051 = vld [vmem:[#allocation8 + $0x2a0] sm:$0xff]
    %v4052 = vld [vmem:[#allocation8 + $0x2a8] sm:$0xff]
    %v4053 = vld [vmem:[#allocation8 + $0x2b0] sm:$0xff]
    %v4054 = vld [vmem:[#allocation8 + $0x2b8] sm:$0xff]
    %v4055 = vld [vmem:[#allocation8 + $0x2c0] sm:$0xff]
    %v4056 = vld [vmem:[#allocation8 + $0x2c8] sm:$0xff]
    %v4057 = vld [vmem:[#allocation8 + $0x2d0] sm:$0xff]
    %v4058 = vld [vmem:[#allocation8 + $0x2d8] sm:$0xff]
    %v4059 = vld [vmem:[#allocation8 + $0x2e0] sm:$0xff]
    %v4060 = vld [vmem:[#allocation8 + $0x2e8] sm:$0xff]
    %v4061 = vld [vmem:[#allocation8 + $0x2f0] sm:$0xff]
    %v4062 = vld [vmem:[#allocation8 + $0x2f8] sm:$0xff]
    %v4063 = vld [vmem:[#allocation8 + $0x300] sm:$0xff]
    %v4064 = vld [vmem:[#allocation8 + $0x308] sm:$0xff]
    %v4065 = vld [vmem:[#allocation8 + $0x310] sm:$0xff]
    %v4066 = vld [vmem:[#allocation8 + $0x318] sm:$0xff]
    %v4067 = vld [vmem:[#allocation8 + $0x320] sm:$0xff]
    %v4068 = vld [vmem:[#allocation8 + $0x328] sm:$0xff]
    %v4069 = vld [vmem:[#allocation8 + $0x330] sm:$0xff]
    %v4070 = vld [vmem:[#allocation8 + $0x338] sm:$0xff]
    %v4071 = vld [vmem:[#allocation8 + $0x340] sm:$0xff]
    %v4072 = vld [vmem:[#allocation8 + $0x348] sm:$0xff]
    %v4073 = vld [vmem:[#allocation8 + $0x350] sm:$0xff]
    %v4074 = vld [vmem:[#allocation8 + $0x358] sm:$0xff]
    %v4075 = vld [vmem:[#allocation8 + $0x360] sm:$0xff]
    %v4076 = vld [vmem:[#allocation8 + $0x368] sm:$0xff]
    %v4077 = vld [vmem:[#allocation8 + $0x370] sm:$0xff]
    %v4078 = vld [vmem:[#allocation8 + $0x378] sm:$0xff]
    %v4079 = vld [vmem:[#allocation8 + $0x380] sm:$0xff]
    %v4080 = vld [vmem:[#allocation8 + $0x388] sm:$0xff]
    %v4081 = vld [vmem:[#allocation8 + $0x390] sm:$0xff]
    %v4082 = vld [vmem:[#allocation8 + $0x398] sm:$0xff]
    %v4083 = vld [vmem:[#allocation8 + $0x3a0] sm:$0xff]
    %v4084 = vld [vmem:[#allocation8 + $0x3a8] sm:$0xff]
    %v4085 = vld [vmem:[#allocation8 + $0x3b0] sm:$0xff]
    %v4086 = vld [vmem:[#allocation8 + $0x3b8] sm:$0xff]
    %v4087 = vld [vmem:[#allocation8 + $0x3c0] sm:$0xff]
    %v4088 = vld [vmem:[#allocation8 + $0x3c8] sm:$0xff]
    %v4089 = vld [vmem:[#allocation8 + $0x3d0] sm:$0xff]
    %v4090 = vld [vmem:[#allocation8 + $0x3d8] sm:$0xff]
    %v4091 = vld [vmem:[#allocation8 + $0x3e0] sm:$0xff]
    %v4092 = vld [vmem:[#allocation8 + $0x3e8] sm:$0xff]
    %v4093 = vld [vmem:[#allocation8 + $0x3f0] sm:$0xff]
    %v4094 = vld [vmem:[#allocation8 + $0x3f8] sm:$0xff]
    %v4095 = vld [vmem:[#allocation8 + $0x400] sm:$0xff]
    %v4096 = vld [vmem:[#allocation8 + $0x408] sm:$0xff]
    %v4097 = vld [vmem:[#allocation8 + $0x410] sm:$0xff]
    %v4098 = vld [vmem:[#allocation8 + $0x418] sm:$0xff]
    %v4099 = vld [vmem:[#allocation8 + $0x420] sm:$0xff]
    %v4100 = vld [vmem:[#allocation8 + $0x428] sm:$0xff]
    %v4101 = vld [vmem:[#allocation8 + $0x430] sm:$0xff]
    %v4102 = vld [vmem:[#allocation8 + $0x438] sm:$0xff]
    %v4103 = vld [vmem:[#allocation8 + $0x440] sm:$0xff]
    %v4104 = vld [vmem:[#allocation8 + $0x448] sm:$0xff]
    %v4105 = vld [vmem:[#allocation8 + $0x450] sm:$0xff]
    %v4106 = vld [vmem:[#allocation8 + $0x458] sm:$0xff]
    %v4107 = vld [vmem:[#allocation8 + $0x460] sm:$0xff]
    %v4108 = vld [vmem:[#allocation8 + $0x468] sm:$0xff]
    %v4109 = vld [vmem:[#allocation8 + $0x470] sm:$0xff]
    %v4110 = vld [vmem:[#allocation8 + $0x478] sm:$0xff]
    %v4111 = vld [vmem:[#allocation8 + $0x480] sm:$0xff]
    %v4112 = vld [vmem:[#allocation8 + $0x488] sm:$0xff]
    %v4113 = vld [vmem:[#allocation8 + $0x490] sm:$0xff]
    %v4114 = vld [vmem:[#allocation8 + $0x498] sm:$0xff]
    %v4115 = vld [vmem:[#allocation8 + $0x4a0] sm:$0xff]
    %v4116 = vld [vmem:[#allocation8 + $0x4a8] sm:$0xff]
    %v4117 = vld [vmem:[#allocation8 + $0x4b0] sm:$0xff]
    %v4118 = vld [vmem:[#allocation8 + $0x4b8] sm:$0xff]
    %v4119 = vld [vmem:[#allocation8 + $0x4c0] sm:$0xff]
    %v4120 = vld [vmem:[#allocation8 + $0x4c8] sm:$0xff]
    %v4121 = vld [vmem:[#allocation8 + $0x4d0] sm:$0xff]
    %v4122 = vld [vmem:[#allocation8 + $0x4d8] sm:$0xff]
    %v4123 = vld [vmem:[#allocation8 + $0x4e0] sm:$0xff]
    %v4124 = vld [vmem:[#allocation8 + $0x4e8] sm:$0xff]
    %v4125 = vld [vmem:[#allocation8 + $0x4f0] sm:$0xff]
    %v4126 = vld [vmem:[#allocation8 + $0x4f8] sm:$0xff]
    %v4127 = vld [vmem:[#allocation8 + $0x500] sm:$0xff]
    %v4128 = vld [vmem:[#allocation8 + $0x508] sm:$0xff]
    %v4129 = vld [vmem:[#allocation8 + $0x510] sm:$0xff]
    %v4130 = vld [vmem:[#allocation8 + $0x518] sm:$0xff]
    %v4131 = vld [vmem:[#allocation8 + $0x520] sm:$0xff]
    %v4132 = vld [vmem:[#allocation8 + $0x528] sm:$0xff]
    %v4133 = vld [vmem:[#allocation8 + $0x530] sm:$0xff]
    %v4134 = vld [vmem:[#allocation8 + $0x538] sm:$0xff]
    %v4135 = vld [vmem:[#allocation8 + $0x540] sm:$0xff]
    %v4136 = vld [vmem:[#allocation8 + $0x548] sm:$0xff]
    %v4137 = vld [vmem:[#allocation8 + $0x550] sm:$0xff]
    %v4138 = vld [vmem:[#allocation8 + $0x558] sm:$0xff]
    %v4139 = vld [vmem:[#allocation8 + $0x560] sm:$0xff]
    %v4140 = vld [vmem:[#allocation8 + $0x568] sm:$0xff]
    %v4141 = vld [vmem:[#allocation8 + $0x570] sm:$0xff]
    %v4142 = vld [vmem:[#allocation8 + $0x578] sm:$0xff]
    %v4143 = vld [vmem:[#allocation8 + $0x580] sm:$0xff]
    %v4144 = vld [vmem:[#allocation8 + $0x588] sm:$0xff]
    %v4145 = vld [vmem:[#allocation8 + $0x590] sm:$0xff]
    %v4146 = vld [vmem:[#allocation8 + $0x598] sm:$0xff]
    %v4147 = vld [vmem:[#allocation8 + $0x5a0] sm:$0xff]
    %v4148 = vld [vmem:[#allocation8 + $0x5a8] sm:$0xff]
    %v4149 = vld [vmem:[#allocation8 + $0x5b0] sm:$0xff]
    %v4150 = vld [vmem:[#allocation8 + $0x5b8] sm:$0xff]
    %v4151 = vld [vmem:[#allocation8 + $0x5c0] sm:$0xff]
    %v4152 = vld [vmem:[#allocation8 + $0x5c8] sm:$0xff]
    %v4153 = vld [vmem:[#allocation8 + $0x5d0] sm:$0xff]
    %v4154 = vld [vmem:[#allocation8 + $0x5d8] sm:$0xff]
    %v4155 = vld [vmem:[#allocation8 + $0x5e0] sm:$0xff]
    %v4156 = vld [vmem:[#allocation8 + $0x5e8] sm:$0xff]
    %v4157 = vld [vmem:[#allocation8 + $0x5f0] sm:$0xff]
    %v4158 = vld [vmem:[#allocation8 + $0x5f8] sm:$0xff]
    %v4159 = vld [vmem:[#allocation8 + $0x600] sm:$0xff]
    %v4160 = vld [vmem:[#allocation8 + $0x608] sm:$0xff]
    %v4161 = vld [vmem:[#allocation8 + $0x610] sm:$0xff]
    %v4162 = vld [vmem:[#allocation8 + $0x618] sm:$0xff]
    %v4163 = vld [vmem:[#allocation8 + $0x620] sm:$0xff]
    %v4164 = vld [vmem:[#allocation8 + $0x628] sm:$0xff]
    %v4165 = vld [vmem:[#allocation8 + $0x630] sm:$0xff]
    %v4166 = vld [vmem:[#allocation8 + $0x638] sm:$0xff]
    %v4167 = vld [vmem:[#allocation8 + $0x640] sm:$0xff]
    %v4168 = vld [vmem:[#allocation8 + $0x648] sm:$0xff]
    %v4169 = vld [vmem:[#allocation8 + $0x650] sm:$0xff]
    %v4170 = vld [vmem:[#allocation8 + $0x658] sm:$0xff]
    %v4171 = vld [vmem:[#allocation8 + $0x660] sm:$0xff]
    %v4172 = vld [vmem:[#allocation8 + $0x668] sm:$0xff]
    %v4173 = vld [vmem:[#allocation8 + $0x670] sm:$0xff]
    %v4174 = vld [vmem:[#allocation8 + $0x678] sm:$0xff]
    %v4175 = vld [vmem:[#allocation8 + $0x680] sm:$0xff]
    %v4176 = vld [vmem:[#allocation8 + $0x688] sm:$0xff]
    %v4177 = vld [vmem:[#allocation8 + $0x690] sm:$0xff]
    %v4178 = vld [vmem:[#allocation8 + $0x698] sm:$0xff]
    %v4179 = vld [vmem:[#allocation8 + $0x6a0] sm:$0xff]
    %v4180 = vld [vmem:[#allocation8 + $0x6a8] sm:$0xff]
    %v4181 = vld [vmem:[#allocation8 + $0x6b0] sm:$0xff]
    %v4182 = vld [vmem:[#allocation8 + $0x6b8] sm:$0xff]
    %v4183 = vld [vmem:[#allocation8 + $0x6c0] sm:$0xff]
    %v4184 = vld [vmem:[#allocation8 + $0x6c8] sm:$0xff]
    %v4185 = vld [vmem:[#allocation8 + $0x6d0] sm:$0xff]
    %v4186 = vld [vmem:[#allocation8 + $0x6d8] sm:$0xff]
    %v4187 = vld [vmem:[#allocation8 + $0x6e0] sm:$0xff]
    %v4188 = vld [vmem:[#allocation8 + $0x6e8] sm:$0xff]
    %v4189 = vld [vmem:[#allocation8 + $0x6f0] sm:$0xff]
    %v4190 = vld [vmem:[#allocation8 + $0x6f8] sm:$0xff]
    %v4191 = vld [vmem:[#allocation8 + $0x700] sm:$0xff]
    %v4192 = vld [vmem:[#allocation8 + $0x708] sm:$0xff]
    %v4193 = vld [vmem:[#allocation8 + $0x710] sm:$0xff]
    %v4194 = vld [vmem:[#allocation8 + $0x718] sm:$0xff]
    %v4195 = vld [vmem:[#allocation8 + $0x720] sm:$0xff]
    %v4196 = vld [vmem:[#allocation8 + $0x728] sm:$0xff]
    %v4197 = vld [vmem:[#allocation8 + $0x730] sm:$0xff]
    %v4198 = vld [vmem:[#allocation8 + $0x738] sm:$0xff]
    %v4199 = vld [vmem:[#allocation8 + $0x740] sm:$0xff]
    %v4200 = vld [vmem:[#allocation8 + $0x748] sm:$0xff]
    %v4201 = vld [vmem:[#allocation8 + $0x750] sm:$0xff]
    %v4202 = vld [vmem:[#allocation8 + $0x758] sm:$0xff]
    %v4203 = vld [vmem:[#allocation8 + $0x760] sm:$0xff]
    %v4204 = vld [vmem:[#allocation8 + $0x768] sm:$0xff]
    %v4205 = vld [vmem:[#allocation8 + $0x770] sm:$0xff]
    %v4206 = vld [vmem:[#allocation8 + $0x778] sm:$0xff]
    %v4207 = vld [vmem:[#allocation8 + $0x780] sm:$0xff]
    %v4208 = vld [vmem:[#allocation8 + $0x788] sm:$0xff]
    %v4209 = vld [vmem:[#allocation8 + $0x790] sm:$0xff]
    %v4210 = vld [vmem:[#allocation8 + $0x798] sm:$0xff]
    %v4211 = vld [vmem:[#allocation8 + $0x7a0] sm:$0xff]
    %v4212 = vld [vmem:[#allocation8 + $0x7a8] sm:$0xff]
    %v4213 = vld [vmem:[#allocation8 + $0x7b0] sm:$0xff]
    %v4214 = vld [vmem:[#allocation8 + $0x7b8] sm:$0xff]
    %v4215 = vld [vmem:[#allocation8 + $0x7c0] sm:$0xff]
    %v4216 = vld [vmem:[#allocation8 + $0x7c8] sm:$0xff]
    %v4217 = vld [vmem:[#allocation8 + $0x7d0] sm:$0xff]
    %v4218 = vld [vmem:[#allocation8 + $0x7d8] sm:$0xff]
    %v4219 = vld [vmem:[#allocation8 + $0x7e0] sm:$0xff]
    %v4220 = vld [vmem:[#allocation8 + $0x7e8] sm:$0xff]
    %v4221 = vld [vmem:[#allocation8 + $0x7f0] sm:$0xff]
    %v4222 = vld [vmem:[#allocation8 + $0x7f8] sm:$0xff]
    %v4223 = vld [vmem:[#allocation8 + $0x800] sm:$0xff]
    %v4224 = vld [vmem:[#allocation8 + $0x808] sm:$0xff]
    %v4225 = vld [vmem:[#allocation8 + $0x810] sm:$0xff]
    %v4226 = vld [vmem:[#allocation8 + $0x818] sm:$0xff]
    %v4227 = vld [vmem:[#allocation8 + $0x820] sm:$0xff]
    %v4228 = vld [vmem:[#allocation8 + $0x828] sm:$0xff]
    %v4229 = vld [vmem:[#allocation8 + $0x830] sm:$0xff]
    %v4230 = vld [vmem:[#allocation8 + $0x838] sm:$0xff]
    %v4231 = vld [vmem:[#allocation8 + $0x840] sm:$0xff]
    %v4232 = vld [vmem:[#allocation8 + $0x848] sm:$0xff]
    %v4233 = vld [vmem:[#allocation8 + $0x850] sm:$0xff]
    %v4234 = vld [vmem:[#allocation8 + $0x858] sm:$0xff]
    %v4235 = vld [vmem:[#allocation8 + $0x860] sm:$0xff]
    %v4236 = vld [vmem:[#allocation8 + $0x868] sm:$0xff]
    %v4237 = vld [vmem:[#allocation8 + $0x870] sm:$0xff]
    %v4238 = vld [vmem:[#allocation8 + $0x878] sm:$0xff]
    %v4239 = vld [vmem:[#allocation8 + $0x880] sm:$0xff]
    %v4240 = vld [vmem:[#allocation8 + $0x888] sm:$0xff]
    %v4241 = vld [vmem:[#allocation8 + $0x890] sm:$0xff]
    %v4242 = vld [vmem:[#allocation8 + $0x898] sm:$0xff]
    %v4243 = vld [vmem:[#allocation8 + $0x8a0] sm:$0xff]
    %v4244 = vld [vmem:[#allocation8 + $0x8a8] sm:$0xff]
    %v4245 = vld [vmem:[#allocation8 + $0x8b0] sm:$0xff]
    %v4246 = vld [vmem:[#allocation8 + $0x8b8] sm:$0xff]
    %v4247 = vld [vmem:[#allocation8 + $0x8c0] sm:$0xff]
    %v4248 = vld [vmem:[#allocation8 + $0x8c8] sm:$0xff]
    %v4249 = vld [vmem:[#allocation8 + $0x8d0] sm:$0xff]
    %v4250 = vld [vmem:[#allocation8 + $0x8d8] sm:$0xff]
    %v4251 = vld [vmem:[#allocation8 + $0x8e0] sm:$0xff]
    %v4252 = vld [vmem:[#allocation8 + $0x8e8] sm:$0xff]
    %v4253 = vld [vmem:[#allocation8 + $0x8f0] sm:$0xff]
    %v4254 = vld [vmem:[#allocation8 + $0x8f8] sm:$0xff]
    %v4255 = vld [vmem:[#allocation8 + $0x900] sm:$0xff]
    %v4256 = vld [vmem:[#allocation8 + $0x908] sm:$0xff]
    %v4257 = vld [vmem:[#allocation8 + $0x910] sm:$0xff]
    %v4258 = vld [vmem:[#allocation8 + $0x918] sm:$0xff]
    %v4259 = vld [vmem:[#allocation8 + $0x920] sm:$0xff]
    %v4260 = vld [vmem:[#allocation8 + $0x928] sm:$0xff]
    %v4261 = vld [vmem:[#allocation8 + $0x930] sm:$0xff]
    %v4262 = vld [vmem:[#allocation8 + $0x938] sm:$0xff]
    %v4263 = vld [vmem:[#allocation8 + $0x940] sm:$0xff]
    %v4264 = vld [vmem:[#allocation8 + $0x948] sm:$0xff]
    %v4265 = vld [vmem:[#allocation8 + $0x950] sm:$0xff]
    %v4266 = vld [vmem:[#allocation8 + $0x958] sm:$0xff]
    %v4267 = vld [vmem:[#allocation8 + $0x960] sm:$0xff]
    %v4268 = vld [vmem:[#allocation8 + $0x968] sm:$0xff]
    %v4269 = vld [vmem:[#allocation8 + $0x970] sm:$0xff]
    %v4270 = vld [vmem:[#allocation8 + $0x978] sm:$0xff]
    %v4271 = vld [vmem:[#allocation8 + $0x980] sm:$0xff]
    %v4272 = vld [vmem:[#allocation8 + $0x988] sm:$0xff]
    %v4273 = vld [vmem:[#allocation8 + $0x990] sm:$0xff]
    %v4274 = vld [vmem:[#allocation8 + $0x998] sm:$0xff]
    %v4275 = vld [vmem:[#allocation8 + $0x9a0] sm:$0xff]
    %v4276 = vld [vmem:[#allocation8 + $0x9a8] sm:$0xff]
    %v4277 = vld [vmem:[#allocation8 + $0x9b0] sm:$0xff]
    %v4278 = vld [vmem:[#allocation8 + $0x9b8] sm:$0xff]
    %v4279 = vld [vmem:[#allocation8 + $0x9c0] sm:$0xff]
    %v4280 = vld [vmem:[#allocation8 + $0x9c8] sm:$0xff]
    %v4281 = vld [vmem:[#allocation8 + $0x9d0] sm:$0xff]
    %v4282 = vld [vmem:[#allocation8 + $0x9d8] sm:$0xff]
    %v4283 = vld [vmem:[#allocation8 + $0x9e0] sm:$0xff]
    %v4284 = vld [vmem:[#allocation8 + $0x9e8] sm:$0xff]
    %v4285 = vld [vmem:[#allocation8 + $0x9f0] sm:$0xff]
    %v4286 = vld [vmem:[#allocation8 + $0x9f8] sm:$0xff]
    %v4287 = vld [vmem:[#allocation8 + $0xa00] sm:$0xff]
    %v4288 = vld [vmem:[#allocation8 + $0xa08] sm:$0xff]
    %v4289 = vld [vmem:[#allocation8 + $0xa10] sm:$0xff]
    %v4290 = vld [vmem:[#allocation8 + $0xa18] sm:$0xff]
    %v4291 = vld [vmem:[#allocation8 + $0xa20] sm:$0xff]
    %v4292 = vld [vmem:[#allocation8 + $0xa28] sm:$0xff]
    %v4293 = vld [vmem:[#allocation8 + $0xa30] sm:$0xff]
    %v4294 = vld [vmem:[#allocation8 + $0xa38] sm:$0xff]
    %v4295 = vld [vmem:[#allocation8 + $0xa40] sm:$0xff]
    %v4296 = vld [vmem:[#allocation8 + $0xa48] sm:$0xff]
    %v4297 = vld [vmem:[#allocation8 + $0xa50] sm:$0xff]
    %v4298 = vld [vmem:[#allocation8 + $0xa58] sm:$0xff]
    %v4299 = vld [vmem:[#allocation8 + $0xa60] sm:$0xff]
    %v4300 = vld [vmem:[#allocation8 + $0xa68] sm:$0xff]
    %v4301 = vld [vmem:[#allocation8 + $0xa70] sm:$0xff]
    %v4302 = vld [vmem:[#allocation8 + $0xa78] sm:$0xff]
    %v4303 = vld [vmem:[#allocation8 + $0xa80] sm:$0xff]
    %v4304 = vld [vmem:[#allocation8 + $0xa88] sm:$0xff]
    %v4305 = vld [vmem:[#allocation8 + $0xa90] sm:$0xff]
    %v4306 = vld [vmem:[#allocation8 + $0xa98] sm:$0xff]
    %v4307 = vld [vmem:[#allocation8 + $0xaa0] sm:$0xff]
    %v4308 = vld [vmem:[#allocation8 + $0xaa8] sm:$0xff]
    %v4309 = vld [vmem:[#allocation8 + $0xab0] sm:$0xff]
    %v4310 = vld [vmem:[#allocation8 + $0xab8] sm:$0xff]
    %v4311 = vld [vmem:[#allocation8 + $0xac0] sm:$0xff]
    %v4312 = vld [vmem:[#allocation8 + $0xac8] sm:$0xff]
    %v4313 = vld [vmem:[#allocation8 + $0xad0] sm:$0xff]
    %v4314 = vld [vmem:[#allocation8 + $0xad8] sm:$0xff]
    %v4315 = vld [vmem:[#allocation8 + $0xae0] sm:$0xff]
    %v4316 = vld [vmem:[#allocation8 + $0xae8] sm:$0xff]
    %v4317 = vld [vmem:[#allocation8 + $0xaf0] sm:$0xff]
    %v4318 = vld [vmem:[#allocation8 + $0xaf8] sm:$0xff]
    %v4319 = vld [vmem:[#allocation8 + $0xb00] sm:$0xff]
    %v4320 = vld [vmem:[#allocation8 + $0xb08] sm:$0xff]
    %v4321 = vld [vmem:[#allocation8 + $0xb10] sm:$0xff]
    %v4322 = vld [vmem:[#allocation8 + $0xb18] sm:$0xff]
    %v4323 = vld [vmem:[#allocation8 + $0xb20] sm:$0xff]
    %v4324 = vld [vmem:[#allocation8 + $0xb28] sm:$0xff]
    %v4325 = vld [vmem:[#allocation8 + $0xb30] sm:$0xff]
    %v4326 = vld [vmem:[#allocation8 + $0xb38] sm:$0xff]
    %v4327 = vld [vmem:[#allocation8 + $0xb40] sm:$0xff]
    %v4328 = vld [vmem:[#allocation8 + $0xb48] sm:$0xff]
    %v4329 = vld [vmem:[#allocation8 + $0xb50] sm:$0xff]
    %v4330 = vld [vmem:[#allocation8 + $0xb58] sm:$0xff]
    %v4331 = vld [vmem:[#allocation8 + $0xb60] sm:$0xff]
    %v4332 = vld [vmem:[#allocation8 + $0xb68] sm:$0xff]
    %v4333 = vld [vmem:[#allocation8 + $0xb70] sm:$0xff]
    %v4334 = vld [vmem:[#allocation8 + $0xb78] sm:$0xff]
    %v4335 = vld [vmem:[#allocation8 + $0xb80] sm:$0xff]
    %v4336 = vld [vmem:[#allocation8 + $0xb88] sm:$0xff]
    %v4337 = vld [vmem:[#allocation8 + $0xb90] sm:$0xff]
    %v4338 = vld [vmem:[#allocation8 + $0xb98] sm:$0xff]
    %v4339 = vld [vmem:[#allocation8 + $0xba0] sm:$0xff]
    %v4340 = vld [vmem:[#allocation8 + $0xba8] sm:$0xff]
    %v4341 = vld [vmem:[#allocation8 + $0xbb0] sm:$0xff]
    %v4342 = vld [vmem:[#allocation8 + $0xbb8] sm:$0xff]
    %v4343 = vld [vmem:[#allocation8 + $0xbc0] sm:$0xff]
    %v4344 = vld [vmem:[#allocation8 + $0xbc8] sm:$0xff]
    %v4345 = vld [vmem:[#allocation8 + $0xbd0] sm:$0xff]
    %v4346 = vld [vmem:[#allocation8 + $0xbd8] sm:$0xff]
    %v4347 = vld [vmem:[#allocation8 + $0xbe0] sm:$0xff]
    %v4348 = vld [vmem:[#allocation8 + $0xbe8] sm:$0xff]
    %v4349 = vld [vmem:[#allocation8 + $0xbf0] sm:$0xff]
    %v4350 = vld [vmem:[#allocation8 + $0xbf8] sm:$0xff]
    %v4351 = vld [vmem:[#allocation8 + $0xc00] sm:$0xff]
    %v4352 = vld [vmem:[#allocation8 + $0xc08] sm:$0xff]
    %v4353 = vld [vmem:[#allocation8 + $0xc10] sm:$0xff]
    %v4354 = vld [vmem:[#allocation8 + $0xc18] sm:$0xff]
    %v4355 = vld [vmem:[#allocation8 + $0xc20] sm:$0xff]
    %v4356 = vld [vmem:[#allocation8 + $0xc28] sm:$0xff]
    %v4357 = vld [vmem:[#allocation8 + $0xc30] sm:$0xff]
    %v4358 = vld [vmem:[#allocation8 + $0xc38] sm:$0xff]
    %v4359 = vld [vmem:[#allocation8 + $0xc40] sm:$0xff]
    %v4360 = vld [vmem:[#allocation8 + $0xc48] sm:$0xff]
    %v4361 = vld [vmem:[#allocation8 + $0xc50] sm:$0xff]
    %v4362 = vld [vmem:[#allocation8 + $0xc58] sm:$0xff]
    %v4363 = vld [vmem:[#allocation8 + $0xc60] sm:$0xff]
    %v4364 = vld [vmem:[#allocation8 + $0xc68] sm:$0xff]
    %v4365 = vld [vmem:[#allocation8 + $0xc70] sm:$0xff]
    %v4366 = vld [vmem:[#allocation8 + $0xc78] sm:$0xff]
    %v4367 = vld [vmem:[#allocation8 + $0xc80] sm:$0xff]
    %v4368 = vld [vmem:[#allocation8 + $0xc88] sm:$0xff]
    %v4369 = vld [vmem:[#allocation8 + $0xc90] sm:$0xff]
    %v4370 = vld [vmem:[#allocation8 + $0xc98] sm:$0xff]
    %v4371 = vld [vmem:[#allocation8 + $0xca0] sm:$0xff]
    %v4372 = vld [vmem:[#allocation8 + $0xca8] sm:$0xff]
    %v4373 = vld [vmem:[#allocation8 + $0xcb0] sm:$0xff]
    %v4374 = vld [vmem:[#allocation8 + $0xcb8] sm:$0xff]
    %v4375 = vld [vmem:[#allocation8 + $0xcc0] sm:$0xff]
    %v4376 = vld [vmem:[#allocation8 + $0xcc8] sm:$0xff]
    %v4377 = vld [vmem:[#allocation8 + $0xcd0] sm:$0xff]
    %v4378 = vld [vmem:[#allocation8 + $0xcd8] sm:$0xff]
    %v4379 = vld [vmem:[#allocation8 + $0xce0] sm:$0xff]
    %v4380 = vld [vmem:[#allocation8 + $0xce8] sm:$0xff]
    %v4381 = vld [vmem:[#allocation8 + $0xcf0] sm:$0xff]
    %v4382 = vld [vmem:[#allocation8 + $0xcf8] sm:$0xff]
    %v4383 = vld [vmem:[#allocation8 + $0xd00] sm:$0xff]
    %v4384 = vld [vmem:[#allocation8 + $0xd08] sm:$0xff]
    %v4385 = vld [vmem:[#allocation8 + $0xd10] sm:$0xff]
    %v4386 = vld [vmem:[#allocation8 + $0xd18] sm:$0xff]
    %v4387 = vld [vmem:[#allocation8 + $0xd20] sm:$0xff]
    %v4388 = vld [vmem:[#allocation8 + $0xd28] sm:$0xff]
    %v4389 = vld [vmem:[#allocation8 + $0xd30] sm:$0xff]
    %v4390 = vld [vmem:[#allocation8 + $0xd38] sm:$0xff]
    %v4391 = vld [vmem:[#allocation8 + $0xd40] sm:$0xff]
    %v4392 = vld [vmem:[#allocation8 + $0xd48] sm:$0xff]
    %v4393 = vld [vmem:[#allocation8 + $0xd50] sm:$0xff]
    %v4394 = vld [vmem:[#allocation8 + $0xd58] sm:$0xff]
    %v4395 = vld [vmem:[#allocation8 + $0xd60] sm:$0xff]
    %v4396 = vld [vmem:[#allocation8 + $0xd68] sm:$0xff]
    %v4397 = vld [vmem:[#allocation8 + $0xd70] sm:$0xff]
    %v4398 = vld [vmem:[#allocation8 + $0xd78] sm:$0xff]
    %v4399 = vld [vmem:[#allocation8 + $0xd80] sm:$0xff]
    %v4400 = vld [vmem:[#allocation8 + $0xd88] sm:$0xff]
    %v4401 = vld [vmem:[#allocation8 + $0xd90] sm:$0xff]
    %v4402 = vld [vmem:[#allocation8 + $0xd98] sm:$0xff]
    %v4403 = vld [vmem:[#allocation8 + $0xda0] sm:$0xff]
    %v4404 = vld [vmem:[#allocation8 + $0xda8] sm:$0xff]
    %v4405 = vld [vmem:[#allocation8 + $0xdb0] sm:$0xff]
    %v4406 = vld [vmem:[#allocation8 + $0xdb8] sm:$0xff]
    %v4407 = vld [vmem:[#allocation8 + $0xdc0] sm:$0xff]
    %v4408 = vld [vmem:[#allocation8 + $0xdc8] sm:$0xff]
    %v4409 = vld [vmem:[#allocation8 + $0xdd0] sm:$0xff]
    %v4410 = vld [vmem:[#allocation8 + $0xdd8] sm:$0xff]
    %v4411 = vld [vmem:[#allocation8 + $0xde0] sm:$0xff]
    %v4412 = vld [vmem:[#allocation8 + $0xde8] sm:$0xff]
    %v4413 = vld [vmem:[#allocation8 + $0xdf0] sm:$0xff]
    %v4414 = vld [vmem:[#allocation8 + $0xdf8] sm:$0xff]
    %v4415 = vld [vmem:[#allocation8 + $0xe00] sm:$0xff]
    %v4416 = vld [vmem:[#allocation8 + $0xe08] sm:$0xff]
    %v4417 = vld [vmem:[#allocation8 + $0xe10] sm:$0xff]
    %v4418 = vld [vmem:[#allocation8 + $0xe18] sm:$0xff]
    %v4419 = vld [vmem:[#allocation8 + $0xe20] sm:$0xff]
    %v4420 = vld [vmem:[#allocation8 + $0xe28] sm:$0xff]
    %v4421 = vld [vmem:[#allocation8 + $0xe30] sm:$0xff]
    %v4422 = vld [vmem:[#allocation8 + $0xe38] sm:$0xff]
    %v4423 = vld [vmem:[#allocation8 + $0xe40] sm:$0xff]
    %v4424 = vld [vmem:[#allocation8 + $0xe48] sm:$0xff]
    %v4425 = vld [vmem:[#allocation8 + $0xe50] sm:$0xff]
    %v4426 = vld [vmem:[#allocation8 + $0xe58] sm:$0xff]
    %v4427 = vld [vmem:[#allocation8 + $0xe60] sm:$0xff]
    %v4428 = vld [vmem:[#allocation8 + $0xe68] sm:$0xff]
    %v4429 = vld [vmem:[#allocation8 + $0xe70] sm:$0xff]
    %v4430 = vld [vmem:[#allocation8 + $0xe78] sm:$0xff]
    %v4431 = vld [vmem:[#allocation8 + $0xe80] sm:$0xff]
    %v4432 = vld [vmem:[#allocation8 + $0xe88] sm:$0xff]
    %v4433 = vld [vmem:[#allocation8 + $0xe90] sm:$0xff]
    %v4434 = vld [vmem:[#allocation8 + $0xe98] sm:$0xff]
    %v4435 = vld [vmem:[#allocation8 + $0xea0] sm:$0xff]
    %v4436 = vld [vmem:[#allocation8 + $0xea8] sm:$0xff]
    %v4437 = vld [vmem:[#allocation8 + $0xeb0] sm:$0xff]
    %v4438 = vld [vmem:[#allocation8 + $0xeb8] sm:$0xff]
    %v4439 = vld [vmem:[#allocation8 + $0xec0] sm:$0xff]
    %v4440 = vld [vmem:[#allocation8 + $0xec8] sm:$0xff]
    %v4441 = vld [vmem:[#allocation8 + $0xed0] sm:$0xff]
    %v4442 = vld [vmem:[#allocation8 + $0xed8] sm:$0xff]
    %v4443 = vld [vmem:[#allocation8 + $0xee0] sm:$0xff]
    %v4444 = vld [vmem:[#allocation8 + $0xee8] sm:$0xff]
    %v4445 = vld [vmem:[#allocation8 + $0xef0] sm:$0xff]
    %v4446 = vld [vmem:[#allocation8 + $0xef8] sm:$0xff]
    %v4447 = vld [vmem:[#allocation8 + $0xf00] sm:$0xff]
    %v4448 = vld [vmem:[#allocation8 + $0xf08] sm:$0xff]
    %v4449 = vld [vmem:[#allocation8 + $0xf10] sm:$0xff]
    %v4450 = vld [vmem:[#allocation8 + $0xf18] sm:$0xff]
    %v4451 = vld [vmem:[#allocation8 + $0xf20] sm:$0xff]
    %v4452 = vld [vmem:[#allocation8 + $0xf28] sm:$0xff]
    %v4453 = vld [vmem:[#allocation8 + $0xf30] sm:$0xff]
    %v4454 = vld [vmem:[#allocation8 + $0xf38] sm:$0xff]
    %v4455 = vld [vmem:[#allocation8 + $0xf40] sm:$0xff]
    %v4456 = vld [vmem:[#allocation8 + $0xf48] sm:$0xff]
    %v4457 = vld [vmem:[#allocation8 + $0xf50] sm:$0xff]
    %v4458 = vld [vmem:[#allocation8 + $0xf58] sm:$0xff]
    %v4459 = vld [vmem:[#allocation8 + $0xf60] sm:$0xff]
    %v4460 = vld [vmem:[#allocation8 + $0xf68] sm:$0xff]
    %v4461 = vld [vmem:[#allocation8 + $0xf70] sm:$0xff]
    %v4462 = vld [vmem:[#allocation8 + $0xf78] sm:$0xff]
    %v4463 = vld [vmem:[#allocation8 + $0xf80] sm:$0xff]
    %v4464 = vld [vmem:[#allocation8 + $0xf88] sm:$0xff]
    %v4465 = vld [vmem:[#allocation8 + $0xf90] sm:$0xff]
    %v4466 = vld [vmem:[#allocation8 + $0xf98] sm:$0xff]
    %v4467 = vld [vmem:[#allocation8 + $0xfa0] sm:$0xff]
    %v4468 = vld [vmem:[#allocation8 + $0xfa8] sm:$0xff]
    %v4469 = vld [vmem:[#allocation8 + $0xfb0] sm:$0xff]
    %v4470 = vld [vmem:[#allocation8 + $0xfb8] sm:$0xff]
    %v4471 = vld [vmem:[#allocation8 + $0xfc0] sm:$0xff]
    %v4472 = vld [vmem:[#allocation8 + $0xfc8] sm:$0xff]
    %v4473 = vld [vmem:[#allocation8 + $0xfd0] sm:$0xff]
    %v4474 = vld [vmem:[#allocation8 + $0xfd8] sm:$0xff]
    %v4475 = vld [vmem:[#allocation8 + $0xfe0] sm:$0xff]
    %v4476 = vld [vmem:[#allocation8 + $0xfe8] sm:$0xff]
    %v4477 = vld [vmem:[#allocation8 + $0xff0] sm:$0xff]
    %v4478 = vld [vmem:[#allocation8 + $0xff8] sm:$0xff]
    %v4479 = vld [vmem:[#allocation8 + $0x1000] sm:$0xff]
    %v4480 = vld [vmem:[#allocation8 + $0x1008] sm:$0xff]
    %v4481 = vld [vmem:[#allocation8 + $0x1010] sm:$0xff]
    %v4482 = vld [vmem:[#allocation8 + $0x1018] sm:$0xff]
    %v4483 = vld [vmem:[#allocation8 + $0x1020] sm:$0xff]
    %v4484 = vld [vmem:[#allocation8 + $0x1028] sm:$0xff]
    %v4485 = vld [vmem:[#allocation8 + $0x1030] sm:$0xff]
    %v4486 = vld [vmem:[#allocation8 + $0x1038] sm:$0xff]
    %v4487 = vld [vmem:[#allocation8 + $0x1040] sm:$0xff]
    %v4488 = vld [vmem:[#allocation8 + $0x1048] sm:$0xff]
    %v4489 = vld [vmem:[#allocation8 + $0x1050] sm:$0xff]
    %v4490 = vld [vmem:[#allocation8 + $0x1058] sm:$0xff]
    %v4491 = vld [vmem:[#allocation8 + $0x1060] sm:$0xff]
    %v4492 = vld [vmem:[#allocation8 + $0x1068] sm:$0xff]
    %v4493 = vld [vmem:[#allocation8 + $0x1070] sm:$0xff]
    %v4494 = vld [vmem:[#allocation8 + $0x1078] sm:$0xff]
    %v4495 = vld [vmem:[#allocation8 + $0x1080] sm:$0xff]
    %v4496 = vld [vmem:[#allocation8 + $0x1088] sm:$0xff]
    %v4497 = vld [vmem:[#allocation8 + $0x1090] sm:$0xff]
    %v4498 = vld [vmem:[#allocation8 + $0x1098] sm:$0xff]
    %v4499 = vld [vmem:[#allocation8 + $0x10a0] sm:$0xff]
    %v4500 = vld [vmem:[#allocation8 + $0x10a8] sm:$0xff]
    %v4501 = vld [vmem:[#allocation8 + $0x10b0] sm:$0xff]
    %v4502 = vld [vmem:[#allocation8 + $0x10b8] sm:$0xff]
    %v4503 = vld [vmem:[#allocation8 + $0x10c0] sm:$0xff]
    %v4504 = vld [vmem:[#allocation8 + $0x10c8] sm:$0xff]
    %v4505 = vld [vmem:[#allocation8 + $0x10d0] sm:$0xff]
    %v4506 = vld [vmem:[#allocation8 + $0x10d8] sm:$0xff]
    %v4507 = vld [vmem:[#allocation8 + $0x10e0] sm:$0xff]
    %v4508 = vld [vmem:[#allocation8 + $0x10e8] sm:$0xff]
    %v4509 = vld [vmem:[#allocation8 + $0x10f0] sm:$0xff]
    %v4510 = vld [vmem:[#allocation8 + $0x10f8] sm:$0xff]
    %v4511 = vld [vmem:[#allocation8 + $0x1100] sm:$0xff]
    %v4512 = vld [vmem:[#allocation8 + $0x1108] sm:$0xff]
    %v4513 = vld [vmem:[#allocation8 + $0x1110] sm:$0xff]
    %v4514 = vld [vmem:[#allocation8 + $0x1118] sm:$0xff]
    %v4515 = vld [vmem:[#allocation8 + $0x1120] sm:$0xff]
    %v4516 = vld [vmem:[#allocation8 + $0x1128] sm:$0xff]
    %v4517 = vld [vmem:[#allocation8 + $0x1130] sm:$0xff]
    %v4518 = vld [vmem:[#allocation8 + $0x1138] sm:$0xff]
    %v4519 = vld [vmem:[#allocation8 + $0x1140] sm:$0xff]
    %v4520 = vld [vmem:[#allocation8 + $0x1148] sm:$0xff]
    %v4521 = vld [vmem:[#allocation8 + $0x1150] sm:$0xff]
    %v4522 = vld [vmem:[#allocation8 + $0x1158] sm:$0xff]
    %v4523 = vld [vmem:[#allocation8 + $0x1160] sm:$0xff]
    %v4524 = vld [vmem:[#allocation8 + $0x1168] sm:$0xff]
    %v4525 = vld [vmem:[#allocation8 + $0x1170] sm:$0xff]
    %v4526 = vld [vmem:[#allocation8 + $0x1178] sm:$0xff]
    %v4527 = vld [vmem:[#allocation8 + $0x1180] sm:$0xff]
    %v4528 = vld [vmem:[#allocation8 + $0x1188] sm:$0xff]
    %v4529 = vld [vmem:[#allocation8 + $0x1190] sm:$0xff]
    %v4530 = vld [vmem:[#allocation8 + $0x1198] sm:$0xff]
    %v4531 = vld [vmem:[#allocation8 + $0x11a0] sm:$0xff]
    %v4532 = vld [vmem:[#allocation8 + $0x11a8] sm:$0xff]
    %v4533 = vld [vmem:[#allocation8 + $0x11b0] sm:$0xff]
    %v4534 = vld [vmem:[#allocation8 + $0x11b8] sm:$0xff]
    %v4535 = vld [vmem:[#allocation8 + $0x11c0] sm:$0xff]
    %v4536 = vld [vmem:[#allocation8 + $0x11c8] sm:$0xff]
    %v4537 = vld [vmem:[#allocation8 + $0x11d0] sm:$0xff]
    %v4538 = vld [vmem:[#allocation8 + $0x11d8] sm:$0xff]
    %v4539 = vld [vmem:[#allocation8 + $0x11e0] sm:$0xff]
    %v4540 = vld [vmem:[#allocation8 + $0x11e8] sm:$0xff]
    %v4541 = vld [vmem:[#allocation8 + $0x11f0] sm:$0xff]
    %v4542 = vld [vmem:[#allocation8 + $0x11f8] sm:$0xff]
    %v4543 = vld [vmem:[#allocation8 + $0x1200] sm:$0xff]
    %v4544 = vld [vmem:[#allocation8 + $0x1208] sm:$0xff]
    %v4545 = vld [vmem:[#allocation8 + $0x1210] sm:$0xff]
    %v4546 = vld [vmem:[#allocation8 + $0x1218] sm:$0xff]
    %v4547 = vld [vmem:[#allocation8 + $0x1220] sm:$0xff]
    %v4548 = vld [vmem:[#allocation8 + $0x1228] sm:$0xff]
    %v4549 = vld [vmem:[#allocation8 + $0x1230] sm:$0xff]
    %v4550 = vld [vmem:[#allocation8 + $0x1238] sm:$0xff]
    %v4551 = vld [vmem:[#allocation8 + $0x1240] sm:$0xff]
    %v4552 = vld [vmem:[#allocation8 + $0x1248] sm:$0xff]
    %v4553 = vld [vmem:[#allocation8 + $0x1250] sm:$0xff]
    %v4554 = vld [vmem:[#allocation8 + $0x1258] sm:$0xff]
    %v4555 = vld [vmem:[#allocation8 + $0x1260] sm:$0xff]
    %v4556 = vld [vmem:[#allocation8 + $0x1268] sm:$0xff]
    %v4557 = vld [vmem:[#allocation8 + $0x1270] sm:$0xff]
    %v4558 = vld [vmem:[#allocation8 + $0x1278] sm:$0xff]
    %v4559 = vld [vmem:[#allocation8 + $0x1280] sm:$0xff]
    %v4560 = vld [vmem:[#allocation8 + $0x1288] sm:$0xff]
    %v4561 = vld [vmem:[#allocation8 + $0x1290] sm:$0xff]
    %v4562 = vld [vmem:[#allocation8 + $0x1298] sm:$0xff]
    %v4563 = vld [vmem:[#allocation8 + $0x12a0] sm:$0xff]
    %v4564 = vld [vmem:[#allocation8 + $0x12a8] sm:$0xff]
    %v4565 = vld [vmem:[#allocation8 + $0x12b0] sm:$0xff]
    %v4566 = vld [vmem:[#allocation8 + $0x12b8] sm:$0xff]
    %v4567 = vld [vmem:[#allocation8 + $0x12c0] sm:$0xff]
    %v4568 = vld [vmem:[#allocation8 + $0x12c8] sm:$0xff]
    %v4569 = vld [vmem:[#allocation8 + $0x12d0] sm:$0xff]
    %v4570 = vld [vmem:[#allocation8 + $0x12d8] sm:$0xff]
    %v4571 = vld [vmem:[#allocation8 + $0x12e0] sm:$0xff]
    %v4572 = vld [vmem:[#allocation8 + $0x12e8] sm:$0xff]
    %v4573 = vld [vmem:[#allocation8 + $0x12f0] sm:$0xff]
    %v4574 = vld [vmem:[#allocation8 + $0x12f8] sm:$0xff]
    %v4575 = vld [vmem:[#allocation8 + $0x1300] sm:$0xff]
    %v4576 = vld [vmem:[#allocation8 + $0x1308] sm:$0xff]
    %v4577 = vld [vmem:[#allocation8 + $0x1310] sm:$0xff]
    %v4578 = vld [vmem:[#allocation8 + $0x1318] sm:$0xff]
    %v4579 = vld [vmem:[#allocation8 + $0x1320] sm:$0xff]
    %v4580 = vld [vmem:[#allocation8 + $0x1328] sm:$0xff]
    %v4581 = vld [vmem:[#allocation8 + $0x1330] sm:$0xff]
    %v4582 = vld [vmem:[#allocation8 + $0x1338] sm:$0xff]
    %v4583 = vld [vmem:[#allocation8 + $0x1340] sm:$0xff]
    %v4584 = vld [vmem:[#allocation8 + $0x1348] sm:$0xff]
    %v4585 = vld [vmem:[#allocation8 + $0x1350] sm:$0xff]
    %v4586 = vld [vmem:[#allocation8 + $0x1358] sm:$0xff]
    %v4587 = vld [vmem:[#allocation8 + $0x1360] sm:$0xff]
    %v4588 = vld [vmem:[#allocation8 + $0x1368] sm:$0xff]
    %v4589 = vld [vmem:[#allocation8 + $0x1370] sm:$0xff]
    %v4590 = vld [vmem:[#allocation8 + $0x1378] sm:$0xff]
    %v4591 = vld [vmem:[#allocation8 + $0x1380] sm:$0xff]
    %v4592 = vld [vmem:[#allocation8 + $0x1388] sm:$0xff]
    %v4593 = vld [vmem:[#allocation8 + $0x1390] sm:$0xff]
    %v4594 = vld [vmem:[#allocation8 + $0x1398] sm:$0xff]
    %v4595 = vld [vmem:[#allocation8 + $0x13a0] sm:$0xff]
    %v4596 = vld [vmem:[#allocation8 + $0x13a8] sm:$0xff]
    %v4597 = vld [vmem:[#allocation8 + $0x13b0] sm:$0xff]
    %v4598 = vld [vmem:[#allocation8 + $0x13b8] sm:$0xff]
    %v4599 = vld [vmem:[#allocation8 + $0x13c0] sm:$0xff]
    %v4600 = vld [vmem:[#allocation8 + $0x13c8] sm:$0xff]
    %v4601 = vld [vmem:[#allocation8 + $0x13d0] sm:$0xff]
    %v4602 = vld [vmem:[#allocation8 + $0x13d8] sm:$0xff]
    %v4603 = vld [vmem:[#allocation8 + $0x13e0] sm:$0xff]
    %v4604 = vld [vmem:[#allocation8 + $0x13e8] sm:$0xff]
    %v4605 = vld [vmem:[#allocation8 + $0x13f0] sm:$0xff]
    %v4606 = vld [vmem:[#allocation8 + $0x13f8] sm:$0xff]
    %v4607 = vld [vmem:[#allocation8 + $0x1400] sm:$0xff]
    %v4608 = vld [vmem:[#allocation8 + $0x1408] sm:$0xff]
    %v4609 = vld [vmem:[#allocation8 + $0x1410] sm:$0xff]
    %v4610 = vld [vmem:[#allocation8 + $0x1418] sm:$0xff]
    %v4611 = vld [vmem:[#allocation8 + $0x1420] sm:$0xff]
    %v4612 = vld [vmem:[#allocation8 + $0x1428] sm:$0xff]
    %v4613 = vld [vmem:[#allocation8 + $0x1430] sm:$0xff]
    %v4614 = vld [vmem:[#allocation8 + $0x1438] sm:$0xff]
    %v4615 = vld [vmem:[#allocation8 + $0x1440] sm:$0xff]
    %v4616 = vld [vmem:[#allocation8 + $0x1448] sm:$0xff]
    %v4617 = vld [vmem:[#allocation8 + $0x1450] sm:$0xff]
    %v4618 = vld [vmem:[#allocation8 + $0x1458] sm:$0xff]
    %v4619 = vld [vmem:[#allocation8 + $0x1460] sm:$0xff]
    %v4620 = vld [vmem:[#allocation8 + $0x1468] sm:$0xff]
    %v4621 = vld [vmem:[#allocation8 + $0x1470] sm:$0xff]
    %v4622 = vld [vmem:[#allocation8 + $0x1478] sm:$0xff]
    %v4623 = vld [vmem:[#allocation8 + $0x1480] sm:$0xff]
    %v4624 = vld [vmem:[#allocation8 + $0x1488] sm:$0xff]
    %v4625 = vld [vmem:[#allocation8 + $0x1490] sm:$0xff]
    %v4626 = vld [vmem:[#allocation8 + $0x1498] sm:$0xff]
    %v4627 = vld [vmem:[#allocation8 + $0x14a0] sm:$0xff]
    %v4628 = vld [vmem:[#allocation8 + $0x14a8] sm:$0xff]
    %v4629 = vld [vmem:[#allocation8 + $0x14b0] sm:$0xff]
    %v4630 = vld [vmem:[#allocation8 + $0x14b8] sm:$0xff]
    %v4631 = vld [vmem:[#allocation8 + $0x14c0] sm:$0xff]
    %v4632 = vld [vmem:[#allocation8 + $0x14c8] sm:$0xff]
    %v4633 = vld [vmem:[#allocation8 + $0x14d0] sm:$0xff]
    %v4634 = vld [vmem:[#allocation8 + $0x14d8] sm:$0xff]
    %v4635 = vld [vmem:[#allocation8 + $0x14e0] sm:$0xff]
    %v4636 = vld [vmem:[#allocation8 + $0x14e8] sm:$0xff]
    %v4637 = vld [vmem:[#allocation8 + $0x14f0] sm:$0xff]
    %v4638 = vld [vmem:[#allocation8 + $0x14f8] sm:$0xff]
    %v4639 = vld [vmem:[#allocation8 + $0x1500] sm:$0xff]
    %v4640 = vld [vmem:[#allocation8 + $0x1508] sm:$0xff]
    %v4641 = vld [vmem:[#allocation8 + $0x1510] sm:$0xff]
    %v4642 = vld [vmem:[#allocation8 + $0x1518] sm:$0xff]
    %v4643 = vld [vmem:[#allocation8 + $0x1520] sm:$0xff]
    %v4644 = vld [vmem:[#allocation8 + $0x1528] sm:$0xff]
    %v4645 = vld [vmem:[#allocation8 + $0x1530] sm:$0xff]
    %v4646 = vld [vmem:[#allocation8 + $0x1538] sm:$0xff]
    %v4647 = vld [vmem:[#allocation8 + $0x1540] sm:$0xff]
    %v4648 = vld [vmem:[#allocation8 + $0x1548] sm:$0xff]
    %v4649 = vld [vmem:[#allocation8 + $0x1550] sm:$0xff]
    %v4650 = vld [vmem:[#allocation8 + $0x1558] sm:$0xff]
    %v4651 = vld [vmem:[#allocation8 + $0x1560] sm:$0xff]
    %v4652 = vld [vmem:[#allocation8 + $0x1568] sm:$0xff]
    %v4653 = vld [vmem:[#allocation8 + $0x1570] sm:$0xff]
    %v4654 = vld [vmem:[#allocation8 + $0x1578] sm:$0xff]
    %v4655 = vld [vmem:[#allocation8 + $0x1580] sm:$0xff]
    %v4656 = vld [vmem:[#allocation8 + $0x1588] sm:$0xff]
    %v4657 = vld [vmem:[#allocation8 + $0x1590] sm:$0xff]
    %v4658 = vld [vmem:[#allocation8 + $0x1598] sm:$0xff]
    %v4659 = vld [vmem:[#allocation8 + $0x15a0] sm:$0xff]
    %v4660 = vld [vmem:[#allocation8 + $0x15a8] sm:$0xff]
    %v4661 = vld [vmem:[#allocation8 + $0x15b0] sm:$0xff]
    %v4662 = vld [vmem:[#allocation8 + $0x15b8] sm:$0xff]
    %v4663 = vld [vmem:[#allocation8 + $0x15c0] sm:$0xff]
    %v4664 = vld [vmem:[#allocation8 + $0x15c8] sm:$0xff]
    %v4665 = vld [vmem:[#allocation8 + $0x15d0] sm:$0xff]
    %v4666 = vld [vmem:[#allocation8 + $0x15d8] sm:$0xff]
    %v4667 = vld [vmem:[#allocation8 + $0x15e0] sm:$0xff]
    %v4668 = vld [vmem:[#allocation8 + $0x15e8] sm:$0xff]
    %v4669 = vld [vmem:[#allocation8 + $0x15f0] sm:$0xff]
    %v4670 = vld [vmem:[#allocation8 + $0x15f8] sm:$0xff]
    %v4671 = vld [vmem:[#allocation8 + $0x1600] sm:$0xff]
    %v4672 = vld [vmem:[#allocation8 + $0x1608] sm:$0xff]
    %v4673 = vld [vmem:[#allocation8 + $0x1610] sm:$0xff]
    %v4674 = vld [vmem:[#allocation8 + $0x1618] sm:$0xff]
    %v4675 = vld [vmem:[#allocation8 + $0x1620] sm:$0xff]
    %v4676 = vld [vmem:[#allocation8 + $0x1628] sm:$0xff]
    %v4677 = vld [vmem:[#allocation8 + $0x1630] sm:$0xff]
    %v4678 = vld [vmem:[#allocation8 + $0x1638] sm:$0xff]
    %v4679 = vld [vmem:[#allocation8 + $0x1640] sm:$0xff]
    %v4680 = vld [vmem:[#allocation8 + $0x1648] sm:$0xff]
    %v4681 = vld [vmem:[#allocation8 + $0x1650] sm:$0xff]
    %v4682 = vld [vmem:[#allocation8 + $0x1658] sm:$0xff]
    %v4683 = vld [vmem:[#allocation8 + $0x1660] sm:$0xff]
    %v4684 = vld [vmem:[#allocation8 + $0x1668] sm:$0xff]
    %v4685 = vld [vmem:[#allocation8 + $0x1670] sm:$0xff]
    %v4686 = vld [vmem:[#allocation8 + $0x1678] sm:$0xff]
    %v4687 = vld [vmem:[#allocation8 + $0x1680] sm:$0xff]
    %v4688 = vld [vmem:[#allocation8 + $0x1688] sm:$0xff]
    %v4689 = vld [vmem:[#allocation8 + $0x1690] sm:$0xff]
    %v4690 = vld [vmem:[#allocation8 + $0x1698] sm:$0xff]
    %v4691 = vld [vmem:[#allocation8 + $0x16a0] sm:$0xff]
    %v4692 = vld [vmem:[#allocation8 + $0x16a8] sm:$0xff]
    %v4693 = vld [vmem:[#allocation8 + $0x16b0] sm:$0xff]
    %v4694 = vld [vmem:[#allocation8 + $0x16b8] sm:$0xff]
    %v4695 = vld [vmem:[#allocation8 + $0x16c0] sm:$0xff]
    %v4696 = vld [vmem:[#allocation8 + $0x16c8] sm:$0xff]
    %v4697 = vld [vmem:[#allocation8 + $0x16d0] sm:$0xff]
    %v4698 = vld [vmem:[#allocation8 + $0x16d8] sm:$0xff]
    %v4699 = vld [vmem:[#allocation8 + $0x16e0] sm:$0xff]
    %v4700 = vld [vmem:[#allocation8 + $0x16e8] sm:$0xff]
    %v4701 = vld [vmem:[#allocation8 + $0x16f0] sm:$0xff]
    %v4702 = vld [vmem:[#allocation8 + $0x16f8] sm:$0xff]
    %v4703 = vld [vmem:[#allocation8 + $0x1700] sm:$0xff]
    %v4704 = vld [vmem:[#allocation8 + $0x1708] sm:$0xff]
    %v4705 = vld [vmem:[#allocation8 + $0x1710] sm:$0xff]
    %v4706 = vld [vmem:[#allocation8 + $0x1718] sm:$0xff]
    %v4707 = vld [vmem:[#allocation8 + $0x1720] sm:$0xff]
    %v4708 = vld [vmem:[#allocation8 + $0x1728] sm:$0xff]
    %v4709 = vld [vmem:[#allocation8 + $0x1730] sm:$0xff]
    %v4710 = vld [vmem:[#allocation8 + $0x1738] sm:$0xff]
    %v4711 = vld [vmem:[#allocation8 + $0x1740] sm:$0xff]
    %v4712 = vld [vmem:[#allocation8 + $0x1748] sm:$0xff]
    %v4713 = vld [vmem:[#allocation8 + $0x1750] sm:$0xff]
    %v4714 = vld [vmem:[#allocation8 + $0x1758] sm:$0xff]
    %v4715 = vld [vmem:[#allocation8 + $0x1760] sm:$0xff]
    %v4716 = vld [vmem:[#allocation8 + $0x1768] sm:$0xff]
    %v4717 = vld [vmem:[#allocation8 + $0x1770] sm:$0xff]
    %v4718 = vld [vmem:[#allocation8 + $0x1778] sm:$0xff]
    %v4719 = vld [vmem:[#allocation8 + $0x1780] sm:$0xff]
    %v4720 = vld [vmem:[#allocation8 + $0x1788] sm:$0xff]
    %v4721 = vld [vmem:[#allocation8 + $0x1790] sm:$0xff]
    %v4722 = vld [vmem:[#allocation8 + $0x1798] sm:$0xff]
    %v4723 = vld [vmem:[#allocation8 + $0x17a0] sm:$0xff]
    %v4724 = vld [vmem:[#allocation8 + $0x17a8] sm:$0xff]
    %v4725 = vld [vmem:[#allocation8 + $0x17b0] sm:$0xff]
    %v4726 = vld [vmem:[#allocation8 + $0x17b8] sm:$0xff]
    %v4727 = vld [vmem:[#allocation8 + $0x17c0] sm:$0xff]
    %v4728 = vld [vmem:[#allocation8 + $0x17c8] sm:$0xff]
    %v4729 = vld [vmem:[#allocation8 + $0x17d0] sm:$0xff]
    %v4730 = vld [vmem:[#allocation8 + $0x17d8] sm:$0xff]
    %v4731 = vld [vmem:[#allocation8 + $0x17e0] sm:$0xff]
    %v4732 = vld [vmem:[#allocation8 + $0x17e8] sm:$0xff]
    %v4733 = vld [vmem:[#allocation8 + $0x17f0] sm:$0xff]
    %v4734 = vld [vmem:[#allocation8 + $0x17f8] sm:$0xff]
    %v4735 = vld [vmem:[#allocation8 + $0x1800] sm:$0xff]
    %v4736 = vld [vmem:[#allocation8 + $0x1808] sm:$0xff]
    %v4737 = vld [vmem:[#allocation8 + $0x1810] sm:$0xff]
    %v4738 = vld [vmem:[#allocation8 + $0x1818] sm:$0xff]
    %v4739 = vld [vmem:[#allocation8 + $0x1820] sm:$0xff]
    %v4740 = vld [vmem:[#allocation8 + $0x1828] sm:$0xff]
    %v4741 = vld [vmem:[#allocation8 + $0x1830] sm:$0xff]
    %v4742 = vld [vmem:[#allocation8 + $0x1838] sm:$0xff]
    %v4743 = vld [vmem:[#allocation8 + $0x1840] sm:$0xff]
    %v4744 = vld [vmem:[#allocation8 + $0x1848] sm:$0xff]
    %v4745 = vld [vmem:[#allocation8 + $0x1850] sm:$0xff]
    %v4746 = vld [vmem:[#allocation8 + $0x1858] sm:$0xff]
    %v4747 = vld [vmem:[#allocation8 + $0x1860] sm:$0xff]
    %v4748 = vld [vmem:[#allocation8 + $0x1868] sm:$0xff]
    %v4749 = vld [vmem:[#allocation8 + $0x1870] sm:$0xff]
    %v4750 = vld [vmem:[#allocation8 + $0x1878] sm:$0xff]
    %v4751 = vld [vmem:[#allocation8 + $0x1880] sm:$0xff]
    %v4752 = vld [vmem:[#allocation8 + $0x1888] sm:$0xff]
    %v4753 = vld [vmem:[#allocation8 + $0x1890] sm:$0xff]
    %v4754 = vld [vmem:[#allocation8 + $0x1898] sm:$0xff]
    %v4755 = vld [vmem:[#allocation8 + $0x18a0] sm:$0xff]
    %v4756 = vld [vmem:[#allocation8 + $0x18a8] sm:$0xff]
    %v4757 = vld [vmem:[#allocation8 + $0x18b0] sm:$0xff]
    %v4758 = vld [vmem:[#allocation8 + $0x18b8] sm:$0xff]
    %v4759 = vld [vmem:[#allocation8 + $0x18c0] sm:$0xff]
    %v4760 = vld [vmem:[#allocation8 + $0x18c8] sm:$0xff]
    %v4761 = vld [vmem:[#allocation8 + $0x18d0] sm:$0xff]
    %v4762 = vld [vmem:[#allocation8 + $0x18d8] sm:$0xff]
    %v4763 = vld [vmem:[#allocation8 + $0x18e0] sm:$0xff]
    %v4764 = vld [vmem:[#allocation8 + $0x18e8] sm:$0xff]
    %v4765 = vld [vmem:[#allocation8 + $0x18f0] sm:$0xff]
    %v4766 = vld [vmem:[#allocation8 + $0x18f8] sm:$0xff]
    %v4767 = vld [vmem:[#allocation10] sm:$0xff]
    %v4768 = vld [vmem:[#allocation10 + $0x8] sm:$0x3]
    %v4771 = vlaneseq
    %v4772 = vshrl.u32 %v4771, 7
    %v4773 = vsub.s32 0, %v4772
    %v4774 = vrot.slane %v4767, %v4773
    %v4775 = vlaneseq
    %v4776 = vshrl.u32 %v4775, 7
    %v4777 = vsub.s32 1, %v4776
    %v4778 = vrot.slane %v4767, %v4777
    %v4779 = vlaneseq
    %v4780 = vshrl.u32 %v4779, 7
    %v4781 = vsub.s32 2, %v4780
    %v4782 = vrot.slane %v4767, %v4781
    %v4783 = vlaneseq
    %v4784 = vshrl.u32 %v4783, 7
    %v4785 = vsub.s32 3, %v4784
    %v4786 = vrot.slane %v4767, %v4785
    %v4787 = vlaneseq
    %v4788 = vshrl.u32 %v4787, 7
    %v4789 = vsub.s32 4, %v4788
    %v4790 = vrot.slane %v4767, %v4789
    %v4791 = vlaneseq
    %v4792 = vshrl.u32 %v4791, 7
    %v4793 = vsub.s32 5, %v4792
    %v4794 = vrot.slane %v4767, %v4793
    %v4795 = vlaneseq
    %v4796 = vshrl.u32 %v4795, 7
    %v4797 = vsub.s32 6, %v4796
    %v4798 = vrot.slane %v4767, %v4797
    %v4799 = vlaneseq
    %v4800 = vshrl.u32 %v4799, 7
    %v4801 = vsub.s32 7, %v4800
    %v4802 = vrot.slane %v4767, %v4801
    %v4803 = vlaneseq
    %v4804 = vshrl.u32 %v4803, 7
    %v4805 = vsub.s32 0, %v4804
    %v4806 = vrot.slane %v4768, %v4805
    %v4807 = vlaneseq
    %v4808 = vshrl.u32 %v4807, 7
    %v4809 = vsub.s32 1, %v4808
    %v4810 = vrot.slane %v4768, %v4809
    %v5621 = vunpack.c.l.b16 %v3967
    %v5622 = vunpack.c.h.b16 %v3967
    %v5623 = vunpack.c.l.b16 %v3968
    %v5624 = vunpack.c.h.b16 %v3968
    %v5625 = vunpack.c.l.b16 %v3969
    %v5626 = vunpack.c.h.b16 %v3969
    %v5627 = vunpack.c.l.b16 %v3970
    %v5628 = vunpack.c.h.b16 %v3970
    %v5629 = vunpack.c.l.b16 %v3971
    %v5630 = vunpack.c.h.b16 %v3971
    %v5631 = vunpack.c.l.b16 %v3972
    %v5632 = vunpack.c.h.b16 %v3972
    %v5633 = vunpack.c.l.b16 %v3973
    %v5634 = vunpack.c.h.b16 %v3973
    %v5635 = vunpack.c.l.b16 %v3974
    %v5636 = vunpack.c.h.b16 %v3974
    %v5637 = vunpack.c.l.b16 %v3975
    %v5638 = vunpack.c.h.b16 %v3975
    %v5639 = vunpack.c.l.b16 %v3976
    %v5640 = vunpack.c.h.b16 %v3976
    %v5641 = vunpack.c.l.b16 %v3977
    %v5642 = vunpack.c.h.b16 %v3977
    %v5643 = vunpack.c.l.b16 %v3978
    %v5644 = vunpack.c.h.b16 %v3978
    %v5645 = vunpack.c.l.b16 %v3979
    %v5646 = vunpack.c.h.b16 %v3979
    %v5647 = vunpack.c.l.b16 %v3980
    %v5648 = vunpack.c.h.b16 %v3980
    %v5649 = vunpack.c.l.b16 %v3981
    %v5650 = vunpack.c.h.b16 %v3981
    %v5651 = vunpack.c.l.b16 %v3982
    %v5652 = vunpack.c.h.b16 %v3982
    %v5653 = vunpack.c.l.b16 %v3983
    %v5654 = vunpack.c.h.b16 %v3983
    %v5655 = vunpack.c.l.b16 %v3984
    %v5656 = vunpack.c.h.b16 %v3984
    %v5657 = vunpack.c.l.b16 %v3985
    %v5658 = vunpack.c.h.b16 %v3985
    %v5659 = vunpack.c.l.b16 %v3986
    %v5660 = vunpack.c.h.b16 %v3986
    %v5661 = vunpack.c.l.b16 %v3987
    %v5662 = vunpack.c.h.b16 %v3987
    %v5663 = vunpack.c.l.b16 %v3988
    %v5664 = vunpack.c.h.b16 %v3988
    %v5665 = vunpack.c.l.b16 %v3989
    %v5666 = vunpack.c.h.b16 %v3989
    %v5667 = vunpack.c.l.b16 %v3990
    %v5668 = vunpack.c.h.b16 %v3990
    %v5669 = vunpack.c.l.b16 %v3991
    %v5670 = vunpack.c.h.b16 %v3991
    %v5671 = vunpack.c.l.b16 %v3992
    %v5672 = vunpack.c.h.b16 %v3992
    %v5673 = vunpack.c.l.b16 %v3993
    %v5674 = vunpack.c.h.b16 %v3993
    %v5675 = vunpack.c.l.b16 %v3994
    %v5676 = vunpack.c.h.b16 %v3994
    %v5677 = vunpack.c.l.b16 %v3995
    %v5678 = vunpack.c.h.b16 %v3995
    %v5679 = vunpack.c.l.b16 %v3996
    %v5680 = vunpack.c.h.b16 %v3996
    %v5681 = vunpack.c.l.b16 %v3997
    %v5682 = vunpack.c.h.b16 %v3997
    %v5683 = vunpack.c.l.b16 %v3998
    %v5684 = vunpack.c.h.b16 %v3998
    %v5685 = vunpack.c.l.b16 %v3999
    %v5686 = vunpack.c.h.b16 %v3999
    %v5687 = vunpack.c.l.b16 %v4000
    %v5688 = vunpack.c.h.b16 %v4000
    %v5689 = vunpack.c.l.b16 %v4001
    %v5690 = vunpack.c.h.b16 %v4001
    %v5691 = vunpack.c.l.b16 %v4002
    %v5692 = vunpack.c.h.b16 %v4002
    %v5693 = vunpack.c.l.b16 %v4003
    %v5694 = vunpack.c.h.b16 %v4003
    %v5695 = vunpack.c.l.b16 %v4004
    %v5696 = vunpack.c.h.b16 %v4004
    %v5697 = vunpack.c.l.b16 %v4005
    %v5698 = vunpack.c.h.b16 %v4005
    %v5699 = vunpack.c.l.b16 %v4006
    %v5700 = vunpack.c.h.b16 %v4006
    %v5701 = vunpack.c.l.b16 %v4007
    %v5702 = vunpack.c.h.b16 %v4007
    %v5703 = vunpack.c.l.b16 %v4008
    %v5704 = vunpack.c.h.b16 %v4008
    %v5705 = vunpack.c.l.b16 %v4009
    %v5706 = vunpack.c.h.b16 %v4009
    %v5707 = vunpack.c.l.b16 %v4010
    %v5708 = vunpack.c.h.b16 %v4010
    %v5709 = vunpack.c.l.b16 %v4011
    %v5710 = vunpack.c.h.b16 %v4011
    %v5711 = vunpack.c.l.b16 %v4012
    %v5712 = vunpack.c.h.b16 %v4012
    %v5713 = vunpack.c.l.b16 %v4013
    %v5714 = vunpack.c.h.b16 %v4013
    %v5715 = vunpack.c.l.b16 %v4014
    %v5716 = vunpack.c.h.b16 %v4014
    %v5717 = vunpack.c.l.b16 %v4015
    %v5718 = vunpack.c.h.b16 %v4015
    %v5719 = vunpack.c.l.b16 %v4016
    %v5720 = vunpack.c.h.b16 %v4016
    %v5721 = vunpack.c.l.b16 %v4017
    %v5722 = vunpack.c.h.b16 %v4017
    %v5723 = vunpack.c.l.b16 %v4018
    %v5724 = vunpack.c.h.b16 %v4018
    %v5725 = vunpack.c.l.b16 %v4019
    %v5726 = vunpack.c.h.b16 %v4019
    %v5727 = vunpack.c.l.b16 %v4020
    %v5728 = vunpack.c.h.b16 %v4020
    %v5729 = vunpack.c.l.b16 %v4021
    %v5730 = vunpack.c.h.b16 %v4021
    %v5731 = vunpack.c.l.b16 %v4022
    %v5732 = vunpack.c.h.b16 %v4022
    %v5733 = vunpack.c.l.b16 %v4023
    %v5734 = vunpack.c.h.b16 %v4023
    %v5735 = vunpack.c.l.b16 %v4024
    %v5736 = vunpack.c.h.b16 %v4024
    %v5737 = vunpack.c.l.b16 %v4025
    %v5738 = vunpack.c.h.b16 %v4025
    %v5739 = vunpack.c.l.b16 %v4026
    %v5740 = vunpack.c.h.b16 %v4026
    %v5741 = vunpack.c.l.b16 %v4027
    %v5742 = vunpack.c.h.b16 %v4027
    %v5743 = vunpack.c.l.b16 %v4028
    %v5744 = vunpack.c.h.b16 %v4028
    %v5745 = vunpack.c.l.b16 %v4029
    %v5746 = vunpack.c.h.b16 %v4029
    %v5747 = vunpack.c.l.b16 %v4030
    %v5748 = vunpack.c.h.b16 %v4030
    %v5749 = vunpack.c.l.b16 %v4031
    %v5750 = vunpack.c.h.b16 %v4031
    %v5751 = vunpack.c.l.b16 %v4032
    %v5752 = vunpack.c.h.b16 %v4032
    %v5753 = vunpack.c.l.b16 %v4033
    %v5754 = vunpack.c.h.b16 %v4033
    %v5755 = vunpack.c.l.b16 %v4034
    %v5756 = vunpack.c.h.b16 %v4034
    %v5757 = vunpack.c.l.b16 %v4035
    %v5758 = vunpack.c.h.b16 %v4035
    %v5759 = vunpack.c.l.b16 %v4036
    %v5760 = vunpack.c.h.b16 %v4036
    %v5761 = vunpack.c.l.b16 %v4037
    %v5762 = vunpack.c.h.b16 %v4037
    %v5763 = vunpack.c.l.b16 %v4038
    %v5764 = vunpack.c.h.b16 %v4038
    %v5765 = vunpack.c.l.b16 %v4039
    %v5766 = vunpack.c.h.b16 %v4039
    %v5767 = vunpack.c.l.b16 %v4040
    %v5768 = vunpack.c.h.b16 %v4040
    %v5769 = vunpack.c.l.b16 %v4041
    %v5770 = vunpack.c.h.b16 %v4041
    %v5771 = vunpack.c.l.b16 %v4042
    %v5772 = vunpack.c.h.b16 %v4042
    %v5773 = vunpack.c.l.b16 %v4043
    %v5774 = vunpack.c.h.b16 %v4043
    %v5775 = vunpack.c.l.b16 %v4044
    %v5776 = vunpack.c.h.b16 %v4044
    %v5777 = vunpack.c.l.b16 %v4045
    %v5778 = vunpack.c.h.b16 %v4045
    %v5779 = vunpack.c.l.b16 %v4046
    %v5780 = vunpack.c.h.b16 %v4046
    %v5781 = vunpack.c.l.b16 %v4047
    %v5782 = vunpack.c.h.b16 %v4047
    %v5783 = vunpack.c.l.b16 %v4048
    %v5784 = vunpack.c.h.b16 %v4048
    %v5785 = vunpack.c.l.b16 %v4049
    %v5786 = vunpack.c.h.b16 %v4049
    %v5787 = vunpack.c.l.b16 %v4050
    %v5788 = vunpack.c.h.b16 %v4050
    %v5789 = vunpack.c.l.b16 %v4051
    %v5790 = vunpack.c.h.b16 %v4051
    %v5791 = vunpack.c.l.b16 %v4052
    %v5792 = vunpack.c.h.b16 %v4052
    %v5793 = vunpack.c.l.b16 %v4053
    %v5794 = vunpack.c.h.b16 %v4053
    %v5795 = vunpack.c.l.b16 %v4054
    %v5796 = vunpack.c.h.b16 %v4054
    %v5797 = vunpack.c.l.b16 %v4055
    %v5798 = vunpack.c.h.b16 %v4055
    %v5799 = vunpack.c.l.b16 %v4056
    %v5800 = vunpack.c.h.b16 %v4056
    %v5801 = vunpack.c.l.b16 %v4057
    %v5802 = vunpack.c.h.b16 %v4057
    %v5803 = vunpack.c.l.b16 %v4058
    %v5804 = vunpack.c.h.b16 %v4058
    %v5805 = vunpack.c.l.b16 %v4059
    %v5806 = vunpack.c.h.b16 %v4059
    %v5807 = vunpack.c.l.b16 %v4060
    %v5808 = vunpack.c.h.b16 %v4060
    %v5809 = vunpack.c.l.b16 %v4061
    %v5810 = vunpack.c.h.b16 %v4061
    %v5811 = vunpack.c.l.b16 %v4062
    %v5812 = vunpack.c.h.b16 %v4062
    %v5813 = vunpack.c.l.b16 %v4063
    %v5814 = vunpack.c.h.b16 %v4063
    %v5815 = vunpack.c.l.b16 %v4064
    %v5816 = vunpack.c.h.b16 %v4064
    %v5817 = vunpack.c.l.b16 %v4065
    %v5818 = vunpack.c.h.b16 %v4065
    %v5819 = vunpack.c.l.b16 %v4066
    %v5820 = vunpack.c.h.b16 %v4066
    %v5821 = vunpack.c.l.b16 %v4067
    %v5822 = vunpack.c.h.b16 %v4067
    %v5823 = vunpack.c.l.b16 %v4068
    %v5824 = vunpack.c.h.b16 %v4068
    %v5825 = vunpack.c.l.b16 %v4069
    %v5826 = vunpack.c.h.b16 %v4069
    %v5827 = vunpack.c.l.b16 %v4070
    %v5828 = vunpack.c.h.b16 %v4070
    %v5829 = vunpack.c.l.b16 %v4071
    %v5830 = vunpack.c.h.b16 %v4071
    %v5831 = vunpack.c.l.b16 %v4072
    %v5832 = vunpack.c.h.b16 %v4072
    %v5833 = vunpack.c.l.b16 %v4073
    %v5834 = vunpack.c.h.b16 %v4073
    %v5835 = vunpack.c.l.b16 %v4074
    %v5836 = vunpack.c.h.b16 %v4074
    %v5837 = vunpack.c.l.b16 %v4075
    %v5838 = vunpack.c.h.b16 %v4075
    %v5839 = vunpack.c.l.b16 %v4076
    %v5840 = vunpack.c.h.b16 %v4076
    %v5841 = vunpack.c.l.b16 %v4077
    %v5842 = vunpack.c.h.b16 %v4077
    %v5843 = vunpack.c.l.b16 %v4078
    %v5844 = vunpack.c.h.b16 %v4078
    %v5845 = vunpack.c.l.b16 %v4079
    %v5846 = vunpack.c.h.b16 %v4079
    %v5847 = vunpack.c.l.b16 %v4080
    %v5848 = vunpack.c.h.b16 %v4080
    %v5849 = vunpack.c.l.b16 %v4081
    %v5850 = vunpack.c.h.b16 %v4081
    %v5851 = vunpack.c.l.b16 %v4082
    %v5852 = vunpack.c.h.b16 %v4082
    %v5853 = vunpack.c.l.b16 %v4083
    %v5854 = vunpack.c.h.b16 %v4083
    %v5855 = vunpack.c.l.b16 %v4084
    %v5856 = vunpack.c.h.b16 %v4084
    %v5857 = vunpack.c.l.b16 %v4085
    %v5858 = vunpack.c.h.b16 %v4085
    %v5859 = vunpack.c.l.b16 %v4086
    %v5860 = vunpack.c.h.b16 %v4086
    %v5861 = vunpack.c.l.b16 %v4087
    %v5862 = vunpack.c.h.b16 %v4087
    %v5863 = vunpack.c.l.b16 %v4088
    %v5864 = vunpack.c.h.b16 %v4088
    %v5865 = vunpack.c.l.b16 %v4089
    %v5866 = vunpack.c.h.b16 %v4089
    %v5867 = vunpack.c.l.b16 %v4090
    %v5868 = vunpack.c.h.b16 %v4090
    %v5869 = vunpack.c.l.b16 %v4091
    %v5870 = vunpack.c.h.b16 %v4091
    %v5871 = vunpack.c.l.b16 %v4092
    %v5872 = vunpack.c.h.b16 %v4092
    %v5873 = vunpack.c.l.b16 %v4093
    %v5874 = vunpack.c.h.b16 %v4093
    %v5875 = vunpack.c.l.b16 %v4094
    %v5876 = vunpack.c.h.b16 %v4094
    %v5877 = vunpack.c.l.b16 %v4095
    %v5878 = vunpack.c.h.b16 %v4095
    %v5879 = vunpack.c.l.b16 %v4096
    %v5880 = vunpack.c.h.b16 %v4096
    %v5881 = vunpack.c.l.b16 %v4097
    %v5882 = vunpack.c.h.b16 %v4097
    %v5883 = vunpack.c.l.b16 %v4098
    %v5884 = vunpack.c.h.b16 %v4098
    %v5885 = vunpack.c.l.b16 %v4099
    %v5886 = vunpack.c.h.b16 %v4099
    %v5887 = vunpack.c.l.b16 %v4100
    %v5888 = vunpack.c.h.b16 %v4100
    %v5889 = vunpack.c.l.b16 %v4101
    %v5890 = vunpack.c.h.b16 %v4101
    %v5891 = vunpack.c.l.b16 %v4102
    %v5892 = vunpack.c.h.b16 %v4102
    %v5893 = vunpack.c.l.b16 %v4103
    %v5894 = vunpack.c.h.b16 %v4103
    %v5895 = vunpack.c.l.b16 %v4104
    %v5896 = vunpack.c.h.b16 %v4104
    %v5897 = vunpack.c.l.b16 %v4105
    %v5898 = vunpack.c.h.b16 %v4105
    %v5899 = vunpack.c.l.b16 %v4106
    %v5900 = vunpack.c.h.b16 %v4106
    %v5901 = vunpack.c.l.b16 %v4107
    %v5902 = vunpack.c.h.b16 %v4107
    %v5903 = vunpack.c.l.b16 %v4108
    %v5904 = vunpack.c.h.b16 %v4108
    %v5905 = vunpack.c.l.b16 %v4109
    %v5906 = vunpack.c.h.b16 %v4109
    %v5907 = vunpack.c.l.b16 %v4110
    %v5908 = vunpack.c.h.b16 %v4110
    %v5909 = vunpack.c.l.b16 %v4111
    %v5910 = vunpack.c.h.b16 %v4111
    %v5911 = vunpack.c.l.b16 %v4112
    %v5912 = vunpack.c.h.b16 %v4112
    %v5913 = vunpack.c.l.b16 %v4113
    %v5914 = vunpack.c.h.b16 %v4113
    %v5915 = vunpack.c.l.b16 %v4114
    %v5916 = vunpack.c.h.b16 %v4114
    %v5917 = vunpack.c.l.b16 %v4115
    %v5918 = vunpack.c.h.b16 %v4115
    %v5919 = vunpack.c.l.b16 %v4116
    %v5920 = vunpack.c.h.b16 %v4116
    %v5921 = vunpack.c.l.b16 %v4117
    %v5922 = vunpack.c.h.b16 %v4117
    %v5923 = vunpack.c.l.b16 %v4118
    %v5924 = vunpack.c.h.b16 %v4118
    %v5925 = vunpack.c.l.b16 %v4119
    %v5926 = vunpack.c.h.b16 %v4119
    %v5927 = vunpack.c.l.b16 %v4120
    %v5928 = vunpack.c.h.b16 %v4120
    %v5929 = vunpack.c.l.b16 %v4121
    %v5930 = vunpack.c.h.b16 %v4121
    %v5931 = vunpack.c.l.b16 %v4122
    %v5932 = vunpack.c.h.b16 %v4122
    %v5933 = vunpack.c.l.b16 %v4123
    %v5934 = vunpack.c.h.b16 %v4123
    %v5935 = vunpack.c.l.b16 %v4124
    %v5936 = vunpack.c.h.b16 %v4124
    %v5937 = vunpack.c.l.b16 %v4125
    %v5938 = vunpack.c.h.b16 %v4125
    %v5939 = vunpack.c.l.b16 %v4126
    %v5940 = vunpack.c.h.b16 %v4126
    %v5941 = vunpack.c.l.b16 %v4127
    %v5942 = vunpack.c.h.b16 %v4127
    %v5943 = vunpack.c.l.b16 %v4128
    %v5944 = vunpack.c.h.b16 %v4128
    %v5945 = vunpack.c.l.b16 %v4129
    %v5946 = vunpack.c.h.b16 %v4129
    %v5947 = vunpack.c.l.b16 %v4130
    %v5948 = vunpack.c.h.b16 %v4130
    %v5949 = vunpack.c.l.b16 %v4131
    %v5950 = vunpack.c.h.b16 %v4131
    %v5951 = vunpack.c.l.b16 %v4132
    %v5952 = vunpack.c.h.b16 %v4132
    %v5953 = vunpack.c.l.b16 %v4133
    %v5954 = vunpack.c.h.b16 %v4133
    %v5955 = vunpack.c.l.b16 %v4134
    %v5956 = vunpack.c.h.b16 %v4134
    %v5957 = vunpack.c.l.b16 %v4135
    %v5958 = vunpack.c.h.b16 %v4135
    %v5959 = vunpack.c.l.b16 %v4136
    %v5960 = vunpack.c.h.b16 %v4136
    %v5961 = vunpack.c.l.b16 %v4137
    %v5962 = vunpack.c.h.b16 %v4137
    %v5963 = vunpack.c.l.b16 %v4138
    %v5964 = vunpack.c.h.b16 %v4138
    %v5965 = vunpack.c.l.b16 %v4139
    %v5966 = vunpack.c.h.b16 %v4139
    %v5967 = vunpack.c.l.b16 %v4140
    %v5968 = vunpack.c.h.b16 %v4140
    %v5969 = vunpack.c.l.b16 %v4141
    %v5970 = vunpack.c.h.b16 %v4141
    %v5971 = vunpack.c.l.b16 %v4142
    %v5972 = vunpack.c.h.b16 %v4142
    %v5973 = vunpack.c.l.b16 %v4143
    %v5974 = vunpack.c.h.b16 %v4143
    %v5975 = vunpack.c.l.b16 %v4144
    %v5976 = vunpack.c.h.b16 %v4144
    %v5977 = vunpack.c.l.b16 %v4145
    %v5978 = vunpack.c.h.b16 %v4145
    %v5979 = vunpack.c.l.b16 %v4146
    %v5980 = vunpack.c.h.b16 %v4146
    %v5981 = vunpack.c.l.b16 %v4147
    %v5982 = vunpack.c.h.b16 %v4147
    %v5983 = vunpack.c.l.b16 %v4148
    %v5984 = vunpack.c.h.b16 %v4148
    %v5985 = vunpack.c.l.b16 %v4149
    %v5986 = vunpack.c.h.b16 %v4149
    %v5987 = vunpack.c.l.b16 %v4150
    %v5988 = vunpack.c.h.b16 %v4150
    %v5989 = vunpack.c.l.b16 %v4151
    %v5990 = vunpack.c.h.b16 %v4151
    %v5991 = vunpack.c.l.b16 %v4152
    %v5992 = vunpack.c.h.b16 %v4152
    %v5993 = vunpack.c.l.b16 %v4153
    %v5994 = vunpack.c.h.b16 %v4153
    %v5995 = vunpack.c.l.b16 %v4154
    %v5996 = vunpack.c.h.b16 %v4154
    %v5997 = vunpack.c.l.b16 %v4155
    %v5998 = vunpack.c.h.b16 %v4155
    %v5999 = vunpack.c.l.b16 %v4156
    %v6000 = vunpack.c.h.b16 %v4156
    %v6001 = vunpack.c.l.b16 %v4157
    %v6002 = vunpack.c.h.b16 %v4157
    %v6003 = vunpack.c.l.b16 %v4158
    %v6004 = vunpack.c.h.b16 %v4158
    %v6005 = vunpack.c.l.b16 %v4159
    %v6006 = vunpack.c.h.b16 %v4159
    %v6007 = vunpack.c.l.b16 %v4160
    %v6008 = vunpack.c.h.b16 %v4160
    %v6009 = vunpack.c.l.b16 %v4161
    %v6010 = vunpack.c.h.b16 %v4161
    %v6011 = vunpack.c.l.b16 %v4162
    %v6012 = vunpack.c.h.b16 %v4162
    %v6013 = vunpack.c.l.b16 %v4163
    %v6014 = vunpack.c.h.b16 %v4163
    %v6015 = vunpack.c.l.b16 %v4164
    %v6016 = vunpack.c.h.b16 %v4164
    %v6017 = vunpack.c.l.b16 %v4165
    %v6018 = vunpack.c.h.b16 %v4165
    %v6019 = vunpack.c.l.b16 %v4166
    %v6020 = vunpack.c.h.b16 %v4166
    %v6021 = vunpack.c.l.b16 %v4167
    %v6022 = vunpack.c.h.b16 %v4167
    %v6023 = vunpack.c.l.b16 %v4168
    %v6024 = vunpack.c.h.b16 %v4168
    %v6025 = vunpack.c.l.b16 %v4169
    %v6026 = vunpack.c.h.b16 %v4169
    %v6027 = vunpack.c.l.b16 %v4170
    %v6028 = vunpack.c.h.b16 %v4170
    %v6029 = vunpack.c.l.b16 %v4171
    %v6030 = vunpack.c.h.b16 %v4171
    %v6031 = vunpack.c.l.b16 %v4172
    %v6032 = vunpack.c.h.b16 %v4172
    %v6033 = vunpack.c.l.b16 %v4173
    %v6034 = vunpack.c.h.b16 %v4173
    %v6035 = vunpack.c.l.b16 %v4174
    %v6036 = vunpack.c.h.b16 %v4174
    %v6037 = vunpack.c.l.b16 %v4175
    %v6038 = vunpack.c.h.b16 %v4175
    %v6039 = vunpack.c.l.b16 %v4176
    %v6040 = vunpack.c.h.b16 %v4176
    %v6041 = vunpack.c.l.b16 %v4177
    %v6042 = vunpack.c.h.b16 %v4177
    %v6043 = vunpack.c.l.b16 %v4178
    %v6044 = vunpack.c.h.b16 %v4178
    %v6045 = vunpack.c.l.b16 %v4179
    %v6046 = vunpack.c.h.b16 %v4179
    %v6047 = vunpack.c.l.b16 %v4180
    %v6048 = vunpack.c.h.b16 %v4180
    %v6049 = vunpack.c.l.b16 %v4181
    %v6050 = vunpack.c.h.b16 %v4181
    %v6051 = vunpack.c.l.b16 %v4182
    %v6052 = vunpack.c.h.b16 %v4182
    %v6053 = vunpack.c.l.b16 %v4183
    %v6054 = vunpack.c.h.b16 %v4183
    %v6055 = vunpack.c.l.b16 %v4184
    %v6056 = vunpack.c.h.b16 %v4184
    %v6057 = vunpack.c.l.b16 %v4185
    %v6058 = vunpack.c.h.b16 %v4185
    %v6059 = vunpack.c.l.b16 %v4186
    %v6060 = vunpack.c.h.b16 %v4186
    %v6061 = vunpack.c.l.b16 %v4187
    %v6062 = vunpack.c.h.b16 %v4187
    %v6063 = vunpack.c.l.b16 %v4188
    %v6064 = vunpack.c.h.b16 %v4188
    %v6065 = vunpack.c.l.b16 %v4189
    %v6066 = vunpack.c.h.b16 %v4189
    %v6067 = vunpack.c.l.b16 %v4190
    %v6068 = vunpack.c.h.b16 %v4190
    %v6069 = vunpack.c.l.b16 %v4191
    %v6070 = vunpack.c.h.b16 %v4191
    %v6071 = vunpack.c.l.b16 %v4192
    %v6072 = vunpack.c.h.b16 %v4192
    %v6073 = vunpack.c.l.b16 %v4193
    %v6074 = vunpack.c.h.b16 %v4193
    %v6075 = vunpack.c.l.b16 %v4194
    %v6076 = vunpack.c.h.b16 %v4194
    %v6077 = vunpack.c.l.b16 %v4195
    %v6078 = vunpack.c.h.b16 %v4195
    %v6079 = vunpack.c.l.b16 %v4196
    %v6080 = vunpack.c.h.b16 %v4196
    %v6081 = vunpack.c.l.b16 %v4197
    %v6082 = vunpack.c.h.b16 %v4197
    %v6083 = vunpack.c.l.b16 %v4198
    %v6084 = vunpack.c.h.b16 %v4198
    %v6085 = vunpack.c.l.b16 %v4199
    %v6086 = vunpack.c.h.b16 %v4199
    %v6087 = vunpack.c.l.b16 %v4200
    %v6088 = vunpack.c.h.b16 %v4200
    %v6089 = vunpack.c.l.b16 %v4201
    %v6090 = vunpack.c.h.b16 %v4201
    %v6091 = vunpack.c.l.b16 %v4202
    %v6092 = vunpack.c.h.b16 %v4202
    %v6093 = vunpack.c.l.b16 %v4203
    %v6094 = vunpack.c.h.b16 %v4203
    %v6095 = vunpack.c.l.b16 %v4204
    %v6096 = vunpack.c.h.b16 %v4204
    %v6097 = vunpack.c.l.b16 %v4205
    %v6098 = vunpack.c.h.b16 %v4205
    %v6099 = vunpack.c.l.b16 %v4206
    %v6100 = vunpack.c.h.b16 %v4206
    %v6101 = vunpack.c.l.b16 %v4207
    %v6102 = vunpack.c.h.b16 %v4207
    %v6103 = vunpack.c.l.b16 %v4208
    %v6104 = vunpack.c.h.b16 %v4208
    %v6105 = vunpack.c.l.b16 %v4209
    %v6106 = vunpack.c.h.b16 %v4209
    %v6107 = vunpack.c.l.b16 %v4210
    %v6108 = vunpack.c.h.b16 %v4210
    %v6109 = vunpack.c.l.b16 %v4211
    %v6110 = vunpack.c.h.b16 %v4211
    %v6111 = vunpack.c.l.b16 %v4212
    %v6112 = vunpack.c.h.b16 %v4212
    %v6113 = vunpack.c.l.b16 %v4213
    %v6114 = vunpack.c.h.b16 %v4213
    %v6115 = vunpack.c.l.b16 %v4214
    %v6116 = vunpack.c.h.b16 %v4214
    %v6117 = vunpack.c.l.b16 %v4215
    %v6118 = vunpack.c.h.b16 %v4215
    %v6119 = vunpack.c.l.b16 %v4216
    %v6120 = vunpack.c.h.b16 %v4216
    %v6121 = vunpack.c.l.b16 %v4217
    %v6122 = vunpack.c.h.b16 %v4217
    %v6123 = vunpack.c.l.b16 %v4218
    %v6124 = vunpack.c.h.b16 %v4218
    %v6125 = vunpack.c.l.b16 %v4219
    %v6126 = vunpack.c.h.b16 %v4219
    %v6127 = vunpack.c.l.b16 %v4220
    %v6128 = vunpack.c.h.b16 %v4220
    %v6129 = vunpack.c.l.b16 %v4221
    %v6130 = vunpack.c.h.b16 %v4221
    %v6131 = vunpack.c.l.b16 %v4222
    %v6132 = vunpack.c.h.b16 %v4222
    %v6133 = vunpack.c.l.b16 %v4223
    %v6134 = vunpack.c.h.b16 %v4223
    %v6135 = vunpack.c.l.b16 %v4224
    %v6136 = vunpack.c.h.b16 %v4224
    %v6137 = vunpack.c.l.b16 %v4225
    %v6138 = vunpack.c.h.b16 %v4225
    %v6139 = vunpack.c.l.b16 %v4226
    %v6140 = vunpack.c.h.b16 %v4226
    %v6141 = vunpack.c.l.b16 %v4227
    %v6142 = vunpack.c.h.b16 %v4227
    %v6143 = vunpack.c.l.b16 %v4228
    %v6144 = vunpack.c.h.b16 %v4228
    %v6145 = vunpack.c.l.b16 %v4229
    %v6146 = vunpack.c.h.b16 %v4229
    %v6147 = vunpack.c.l.b16 %v4230
    %v6148 = vunpack.c.h.b16 %v4230
    %v6149 = vunpack.c.l.b16 %v4231
    %v6150 = vunpack.c.h.b16 %v4231
    %v6151 = vunpack.c.l.b16 %v4232
    %v6152 = vunpack.c.h.b16 %v4232
    %v6153 = vunpack.c.l.b16 %v4233
    %v6154 = vunpack.c.h.b16 %v4233
    %v6155 = vunpack.c.l.b16 %v4234
    %v6156 = vunpack.c.h.b16 %v4234
    %v6157 = vunpack.c.l.b16 %v4235
    %v6158 = vunpack.c.h.b16 %v4235
    %v6159 = vunpack.c.l.b16 %v4236
    %v6160 = vunpack.c.h.b16 %v4236
    %v6161 = vunpack.c.l.b16 %v4237
    %v6162 = vunpack.c.h.b16 %v4237
    %v6163 = vunpack.c.l.b16 %v4238
    %v6164 = vunpack.c.h.b16 %v4238
    %v6165 = vunpack.c.l.b16 %v4239
    %v6166 = vunpack.c.h.b16 %v4239
    %v6167 = vunpack.c.l.b16 %v4240
    %v6168 = vunpack.c.h.b16 %v4240
    %v6169 = vunpack.c.l.b16 %v4241
    %v6170 = vunpack.c.h.b16 %v4241
    %v6171 = vunpack.c.l.b16 %v4242
    %v6172 = vunpack.c.h.b16 %v4242
    %v6173 = vunpack.c.l.b16 %v4243
    %v6174 = vunpack.c.h.b16 %v4243
    %v6175 = vunpack.c.l.b16 %v4244
    %v6176 = vunpack.c.h.b16 %v4244
    %v6177 = vunpack.c.l.b16 %v4245
    %v6178 = vunpack.c.h.b16 %v4245
    %v6179 = vunpack.c.l.b16 %v4246
    %v6180 = vunpack.c.h.b16 %v4246
    %v6181 = vunpack.c.l.b16 %v4247
    %v6182 = vunpack.c.h.b16 %v4247
    %v6183 = vunpack.c.l.b16 %v4248
    %v6184 = vunpack.c.h.b16 %v4248
    %v6185 = vunpack.c.l.b16 %v4249
    %v6186 = vunpack.c.h.b16 %v4249
    %v6187 = vunpack.c.l.b16 %v4250
    %v6188 = vunpack.c.h.b16 %v4250
    %v6189 = vunpack.c.l.b16 %v4251
    %v6190 = vunpack.c.h.b16 %v4251
    %v6191 = vunpack.c.l.b16 %v4252
    %v6192 = vunpack.c.h.b16 %v4252
    %v6193 = vunpack.c.l.b16 %v4253
    %v6194 = vunpack.c.h.b16 %v4253
    %v6195 = vunpack.c.l.b16 %v4254
    %v6196 = vunpack.c.h.b16 %v4254
    %v6197 = vunpack.c.l.b16 %v4255
    %v6198 = vunpack.c.h.b16 %v4255
    %v6199 = vunpack.c.l.b16 %v4256
    %v6200 = vunpack.c.h.b16 %v4256
    %v6201 = vunpack.c.l.b16 %v4257
    %v6202 = vunpack.c.h.b16 %v4257
    %v6203 = vunpack.c.l.b16 %v4258
    %v6204 = vunpack.c.h.b16 %v4258
    %v6205 = vunpack.c.l.b16 %v4259
    %v6206 = vunpack.c.h.b16 %v4259
    %v6207 = vunpack.c.l.b16 %v4260
    %v6208 = vunpack.c.h.b16 %v4260
    %v6209 = vunpack.c.l.b16 %v4261
    %v6210 = vunpack.c.h.b16 %v4261
    %v6211 = vunpack.c.l.b16 %v4262
    %v6212 = vunpack.c.h.b16 %v4262
    %v6213 = vunpack.c.l.b16 %v4263
    %v6214 = vunpack.c.h.b16 %v4263
    %v6215 = vunpack.c.l.b16 %v4264
    %v6216 = vunpack.c.h.b16 %v4264
    %v6217 = vunpack.c.l.b16 %v4265
    %v6218 = vunpack.c.h.b16 %v4265
    %v6219 = vunpack.c.l.b16 %v4266
    %v6220 = vunpack.c.h.b16 %v4266
    %v6221 = vunpack.c.l.b16 %v4267
    %v6222 = vunpack.c.h.b16 %v4267
    %v6223 = vunpack.c.l.b16 %v4268
    %v6224 = vunpack.c.h.b16 %v4268
    %v6225 = vunpack.c.l.b16 %v4269
    %v6226 = vunpack.c.h.b16 %v4269
    %v6227 = vunpack.c.l.b16 %v4270
    %v6228 = vunpack.c.h.b16 %v4270
    %v6229 = vunpack.c.l.b16 %v4271
    %v6230 = vunpack.c.h.b16 %v4271
    %v6231 = vunpack.c.l.b16 %v4272
    %v6232 = vunpack.c.h.b16 %v4272
    %v6233 = vunpack.c.l.b16 %v4273
    %v6234 = vunpack.c.h.b16 %v4273
    %v6235 = vunpack.c.l.b16 %v4274
    %v6236 = vunpack.c.h.b16 %v4274
    %v6237 = vunpack.c.l.b16 %v4275
    %v6238 = vunpack.c.h.b16 %v4275
    %v6239 = vunpack.c.l.b16 %v4276
    %v6240 = vunpack.c.h.b16 %v4276
    %v6241 = vunpack.c.l.b16 %v4277
    %v6242 = vunpack.c.h.b16 %v4277
    %v6243 = vunpack.c.l.b16 %v4278
    %v6244 = vunpack.c.h.b16 %v4278
    %v6245 = vunpack.c.l.b16 %v4279
    %v6246 = vunpack.c.h.b16 %v4279
    %v6247 = vunpack.c.l.b16 %v4280
    %v6248 = vunpack.c.h.b16 %v4280
    %v6249 = vunpack.c.l.b16 %v4281
    %v6250 = vunpack.c.h.b16 %v4281
    %v6251 = vunpack.c.l.b16 %v4282
    %v6252 = vunpack.c.h.b16 %v4282
    %v6253 = vunpack.c.l.b16 %v4283
    %v6254 = vunpack.c.h.b16 %v4283
    %v6255 = vunpack.c.l.b16 %v4284
    %v6256 = vunpack.c.h.b16 %v4284
    %v6257 = vunpack.c.l.b16 %v4285
    %v6258 = vunpack.c.h.b16 %v4285
    %v6259 = vunpack.c.l.b16 %v4286
    %v6260 = vunpack.c.h.b16 %v4286
    %v6261 = vunpack.c.l.b16 %v4287
    %v6262 = vunpack.c.h.b16 %v4287
    %v6263 = vunpack.c.l.b16 %v4288
    %v6264 = vunpack.c.h.b16 %v4288
    %v6265 = vunpack.c.l.b16 %v4289
    %v6266 = vunpack.c.h.b16 %v4289
    %v6267 = vunpack.c.l.b16 %v4290
    %v6268 = vunpack.c.h.b16 %v4290
    %v6269 = vunpack.c.l.b16 %v4291
    %v6270 = vunpack.c.h.b16 %v4291
    %v6271 = vunpack.c.l.b16 %v4292
    %v6272 = vunpack.c.h.b16 %v4292
    %v6273 = vunpack.c.l.b16 %v4293
    %v6274 = vunpack.c.h.b16 %v4293
    %v6275 = vunpack.c.l.b16 %v4294
    %v6276 = vunpack.c.h.b16 %v4294
    %v6277 = vunpack.c.l.b16 %v4295
    %v6278 = vunpack.c.h.b16 %v4295
    %v6279 = vunpack.c.l.b16 %v4296
    %v6280 = vunpack.c.h.b16 %v4296
    %v6281 = vunpack.c.l.b16 %v4297
    %v6282 = vunpack.c.h.b16 %v4297
    %v6283 = vunpack.c.l.b16 %v4298
    %v6284 = vunpack.c.h.b16 %v4298
    %v6285 = vunpack.c.l.b16 %v4299
    %v6286 = vunpack.c.h.b16 %v4299
    %v6287 = vunpack.c.l.b16 %v4300
    %v6288 = vunpack.c.h.b16 %v4300
    %v6289 = vunpack.c.l.b16 %v4301
    %v6290 = vunpack.c.h.b16 %v4301
    %v6291 = vunpack.c.l.b16 %v4302
    %v6292 = vunpack.c.h.b16 %v4302
    %v6293 = vunpack.c.l.b16 %v4303
    %v6294 = vunpack.c.h.b16 %v4303
    %v6295 = vunpack.c.l.b16 %v4304
    %v6296 = vunpack.c.h.b16 %v4304
    %v6297 = vunpack.c.l.b16 %v4305
    %v6298 = vunpack.c.h.b16 %v4305
    %v6299 = vunpack.c.l.b16 %v4306
    %v6300 = vunpack.c.h.b16 %v4306
    %v6301 = vunpack.c.l.b16 %v4307
    %v6302 = vunpack.c.h.b16 %v4307
    %v6303 = vunpack.c.l.b16 %v4308
    %v6304 = vunpack.c.h.b16 %v4308
    %v6305 = vunpack.c.l.b16 %v4309
    %v6306 = vunpack.c.h.b16 %v4309
    %v6307 = vunpack.c.l.b16 %v4310
    %v6308 = vunpack.c.h.b16 %v4310
    %v6309 = vunpack.c.l.b16 %v4311
    %v6310 = vunpack.c.h.b16 %v4311
    %v6311 = vunpack.c.l.b16 %v4312
    %v6312 = vunpack.c.h.b16 %v4312
    %v6313 = vunpack.c.l.b16 %v4313
    %v6314 = vunpack.c.h.b16 %v4313
    %v6315 = vunpack.c.l.b16 %v4314
    %v6316 = vunpack.c.h.b16 %v4314
    %v6317 = vunpack.c.l.b16 %v4315
    %v6318 = vunpack.c.h.b16 %v4315
    %v6319 = vunpack.c.l.b16 %v4316
    %v6320 = vunpack.c.h.b16 %v4316
    %v6321 = vunpack.c.l.b16 %v4317
    %v6322 = vunpack.c.h.b16 %v4317
    %v6323 = vunpack.c.l.b16 %v4318
    %v6324 = vunpack.c.h.b16 %v4318
    %v6325 = vunpack.c.l.b16 %v4319
    %v6326 = vunpack.c.h.b16 %v4319
    %v6327 = vunpack.c.l.b16 %v4320
    %v6328 = vunpack.c.h.b16 %v4320
    %v6329 = vunpack.c.l.b16 %v4321
    %v6330 = vunpack.c.h.b16 %v4321
    %v6331 = vunpack.c.l.b16 %v4322
    %v6332 = vunpack.c.h.b16 %v4322
    %v6333 = vunpack.c.l.b16 %v4323
    %v6334 = vunpack.c.h.b16 %v4323
    %v6335 = vunpack.c.l.b16 %v4324
    %v6336 = vunpack.c.h.b16 %v4324
    %v6337 = vunpack.c.l.b16 %v4325
    %v6338 = vunpack.c.h.b16 %v4325
    %v6339 = vunpack.c.l.b16 %v4326
    %v6340 = vunpack.c.h.b16 %v4326
    %v6341 = vunpack.c.l.b16 %v4327
    %v6342 = vunpack.c.h.b16 %v4327
    %v6343 = vunpack.c.l.b16 %v4328
    %v6344 = vunpack.c.h.b16 %v4328
    %v6345 = vunpack.c.l.b16 %v4329
    %v6346 = vunpack.c.h.b16 %v4329
    %v6347 = vunpack.c.l.b16 %v4330
    %v6348 = vunpack.c.h.b16 %v4330
    %v6349 = vunpack.c.l.b16 %v4331
    %v6350 = vunpack.c.h.b16 %v4331
    %v6351 = vunpack.c.l.b16 %v4332
    %v6352 = vunpack.c.h.b16 %v4332
    %v6353 = vunpack.c.l.b16 %v4333
    %v6354 = vunpack.c.h.b16 %v4333
    %v6355 = vunpack.c.l.b16 %v4334
    %v6356 = vunpack.c.h.b16 %v4334
    %v6357 = vunpack.c.l.b16 %v4335
    %v6358 = vunpack.c.h.b16 %v4335
    %v6359 = vunpack.c.l.b16 %v4336
    %v6360 = vunpack.c.h.b16 %v4336
    %v6361 = vunpack.c.l.b16 %v4337
    %v6362 = vunpack.c.h.b16 %v4337
    %v6363 = vunpack.c.l.b16 %v4338
    %v6364 = vunpack.c.h.b16 %v4338
    %v6365 = vunpack.c.l.b16 %v4339
    %v6366 = vunpack.c.h.b16 %v4339
    %v6367 = vunpack.c.l.b16 %v4340
    %v6368 = vunpack.c.h.b16 %v4340
    %v6369 = vunpack.c.l.b16 %v4341
    %v6370 = vunpack.c.h.b16 %v4341
    %v6371 = vunpack.c.l.b16 %v4342
    %v6372 = vunpack.c.h.b16 %v4342
    %v6373 = vunpack.c.l.b16 %v4343
    %v6374 = vunpack.c.h.b16 %v4343
    %v6375 = vunpack.c.l.b16 %v4344
    %v6376 = vunpack.c.h.b16 %v4344
    %v6377 = vunpack.c.l.b16 %v4345
    %v6378 = vunpack.c.h.b16 %v4345
    %v6379 = vunpack.c.l.b16 %v4346
    %v6380 = vunpack.c.h.b16 %v4346
    %v6381 = vunpack.c.l.b16 %v4347
    %v6382 = vunpack.c.h.b16 %v4347
    %v6383 = vunpack.c.l.b16 %v4348
    %v6384 = vunpack.c.h.b16 %v4348
    %v6385 = vunpack.c.l.b16 %v4349
    %v6386 = vunpack.c.h.b16 %v4349
    %v6387 = vunpack.c.l.b16 %v4350
    %v6388 = vunpack.c.h.b16 %v4350
    %v6389 = vunpack.c.l.b16 %v4351
    %v6390 = vunpack.c.h.b16 %v4351
    %v6391 = vunpack.c.l.b16 %v4352
    %v6392 = vunpack.c.h.b16 %v4352
    %v6393 = vunpack.c.l.b16 %v4353
    %v6394 = vunpack.c.h.b16 %v4353
    %v6395 = vunpack.c.l.b16 %v4354
    %v6396 = vunpack.c.h.b16 %v4354
    %v6397 = vunpack.c.l.b16 %v4355
    %v6398 = vunpack.c.h.b16 %v4355
    %v6399 = vunpack.c.l.b16 %v4356
    %v6400 = vunpack.c.h.b16 %v4356
    %v6401 = vunpack.c.l.b16 %v4357
    %v6402 = vunpack.c.h.b16 %v4357
    %v6403 = vunpack.c.l.b16 %v4358
    %v6404 = vunpack.c.h.b16 %v4358
    %v6405 = vunpack.c.l.b16 %v4359
    %v6406 = vunpack.c.h.b16 %v4359
    %v6407 = vunpack.c.l.b16 %v4360
    %v6408 = vunpack.c.h.b16 %v4360
    %v6409 = vunpack.c.l.b16 %v4361
    %v6410 = vunpack.c.h.b16 %v4361
    %v6411 = vunpack.c.l.b16 %v4362
    %v6412 = vunpack.c.h.b16 %v4362
    %v6413 = vunpack.c.l.b16 %v4363
    %v6414 = vunpack.c.h.b16 %v4363
    %v6415 = vunpack.c.l.b16 %v4364
    %v6416 = vunpack.c.h.b16 %v4364
    %v6417 = vunpack.c.l.b16 %v4365
    %v6418 = vunpack.c.h.b16 %v4365
    %v6419 = vunpack.c.l.b16 %v4366
    %v6420 = vunpack.c.h.b16 %v4366
    %v6421 = vunpack.c.l.b16 %v4367
    %v6422 = vunpack.c.h.b16 %v4367
    %v6423 = vunpack.c.l.b16 %v4368
    %v6424 = vunpack.c.h.b16 %v4368
    %v6425 = vunpack.c.l.b16 %v4369
    %v6426 = vunpack.c.h.b16 %v4369
    %v6427 = vunpack.c.l.b16 %v4370
    %v6428 = vunpack.c.h.b16 %v4370
    %v6429 = vunpack.c.l.b16 %v4371
    %v6430 = vunpack.c.h.b16 %v4371
    %v6431 = vunpack.c.l.b16 %v4372
    %v6432 = vunpack.c.h.b16 %v4372
    %v6433 = vunpack.c.l.b16 %v4373
    %v6434 = vunpack.c.h.b16 %v4373
    %v6435 = vunpack.c.l.b16 %v4374
    %v6436 = vunpack.c.h.b16 %v4374
    %v6437 = vunpack.c.l.b16 %v4375
    %v6438 = vunpack.c.h.b16 %v4375
    %v6439 = vunpack.c.l.b16 %v4376
    %v6440 = vunpack.c.h.b16 %v4376
    %v6441 = vunpack.c.l.b16 %v4377
    %v6442 = vunpack.c.h.b16 %v4377
    %v6443 = vunpack.c.l.b16 %v4378
    %v6444 = vunpack.c.h.b16 %v4378
    %v6445 = vunpack.c.l.b16 %v4379
    %v6446 = vunpack.c.h.b16 %v4379
    %v6447 = vunpack.c.l.b16 %v4380
    %v6448 = vunpack.c.h.b16 %v4380
    %v6449 = vunpack.c.l.b16 %v4381
    %v6450 = vunpack.c.h.b16 %v4381
    %v6451 = vunpack.c.l.b16 %v4382
    %v6452 = vunpack.c.h.b16 %v4382
    %v6453 = vunpack.c.l.b16 %v4383
    %v6454 = vunpack.c.h.b16 %v4383
    %v6455 = vunpack.c.l.b16 %v4384
    %v6456 = vunpack.c.h.b16 %v4384
    %v6457 = vunpack.c.l.b16 %v4385
    %v6458 = vunpack.c.h.b16 %v4385
    %v6459 = vunpack.c.l.b16 %v4386
    %v6460 = vunpack.c.h.b16 %v4386
    %v6461 = vunpack.c.l.b16 %v4387
    %v6462 = vunpack.c.h.b16 %v4387
    %v6463 = vunpack.c.l.b16 %v4388
    %v6464 = vunpack.c.h.b16 %v4388
    %v6465 = vunpack.c.l.b16 %v4389
    %v6466 = vunpack.c.h.b16 %v4389
    %v6467 = vunpack.c.l.b16 %v4390
    %v6468 = vunpack.c.h.b16 %v4390
    %v6469 = vunpack.c.l.b16 %v4391
    %v6470 = vunpack.c.h.b16 %v4391
    %v6471 = vunpack.c.l.b16 %v4392
    %v6472 = vunpack.c.h.b16 %v4392
    %v6473 = vunpack.c.l.b16 %v4393
    %v6474 = vunpack.c.h.b16 %v4393
    %v6475 = vunpack.c.l.b16 %v4394
    %v6476 = vunpack.c.h.b16 %v4394
    %v6477 = vunpack.c.l.b16 %v4395
    %v6478 = vunpack.c.h.b16 %v4395
    %v6479 = vunpack.c.l.b16 %v4396
    %v6480 = vunpack.c.h.b16 %v4396
    %v6481 = vunpack.c.l.b16 %v4397
    %v6482 = vunpack.c.h.b16 %v4397
    %v6483 = vunpack.c.l.b16 %v4398
    %v6484 = vunpack.c.h.b16 %v4398
    %v6485 = vunpack.c.l.b16 %v4399
    %v6486 = vunpack.c.h.b16 %v4399
    %v6487 = vunpack.c.l.b16 %v4400
    %v6488 = vunpack.c.h.b16 %v4400
    %v6489 = vunpack.c.l.b16 %v4401
    %v6490 = vunpack.c.h.b16 %v4401
    %v6491 = vunpack.c.l.b16 %v4402
    %v6492 = vunpack.c.h.b16 %v4402
    %v6493 = vunpack.c.l.b16 %v4403
    %v6494 = vunpack.c.h.b16 %v4403
    %v6495 = vunpack.c.l.b16 %v4404
    %v6496 = vunpack.c.h.b16 %v4404
    %v6497 = vunpack.c.l.b16 %v4405
    %v6498 = vunpack.c.h.b16 %v4405
    %v6499 = vunpack.c.l.b16 %v4406
    %v6500 = vunpack.c.h.b16 %v4406
    %v6501 = vunpack.c.l.b16 %v4407
    %v6502 = vunpack.c.h.b16 %v4407
    %v6503 = vunpack.c.l.b16 %v4408
    %v6504 = vunpack.c.h.b16 %v4408
    %v6505 = vunpack.c.l.b16 %v4409
    %v6506 = vunpack.c.h.b16 %v4409
    %v6507 = vunpack.c.l.b16 %v4410
    %v6508 = vunpack.c.h.b16 %v4410
    %v6509 = vunpack.c.l.b16 %v4411
    %v6510 = vunpack.c.h.b16 %v4411
    %v6511 = vunpack.c.l.b16 %v4412
    %v6512 = vunpack.c.h.b16 %v4412
    %v6513 = vunpack.c.l.b16 %v4413
    %v6514 = vunpack.c.h.b16 %v4413
    %v6515 = vunpack.c.l.b16 %v4414
    %v6516 = vunpack.c.h.b16 %v4414
    %v6517 = vunpack.c.l.b16 %v4415
    %v6518 = vunpack.c.h.b16 %v4415
    %v6519 = vunpack.c.l.b16 %v4416
    %v6520 = vunpack.c.h.b16 %v4416
    %v6521 = vunpack.c.l.b16 %v4417
    %v6522 = vunpack.c.h.b16 %v4417
    %v6523 = vunpack.c.l.b16 %v4418
    %v6524 = vunpack.c.h.b16 %v4418
    %v6525 = vunpack.c.l.b16 %v4419
    %v6526 = vunpack.c.h.b16 %v4419
    %v6527 = vunpack.c.l.b16 %v4420
    %v6528 = vunpack.c.h.b16 %v4420
    %v6529 = vunpack.c.l.b16 %v4421
    %v6530 = vunpack.c.h.b16 %v4421
    %v6531 = vunpack.c.l.b16 %v4422
    %v6532 = vunpack.c.h.b16 %v4422
    %v6533 = vunpack.c.l.b16 %v4423
    %v6534 = vunpack.c.h.b16 %v4423
    %v6535 = vunpack.c.l.b16 %v4424
    %v6536 = vunpack.c.h.b16 %v4424
    %v6537 = vunpack.c.l.b16 %v4425
    %v6538 = vunpack.c.h.b16 %v4425
    %v6539 = vunpack.c.l.b16 %v4426
    %v6540 = vunpack.c.h.b16 %v4426
    %v6541 = vunpack.c.l.b16 %v4427
    %v6542 = vunpack.c.h.b16 %v4427
    %v6543 = vunpack.c.l.b16 %v4428
    %v6544 = vunpack.c.h.b16 %v4428
    %v6545 = vunpack.c.l.b16 %v4429
    %v6546 = vunpack.c.h.b16 %v4429
    %v6547 = vunpack.c.l.b16 %v4430
    %v6548 = vunpack.c.h.b16 %v4430
    %v6549 = vunpack.c.l.b16 %v4431
    %v6550 = vunpack.c.h.b16 %v4431
    %v6551 = vunpack.c.l.b16 %v4432
    %v6552 = vunpack.c.h.b16 %v4432
    %v6553 = vunpack.c.l.b16 %v4433
    %v6554 = vunpack.c.h.b16 %v4433
    %v6555 = vunpack.c.l.b16 %v4434
    %v6556 = vunpack.c.h.b16 %v4434
    %v6557 = vunpack.c.l.b16 %v4435
    %v6558 = vunpack.c.h.b16 %v4435
    %v6559 = vunpack.c.l.b16 %v4436
    %v6560 = vunpack.c.h.b16 %v4436
    %v6561 = vunpack.c.l.b16 %v4437
    %v6562 = vunpack.c.h.b16 %v4437
    %v6563 = vunpack.c.l.b16 %v4438
    %v6564 = vunpack.c.h.b16 %v4438
    %v6565 = vunpack.c.l.b16 %v4439
    %v6566 = vunpack.c.h.b16 %v4439
    %v6567 = vunpack.c.l.b16 %v4440
    %v6568 = vunpack.c.h.b16 %v4440
    %v6569 = vunpack.c.l.b16 %v4441
    %v6570 = vunpack.c.h.b16 %v4441
    %v6571 = vunpack.c.l.b16 %v4442
    %v6572 = vunpack.c.h.b16 %v4442
    %v6573 = vunpack.c.l.b16 %v4443
    %v6574 = vunpack.c.h.b16 %v4443
    %v6575 = vunpack.c.l.b16 %v4444
    %v6576 = vunpack.c.h.b16 %v4444
    %v6577 = vunpack.c.l.b16 %v4445
    %v6578 = vunpack.c.h.b16 %v4445
    %v6579 = vunpack.c.l.b16 %v4446
    %v6580 = vunpack.c.h.b16 %v4446
    %v6581 = vunpack.c.l.b16 %v4447
    %v6582 = vunpack.c.h.b16 %v4447
    %v6583 = vunpack.c.l.b16 %v4448
    %v6584 = vunpack.c.h.b16 %v4448
    %v6585 = vunpack.c.l.b16 %v4449
    %v6586 = vunpack.c.h.b16 %v4449
    %v6587 = vunpack.c.l.b16 %v4450
    %v6588 = vunpack.c.h.b16 %v4450
    %v6589 = vunpack.c.l.b16 %v4451
    %v6590 = vunpack.c.h.b16 %v4451
    %v6591 = vunpack.c.l.b16 %v4452
    %v6592 = vunpack.c.h.b16 %v4452
    %v6593 = vunpack.c.l.b16 %v4453
    %v6594 = vunpack.c.h.b16 %v4453
    %v6595 = vunpack.c.l.b16 %v4454
    %v6596 = vunpack.c.h.b16 %v4454
    %v6597 = vunpack.c.l.b16 %v4455
    %v6598 = vunpack.c.h.b16 %v4455
    %v6599 = vunpack.c.l.b16 %v4456
    %v6600 = vunpack.c.h.b16 %v4456
    %v6601 = vunpack.c.l.b16 %v4457
    %v6602 = vunpack.c.h.b16 %v4457
    %v6603 = vunpack.c.l.b16 %v4458
    %v6604 = vunpack.c.h.b16 %v4458
    %v6605 = vunpack.c.l.b16 %v4459
    %v6606 = vunpack.c.h.b16 %v4459
    %v6607 = vunpack.c.l.b16 %v4460
    %v6608 = vunpack.c.h.b16 %v4460
    %v6609 = vunpack.c.l.b16 %v4461
    %v6610 = vunpack.c.h.b16 %v4461
    %v6611 = vunpack.c.l.b16 %v4462
    %v6612 = vunpack.c.h.b16 %v4462
    %v6613 = vunpack.c.l.b16 %v4463
    %v6614 = vunpack.c.h.b16 %v4463
    %v6615 = vunpack.c.l.b16 %v4464
    %v6616 = vunpack.c.h.b16 %v4464
    %v6617 = vunpack.c.l.b16 %v4465
    %v6618 = vunpack.c.h.b16 %v4465
    %v6619 = vunpack.c.l.b16 %v4466
    %v6620 = vunpack.c.h.b16 %v4466
    %v6621 = vunpack.c.l.b16 %v4467
    %v6622 = vunpack.c.h.b16 %v4467
    %v6623 = vunpack.c.l.b16 %v4468
    %v6624 = vunpack.c.h.b16 %v4468
    %v6625 = vunpack.c.l.b16 %v4469
    %v6626 = vunpack.c.h.b16 %v4469
    %v6627 = vunpack.c.l.b16 %v4470
    %v6628 = vunpack.c.h.b16 %v4470
    %v6629 = vunpack.c.l.b16 %v4471
    %v6630 = vunpack.c.h.b16 %v4471
    %v6631 = vunpack.c.l.b16 %v4472
    %v6632 = vunpack.c.h.b16 %v4472
    %v6633 = vunpack.c.l.b16 %v4473
    %v6634 = vunpack.c.h.b16 %v4473
    %v6635 = vunpack.c.l.b16 %v4474
    %v6636 = vunpack.c.h.b16 %v4474
    %v6637 = vunpack.c.l.b16 %v4475
    %v6638 = vunpack.c.h.b16 %v4475
    %v6639 = vunpack.c.l.b16 %v4476
    %v6640 = vunpack.c.h.b16 %v4476
    %v6641 = vunpack.c.l.b16 %v4477
    %v6642 = vunpack.c.h.b16 %v4477
    %v6643 = vunpack.c.l.b16 %v4478
    %v6644 = vunpack.c.h.b16 %v4478
    %v6645 = vunpack.c.l.b16 %v4479
    %v6646 = vunpack.c.h.b16 %v4479
    %v6647 = vunpack.c.l.b16 %v4480
    %v6648 = vunpack.c.h.b16 %v4480
    %v6649 = vunpack.c.l.b16 %v4481
    %v6650 = vunpack.c.h.b16 %v4481
    %v6651 = vunpack.c.l.b16 %v4482
    %v6652 = vunpack.c.h.b16 %v4482
    %v6653 = vunpack.c.l.b16 %v4483
    %v6654 = vunpack.c.h.b16 %v4483
    %v6655 = vunpack.c.l.b16 %v4484
    %v6656 = vunpack.c.h.b16 %v4484
    %v6657 = vunpack.c.l.b16 %v4485
    %v6658 = vunpack.c.h.b16 %v4485
    %v6659 = vunpack.c.l.b16 %v4486
    %v6660 = vunpack.c.h.b16 %v4486
    %v6661 = vunpack.c.l.b16 %v4487
    %v6662 = vunpack.c.h.b16 %v4487
    %v6663 = vunpack.c.l.b16 %v4488
    %v6664 = vunpack.c.h.b16 %v4488
    %v6665 = vunpack.c.l.b16 %v4489
    %v6666 = vunpack.c.h.b16 %v4489
    %v6667 = vunpack.c.l.b16 %v4490
    %v6668 = vunpack.c.h.b16 %v4490
    %v6669 = vunpack.c.l.b16 %v4491
    %v6670 = vunpack.c.h.b16 %v4491
    %v6671 = vunpack.c.l.b16 %v4492
    %v6672 = vunpack.c.h.b16 %v4492
    %v6673 = vunpack.c.l.b16 %v4493
    %v6674 = vunpack.c.h.b16 %v4493
    %v6675 = vunpack.c.l.b16 %v4494
    %v6676 = vunpack.c.h.b16 %v4494
    %v6677 = vunpack.c.l.b16 %v4495
    %v6678 = vunpack.c.h.b16 %v4495
    %v6679 = vunpack.c.l.b16 %v4496
    %v6680 = vunpack.c.h.b16 %v4496
    %v6681 = vunpack.c.l.b16 %v4497
    %v6682 = vunpack.c.h.b16 %v4497
    %v6683 = vunpack.c.l.b16 %v4498
    %v6684 = vunpack.c.h.b16 %v4498
    %v6685 = vunpack.c.l.b16 %v4499
    %v6686 = vunpack.c.h.b16 %v4499
    %v6687 = vunpack.c.l.b16 %v4500
    %v6688 = vunpack.c.h.b16 %v4500
    %v6689 = vunpack.c.l.b16 %v4501
    %v6690 = vunpack.c.h.b16 %v4501
    %v6691 = vunpack.c.l.b16 %v4502
    %v6692 = vunpack.c.h.b16 %v4502
    %v6693 = vunpack.c.l.b16 %v4503
    %v6694 = vunpack.c.h.b16 %v4503
    %v6695 = vunpack.c.l.b16 %v4504
    %v6696 = vunpack.c.h.b16 %v4504
    %v6697 = vunpack.c.l.b16 %v4505
    %v6698 = vunpack.c.h.b16 %v4505
    %v6699 = vunpack.c.l.b16 %v4506
    %v6700 = vunpack.c.h.b16 %v4506
    %v6701 = vunpack.c.l.b16 %v4507
    %v6702 = vunpack.c.h.b16 %v4507
    %v6703 = vunpack.c.l.b16 %v4508
    %v6704 = vunpack.c.h.b16 %v4508
    %v6705 = vunpack.c.l.b16 %v4509
    %v6706 = vunpack.c.h.b16 %v4509
    %v6707 = vunpack.c.l.b16 %v4510
    %v6708 = vunpack.c.h.b16 %v4510
    %v6709 = vunpack.c.l.b16 %v4511
    %v6710 = vunpack.c.h.b16 %v4511
    %v6711 = vunpack.c.l.b16 %v4512
    %v6712 = vunpack.c.h.b16 %v4512
    %v6713 = vunpack.c.l.b16 %v4513
    %v6714 = vunpack.c.h.b16 %v4513
    %v6715 = vunpack.c.l.b16 %v4514
    %v6716 = vunpack.c.h.b16 %v4514
    %v6717 = vunpack.c.l.b16 %v4515
    %v6718 = vunpack.c.h.b16 %v4515
    %v6719 = vunpack.c.l.b16 %v4516
    %v6720 = vunpack.c.h.b16 %v4516
    %v6721 = vunpack.c.l.b16 %v4517
    %v6722 = vunpack.c.h.b16 %v4517
    %v6723 = vunpack.c.l.b16 %v4518
    %v6724 = vunpack.c.h.b16 %v4518
    %v6725 = vunpack.c.l.b16 %v4519
    %v6726 = vunpack.c.h.b16 %v4519
    %v6727 = vunpack.c.l.b16 %v4520
    %v6728 = vunpack.c.h.b16 %v4520
    %v6729 = vunpack.c.l.b16 %v4521
    %v6730 = vunpack.c.h.b16 %v4521
    %v6731 = vunpack.c.l.b16 %v4522
    %v6732 = vunpack.c.h.b16 %v4522
    %v6733 = vunpack.c.l.b16 %v4523
    %v6734 = vunpack.c.h.b16 %v4523
    %v6735 = vunpack.c.l.b16 %v4524
    %v6736 = vunpack.c.h.b16 %v4524
    %v6737 = vunpack.c.l.b16 %v4525
    %v6738 = vunpack.c.h.b16 %v4525
    %v6739 = vunpack.c.l.b16 %v4526
    %v6740 = vunpack.c.h.b16 %v4526
    %v6741 = vunpack.c.l.b16 %v4527
    %v6742 = vunpack.c.h.b16 %v4527
    %v6743 = vunpack.c.l.b16 %v4528
    %v6744 = vunpack.c.h.b16 %v4528
    %v6745 = vunpack.c.l.b16 %v4529
    %v6746 = vunpack.c.h.b16 %v4529
    %v6747 = vunpack.c.l.b16 %v4530
    %v6748 = vunpack.c.h.b16 %v4530
    %v6749 = vunpack.c.l.b16 %v4531
    %v6750 = vunpack.c.h.b16 %v4531
    %v6751 = vunpack.c.l.b16 %v4532
    %v6752 = vunpack.c.h.b16 %v4532
    %v6753 = vunpack.c.l.b16 %v4533
    %v6754 = vunpack.c.h.b16 %v4533
    %v6755 = vunpack.c.l.b16 %v4534
    %v6756 = vunpack.c.h.b16 %v4534
    %v6757 = vunpack.c.l.b16 %v4535
    %v6758 = vunpack.c.h.b16 %v4535
    %v6759 = vunpack.c.l.b16 %v4536
    %v6760 = vunpack.c.h.b16 %v4536
    %v6761 = vunpack.c.l.b16 %v4537
    %v6762 = vunpack.c.h.b16 %v4537
    %v6763 = vunpack.c.l.b16 %v4538
    %v6764 = vunpack.c.h.b16 %v4538
    %v6765 = vunpack.c.l.b16 %v4539
    %v6766 = vunpack.c.h.b16 %v4539
    %v6767 = vunpack.c.l.b16 %v4540
    %v6768 = vunpack.c.h.b16 %v4540
    %v6769 = vunpack.c.l.b16 %v4541
    %v6770 = vunpack.c.h.b16 %v4541
    %v6771 = vunpack.c.l.b16 %v4542
    %v6772 = vunpack.c.h.b16 %v4542
    %v6773 = vunpack.c.l.b16 %v4543
    %v6774 = vunpack.c.h.b16 %v4543
    %v6775 = vunpack.c.l.b16 %v4544
    %v6776 = vunpack.c.h.b16 %v4544
    %v6777 = vunpack.c.l.b16 %v4545
    %v6778 = vunpack.c.h.b16 %v4545
    %v6779 = vunpack.c.l.b16 %v4546
    %v6780 = vunpack.c.h.b16 %v4546
    %v6781 = vunpack.c.l.b16 %v4547
    %v6782 = vunpack.c.h.b16 %v4547
    %v6783 = vunpack.c.l.b16 %v4548
    %v6784 = vunpack.c.h.b16 %v4548
    %v6785 = vunpack.c.l.b16 %v4549
    %v6786 = vunpack.c.h.b16 %v4549
    %v6787 = vunpack.c.l.b16 %v4550
    %v6788 = vunpack.c.h.b16 %v4550
    %v6789 = vunpack.c.l.b16 %v4551
    %v6790 = vunpack.c.h.b16 %v4551
    %v6791 = vunpack.c.l.b16 %v4552
    %v6792 = vunpack.c.h.b16 %v4552
    %v6793 = vunpack.c.l.b16 %v4553
    %v6794 = vunpack.c.h.b16 %v4553
    %v6795 = vunpack.c.l.b16 %v4554
    %v6796 = vunpack.c.h.b16 %v4554
    %v6797 = vunpack.c.l.b16 %v4555
    %v6798 = vunpack.c.h.b16 %v4555
    %v6799 = vunpack.c.l.b16 %v4556
    %v6800 = vunpack.c.h.b16 %v4556
    %v6801 = vunpack.c.l.b16 %v4557
    %v6802 = vunpack.c.h.b16 %v4557
    %v6803 = vunpack.c.l.b16 %v4558
    %v6804 = vunpack.c.h.b16 %v4558
    %v6805 = vunpack.c.l.b16 %v4559
    %v6806 = vunpack.c.h.b16 %v4559
    %v6807 = vunpack.c.l.b16 %v4560
    %v6808 = vunpack.c.h.b16 %v4560
    %v6809 = vunpack.c.l.b16 %v4561
    %v6810 = vunpack.c.h.b16 %v4561
    %v6811 = vunpack.c.l.b16 %v4562
    %v6812 = vunpack.c.h.b16 %v4562
    %v6813 = vunpack.c.l.b16 %v4563
    %v6814 = vunpack.c.h.b16 %v4563
    %v6815 = vunpack.c.l.b16 %v4564
    %v6816 = vunpack.c.h.b16 %v4564
    %v6817 = vunpack.c.l.b16 %v4565
    %v6818 = vunpack.c.h.b16 %v4565
    %v6819 = vunpack.c.l.b16 %v4566
    %v6820 = vunpack.c.h.b16 %v4566
    %v6821 = vunpack.c.l.b16 %v4567
    %v6822 = vunpack.c.h.b16 %v4567
    %v6823 = vunpack.c.l.b16 %v4568
    %v6824 = vunpack.c.h.b16 %v4568
    %v6825 = vunpack.c.l.b16 %v4569
    %v6826 = vunpack.c.h.b16 %v4569
    %v6827 = vunpack.c.l.b16 %v4570
    %v6828 = vunpack.c.h.b16 %v4570
    %v6829 = vunpack.c.l.b16 %v4571
    %v6830 = vunpack.c.h.b16 %v4571
    %v6831 = vunpack.c.l.b16 %v4572
    %v6832 = vunpack.c.h.b16 %v4572
    %v6833 = vunpack.c.l.b16 %v4573
    %v6834 = vunpack.c.h.b16 %v4573
    %v6835 = vunpack.c.l.b16 %v4574
    %v6836 = vunpack.c.h.b16 %v4574
    %v6837 = vunpack.c.l.b16 %v4575
    %v6838 = vunpack.c.h.b16 %v4575
    %v6839 = vunpack.c.l.b16 %v4576
    %v6840 = vunpack.c.h.b16 %v4576
    %v6841 = vunpack.c.l.b16 %v4577
    %v6842 = vunpack.c.h.b16 %v4577
    %v6843 = vunpack.c.l.b16 %v4578
    %v6844 = vunpack.c.h.b16 %v4578
    %v6845 = vunpack.c.l.b16 %v4579
    %v6846 = vunpack.c.h.b16 %v4579
    %v6847 = vunpack.c.l.b16 %v4580
    %v6848 = vunpack.c.h.b16 %v4580
    %v6849 = vunpack.c.l.b16 %v4581
    %v6850 = vunpack.c.h.b16 %v4581
    %v6851 = vunpack.c.l.b16 %v4582
    %v6852 = vunpack.c.h.b16 %v4582
    %v6853 = vunpack.c.l.b16 %v4583
    %v6854 = vunpack.c.h.b16 %v4583
    %v6855 = vunpack.c.l.b16 %v4584
    %v6856 = vunpack.c.h.b16 %v4584
    %v6857 = vunpack.c.l.b16 %v4585
    %v6858 = vunpack.c.h.b16 %v4585
    %v6859 = vunpack.c.l.b16 %v4586
    %v6860 = vunpack.c.h.b16 %v4586
    %v6861 = vunpack.c.l.b16 %v4587
    %v6862 = vunpack.c.h.b16 %v4587
    %v6863 = vunpack.c.l.b16 %v4588
    %v6864 = vunpack.c.h.b16 %v4588
    %v6865 = vunpack.c.l.b16 %v4589
    %v6866 = vunpack.c.h.b16 %v4589
    %v6867 = vunpack.c.l.b16 %v4590
    %v6868 = vunpack.c.h.b16 %v4590
    %v6869 = vunpack.c.l.b16 %v4591
    %v6870 = vunpack.c.h.b16 %v4591
    %v6871 = vunpack.c.l.b16 %v4592
    %v6872 = vunpack.c.h.b16 %v4592
    %v6873 = vunpack.c.l.b16 %v4593
    %v6874 = vunpack.c.h.b16 %v4593
    %v6875 = vunpack.c.l.b16 %v4594
    %v6876 = vunpack.c.h.b16 %v4594
    %v6877 = vunpack.c.l.b16 %v4595
    %v6878 = vunpack.c.h.b16 %v4595
    %v6879 = vunpack.c.l.b16 %v4596
    %v6880 = vunpack.c.h.b16 %v4596
    %v6881 = vunpack.c.l.b16 %v4597
    %v6882 = vunpack.c.h.b16 %v4597
    %v6883 = vunpack.c.l.b16 %v4598
    %v6884 = vunpack.c.h.b16 %v4598
    %v6885 = vunpack.c.l.b16 %v4599
    %v6886 = vunpack.c.h.b16 %v4599
    %v6887 = vunpack.c.l.b16 %v4600
    %v6888 = vunpack.c.h.b16 %v4600
    %v6889 = vunpack.c.l.b16 %v4601
    %v6890 = vunpack.c.h.b16 %v4601
    %v6891 = vunpack.c.l.b16 %v4602
    %v6892 = vunpack.c.h.b16 %v4602
    %v6893 = vunpack.c.l.b16 %v4603
    %v6894 = vunpack.c.h.b16 %v4603
    %v6895 = vunpack.c.l.b16 %v4604
    %v6896 = vunpack.c.h.b16 %v4604
    %v6897 = vunpack.c.l.b16 %v4605
    %v6898 = vunpack.c.h.b16 %v4605
    %v6899 = vunpack.c.l.b16 %v4606
    %v6900 = vunpack.c.h.b16 %v4606
    %v6901 = vunpack.c.l.b16 %v4607
    %v6902 = vunpack.c.h.b16 %v4607
    %v6903 = vunpack.c.l.b16 %v4608
    %v6904 = vunpack.c.h.b16 %v4608
    %v6905 = vunpack.c.l.b16 %v4609
    %v6906 = vunpack.c.h.b16 %v4609
    %v6907 = vunpack.c.l.b16 %v4610
    %v6908 = vunpack.c.h.b16 %v4610
    %v6909 = vunpack.c.l.b16 %v4611
    %v6910 = vunpack.c.h.b16 %v4611
    %v6911 = vunpack.c.l.b16 %v4612
    %v6912 = vunpack.c.h.b16 %v4612
    %v6913 = vunpack.c.l.b16 %v4613
    %v6914 = vunpack.c.h.b16 %v4613
    %v6915 = vunpack.c.l.b16 %v4614
    %v6916 = vunpack.c.h.b16 %v4614
    %v6917 = vunpack.c.l.b16 %v4615
    %v6918 = vunpack.c.h.b16 %v4615
    %v6919 = vunpack.c.l.b16 %v4616
    %v6920 = vunpack.c.h.b16 %v4616
    %v6921 = vunpack.c.l.b16 %v4617
    %v6922 = vunpack.c.h.b16 %v4617
    %v6923 = vunpack.c.l.b16 %v4618
    %v6924 = vunpack.c.h.b16 %v4618
    %v6925 = vunpack.c.l.b16 %v4619
    %v6926 = vunpack.c.h.b16 %v4619
    %v6927 = vunpack.c.l.b16 %v4620
    %v6928 = vunpack.c.h.b16 %v4620
    %v6929 = vunpack.c.l.b16 %v4621
    %v6930 = vunpack.c.h.b16 %v4621
    %v6931 = vunpack.c.l.b16 %v4622
    %v6932 = vunpack.c.h.b16 %v4622
    %v6933 = vunpack.c.l.b16 %v4623
    %v6934 = vunpack.c.h.b16 %v4623
    %v6935 = vunpack.c.l.b16 %v4624
    %v6936 = vunpack.c.h.b16 %v4624
    %v6937 = vunpack.c.l.b16 %v4625
    %v6938 = vunpack.c.h.b16 %v4625
    %v6939 = vunpack.c.l.b16 %v4626
    %v6940 = vunpack.c.h.b16 %v4626
    %v6941 = vunpack.c.l.b16 %v4627
    %v6942 = vunpack.c.h.b16 %v4627
    %v6943 = vunpack.c.l.b16 %v4628
    %v6944 = vunpack.c.h.b16 %v4628
    %v6945 = vunpack.c.l.b16 %v4629
    %v6946 = vunpack.c.h.b16 %v4629
    %v6947 = vunpack.c.l.b16 %v4630
    %v6948 = vunpack.c.h.b16 %v4630
    %v6949 = vunpack.c.l.b16 %v4631
    %v6950 = vunpack.c.h.b16 %v4631
    %v6951 = vunpack.c.l.b16 %v4632
    %v6952 = vunpack.c.h.b16 %v4632
    %v6953 = vunpack.c.l.b16 %v4633
    %v6954 = vunpack.c.h.b16 %v4633
    %v6955 = vunpack.c.l.b16 %v4634
    %v6956 = vunpack.c.h.b16 %v4634
    %v6957 = vunpack.c.l.b16 %v4635
    %v6958 = vunpack.c.h.b16 %v4635
    %v6959 = vunpack.c.l.b16 %v4636
    %v6960 = vunpack.c.h.b16 %v4636
    %v6961 = vunpack.c.l.b16 %v4637
    %v6962 = vunpack.c.h.b16 %v4637
    %v6963 = vunpack.c.l.b16 %v4638
    %v6964 = vunpack.c.h.b16 %v4638
    %v6965 = vunpack.c.l.b16 %v4639
    %v6966 = vunpack.c.h.b16 %v4639
    %v6967 = vunpack.c.l.b16 %v4640
    %v6968 = vunpack.c.h.b16 %v4640
    %v6969 = vunpack.c.l.b16 %v4641
    %v6970 = vunpack.c.h.b16 %v4641
    %v6971 = vunpack.c.l.b16 %v4642
    %v6972 = vunpack.c.h.b16 %v4642
    %v6973 = vunpack.c.l.b16 %v4643
    %v6974 = vunpack.c.h.b16 %v4643
    %v6975 = vunpack.c.l.b16 %v4644
    %v6976 = vunpack.c.h.b16 %v4644
    %v6977 = vunpack.c.l.b16 %v4645
    %v6978 = vunpack.c.h.b16 %v4645
    %v6979 = vunpack.c.l.b16 %v4646
    %v6980 = vunpack.c.h.b16 %v4646
    %v6981 = vunpack.c.l.b16 %v4647
    %v6982 = vunpack.c.h.b16 %v4647
    %v6983 = vunpack.c.l.b16 %v4648
    %v6984 = vunpack.c.h.b16 %v4648
    %v6985 = vunpack.c.l.b16 %v4649
    %v6986 = vunpack.c.h.b16 %v4649
    %v6987 = vunpack.c.l.b16 %v4650
    %v6988 = vunpack.c.h.b16 %v4650
    %v6989 = vunpack.c.l.b16 %v4651
    %v6990 = vunpack.c.h.b16 %v4651
    %v6991 = vunpack.c.l.b16 %v4652
    %v6992 = vunpack.c.h.b16 %v4652
    %v6993 = vunpack.c.l.b16 %v4653
    %v6994 = vunpack.c.h.b16 %v4653
    %v6995 = vunpack.c.l.b16 %v4654
    %v6996 = vunpack.c.h.b16 %v4654
    %v6997 = vunpack.c.l.b16 %v4655
    %v6998 = vunpack.c.h.b16 %v4655
    %v6999 = vunpack.c.l.b16 %v4656
    %v7000 = vunpack.c.h.b16 %v4656
    %v7001 = vunpack.c.l.b16 %v4657
    %v7002 = vunpack.c.h.b16 %v4657
    %v7003 = vunpack.c.l.b16 %v4658
    %v7004 = vunpack.c.h.b16 %v4658
    %v7005 = vunpack.c.l.b16 %v4659
    %v7006 = vunpack.c.h.b16 %v4659
    %v7007 = vunpack.c.l.b16 %v4660
    %v7008 = vunpack.c.h.b16 %v4660
    %v7009 = vunpack.c.l.b16 %v4661
    %v7010 = vunpack.c.h.b16 %v4661
    %v7011 = vunpack.c.l.b16 %v4662
    %v7012 = vunpack.c.h.b16 %v4662
    %v7013 = vunpack.c.l.b16 %v4663
    %v7014 = vunpack.c.h.b16 %v4663
    %v7015 = vunpack.c.l.b16 %v4664
    %v7016 = vunpack.c.h.b16 %v4664
    %v7017 = vunpack.c.l.b16 %v4665
    %v7018 = vunpack.c.h.b16 %v4665
    %v7019 = vunpack.c.l.b16 %v4666
    %v7020 = vunpack.c.h.b16 %v4666
    %v7021 = vunpack.c.l.b16 %v4667
    %v7022 = vunpack.c.h.b16 %v4667
    %v7023 = vunpack.c.l.b16 %v4668
    %v7024 = vunpack.c.h.b16 %v4668
    %v7025 = vunpack.c.l.b16 %v4669
    %v7026 = vunpack.c.h.b16 %v4669
    %v7027 = vunpack.c.l.b16 %v4670
    %v7028 = vunpack.c.h.b16 %v4670
    %v7029 = vunpack.c.l.b16 %v4671
    %v7030 = vunpack.c.h.b16 %v4671
    %v7031 = vunpack.c.l.b16 %v4672
    %v7032 = vunpack.c.h.b16 %v4672
    %v7033 = vunpack.c.l.b16 %v4673
    %v7034 = vunpack.c.h.b16 %v4673
    %v7035 = vunpack.c.l.b16 %v4674
    %v7036 = vunpack.c.h.b16 %v4674
    %v7037 = vunpack.c.l.b16 %v4675
    %v7038 = vunpack.c.h.b16 %v4675
    %v7039 = vunpack.c.l.b16 %v4676
    %v7040 = vunpack.c.h.b16 %v4676
    %v7041 = vunpack.c.l.b16 %v4677
    %v7042 = vunpack.c.h.b16 %v4677
    %v7043 = vunpack.c.l.b16 %v4678
    %v7044 = vunpack.c.h.b16 %v4678
    %v7045 = vunpack.c.l.b16 %v4679
    %v7046 = vunpack.c.h.b16 %v4679
    %v7047 = vunpack.c.l.b16 %v4680
    %v7048 = vunpack.c.h.b16 %v4680
    %v7049 = vunpack.c.l.b16 %v4681
    %v7050 = vunpack.c.h.b16 %v4681
    %v7051 = vunpack.c.l.b16 %v4682
    %v7052 = vunpack.c.h.b16 %v4682
    %v7053 = vunpack.c.l.b16 %v4683
    %v7054 = vunpack.c.h.b16 %v4683
    %v7055 = vunpack.c.l.b16 %v4684
    %v7056 = vunpack.c.h.b16 %v4684
    %v7057 = vunpack.c.l.b16 %v4685
    %v7058 = vunpack.c.h.b16 %v4685
    %v7059 = vunpack.c.l.b16 %v4686
    %v7060 = vunpack.c.h.b16 %v4686
    %v7061 = vunpack.c.l.b16 %v4687
    %v7062 = vunpack.c.h.b16 %v4687
    %v7063 = vunpack.c.l.b16 %v4688
    %v7064 = vunpack.c.h.b16 %v4688
    %v7065 = vunpack.c.l.b16 %v4689
    %v7066 = vunpack.c.h.b16 %v4689
    %v7067 = vunpack.c.l.b16 %v4690
    %v7068 = vunpack.c.h.b16 %v4690
    %v7069 = vunpack.c.l.b16 %v4691
    %v7070 = vunpack.c.h.b16 %v4691
    %v7071 = vunpack.c.l.b16 %v4692
    %v7072 = vunpack.c.h.b16 %v4692
    %v7073 = vunpack.c.l.b16 %v4693
    %v7074 = vunpack.c.h.b16 %v4693
    %v7075 = vunpack.c.l.b16 %v4694
    %v7076 = vunpack.c.h.b16 %v4694
    %v7077 = vunpack.c.l.b16 %v4695
    %v7078 = vunpack.c.h.b16 %v4695
    %v7079 = vunpack.c.l.b16 %v4696
    %v7080 = vunpack.c.h.b16 %v4696
    %v7081 = vunpack.c.l.b16 %v4697
    %v7082 = vunpack.c.h.b16 %v4697
    %v7083 = vunpack.c.l.b16 %v4698
    %v7084 = vunpack.c.h.b16 %v4698
    %v7085 = vunpack.c.l.b16 %v4699
    %v7086 = vunpack.c.h.b16 %v4699
    %v7087 = vunpack.c.l.b16 %v4700
    %v7088 = vunpack.c.h.b16 %v4700
    %v7089 = vunpack.c.l.b16 %v4701
    %v7090 = vunpack.c.h.b16 %v4701
    %v7091 = vunpack.c.l.b16 %v4702
    %v7092 = vunpack.c.h.b16 %v4702
    %v7093 = vunpack.c.l.b16 %v4703
    %v7094 = vunpack.c.h.b16 %v4703
    %v7095 = vunpack.c.l.b16 %v4704
    %v7096 = vunpack.c.h.b16 %v4704
    %v7097 = vunpack.c.l.b16 %v4705
    %v7098 = vunpack.c.h.b16 %v4705
    %v7099 = vunpack.c.l.b16 %v4706
    %v7100 = vunpack.c.h.b16 %v4706
    %v7101 = vunpack.c.l.b16 %v4707
    %v7102 = vunpack.c.h.b16 %v4707
    %v7103 = vunpack.c.l.b16 %v4708
    %v7104 = vunpack.c.h.b16 %v4708
    %v7105 = vunpack.c.l.b16 %v4709
    %v7106 = vunpack.c.h.b16 %v4709
    %v7107 = vunpack.c.l.b16 %v4710
    %v7108 = vunpack.c.h.b16 %v4710
    %v7109 = vunpack.c.l.b16 %v4711
    %v7110 = vunpack.c.h.b16 %v4711
    %v7111 = vunpack.c.l.b16 %v4712
    %v7112 = vunpack.c.h.b16 %v4712
    %v7113 = vunpack.c.l.b16 %v4713
    %v7114 = vunpack.c.h.b16 %v4713
    %v7115 = vunpack.c.l.b16 %v4714
    %v7116 = vunpack.c.h.b16 %v4714
    %v7117 = vunpack.c.l.b16 %v4715
    %v7118 = vunpack.c.h.b16 %v4715
    %v7119 = vunpack.c.l.b16 %v4716
    %v7120 = vunpack.c.h.b16 %v4716
    %v7121 = vunpack.c.l.b16 %v4717
    %v7122 = vunpack.c.h.b16 %v4717
    %v7123 = vunpack.c.l.b16 %v4718
    %v7124 = vunpack.c.h.b16 %v4718
    %v7125 = vunpack.c.l.b16 %v4719
    %v7126 = vunpack.c.h.b16 %v4719
    %v7127 = vunpack.c.l.b16 %v4720
    %v7128 = vunpack.c.h.b16 %v4720
    %v7129 = vunpack.c.l.b16 %v4721
    %v7130 = vunpack.c.h.b16 %v4721
    %v7131 = vunpack.c.l.b16 %v4722
    %v7132 = vunpack.c.h.b16 %v4722
    %v7133 = vunpack.c.l.b16 %v4723
    %v7134 = vunpack.c.h.b16 %v4723
    %v7135 = vunpack.c.l.b16 %v4724
    %v7136 = vunpack.c.h.b16 %v4724
    %v7137 = vunpack.c.l.b16 %v4725
    %v7138 = vunpack.c.h.b16 %v4725
    %v7139 = vunpack.c.l.b16 %v4726
    %v7140 = vunpack.c.h.b16 %v4726
    %v7141 = vunpack.c.l.b16 %v4727
    %v7142 = vunpack.c.h.b16 %v4727
    %v7143 = vunpack.c.l.b16 %v4728
    %v7144 = vunpack.c.h.b16 %v4728
    %v7145 = vunpack.c.l.b16 %v4729
    %v7146 = vunpack.c.h.b16 %v4729
    %v7147 = vunpack.c.l.b16 %v4730
    %v7148 = vunpack.c.h.b16 %v4730
    %v7149 = vunpack.c.l.b16 %v4731
    %v7150 = vunpack.c.h.b16 %v4731
    %v7151 = vunpack.c.l.b16 %v4732
    %v7152 = vunpack.c.h.b16 %v4732
    %v7153 = vunpack.c.l.b16 %v4733
    %v7154 = vunpack.c.h.b16 %v4733
    %v7155 = vunpack.c.l.b16 %v4734
    %v7156 = vunpack.c.h.b16 %v4734
    %v7157 = vunpack.c.l.b16 %v4735
    %v7158 = vunpack.c.h.b16 %v4735
    %v7159 = vunpack.c.l.b16 %v4736
    %v7160 = vunpack.c.h.b16 %v4736
    %v7161 = vunpack.c.l.b16 %v4737
    %v7162 = vunpack.c.h.b16 %v4737
    %v7163 = vunpack.c.l.b16 %v4738
    %v7164 = vunpack.c.h.b16 %v4738
    %v7165 = vunpack.c.l.b16 %v4739
    %v7166 = vunpack.c.h.b16 %v4739
    %v7167 = vunpack.c.l.b16 %v4740
    %v7168 = vunpack.c.h.b16 %v4740
    %v7169 = vunpack.c.l.b16 %v4741
    %v7170 = vunpack.c.h.b16 %v4741
    %v7171 = vunpack.c.l.b16 %v4742
    %v7172 = vunpack.c.h.b16 %v4742
    %v7173 = vunpack.c.l.b16 %v4743
    %v7174 = vunpack.c.h.b16 %v4743
    %v7175 = vunpack.c.l.b16 %v4744
    %v7176 = vunpack.c.h.b16 %v4744
    %v7177 = vunpack.c.l.b16 %v4745
    %v7178 = vunpack.c.h.b16 %v4745
    %v7179 = vunpack.c.l.b16 %v4746
    %v7180 = vunpack.c.h.b16 %v4746
    %v7181 = vunpack.c.l.b16 %v4747
    %v7182 = vunpack.c.h.b16 %v4747
    %v7183 = vunpack.c.l.b16 %v4748
    %v7184 = vunpack.c.h.b16 %v4748
    %v7185 = vunpack.c.l.b16 %v4749
    %v7186 = vunpack.c.h.b16 %v4749
    %v7187 = vunpack.c.l.b16 %v4750
    %v7188 = vunpack.c.h.b16 %v4750
    %v7189 = vunpack.c.l.b16 %v4751
    %v7190 = vunpack.c.h.b16 %v4751
    %v7191 = vunpack.c.l.b16 %v4752
    %v7192 = vunpack.c.h.b16 %v4752
    %v7193 = vunpack.c.l.b16 %v4753
    %v7194 = vunpack.c.h.b16 %v4753
    %v7195 = vunpack.c.l.b16 %v4754
    %v7196 = vunpack.c.h.b16 %v4754
    %v7197 = vunpack.c.l.b16 %v4755
    %v7198 = vunpack.c.h.b16 %v4755
    %v7199 = vunpack.c.l.b16 %v4756
    %v7200 = vunpack.c.h.b16 %v4756
    %v7201 = vunpack.c.l.b16 %v4757
    %v7202 = vunpack.c.h.b16 %v4757
    %v7203 = vunpack.c.l.b16 %v4758
    %v7204 = vunpack.c.h.b16 %v4758
    %v7205 = vunpack.c.l.b16 %v4759
    %v7206 = vunpack.c.h.b16 %v4759
    %v7207 = vunpack.c.l.b16 %v4760
    %v7208 = vunpack.c.h.b16 %v4760
    %v7209 = vunpack.c.l.b16 %v4761
    %v7210 = vunpack.c.h.b16 %v4761
    %v7211 = vunpack.c.l.b16 %v4762
    %v7212 = vunpack.c.h.b16 %v4762
    %v7213 = vunpack.c.l.b16 %v4763
    %v7214 = vunpack.c.h.b16 %v4763
    %v7215 = vunpack.c.l.b16 %v4764
    %v7216 = vunpack.c.h.b16 %v4764
    %v7217 = vunpack.c.l.b16 %v4765
    %v7218 = vunpack.c.h.b16 %v4765
    %v7219 = vunpack.c.l.b16 %v4766
    %v7220 = vunpack.c.h.b16 %v4766
    %v7221 = vpack.c.b16 %v5631, %v5621
    %v7222 = vpack.c.b16 %v5632, %v5622
    %v7223 = vpack.c.b16 %v5633, %v5623
    %v7224 = vpack.c.b16 %v5634, %v5624
    %v7225 = vpack.c.b16 %v5635, %v5625
    %v7226 = vpack.c.b16 %v5636, %v5626
    %v7227 = vpack.c.b16 %v5637, %v5627
    %v7228 = vpack.c.b16 %v5638, %v5628
    %v7229 = vpack.c.b16 %v5639, %v5629
    %v7230 = vpack.c.b16 %v5640, %v5630
    %v7231 = vpack.c.b16 %v5651, %v5641
    %v7232 = vpack.c.b16 %v5652, %v5642
    %v7233 = vpack.c.b16 %v5653, %v5643
    %v7234 = vpack.c.b16 %v5654, %v5644
    %v7235 = vpack.c.b16 %v5655, %v5645
    %v7236 = vpack.c.b16 %v5656, %v5646
    %v7237 = vpack.c.b16 %v5657, %v5647
    %v7238 = vpack.c.b16 %v5658, %v5648
    %v7239 = vpack.c.b16 %v5659, %v5649
    %v7240 = vpack.c.b16 %v5660, %v5650
    %v7241 = vpack.c.b16 %v5671, %v5661
    %v7242 = vpack.c.b16 %v5672, %v5662
    %v7243 = vpack.c.b16 %v5673, %v5663
    %v7244 = vpack.c.b16 %v5674, %v5664
    %v7245 = vpack.c.b16 %v5675, %v5665
    %v7246 = vpack.c.b16 %v5676, %v5666
    %v7247 = vpack.c.b16 %v5677, %v5667
    %v7248 = vpack.c.b16 %v5678, %v5668
    %v7249 = vpack.c.b16 %v5679, %v5669
    %v7250 = vpack.c.b16 %v5680, %v5670
    %v7251 = vpack.c.b16 %v5691, %v5681
    %v7252 = vpack.c.b16 %v5692, %v5682
    %v7253 = vpack.c.b16 %v5693, %v5683
    %v7254 = vpack.c.b16 %v5694, %v5684
    %v7255 = vpack.c.b16 %v5695, %v5685
    %v7256 = vpack.c.b16 %v5696, %v5686
    %v7257 = vpack.c.b16 %v5697, %v5687
    %v7258 = vpack.c.b16 %v5698, %v5688
    %v7259 = vpack.c.b16 %v5699, %v5689
    %v7260 = vpack.c.b16 %v5700, %v5690
    %v7261 = vpack.c.b16 %v5711, %v5701
    %v7262 = vpack.c.b16 %v5712, %v5702
    %v7263 = vpack.c.b16 %v5713, %v5703
    %v7264 = vpack.c.b16 %v5714, %v5704
    %v7265 = vpack.c.b16 %v5715, %v5705
    %v7266 = vpack.c.b16 %v5716, %v5706
    %v7267 = vpack.c.b16 %v5717, %v5707
    %v7268 = vpack.c.b16 %v5718, %v5708
    %v7269 = vpack.c.b16 %v5719, %v5709
    %v7270 = vpack.c.b16 %v5720, %v5710
    %v7271 = vpack.c.b16 %v5731, %v5721
    %v7272 = vpack.c.b16 %v5732, %v5722
    %v7273 = vpack.c.b16 %v5733, %v5723
    %v7274 = vpack.c.b16 %v5734, %v5724
    %v7275 = vpack.c.b16 %v5735, %v5725
    %v7276 = vpack.c.b16 %v5736, %v5726
    %v7277 = vpack.c.b16 %v5737, %v5727
    %v7278 = vpack.c.b16 %v5738, %v5728
    %v7279 = vpack.c.b16 %v5739, %v5729
    %v7280 = vpack.c.b16 %v5740, %v5730
    %v7281 = vpack.c.b16 %v5751, %v5741
    %v7282 = vpack.c.b16 %v5752, %v5742
    %v7283 = vpack.c.b16 %v5753, %v5743
    %v7284 = vpack.c.b16 %v5754, %v5744
    %v7285 = vpack.c.b16 %v5755, %v5745
    %v7286 = vpack.c.b16 %v5756, %v5746
    %v7287 = vpack.c.b16 %v5757, %v5747
    %v7288 = vpack.c.b16 %v5758, %v5748
    %v7289 = vpack.c.b16 %v5759, %v5749
    %v7290 = vpack.c.b16 %v5760, %v5750
    %v7291 = vpack.c.b16 %v5771, %v5761
    %v7292 = vpack.c.b16 %v5772, %v5762
    %v7293 = vpack.c.b16 %v5773, %v5763
    %v7294 = vpack.c.b16 %v5774, %v5764
    %v7295 = vpack.c.b16 %v5775, %v5765
    %v7296 = vpack.c.b16 %v5776, %v5766
    %v7297 = vpack.c.b16 %v5777, %v5767
    %v7298 = vpack.c.b16 %v5778, %v5768
    %v7299 = vpack.c.b16 %v5779, %v5769
    %v7300 = vpack.c.b16 %v5780, %v5770
    %v7301 = vpack.c.b16 %v5791, %v5781
    %v7302 = vpack.c.b16 %v5792, %v5782
    %v7303 = vpack.c.b16 %v5793, %v5783
    %v7304 = vpack.c.b16 %v5794, %v5784
    %v7305 = vpack.c.b16 %v5795, %v5785
    %v7306 = vpack.c.b16 %v5796, %v5786
    %v7307 = vpack.c.b16 %v5797, %v5787
    %v7308 = vpack.c.b16 %v5798, %v5788
    %v7309 = vpack.c.b16 %v5799, %v5789
    %v7310 = vpack.c.b16 %v5800, %v5790
    %v7311 = vpack.c.b16 %v5811, %v5801
    %v7312 = vpack.c.b16 %v5812, %v5802
    %v7313 = vpack.c.b16 %v5813, %v5803
    %v7314 = vpack.c.b16 %v5814, %v5804
    %v7315 = vpack.c.b16 %v5815, %v5805
    %v7316 = vpack.c.b16 %v5816, %v5806
    %v7317 = vpack.c.b16 %v5817, %v5807
    %v7318 = vpack.c.b16 %v5818, %v5808
    %v7319 = vpack.c.b16 %v5819, %v5809
    %v7320 = vpack.c.b16 %v5820, %v5810
    %v7321 = vpack.c.b16 %v5831, %v5821
    %v7322 = vpack.c.b16 %v5832, %v5822
    %v7323 = vpack.c.b16 %v5833, %v5823
    %v7324 = vpack.c.b16 %v5834, %v5824
    %v7325 = vpack.c.b16 %v5835, %v5825
    %v7326 = vpack.c.b16 %v5836, %v5826
    %v7327 = vpack.c.b16 %v5837, %v5827
    %v7328 = vpack.c.b16 %v5838, %v5828
    %v7329 = vpack.c.b16 %v5839, %v5829
    %v7330 = vpack.c.b16 %v5840, %v5830
    %v7331 = vpack.c.b16 %v5851, %v5841
    %v7332 = vpack.c.b16 %v5852, %v5842
    %v7333 = vpack.c.b16 %v5853, %v5843
    %v7334 = vpack.c.b16 %v5854, %v5844
    %v7335 = vpack.c.b16 %v5855, %v5845
    %v7336 = vpack.c.b16 %v5856, %v5846
    %v7337 = vpack.c.b16 %v5857, %v5847
    %v7338 = vpack.c.b16 %v5858, %v5848
    %v7339 = vpack.c.b16 %v5859, %v5849
    %v7340 = vpack.c.b16 %v5860, %v5850
    %v7341 = vpack.c.b16 %v5871, %v5861
    %v7342 = vpack.c.b16 %v5872, %v5862
    %v7343 = vpack.c.b16 %v5873, %v5863
    %v7344 = vpack.c.b16 %v5874, %v5864
    %v7345 = vpack.c.b16 %v5875, %v5865
    %v7346 = vpack.c.b16 %v5876, %v5866
    %v7347 = vpack.c.b16 %v5877, %v5867
    %v7348 = vpack.c.b16 %v5878, %v5868
    %v7349 = vpack.c.b16 %v5879, %v5869
    %v7350 = vpack.c.b16 %v5880, %v5870
    %v7351 = vpack.c.b16 %v5891, %v5881
    %v7352 = vpack.c.b16 %v5892, %v5882
    %v7353 = vpack.c.b16 %v5893, %v5883
    %v7354 = vpack.c.b16 %v5894, %v5884
    %v7355 = vpack.c.b16 %v5895, %v5885
    %v7356 = vpack.c.b16 %v5896, %v5886
    %v7357 = vpack.c.b16 %v5897, %v5887
    %v7358 = vpack.c.b16 %v5898, %v5888
    %v7359 = vpack.c.b16 %v5899, %v5889
    %v7360 = vpack.c.b16 %v5900, %v5890
    %v7361 = vpack.c.b16 %v5911, %v5901
    %v7362 = vpack.c.b16 %v5912, %v5902
    %v7363 = vpack.c.b16 %v5913, %v5903
    %v7364 = vpack.c.b16 %v5914, %v5904
    %v7365 = vpack.c.b16 %v5915, %v5905
    %v7366 = vpack.c.b16 %v5916, %v5906
    %v7367 = vpack.c.b16 %v5917, %v5907
    %v7368 = vpack.c.b16 %v5918, %v5908
    %v7369 = vpack.c.b16 %v5919, %v5909
    %v7370 = vpack.c.b16 %v5920, %v5910
    %v7371 = vpack.c.b16 %v5931, %v5921
    %v7372 = vpack.c.b16 %v5932, %v5922
    %v7373 = vpack.c.b16 %v5933, %v5923
    %v7374 = vpack.c.b16 %v5934, %v5924
    %v7375 = vpack.c.b16 %v5935, %v5925
    %v7376 = vpack.c.b16 %v5936, %v5926
    %v7377 = vpack.c.b16 %v5937, %v5927
    %v7378 = vpack.c.b16 %v5938, %v5928
    %v7379 = vpack.c.b16 %v5939, %v5929
    %v7380 = vpack.c.b16 %v5940, %v5930
    %v7381 = vpack.c.b16 %v5951, %v5941
    %v7382 = vpack.c.b16 %v5952, %v5942
    %v7383 = vpack.c.b16 %v5953, %v5943
    %v7384 = vpack.c.b16 %v5954, %v5944
    %v7385 = vpack.c.b16 %v5955, %v5945
    %v7386 = vpack.c.b16 %v5956, %v5946
    %v7387 = vpack.c.b16 %v5957, %v5947
    %v7388 = vpack.c.b16 %v5958, %v5948
    %v7389 = vpack.c.b16 %v5959, %v5949
    %v7390 = vpack.c.b16 %v5960, %v5950
    %v7391 = vpack.c.b16 %v5971, %v5961
    %v7392 = vpack.c.b16 %v5972, %v5962
    %v7393 = vpack.c.b16 %v5973, %v5963
    %v7394 = vpack.c.b16 %v5974, %v5964
    %v7395 = vpack.c.b16 %v5975, %v5965
    %v7396 = vpack.c.b16 %v5976, %v5966
    %v7397 = vpack.c.b16 %v5977, %v5967
    %v7398 = vpack.c.b16 %v5978, %v5968
    %v7399 = vpack.c.b16 %v5979, %v5969
    %v7400 = vpack.c.b16 %v5980, %v5970
    %v7401 = vpack.c.b16 %v5991, %v5981
    %v7402 = vpack.c.b16 %v5992, %v5982
    %v7403 = vpack.c.b16 %v5993, %v5983
    %v7404 = vpack.c.b16 %v5994, %v5984
    %v7405 = vpack.c.b16 %v5995, %v5985
    %v7406 = vpack.c.b16 %v5996, %v5986
    %v7407 = vpack.c.b16 %v5997, %v5987
    %v7408 = vpack.c.b16 %v5998, %v5988
    %v7409 = vpack.c.b16 %v5999, %v5989
    %v7410 = vpack.c.b16 %v6000, %v5990
    %v7411 = vpack.c.b16 %v6011, %v6001
    %v7412 = vpack.c.b16 %v6012, %v6002
    %v7413 = vpack.c.b16 %v6013, %v6003
    %v7414 = vpack.c.b16 %v6014, %v6004
    %v7415 = vpack.c.b16 %v6015, %v6005
    %v7416 = vpack.c.b16 %v6016, %v6006
    %v7417 = vpack.c.b16 %v6017, %v6007
    %v7418 = vpack.c.b16 %v6018, %v6008
    %v7419 = vpack.c.b16 %v6019, %v6009
    %v7420 = vpack.c.b16 %v6020, %v6010
    %v7421 = vpack.c.b16 %v6031, %v6021
    %v7422 = vpack.c.b16 %v6032, %v6022
    %v7423 = vpack.c.b16 %v6033, %v6023
    %v7424 = vpack.c.b16 %v6034, %v6024
    %v7425 = vpack.c.b16 %v6035, %v6025
    %v7426 = vpack.c.b16 %v6036, %v6026
    %v7427 = vpack.c.b16 %v6037, %v6027
    %v7428 = vpack.c.b16 %v6038, %v6028
    %v7429 = vpack.c.b16 %v6039, %v6029
    %v7430 = vpack.c.b16 %v6040, %v6030
    %v7431 = vpack.c.b16 %v6051, %v6041
    %v7432 = vpack.c.b16 %v6052, %v6042
    %v7433 = vpack.c.b16 %v6053, %v6043
    %v7434 = vpack.c.b16 %v6054, %v6044
    %v7435 = vpack.c.b16 %v6055, %v6045
    %v7436 = vpack.c.b16 %v6056, %v6046
    %v7437 = vpack.c.b16 %v6057, %v6047
    %v7438 = vpack.c.b16 %v6058, %v6048
    %v7439 = vpack.c.b16 %v6059, %v6049
    %v7440 = vpack.c.b16 %v6060, %v6050
    %v7441 = vpack.c.b16 %v6071, %v6061
    %v7442 = vpack.c.b16 %v6072, %v6062
    %v7443 = vpack.c.b16 %v6073, %v6063
    %v7444 = vpack.c.b16 %v6074, %v6064
    %v7445 = vpack.c.b16 %v6075, %v6065
    %v7446 = vpack.c.b16 %v6076, %v6066
    %v7447 = vpack.c.b16 %v6077, %v6067
    %v7448 = vpack.c.b16 %v6078, %v6068
    %v7449 = vpack.c.b16 %v6079, %v6069
    %v7450 = vpack.c.b16 %v6080, %v6070
    %v7451 = vpack.c.b16 %v6091, %v6081
    %v7452 = vpack.c.b16 %v6092, %v6082
    %v7453 = vpack.c.b16 %v6093, %v6083
    %v7454 = vpack.c.b16 %v6094, %v6084
    %v7455 = vpack.c.b16 %v6095, %v6085
    %v7456 = vpack.c.b16 %v6096, %v6086
    %v7457 = vpack.c.b16 %v6097, %v6087
    %v7458 = vpack.c.b16 %v6098, %v6088
    %v7459 = vpack.c.b16 %v6099, %v6089
    %v7460 = vpack.c.b16 %v6100, %v6090
    %v7461 = vpack.c.b16 %v6111, %v6101
    %v7462 = vpack.c.b16 %v6112, %v6102
    %v7463 = vpack.c.b16 %v6113, %v6103
    %v7464 = vpack.c.b16 %v6114, %v6104
    %v7465 = vpack.c.b16 %v6115, %v6105
    %v7466 = vpack.c.b16 %v6116, %v6106
    %v7467 = vpack.c.b16 %v6117, %v6107
    %v7468 = vpack.c.b16 %v6118, %v6108
    %v7469 = vpack.c.b16 %v6119, %v6109
    %v7470 = vpack.c.b16 %v6120, %v6110
    %v7471 = vpack.c.b16 %v6131, %v6121
    %v7472 = vpack.c.b16 %v6132, %v6122
    %v7473 = vpack.c.b16 %v6133, %v6123
    %v7474 = vpack.c.b16 %v6134, %v6124
    %v7475 = vpack.c.b16 %v6135, %v6125
    %v7476 = vpack.c.b16 %v6136, %v6126
    %v7477 = vpack.c.b16 %v6137, %v6127
    %v7478 = vpack.c.b16 %v6138, %v6128
    %v7479 = vpack.c.b16 %v6139, %v6129
    %v7480 = vpack.c.b16 %v6140, %v6130
    %v7481 = vpack.c.b16 %v6151, %v6141
    %v7482 = vpack.c.b16 %v6152, %v6142
    %v7483 = vpack.c.b16 %v6153, %v6143
    %v7484 = vpack.c.b16 %v6154, %v6144
    %v7485 = vpack.c.b16 %v6155, %v6145
    %v7486 = vpack.c.b16 %v6156, %v6146
    %v7487 = vpack.c.b16 %v6157, %v6147
    %v7488 = vpack.c.b16 %v6158, %v6148
    %v7489 = vpack.c.b16 %v6159, %v6149
    %v7490 = vpack.c.b16 %v6160, %v6150
    %v7491 = vpack.c.b16 %v6171, %v6161
    %v7492 = vpack.c.b16 %v6172, %v6162
    %v7493 = vpack.c.b16 %v6173, %v6163
    %v7494 = vpack.c.b16 %v6174, %v6164
    %v7495 = vpack.c.b16 %v6175, %v6165
    %v7496 = vpack.c.b16 %v6176, %v6166
    %v7497 = vpack.c.b16 %v6177, %v6167
    %v7498 = vpack.c.b16 %v6178, %v6168
    %v7499 = vpack.c.b16 %v6179, %v6169
    %v7500 = vpack.c.b16 %v6180, %v6170
    %v7501 = vpack.c.b16 %v6191, %v6181
    %v7502 = vpack.c.b16 %v6192, %v6182
    %v7503 = vpack.c.b16 %v6193, %v6183
    %v7504 = vpack.c.b16 %v6194, %v6184
    %v7505 = vpack.c.b16 %v6195, %v6185
    %v7506 = vpack.c.b16 %v6196, %v6186
    %v7507 = vpack.c.b16 %v6197, %v6187
    %v7508 = vpack.c.b16 %v6198, %v6188
    %v7509 = vpack.c.b16 %v6199, %v6189
    %v7510 = vpack.c.b16 %v6200, %v6190
    %v7511 = vpack.c.b16 %v6211, %v6201
    %v7512 = vpack.c.b16 %v6212, %v6202
    %v7513 = vpack.c.b16 %v6213, %v6203
    %v7514 = vpack.c.b16 %v6214, %v6204
    %v7515 = vpack.c.b16 %v6215, %v6205
    %v7516 = vpack.c.b16 %v6216, %v6206
    %v7517 = vpack.c.b16 %v6217, %v6207
    %v7518 = vpack.c.b16 %v6218, %v6208
    %v7519 = vpack.c.b16 %v6219, %v6209
    %v7520 = vpack.c.b16 %v6220, %v6210
    %v7521 = vpack.c.b16 %v6231, %v6221
    %v7522 = vpack.c.b16 %v6232, %v6222
    %v7523 = vpack.c.b16 %v6233, %v6223
    %v7524 = vpack.c.b16 %v6234, %v6224
    %v7525 = vpack.c.b16 %v6235, %v6225
    %v7526 = vpack.c.b16 %v6236, %v6226
    %v7527 = vpack.c.b16 %v6237, %v6227
    %v7528 = vpack.c.b16 %v6238, %v6228
    %v7529 = vpack.c.b16 %v6239, %v6229
    %v7530 = vpack.c.b16 %v6240, %v6230
    %v7531 = vpack.c.b16 %v6251, %v6241
    %v7532 = vpack.c.b16 %v6252, %v6242
    %v7533 = vpack.c.b16 %v6253, %v6243
    %v7534 = vpack.c.b16 %v6254, %v6244
    %v7535 = vpack.c.b16 %v6255, %v6245
    %v7536 = vpack.c.b16 %v6256, %v6246
    %v7537 = vpack.c.b16 %v6257, %v6247
    %v7538 = vpack.c.b16 %v6258, %v6248
    %v7539 = vpack.c.b16 %v6259, %v6249
    %v7540 = vpack.c.b16 %v6260, %v6250
    %v7541 = vpack.c.b16 %v6271, %v6261
    %v7542 = vpack.c.b16 %v6272, %v6262
    %v7543 = vpack.c.b16 %v6273, %v6263
    %v7544 = vpack.c.b16 %v6274, %v6264
    %v7545 = vpack.c.b16 %v6275, %v6265
    %v7546 = vpack.c.b16 %v6276, %v6266
    %v7547 = vpack.c.b16 %v6277, %v6267
    %v7548 = vpack.c.b16 %v6278, %v6268
    %v7549 = vpack.c.b16 %v6279, %v6269
    %v7550 = vpack.c.b16 %v6280, %v6270
    %v7551 = vpack.c.b16 %v6291, %v6281
    %v7552 = vpack.c.b16 %v6292, %v6282
    %v7553 = vpack.c.b16 %v6293, %v6283
    %v7554 = vpack.c.b16 %v6294, %v6284
    %v7555 = vpack.c.b16 %v6295, %v6285
    %v7556 = vpack.c.b16 %v6296, %v6286
    %v7557 = vpack.c.b16 %v6297, %v6287
    %v7558 = vpack.c.b16 %v6298, %v6288
    %v7559 = vpack.c.b16 %v6299, %v6289
    %v7560 = vpack.c.b16 %v6300, %v6290
    %v7561 = vpack.c.b16 %v6311, %v6301
    %v7562 = vpack.c.b16 %v6312, %v6302
    %v7563 = vpack.c.b16 %v6313, %v6303
    %v7564 = vpack.c.b16 %v6314, %v6304
    %v7565 = vpack.c.b16 %v6315, %v6305
    %v7566 = vpack.c.b16 %v6316, %v6306
    %v7567 = vpack.c.b16 %v6317, %v6307
    %v7568 = vpack.c.b16 %v6318, %v6308
    %v7569 = vpack.c.b16 %v6319, %v6309
    %v7570 = vpack.c.b16 %v6320, %v6310
    %v7571 = vpack.c.b16 %v6331, %v6321
    %v7572 = vpack.c.b16 %v6332, %v6322
    %v7573 = vpack.c.b16 %v6333, %v6323
    %v7574 = vpack.c.b16 %v6334, %v6324
    %v7575 = vpack.c.b16 %v6335, %v6325
    %v7576 = vpack.c.b16 %v6336, %v6326
    %v7577 = vpack.c.b16 %v6337, %v6327
    %v7578 = vpack.c.b16 %v6338, %v6328
    %v7579 = vpack.c.b16 %v6339, %v6329
    %v7580 = vpack.c.b16 %v6340, %v6330
    %v7581 = vpack.c.b16 %v6351, %v6341
    %v7582 = vpack.c.b16 %v6352, %v6342
    %v7583 = vpack.c.b16 %v6353, %v6343
    %v7584 = vpack.c.b16 %v6354, %v6344
    %v7585 = vpack.c.b16 %v6355, %v6345
    %v7586 = vpack.c.b16 %v6356, %v6346
    %v7587 = vpack.c.b16 %v6357, %v6347
    %v7588 = vpack.c.b16 %v6358, %v6348
    %v7589 = vpack.c.b16 %v6359, %v6349
    %v7590 = vpack.c.b16 %v6360, %v6350
    %v7591 = vpack.c.b16 %v6371, %v6361
    %v7592 = vpack.c.b16 %v6372, %v6362
    %v7593 = vpack.c.b16 %v6373, %v6363
    %v7594 = vpack.c.b16 %v6374, %v6364
    %v7595 = vpack.c.b16 %v6375, %v6365
    %v7596 = vpack.c.b16 %v6376, %v6366
    %v7597 = vpack.c.b16 %v6377, %v6367
    %v7598 = vpack.c.b16 %v6378, %v6368
    %v7599 = vpack.c.b16 %v6379, %v6369
    %v7600 = vpack.c.b16 %v6380, %v6370
    %v7601 = vpack.c.b16 %v6391, %v6381
    %v7602 = vpack.c.b16 %v6392, %v6382
    %v7603 = vpack.c.b16 %v6393, %v6383
    %v7604 = vpack.c.b16 %v6394, %v6384
    %v7605 = vpack.c.b16 %v6395, %v6385
    %v7606 = vpack.c.b16 %v6396, %v6386
    %v7607 = vpack.c.b16 %v6397, %v6387
    %v7608 = vpack.c.b16 %v6398, %v6388
    %v7609 = vpack.c.b16 %v6399, %v6389
    %v7610 = vpack.c.b16 %v6400, %v6390
    %v7611 = vpack.c.b16 %v6411, %v6401
    %v7612 = vpack.c.b16 %v6412, %v6402
    %v7613 = vpack.c.b16 %v6413, %v6403
    %v7614 = vpack.c.b16 %v6414, %v6404
    %v7615 = vpack.c.b16 %v6415, %v6405
    %v7616 = vpack.c.b16 %v6416, %v6406
    %v7617 = vpack.c.b16 %v6417, %v6407
    %v7618 = vpack.c.b16 %v6418, %v6408
    %v7619 = vpack.c.b16 %v6419, %v6409
    %v7620 = vpack.c.b16 %v6420, %v6410
    %v7621 = vpack.c.b16 %v6431, %v6421
    %v7622 = vpack.c.b16 %v6432, %v6422
    %v7623 = vpack.c.b16 %v6433, %v6423
    %v7624 = vpack.c.b16 %v6434, %v6424
    %v7625 = vpack.c.b16 %v6435, %v6425
    %v7626 = vpack.c.b16 %v6436, %v6426
    %v7627 = vpack.c.b16 %v6437, %v6427
    %v7628 = vpack.c.b16 %v6438, %v6428
    %v7629 = vpack.c.b16 %v6439, %v6429
    %v7630 = vpack.c.b16 %v6440, %v6430
    %v7631 = vpack.c.b16 %v6451, %v6441
    %v7632 = vpack.c.b16 %v6452, %v6442
    %v7633 = vpack.c.b16 %v6453, %v6443
    %v7634 = vpack.c.b16 %v6454, %v6444
    %v7635 = vpack.c.b16 %v6455, %v6445
    %v7636 = vpack.c.b16 %v6456, %v6446
    %v7637 = vpack.c.b16 %v6457, %v6447
    %v7638 = vpack.c.b16 %v6458, %v6448
    %v7639 = vpack.c.b16 %v6459, %v6449
    %v7640 = vpack.c.b16 %v6460, %v6450
    %v7641 = vpack.c.b16 %v6471, %v6461
    %v7642 = vpack.c.b16 %v6472, %v6462
    %v7643 = vpack.c.b16 %v6473, %v6463
    %v7644 = vpack.c.b16 %v6474, %v6464
    %v7645 = vpack.c.b16 %v6475, %v6465
    %v7646 = vpack.c.b16 %v6476, %v6466
    %v7647 = vpack.c.b16 %v6477, %v6467
    %v7648 = vpack.c.b16 %v6478, %v6468
    %v7649 = vpack.c.b16 %v6479, %v6469
    %v7650 = vpack.c.b16 %v6480, %v6470
    %v7651 = vpack.c.b16 %v6491, %v6481
    %v7652 = vpack.c.b16 %v6492, %v6482
    %v7653 = vpack.c.b16 %v6493, %v6483
    %v7654 = vpack.c.b16 %v6494, %v6484
    %v7655 = vpack.c.b16 %v6495, %v6485
    %v7656 = vpack.c.b16 %v6496, %v6486
    %v7657 = vpack.c.b16 %v6497, %v6487
    %v7658 = vpack.c.b16 %v6498, %v6488
    %v7659 = vpack.c.b16 %v6499, %v6489
    %v7660 = vpack.c.b16 %v6500, %v6490
    %v7661 = vpack.c.b16 %v6511, %v6501
    %v7662 = vpack.c.b16 %v6512, %v6502
    %v7663 = vpack.c.b16 %v6513, %v6503
    %v7664 = vpack.c.b16 %v6514, %v6504
    %v7665 = vpack.c.b16 %v6515, %v6505
    %v7666 = vpack.c.b16 %v6516, %v6506
    %v7667 = vpack.c.b16 %v6517, %v6507
    %v7668 = vpack.c.b16 %v6518, %v6508
    %v7669 = vpack.c.b16 %v6519, %v6509
    %v7670 = vpack.c.b16 %v6520, %v6510
    %v7671 = vpack.c.b16 %v6531, %v6521
    %v7672 = vpack.c.b16 %v6532, %v6522
    %v7673 = vpack.c.b16 %v6533, %v6523
    %v7674 = vpack.c.b16 %v6534, %v6524
    %v7675 = vpack.c.b16 %v6535, %v6525
    %v7676 = vpack.c.b16 %v6536, %v6526
    %v7677 = vpack.c.b16 %v6537, %v6527
    %v7678 = vpack.c.b16 %v6538, %v6528
    %v7679 = vpack.c.b16 %v6539, %v6529
    %v7680 = vpack.c.b16 %v6540, %v6530
    %v7681 = vpack.c.b16 %v6551, %v6541
    %v7682 = vpack.c.b16 %v6552, %v6542
    %v7683 = vpack.c.b16 %v6553, %v6543
    %v7684 = vpack.c.b16 %v6554, %v6544
    %v7685 = vpack.c.b16 %v6555, %v6545
    %v7686 = vpack.c.b16 %v6556, %v6546
    %v7687 = vpack.c.b16 %v6557, %v6547
    %v7688 = vpack.c.b16 %v6558, %v6548
    %v7689 = vpack.c.b16 %v6559, %v6549
    %v7690 = vpack.c.b16 %v6560, %v6550
    %v7691 = vpack.c.b16 %v6571, %v6561
    %v7692 = vpack.c.b16 %v6572, %v6562
    %v7693 = vpack.c.b16 %v6573, %v6563
    %v7694 = vpack.c.b16 %v6574, %v6564
    %v7695 = vpack.c.b16 %v6575, %v6565
    %v7696 = vpack.c.b16 %v6576, %v6566
    %v7697 = vpack.c.b16 %v6577, %v6567
    %v7698 = vpack.c.b16 %v6578, %v6568
    %v7699 = vpack.c.b16 %v6579, %v6569
    %v7700 = vpack.c.b16 %v6580, %v6570
    %v7701 = vpack.c.b16 %v6591, %v6581
    %v7702 = vpack.c.b16 %v6592, %v6582
    %v7703 = vpack.c.b16 %v6593, %v6583
    %v7704 = vpack.c.b16 %v6594, %v6584
    %v7705 = vpack.c.b16 %v6595, %v6585
    %v7706 = vpack.c.b16 %v6596, %v6586
    %v7707 = vpack.c.b16 %v6597, %v6587
    %v7708 = vpack.c.b16 %v6598, %v6588
    %v7709 = vpack.c.b16 %v6599, %v6589
    %v7710 = vpack.c.b16 %v6600, %v6590
    %v7711 = vpack.c.b16 %v6611, %v6601
    %v7712 = vpack.c.b16 %v6612, %v6602
    %v7713 = vpack.c.b16 %v6613, %v6603
    %v7714 = vpack.c.b16 %v6614, %v6604
    %v7715 = vpack.c.b16 %v6615, %v6605
    %v7716 = vpack.c.b16 %v6616, %v6606
    %v7717 = vpack.c.b16 %v6617, %v6607
    %v7718 = vpack.c.b16 %v6618, %v6608
    %v7719 = vpack.c.b16 %v6619, %v6609
    %v7720 = vpack.c.b16 %v6620, %v6610
    %v7721 = vpack.c.b16 %v6631, %v6621
    %v7722 = vpack.c.b16 %v6632, %v6622
    %v7723 = vpack.c.b16 %v6633, %v6623
    %v7724 = vpack.c.b16 %v6634, %v6624
    %v7725 = vpack.c.b16 %v6635, %v6625
    %v7726 = vpack.c.b16 %v6636, %v6626
    %v7727 = vpack.c.b16 %v6637, %v6627
    %v7728 = vpack.c.b16 %v6638, %v6628
    %v7729 = vpack.c.b16 %v6639, %v6629
    %v7730 = vpack.c.b16 %v6640, %v6630
    %v7731 = vpack.c.b16 %v6651, %v6641
    %v7732 = vpack.c.b16 %v6652, %v6642
    %v7733 = vpack.c.b16 %v6653, %v6643
    %v7734 = vpack.c.b16 %v6654, %v6644
    %v7735 = vpack.c.b16 %v6655, %v6645
    %v7736 = vpack.c.b16 %v6656, %v6646
    %v7737 = vpack.c.b16 %v6657, %v6647
    %v7738 = vpack.c.b16 %v6658, %v6648
    %v7739 = vpack.c.b16 %v6659, %v6649
    %v7740 = vpack.c.b16 %v6660, %v6650
    %v7741 = vpack.c.b16 %v6671, %v6661
    %v7742 = vpack.c.b16 %v6672, %v6662
    %v7743 = vpack.c.b16 %v6673, %v6663
    %v7744 = vpack.c.b16 %v6674, %v6664
    %v7745 = vpack.c.b16 %v6675, %v6665
    %v7746 = vpack.c.b16 %v6676, %v6666
    %v7747 = vpack.c.b16 %v6677, %v6667
    %v7748 = vpack.c.b16 %v6678, %v6668
    %v7749 = vpack.c.b16 %v6679, %v6669
    %v7750 = vpack.c.b16 %v6680, %v6670
    %v7751 = vpack.c.b16 %v6691, %v6681
    %v7752 = vpack.c.b16 %v6692, %v6682
    %v7753 = vpack.c.b16 %v6693, %v6683
    %v7754 = vpack.c.b16 %v6694, %v6684
    %v7755 = vpack.c.b16 %v6695, %v6685
    %v7756 = vpack.c.b16 %v6696, %v6686
    %v7757 = vpack.c.b16 %v6697, %v6687
    %v7758 = vpack.c.b16 %v6698, %v6688
    %v7759 = vpack.c.b16 %v6699, %v6689
    %v7760 = vpack.c.b16 %v6700, %v6690
    %v7761 = vpack.c.b16 %v6711, %v6701
    %v7762 = vpack.c.b16 %v6712, %v6702
    %v7763 = vpack.c.b16 %v6713, %v6703
    %v7764 = vpack.c.b16 %v6714, %v6704
    %v7765 = vpack.c.b16 %v6715, %v6705
    %v7766 = vpack.c.b16 %v6716, %v6706
    %v7767 = vpack.c.b16 %v6717, %v6707
    %v7768 = vpack.c.b16 %v6718, %v6708
    %v7769 = vpack.c.b16 %v6719, %v6709
    %v7770 = vpack.c.b16 %v6720, %v6710
    %v7771 = vpack.c.b16 %v6731, %v6721
    %v7772 = vpack.c.b16 %v6732, %v6722
    %v7773 = vpack.c.b16 %v6733, %v6723
    %v7774 = vpack.c.b16 %v6734, %v6724
    %v7775 = vpack.c.b16 %v6735, %v6725
    %v7776 = vpack.c.b16 %v6736, %v6726
    %v7777 = vpack.c.b16 %v6737, %v6727
    %v7778 = vpack.c.b16 %v6738, %v6728
    %v7779 = vpack.c.b16 %v6739, %v6729
    %v7780 = vpack.c.b16 %v6740, %v6730
    %v7781 = vpack.c.b16 %v6751, %v6741
    %v7782 = vpack.c.b16 %v6752, %v6742
    %v7783 = vpack.c.b16 %v6753, %v6743
    %v7784 = vpack.c.b16 %v6754, %v6744
    %v7785 = vpack.c.b16 %v6755, %v6745
    %v7786 = vpack.c.b16 %v6756, %v6746
    %v7787 = vpack.c.b16 %v6757, %v6747
    %v7788 = vpack.c.b16 %v6758, %v6748
    %v7789 = vpack.c.b16 %v6759, %v6749
    %v7790 = vpack.c.b16 %v6760, %v6750
    %v7791 = vpack.c.b16 %v6771, %v6761
    %v7792 = vpack.c.b16 %v6772, %v6762
    %v7793 = vpack.c.b16 %v6773, %v6763
    %v7794 = vpack.c.b16 %v6774, %v6764
    %v7795 = vpack.c.b16 %v6775, %v6765
    %v7796 = vpack.c.b16 %v6776, %v6766
    %v7797 = vpack.c.b16 %v6777, %v6767
    %v7798 = vpack.c.b16 %v6778, %v6768
    %v7799 = vpack.c.b16 %v6779, %v6769
    %v7800 = vpack.c.b16 %v6780, %v6770
    %v7801 = vpack.c.b16 %v6791, %v6781
    %v7802 = vpack.c.b16 %v6792, %v6782
    %v7803 = vpack.c.b16 %v6793, %v6783
    %v7804 = vpack.c.b16 %v6794, %v6784
    %v7805 = vpack.c.b16 %v6795, %v6785
    %v7806 = vpack.c.b16 %v6796, %v6786
    %v7807 = vpack.c.b16 %v6797, %v6787
    %v7808 = vpack.c.b16 %v6798, %v6788
    %v7809 = vpack.c.b16 %v6799, %v6789
    %v7810 = vpack.c.b16 %v6800, %v6790
    %v7811 = vpack.c.b16 %v6811, %v6801
    %v7812 = vpack.c.b16 %v6812, %v6802
    %v7813 = vpack.c.b16 %v6813, %v6803
    %v7814 = vpack.c.b16 %v6814, %v6804
    %v7815 = vpack.c.b16 %v6815, %v6805
    %v7816 = vpack.c.b16 %v6816, %v6806
    %v7817 = vpack.c.b16 %v6817, %v6807
    %v7818 = vpack.c.b16 %v6818, %v6808
    %v7819 = vpack.c.b16 %v6819, %v6809
    %v7820 = vpack.c.b16 %v6820, %v6810
    %v7821 = vpack.c.b16 %v6831, %v6821
    %v7822 = vpack.c.b16 %v6832, %v6822
    %v7823 = vpack.c.b16 %v6833, %v6823
    %v7824 = vpack.c.b16 %v6834, %v6824
    %v7825 = vpack.c.b16 %v6835, %v6825
    %v7826 = vpack.c.b16 %v6836, %v6826
    %v7827 = vpack.c.b16 %v6837, %v6827
    %v7828 = vpack.c.b16 %v6838, %v6828
    %v7829 = vpack.c.b16 %v6839, %v6829
    %v7830 = vpack.c.b16 %v6840, %v6830
    %v7831 = vpack.c.b16 %v6851, %v6841
    %v7832 = vpack.c.b16 %v6852, %v6842
    %v7833 = vpack.c.b16 %v6853, %v6843
    %v7834 = vpack.c.b16 %v6854, %v6844
    %v7835 = vpack.c.b16 %v6855, %v6845
    %v7836 = vpack.c.b16 %v6856, %v6846
    %v7837 = vpack.c.b16 %v6857, %v6847
    %v7838 = vpack.c.b16 %v6858, %v6848
    %v7839 = vpack.c.b16 %v6859, %v6849
    %v7840 = vpack.c.b16 %v6860, %v6850
    %v7841 = vpack.c.b16 %v6871, %v6861
    %v7842 = vpack.c.b16 %v6872, %v6862
    %v7843 = vpack.c.b16 %v6873, %v6863
    %v7844 = vpack.c.b16 %v6874, %v6864
    %v7845 = vpack.c.b16 %v6875, %v6865
    %v7846 = vpack.c.b16 %v6876, %v6866
    %v7847 = vpack.c.b16 %v6877, %v6867
    %v7848 = vpack.c.b16 %v6878, %v6868
    %v7849 = vpack.c.b16 %v6879, %v6869
    %v7850 = vpack.c.b16 %v6880, %v6870
    %v7851 = vpack.c.b16 %v6891, %v6881
    %v7852 = vpack.c.b16 %v6892, %v6882
    %v7853 = vpack.c.b16 %v6893, %v6883
    %v7854 = vpack.c.b16 %v6894, %v6884
    %v7855 = vpack.c.b16 %v6895, %v6885
    %v7856 = vpack.c.b16 %v6896, %v6886
    %v7857 = vpack.c.b16 %v6897, %v6887
    %v7858 = vpack.c.b16 %v6898, %v6888
    %v7859 = vpack.c.b16 %v6899, %v6889
    %v7860 = vpack.c.b16 %v6900, %v6890
    %v7861 = vpack.c.b16 %v6911, %v6901
    %v7862 = vpack.c.b16 %v6912, %v6902
    %v7863 = vpack.c.b16 %v6913, %v6903
    %v7864 = vpack.c.b16 %v6914, %v6904
    %v7865 = vpack.c.b16 %v6915, %v6905
    %v7866 = vpack.c.b16 %v6916, %v6906
    %v7867 = vpack.c.b16 %v6917, %v6907
    %v7868 = vpack.c.b16 %v6918, %v6908
    %v7869 = vpack.c.b16 %v6919, %v6909
    %v7870 = vpack.c.b16 %v6920, %v6910
    %v7871 = vpack.c.b16 %v6931, %v6921
    %v7872 = vpack.c.b16 %v6932, %v6922
    %v7873 = vpack.c.b16 %v6933, %v6923
    %v7874 = vpack.c.b16 %v6934, %v6924
    %v7875 = vpack.c.b16 %v6935, %v6925
    %v7876 = vpack.c.b16 %v6936, %v6926
    %v7877 = vpack.c.b16 %v6937, %v6927
    %v7878 = vpack.c.b16 %v6938, %v6928
    %v7879 = vpack.c.b16 %v6939, %v6929
    %v7880 = vpack.c.b16 %v6940, %v6930
    %v7881 = vpack.c.b16 %v6951, %v6941
    %v7882 = vpack.c.b16 %v6952, %v6942
    %v7883 = vpack.c.b16 %v6953, %v6943
    %v7884 = vpack.c.b16 %v6954, %v6944
    %v7885 = vpack.c.b16 %v6955, %v6945
    %v7886 = vpack.c.b16 %v6956, %v6946
    %v7887 = vpack.c.b16 %v6957, %v6947
    %v7888 = vpack.c.b16 %v6958, %v6948
    %v7889 = vpack.c.b16 %v6959, %v6949
    %v7890 = vpack.c.b16 %v6960, %v6950
    %v7891 = vpack.c.b16 %v6971, %v6961
    %v7892 = vpack.c.b16 %v6972, %v6962
    %v7893 = vpack.c.b16 %v6973, %v6963
    %v7894 = vpack.c.b16 %v6974, %v6964
    %v7895 = vpack.c.b16 %v6975, %v6965
    %v7896 = vpack.c.b16 %v6976, %v6966
    %v7897 = vpack.c.b16 %v6977, %v6967
    %v7898 = vpack.c.b16 %v6978, %v6968
    %v7899 = vpack.c.b16 %v6979, %v6969
    %v7900 = vpack.c.b16 %v6980, %v6970
    %v7901 = vpack.c.b16 %v6991, %v6981
    %v7902 = vpack.c.b16 %v6992, %v6982
    %v7903 = vpack.c.b16 %v6993, %v6983
    %v7904 = vpack.c.b16 %v6994, %v6984
    %v7905 = vpack.c.b16 %v6995, %v6985
    %v7906 = vpack.c.b16 %v6996, %v6986
    %v7907 = vpack.c.b16 %v6997, %v6987
    %v7908 = vpack.c.b16 %v6998, %v6988
    %v7909 = vpack.c.b16 %v6999, %v6989
    %v7910 = vpack.c.b16 %v7000, %v6990
    %v7911 = vpack.c.b16 %v7011, %v7001
    %v7912 = vpack.c.b16 %v7012, %v7002
    %v7913 = vpack.c.b16 %v7013, %v7003
    %v7914 = vpack.c.b16 %v7014, %v7004
    %v7915 = vpack.c.b16 %v7015, %v7005
    %v7916 = vpack.c.b16 %v7016, %v7006
    %v7917 = vpack.c.b16 %v7017, %v7007
    %v7918 = vpack.c.b16 %v7018, %v7008
    %v7919 = vpack.c.b16 %v7019, %v7009
    %v7920 = vpack.c.b16 %v7020, %v7010
    %v7921 = vpack.c.b16 %v7031, %v7021
    %v7922 = vpack.c.b16 %v7032, %v7022
    %v7923 = vpack.c.b16 %v7033, %v7023
    %v7924 = vpack.c.b16 %v7034, %v7024
    %v7925 = vpack.c.b16 %v7035, %v7025
    %v7926 = vpack.c.b16 %v7036, %v7026
    %v7927 = vpack.c.b16 %v7037, %v7027
    %v7928 = vpack.c.b16 %v7038, %v7028
    %v7929 = vpack.c.b16 %v7039, %v7029
    %v7930 = vpack.c.b16 %v7040, %v7030
    %v7931 = vpack.c.b16 %v7051, %v7041
    %v7932 = vpack.c.b16 %v7052, %v7042
    %v7933 = vpack.c.b16 %v7053, %v7043
    %v7934 = vpack.c.b16 %v7054, %v7044
    %v7935 = vpack.c.b16 %v7055, %v7045
    %v7936 = vpack.c.b16 %v7056, %v7046
    %v7937 = vpack.c.b16 %v7057, %v7047
    %v7938 = vpack.c.b16 %v7058, %v7048
    %v7939 = vpack.c.b16 %v7059, %v7049
    %v7940 = vpack.c.b16 %v7060, %v7050
    %v7941 = vpack.c.b16 %v7071, %v7061
    %v7942 = vpack.c.b16 %v7072, %v7062
    %v7943 = vpack.c.b16 %v7073, %v7063
    %v7944 = vpack.c.b16 %v7074, %v7064
    %v7945 = vpack.c.b16 %v7075, %v7065
    %v7946 = vpack.c.b16 %v7076, %v7066
    %v7947 = vpack.c.b16 %v7077, %v7067
    %v7948 = vpack.c.b16 %v7078, %v7068
    %v7949 = vpack.c.b16 %v7079, %v7069
    %v7950 = vpack.c.b16 %v7080, %v7070
    %v7951 = vpack.c.b16 %v7091, %v7081
    %v7952 = vpack.c.b16 %v7092, %v7082
    %v7953 = vpack.c.b16 %v7093, %v7083
    %v7954 = vpack.c.b16 %v7094, %v7084
    %v7955 = vpack.c.b16 %v7095, %v7085
    %v7956 = vpack.c.b16 %v7096, %v7086
    %v7957 = vpack.c.b16 %v7097, %v7087
    %v7958 = vpack.c.b16 %v7098, %v7088
    %v7959 = vpack.c.b16 %v7099, %v7089
    %v7960 = vpack.c.b16 %v7100, %v7090
    %v7961 = vpack.c.b16 %v7111, %v7101
    %v7962 = vpack.c.b16 %v7112, %v7102
    %v7963 = vpack.c.b16 %v7113, %v7103
    %v7964 = vpack.c.b16 %v7114, %v7104
    %v7965 = vpack.c.b16 %v7115, %v7105
    %v7966 = vpack.c.b16 %v7116, %v7106
    %v7967 = vpack.c.b16 %v7117, %v7107
    %v7968 = vpack.c.b16 %v7118, %v7108
    %v7969 = vpack.c.b16 %v7119, %v7109
    %v7970 = vpack.c.b16 %v7120, %v7110
    %v7971 = vpack.c.b16 %v7131, %v7121
    %v7972 = vpack.c.b16 %v7132, %v7122
    %v7973 = vpack.c.b16 %v7133, %v7123
    %v7974 = vpack.c.b16 %v7134, %v7124
    %v7975 = vpack.c.b16 %v7135, %v7125
    %v7976 = vpack.c.b16 %v7136, %v7126
    %v7977 = vpack.c.b16 %v7137, %v7127
    %v7978 = vpack.c.b16 %v7138, %v7128
    %v7979 = vpack.c.b16 %v7139, %v7129
    %v7980 = vpack.c.b16 %v7140, %v7130
    %v7981 = vpack.c.b16 %v7151, %v7141
    %v7982 = vpack.c.b16 %v7152, %v7142
    %v7983 = vpack.c.b16 %v7153, %v7143
    %v7984 = vpack.c.b16 %v7154, %v7144
    %v7985 = vpack.c.b16 %v7155, %v7145
    %v7986 = vpack.c.b16 %v7156, %v7146
    %v7987 = vpack.c.b16 %v7157, %v7147
    %v7988 = vpack.c.b16 %v7158, %v7148
    %v7989 = vpack.c.b16 %v7159, %v7149
    %v7990 = vpack.c.b16 %v7160, %v7150
    %v7991 = vpack.c.b16 %v7171, %v7161
    %v7992 = vpack.c.b16 %v7172, %v7162
    %v7993 = vpack.c.b16 %v7173, %v7163
    %v7994 = vpack.c.b16 %v7174, %v7164
    %v7995 = vpack.c.b16 %v7175, %v7165
    %v7996 = vpack.c.b16 %v7176, %v7166
    %v7997 = vpack.c.b16 %v7177, %v7167
    %v7998 = vpack.c.b16 %v7178, %v7168
    %v7999 = vpack.c.b16 %v7179, %v7169
    %v8000 = vpack.c.b16 %v7180, %v7170
    %v8001 = vpack.c.b16 %v7191, %v7181
    %v8002 = vpack.c.b16 %v7192, %v7182
    %v8003 = vpack.c.b16 %v7193, %v7183
    %v8004 = vpack.c.b16 %v7194, %v7184
    %v8005 = vpack.c.b16 %v7195, %v7185
    %v8006 = vpack.c.b16 %v7196, %v7186
    %v8007 = vpack.c.b16 %v7197, %v7187
    %v8008 = vpack.c.b16 %v7198, %v7188
    %v8009 = vpack.c.b16 %v7199, %v7189
    %v8010 = vpack.c.b16 %v7200, %v7190
    %v8011 = vpack.c.b16 %v7211, %v7201
    %v8012 = vpack.c.b16 %v7212, %v7202
    %v8013 = vpack.c.b16 %v7213, %v7203
    %v8014 = vpack.c.b16 %v7214, %v7204
    %v8015 = vpack.c.b16 %v7215, %v7205
    %v8016 = vpack.c.b16 %v7216, %v7206
    %v8017 = vpack.c.b16 %v7217, %v7207
    %v8018 = vpack.c.b16 %v7218, %v7208
    %v8019 = vpack.c.b16 %v7219, %v7209
    %v8020 = vpack.c.b16 %v7220, %v7210
    %8821 = vmatprep.subr.bf16.mxu0 %v7292
    %8822 = vmatpush1.bf16.msra.mxu0 %v7291
    %8823 = vmatprep.subr.bf16.mxu0 %v7282
    %8824 = vmatpush1.bf16.msra.mxu0 %v7281
    %8825 = vmatprep.subr.bf16.mxu0 %v7272
    %8826 = vmatpush1.bf16.msra.mxu0 %v7271
    %8827 = vmatprep.subr.bf16.mxu0 %v7262
    %8828 = vmatpush1.bf16.msra.mxu0 %v7261
    %8829 = vmatprep.subr.bf16.mxu0 %v7252
    %8830 = vmatpush1.bf16.msra.mxu0 %v7251
    %8831 = vmatprep.subr.bf16.mxu0 %v7242
    %8832 = vmatpush1.bf16.msra.mxu0 %v7241
    %8833 = vmatprep.subr.bf16.mxu0 %v7232
    %8834 = vmatpush1.bf16.msra.mxu0 %v7231
    %8835 = vmatprep.subr.bf16.mxu0 %v7222
    %8836 = vmatpush1.bf16.msra.mxu0 %v7221
    %8837 = vmatprep.subr.bf16.mxu0 %v7372
    %8838 = vmatpush2.bf16.msra.mxu0 %v7371
    %8839 = vmatprep.subr.bf16.mxu0 %v7362
    %8840 = vmatpush2.bf16.msra.mxu0 %v7361
    %8841 = vmatprep.subr.bf16.mxu0 %v7352
    %8842 = vmatpush2.bf16.msra.mxu0 %v7351
    %8843 = vmatprep.subr.bf16.mxu0 %v7342
    %8844 = vmatpush2.bf16.msra.mxu0 %v7341
    %8845 = vmatprep.subr.bf16.mxu0 %v7332
    %8846 = vmatpush2.bf16.msra.mxu0 %v7331
    %8847 = vmatprep.subr.bf16.mxu0 %v7322
    %8848 = vmatpush2.bf16.msra.mxu0 %v7321
    %8849 = vmatprep.subr.bf16.mxu0 %v7312
    %8850 = vmatpush2.bf16.msra.mxu0 %v7311
    %8851 = vmatprep.subr.bf16.mxu0 %v7302
    %8852 = vmatpush2.bf16.msra.mxu0 %v7301
    %8853 = vmatprep.mubr.bf16.mxu0 %v3958
    %8854 = vmatmul.mubr.bf16.gmra.mxu0 %v3957
    %v8855 = vpop.f32.mrf.mxu0
    %v8856 = vadd.f32 %v4774, %v8855
    %v8857 = vpop.f32.mrf.mxu0
    %v8858 = vadd.f32 %v4778, %v8857
    %v8859 = vpop.f32.mrf.mxu0
    %v8860 = vpop.f32.mrf.mxu0
    %8861 = vdwg.mxu0
    %8862 = vmatprep.subr.bf16.mxu0 %v7452
    %8863 = vmatpush1.bf16.msra.mxu0 %v7451
    %8864 = vmatprep.subr.bf16.mxu0 %v7442
    %8865 = vmatpush1.bf16.msra.mxu0 %v7441
    %8866 = vmatprep.subr.bf16.mxu0 %v7432
    %8867 = vmatpush1.bf16.msra.mxu0 %v7431
    %8868 = vmatprep.subr.bf16.mxu0 %v7422
    %8869 = vmatpush1.bf16.msra.mxu0 %v7421
    %8870 = vmatprep.subr.bf16.mxu0 %v7412
    %8871 = vmatpush1.bf16.msra.mxu0 %v7411
    %8872 = vmatprep.subr.bf16.mxu0 %v7402
    %8873 = vmatpush1.bf16.msra.mxu0 %v7401
    %8874 = vmatprep.subr.bf16.mxu0 %v7392
    %8875 = vmatpush1.bf16.msra.mxu0 %v7391
    %8876 = vmatprep.subr.bf16.mxu0 %v7382
    %8877 = vmatpush1.bf16.msra.mxu0 %v7381
    %8878 = vmatprep.subr.bf16.mxu0 %v7532
    %8879 = vmatpush2.bf16.msra.mxu0 %v7531
    %8880 = vmatprep.subr.bf16.mxu0 %v7522
    %8881 = vmatpush2.bf16.msra.mxu0 %v7521
    %8882 = vmatprep.subr.bf16.mxu0 %v7512
    %8883 = vmatpush2.bf16.msra.mxu0 %v7511
    %8884 = vmatprep.subr.bf16.mxu0 %v7502
    %8885 = vmatpush2.bf16.msra.mxu0 %v7501
    %8886 = vmatprep.subr.bf16.mxu0 %v7492
    %8887 = vmatpush2.bf16.msra.mxu0 %v7491
    %8888 = vmatprep.subr.bf16.mxu0 %v7482
    %8889 = vmatpush2.bf16.msra.mxu0 %v7481
    %8890 = vmatprep.subr.bf16.mxu0 %v7472
    %8891 = vmatpush2.bf16.msra.mxu0 %v7471
    %8892 = vmatprep.subr.bf16.mxu0 %v7462
    %8893 = vmatpush2.bf16.msra.mxu0 %v7461
    %8894 = vmatprep.mubr.bf16.mxu0 %v3960
    %8895 = vmatmul.mubr.bf16.gmra.mxu0 %v3959
    %v8896 = vpop.f32.mrf.mxu0
    %v8897 = vadd.f32 %v8856, %v8896
    %v8898 = vpop.f32.mrf.mxu0
    %v8899 = vadd.f32 %v8858, %v8898
    %v8900 = vpop.f32.mrf.mxu0
    %v8901 = vpop.f32.mrf.mxu0
    %8902 = vdwg.mxu0
    %8903 = vmatprep.subr.bf16.mxu0 %v7612
    %8904 = vmatpush1.bf16.msra.mxu0 %v7611
    %8905 = vmatprep.subr.bf16.mxu0 %v7602
    %8906 = vmatpush1.bf16.msra.mxu0 %v7601
    %8907 = vmatprep.subr.bf16.mxu0 %v7592
    %8908 = vmatpush1.bf16.msra.mxu0 %v7591
    %8909 = vmatprep.subr.bf16.mxu0 %v7582
    %8910 = vmatpush1.bf16.msra.mxu0 %v7581
    %8911 = vmatprep.subr.bf16.mxu0 %v7572
    %8912 = vmatpush1.bf16.msra.mxu0 %v7571
    %8913 = vmatprep.subr.bf16.mxu0 %v7562
    %8914 = vmatpush1.bf16.msra.mxu0 %v7561
    %8915 = vmatprep.subr.bf16.mxu0 %v7552
    %8916 = vmatpush1.bf16.msra.mxu0 %v7551
    %8917 = vmatprep.subr.bf16.mxu0 %v7542
    %8918 = vmatpush1.bf16.msra.mxu0 %v7541
    %8919 = vmatprep.subr.bf16.mxu0 %v7692
    %8920 = vmatpush2.bf16.msra.mxu0 %v7691
    %8921 = vmatprep.subr.bf16.mxu0 %v7682
    %8922 = vmatpush2.bf16.msra.mxu0 %v7681
    %8923 = vmatprep.subr.bf16.mxu0 %v7672
    %8924 = vmatpush2.bf16.msra.mxu0 %v7671
    %8925 = vmatprep.subr.bf16.mxu0 %v7662
    %8926 = vmatpush2.bf16.msra.mxu0 %v7661
    %8927 = vmatprep.subr.bf16.mxu0 %v7652
    %8928 = vmatpush2.bf16.msra.mxu0 %v7651
    %8929 = vmatprep.subr.bf16.mxu0 %v7642
    %8930 = vmatpush2.bf16.msra.mxu0 %v7641
    %8931 = vmatprep.subr.bf16.mxu0 %v7632
    %8932 = vmatpush2.bf16.msra.mxu0 %v7631
    %8933 = vmatprep.subr.bf16.mxu0 %v7622
    %8934 = vmatpush2.bf16.msra.mxu0 %v7621
    %8935 = vmatprep.mubr.bf16.mxu0 %v3962
    %8936 = vmatmul.mubr.bf16.gmra.mxu0 %v3961
    %v8937 = vpop.f32.mrf.mxu0
    %v8938 = vadd.f32 %v8897, %v8937
    %v8939 = vpop.f32.mrf.mxu0
    %v8940 = vadd.f32 %v8899, %v8939
    %v8941 = vpop.f32.mrf.mxu0
    %v8942 = vpop.f32.mrf.mxu0
    %8943 = vdwg.mxu0
    %8944 = vmatprep.subr.bf16.mxu0 %v7772
    %8945 = vmatpush1.bf16.msra.mxu0 %v7771
    %8946 = vmatprep.subr.bf16.mxu0 %v7762
    %8947 = vmatpush1.bf16.msra.mxu0 %v7761
    %8948 = vmatprep.subr.bf16.mxu0 %v7752
    %8949 = vmatpush1.bf16.msra.mxu0 %v7751
    %8950 = vmatprep.subr.bf16.mxu0 %v7742
    %8951 = vmatpush1.bf16.msra.mxu0 %v7741
    %8952 = vmatprep.subr.bf16.mxu0 %v7732
    %8953 = vmatpush1.bf16.msra.mxu0 %v7731
    %8954 = vmatprep.subr.bf16.mxu0 %v7722
    %8955 = vmatpush1.bf16.msra.mxu0 %v7721
    %8956 = vmatprep.subr.bf16.mxu0 %v7712
    %8957 = vmatpush1.bf16.msra.mxu0 %v7711
    %8958 = vmatprep.subr.bf16.mxu0 %v7702
    %8959 = vmatpush1.bf16.msra.mxu0 %v7701
    %8960 = vmatprep.subr.bf16.mxu0 %v7852
    %8961 = vmatpush2.bf16.msra.mxu0 %v7851
    %8962 = vmatprep.subr.bf16.mxu0 %v7842
    %8963 = vmatpush2.bf16.msra.mxu0 %v7841
    %8964 = vmatprep.subr.bf16.mxu0 %v7832
    %8965 = vmatpush2.bf16.msra.mxu0 %v7831
    %8966 = vmatprep.subr.bf16.mxu0 %v7822
    %8967 = vmatpush2.bf16.msra.mxu0 %v7821
    %8968 = vmatprep.subr.bf16.mxu0 %v7812
    %8969 = vmatpush2.bf16.msra.mxu0 %v7811
    %8970 = vmatprep.subr.bf16.mxu0 %v7802
    %8971 = vmatpush2.bf16.msra.mxu0 %v7801
    %8972 = vmatprep.subr.bf16.mxu0 %v7792
    %8973 = vmatpush2.bf16.msra.mxu0 %v7791
    %8974 = vmatprep.subr.bf16.mxu0 %v7782
    %8975 = vmatpush2.bf16.msra.mxu0 %v7781
    %8976 = vmatprep.mubr.bf16.mxu0 %v3964
    %8977 = vmatmul.mubr.bf16.gmra.mxu0 %v3963
    %v8978 = vpop.f32.mrf.mxu0
    %v8979 = vadd.f32 %v8938, %v8978
    %v8980 = vpop.f32.mrf.mxu0
    %v8981 = vadd.f32 %v8940, %v8980
    %v8982 = vpop.f32.mrf.mxu0
    %v8983 = vpop.f32.mrf.mxu0
    %8984 = vdwg.mxu0
    %8985 = vmatprep.subr.bf16.mxu0 %v7932
    %8986 = vmatpush1.bf16.msra.mxu0 %v7931
    %8987 = vmatprep.subr.bf16.mxu0 %v7922
    %8988 = vmatpush1.bf16.msra.mxu0 %v7921
    %8989 = vmatprep.subr.bf16.mxu0 %v7912
    %8990 = vmatpush1.bf16.msra.mxu0 %v7911
    %8991 = vmatprep.subr.bf16.mxu0 %v7902
    %8992 = vmatpush1.bf16.msra.mxu0 %v7901
    %8993 = vmatprep.subr.bf16.mxu0 %v7892
    %8994 = vmatpush1.bf16.msra.mxu0 %v7891
    %8995 = vmatprep.subr.bf16.mxu0 %v7882
    %8996 = vmatpush1.bf16.msra.mxu0 %v7881
    %8997 = vmatprep.subr.bf16.mxu0 %v7872
    %8998 = vmatpush1.bf16.msra.mxu0 %v7871
    %8999 = vmatprep.subr.bf16.mxu0 %v7862
    %9000 = vmatpush1.bf16.msra.mxu0 %v7861
    %9001 = vmatprep.subr.bf16.mxu0 %v8012
    %9002 = vmatpush2.bf16.msra.mxu0 %v8011
    %9003 = vmatprep.subr.bf16.mxu0 %v8002
    %9004 = vmatpush2.bf16.msra.mxu0 %v8001
    %9005 = vmatprep.subr.bf16.mxu0 %v7992
    %9006 = vmatpush2.bf16.msra.mxu0 %v7991
    %9007 = vmatprep.subr.bf16.mxu0 %v7982
    %9008 = vmatpush2.bf16.msra.mxu0 %v7981
    %9009 = vmatprep.subr.bf16.mxu0 %v7972
    %9010 = vmatpush2.bf16.msra.mxu0 %v7971
    %9011 = vmatprep.subr.bf16.mxu0 %v7962
    %9012 = vmatpush2.bf16.msra.mxu0 %v7961
    %9013 = vmatprep.subr.bf16.mxu0 %v7952
    %9014 = vmatpush2.bf16.msra.mxu0 %v7951
    %9015 = vmatprep.subr.bf16.mxu0 %v7942
    %9016 = vmatpush2.bf16.msra.mxu0 %v7941
    %9017 = vmatprep.mubr.bf16.mxu0 %v3966
    %9018 = vmatmul.mubr.bf16.gmra.mxu0 %v3965
    %v9019 = vpop.f32.mrf.mxu0
    %v9020 = vadd.f32 %v8979, %v9019
    %v9021 = vpop.f32.mrf.mxu0
    %v9022 = vadd.f32 %v8981, %v9021
    %v9023 = vpop.f32.mrf.mxu0
    %v9024 = vpop.f32.mrf.mxu0
    %9025 = vdwg.mxu0
    %9026 = vmatprep.subr.bf16.mxu0 %v7294
    %9027 = vmatpush1.bf16.msra.mxu0 %v7293
    %9028 = vmatprep.subr.bf16.mxu0 %v7284
    %9029 = vmatpush1.bf16.msra.mxu0 %v7283
    %9030 = vmatprep.subr.bf16.mxu0 %v7274
    %9031 = vmatpush1.bf16.msra.mxu0 %v7273
    %9032 = vmatprep.subr.bf16.mxu0 %v7264
    %9033 = vmatpush1.bf16.msra.mxu0 %v7263
    %9034 = vmatprep.subr.bf16.mxu0 %v7254
    %9035 = vmatpush1.bf16.msra.mxu0 %v7253
    %9036 = vmatprep.subr.bf16.mxu0 %v7244
    %9037 = vmatpush1.bf16.msra.mxu0 %v7243
    %9038 = vmatprep.subr.bf16.mxu0 %v7234
    %9039 = vmatpush1.bf16.msra.mxu0 %v7233
    %9040 = vmatprep.subr.bf16.mxu0 %v7224
    %9041 = vmatpush1.bf16.msra.mxu0 %v7223
    %9042 = vmatprep.subr.bf16.mxu0 %v7374
    %9043 = vmatpush2.bf16.msra.mxu0 %v7373
    %9044 = vmatprep.subr.bf16.mxu0 %v7364
    %9045 = vmatpush2.bf16.msra.mxu0 %v7363
    %9046 = vmatprep.subr.bf16.mxu0 %v7354
    %9047 = vmatpush2.bf16.msra.mxu0 %v7353
    %9048 = vmatprep.subr.bf16.mxu0 %v7344
    %9049 = vmatpush2.bf16.msra.mxu0 %v7343
    %9050 = vmatprep.subr.bf16.mxu0 %v7334
    %9051 = vmatpush2.bf16.msra.mxu0 %v7333
    %9052 = vmatprep.subr.bf16.mxu0 %v7324
    %9053 = vmatpush2.bf16.msra.mxu0 %v7323
    %9054 = vmatprep.subr.bf16.mxu0 %v7314
    %9055 = vmatpush2.bf16.msra.mxu0 %v7313
    %9056 = vmatprep.subr.bf16.mxu0 %v7304
    %9057 = vmatpush2.bf16.msra.mxu0 %v7303
    %9058 = vmatprep.mubr.bf16.mxu0 %v3958
    %9059 = vmatmul.mubr.bf16.gmra.mxu0 %v3957
    %v9060 = vpop.f32.mrf.mxu0
    %v9061 = vadd.f32 %v4782, %v9060
    %v9062 = vpop.f32.mrf.mxu0
    %v9063 = vadd.f32 %v4786, %v9062
    %v9064 = vpop.f32.mrf.mxu0
    %v9065 = vpop.f32.mrf.mxu0
    %9066 = vdwg.mxu0
    %9067 = vmatprep.subr.bf16.mxu0 %v7454
    %9068 = vmatpush1.bf16.msra.mxu0 %v7453
    %9069 = vmatprep.subr.bf16.mxu0 %v7444
    %9070 = vmatpush1.bf16.msra.mxu0 %v7443
    %9071 = vmatprep.subr.bf16.mxu0 %v7434
    %9072 = vmatpush1.bf16.msra.mxu0 %v7433
    %9073 = vmatprep.subr.bf16.mxu0 %v7424
    %9074 = vmatpush1.bf16.msra.mxu0 %v7423
    %9075 = vmatprep.subr.bf16.mxu0 %v7414
    %9076 = vmatpush1.bf16.msra.mxu0 %v7413
    %9077 = vmatprep.subr.bf16.mxu0 %v7404
    %9078 = vmatpush1.bf16.msra.mxu0 %v7403
    %9079 = vmatprep.subr.bf16.mxu0 %v7394
    %9080 = vmatpush1.bf16.msra.mxu0 %v7393
    %9081 = vmatprep.subr.bf16.mxu0 %v7384
    %9082 = vmatpush1.bf16.msra.mxu0 %v7383
    %9083 = vmatprep.subr.bf16.mxu0 %v7534
    %9084 = vmatpush2.bf16.msra.mxu0 %v7533
    %9085 = vmatprep.subr.bf16.mxu0 %v7524
    %9086 = vmatpush2.bf16.msra.mxu0 %v7523
    %9087 = vmatprep.subr.bf16.mxu0 %v7514
    %9088 = vmatpush2.bf16.msra.mxu0 %v7513
    %9089 = vmatprep.subr.bf16.mxu0 %v7504
    %9090 = vmatpush2.bf16.msra.mxu0 %v7503
    %9091 = vmatprep.subr.bf16.mxu0 %v7494
    %9092 = vmatpush2.bf16.msra.mxu0 %v7493
    %9093 = vmatprep.subr.bf16.mxu0 %v7484
    %9094 = vmatpush2.bf16.msra.mxu0 %v7483
    %9095 = vmatprep.subr.bf16.mxu0 %v7474
    %9096 = vmatpush2.bf16.msra.mxu0 %v7473
    %9097 = vmatprep.subr.bf16.mxu0 %v7464
    %9098 = vmatpush2.bf16.msra.mxu0 %v7463
    %9099 = vmatprep.mubr.bf16.mxu0 %v3960
    %9100 = vmatmul.mubr.bf16.gmra.mxu0 %v3959
    %v9101 = vpop.f32.mrf.mxu0
    %v9102 = vadd.f32 %v9061, %v9101
    %v9103 = vpop.f32.mrf.mxu0
    %v9104 = vadd.f32 %v9063, %v9103
    %v9105 = vpop.f32.mrf.mxu0
    %v9106 = vpop.f32.mrf.mxu0
    %9107 = vdwg.mxu0
    %9108 = vmatprep.subr.bf16.mxu0 %v7614
    %9109 = vmatpush1.bf16.msra.mxu0 %v7613
    %9110 = vmatprep.subr.bf16.mxu0 %v7604
    %9111 = vmatpush1.bf16.msra.mxu0 %v7603
    %9112 = vmatprep.subr.bf16.mxu0 %v7594
    %9113 = vmatpush1.bf16.msra.mxu0 %v7593
    %9114 = vmatprep.subr.bf16.mxu0 %v7584
    %9115 = vmatpush1.bf16.msra.mxu0 %v7583
    %9116 = vmatprep.subr.bf16.mxu0 %v7574
    %9117 = vmatpush1.bf16.msra.mxu0 %v7573
    %9118 = vmatprep.subr.bf16.mxu0 %v7564
    %9119 = vmatpush1.bf16.msra.mxu0 %v7563
    %9120 = vmatprep.subr.bf16.mxu0 %v7554
    %9121 = vmatpush1.bf16.msra.mxu0 %v7553
    %9122 = vmatprep.subr.bf16.mxu0 %v7544
    %9123 = vmatpush1.bf16.msra.mxu0 %v7543
    %9124 = vmatprep.subr.bf16.mxu0 %v7694
    %9125 = vmatpush2.bf16.msra.mxu0 %v7693
    %9126 = vmatprep.subr.bf16.mxu0 %v7684
    %9127 = vmatpush2.bf16.msra.mxu0 %v7683
    %9128 = vmatprep.subr.bf16.mxu0 %v7674
    %9129 = vmatpush2.bf16.msra.mxu0 %v7673
    %9130 = vmatprep.subr.bf16.mxu0 %v7664
    %9131 = vmatpush2.bf16.msra.mxu0 %v7663
    %9132 = vmatprep.subr.bf16.mxu0 %v7654
    %9133 = vmatpush2.bf16.msra.mxu0 %v7653
    %9134 = vmatprep.subr.bf16.mxu0 %v7644
    %9135 = vmatpush2.bf16.msra.mxu0 %v7643
    %9136 = vmatprep.subr.bf16.mxu0 %v7634
    %9137 = vmatpush2.bf16.msra.mxu0 %v7633
    %9138 = vmatprep.subr.bf16.mxu0 %v7624
    %9139 = vmatpush2.bf16.msra.mxu0 %v7623
    %9140 = vmatprep.mubr.bf16.mxu0 %v3962
    %9141 = vmatmul.mubr.bf16.gmra.mxu0 %v3961
    %v9142 = vpop.f32.mrf.mxu0
    %v9143 = vadd.f32 %v9102, %v9142
    %v9144 = vpop.f32.mrf.mxu0
    %v9145 = vadd.f32 %v9104, %v9144
    %v9146 = vpop.f32.mrf.mxu0
    %v9147 = vpop.f32.mrf.mxu0
    %9148 = vdwg.mxu0
    %9149 = vmatprep.subr.bf16.mxu0 %v7774
    %9150 = vmatpush1.bf16.msra.mxu0 %v7773
    %9151 = vmatprep.subr.bf16.mxu0 %v7764
    %9152 = vmatpush1.bf16.msra.mxu0 %v7763
    %9153 = vmatprep.subr.bf16.mxu0 %v7754
    %9154 = vmatpush1.bf16.msra.mxu0 %v7753
    %9155 = vmatprep.subr.bf16.mxu0 %v7744
    %9156 = vmatpush1.bf16.msra.mxu0 %v7743
    %9157 = vmatprep.subr.bf16.mxu0 %v7734
    %9158 = vmatpush1.bf16.msra.mxu0 %v7733
    %9159 = vmatprep.subr.bf16.mxu0 %v7724
    %9160 = vmatpush1.bf16.msra.mxu0 %v7723
    %9161 = vmatprep.subr.bf16.mxu0 %v7714
    %9162 = vmatpush1.bf16.msra.mxu0 %v7713
    %9163 = vmatprep.subr.bf16.mxu0 %v7704
    %9164 = vmatpush1.bf16.msra.mxu0 %v7703
    %9165 = vmatprep.subr.bf16.mxu0 %v7854
    %9166 = vmatpush2.bf16.msra.mxu0 %v7853
    %9167 = vmatprep.subr.bf16.mxu0 %v7844
    %9168 = vmatpush2.bf16.msra.mxu0 %v7843
    %9169 = vmatprep.subr.bf16.mxu0 %v7834
    %9170 = vmatpush2.bf16.msra.mxu0 %v7833
    %9171 = vmatprep.subr.bf16.mxu0 %v7824
    %9172 = vmatpush2.bf16.msra.mxu0 %v7823
    %9173 = vmatprep.subr.bf16.mxu0 %v7814
    %9174 = vmatpush2.bf16.msra.mxu0 %v7813
    %9175 = vmatprep.subr.bf16.mxu0 %v7804
    %9176 = vmatpush2.bf16.msra.mxu0 %v7803
    %9177 = vmatprep.subr.bf16.mxu0 %v7794
    %9178 = vmatpush2.bf16.msra.mxu0 %v7793
    %9179 = vmatprep.subr.bf16.mxu0 %v7784
    %9180 = vmatpush2.bf16.msra.mxu0 %v7783
    %9181 = vmatprep.mubr.bf16.mxu0 %v3964
    %9182 = vmatmul.mubr.bf16.gmra.mxu0 %v3963
    %v9183 = vpop.f32.mrf.mxu0
    %v9184 = vadd.f32 %v9143, %v9183
    %v9185 = vpop.f32.mrf.mxu0
    %v9186 = vadd.f32 %v9145, %v9185
    %v9187 = vpop.f32.mrf.mxu0
    %v9188 = vpop.f32.mrf.mxu0
    %9189 = vdwg.mxu0
    %9190 = vmatprep.subr.bf16.mxu0 %v7934
    %9191 = vmatpush1.bf16.msra.mxu0 %v7933
    %9192 = vmatprep.subr.bf16.mxu0 %v7924
    %9193 = vmatpush1.bf16.msra.mxu0 %v7923
    %9194 = vmatprep.subr.bf16.mxu0 %v7914
    %9195 = vmatpush1.bf16.msra.mxu0 %v7913
    %9196 = vmatprep.subr.bf16.mxu0 %v7904
    %9197 = vmatpush1.bf16.msra.mxu0 %v7903
    %9198 = vmatprep.subr.bf16.mxu0 %v7894
    %9199 = vmatpush1.bf16.msra.mxu0 %v7893
    %9200 = vmatprep.subr.bf16.mxu0 %v7884
    %9201 = vmatpush1.bf16.msra.mxu0 %v7883
    %9202 = vmatprep.subr.bf16.mxu0 %v7874
    %9203 = vmatpush1.bf16.msra.mxu0 %v7873
    %9204 = vmatprep.subr.bf16.mxu0 %v7864
    %9205 = vmatpush1.bf16.msra.mxu0 %v7863
    %9206 = vmatprep.subr.bf16.mxu0 %v8014
    %9207 = vmatpush2.bf16.msra.mxu0 %v8013
    %9208 = vmatprep.subr.bf16.mxu0 %v8004
    %9209 = vmatpush2.bf16.msra.mxu0 %v8003
    %9210 = vmatprep.subr.bf16.mxu0 %v7994
    %9211 = vmatpush2.bf16.msra.mxu0 %v7993
    %9212 = vmatprep.subr.bf16.mxu0 %v7984
    %9213 = vmatpush2.bf16.msra.mxu0 %v7983
    %9214 = vmatprep.subr.bf16.mxu0 %v7974
    %9215 = vmatpush2.bf16.msra.mxu0 %v7973
    %9216 = vmatprep.subr.bf16.mxu0 %v7964
    %9217 = vmatpush2.bf16.msra.mxu0 %v7963
    %9218 = vmatprep.subr.bf16.mxu0 %v7954
    %9219 = vmatpush2.bf16.msra.mxu0 %v7953
    %9220 = vmatprep.subr.bf16.mxu0 %v7944
    %9221 = vmatpush2.bf16.msra.mxu0 %v7943
    %9222 = vmatprep.mubr.bf16.mxu0 %v3966
    %9223 = vmatmul.mubr.bf16.gmra.mxu0 %v3965
    %v9224 = vpop.f32.mrf.mxu0
    %v9225 = vadd.f32 %v9184, %v9224
    %v9226 = vpop.f32.mrf.mxu0
    %v9227 = vadd.f32 %v9186, %v9226
    %v9228 = vpop.f32.mrf.mxu0
    %v9229 = vpop.f32.mrf.mxu0
    %9230 = vdwg.mxu0
    %9231 = vmatprep.subr.bf16.mxu0 %v7296
    %9232 = vmatpush1.bf16.msra.mxu0 %v7295
    %9233 = vmatprep.subr.bf16.mxu0 %v7286
    %9234 = vmatpush1.bf16.msra.mxu0 %v7285
    %9235 = vmatprep.subr.bf16.mxu0 %v7276
    %9236 = vmatpush1.bf16.msra.mxu0 %v7275
    %9237 = vmatprep.subr.bf16.mxu0 %v7266
    %9238 = vmatpush1.bf16.msra.mxu0 %v7265
    %9239 = vmatprep.subr.bf16.mxu0 %v7256
    %9240 = vmatpush1.bf16.msra.mxu0 %v7255
    %9241 = vmatprep.subr.bf16.mxu0 %v7246
    %9242 = vmatpush1.bf16.msra.mxu0 %v7245
    %9243 = vmatprep.subr.bf16.mxu0 %v7236
    %9244 = vmatpush1.bf16.msra.mxu0 %v7235
    %9245 = vmatprep.subr.bf16.mxu0 %v7226
    %9246 = vmatpush1.bf16.msra.mxu0 %v7225
    %9247 = vmatprep.subr.bf16.mxu0 %v7376
    %9248 = vmatpush2.bf16.msra.mxu0 %v7375
    %9249 = vmatprep.subr.bf16.mxu0 %v7366
    %9250 = vmatpush2.bf16.msra.mxu0 %v7365
    %9251 = vmatprep.subr.bf16.mxu0 %v7356
    %9252 = vmatpush2.bf16.msra.mxu0 %v7355
    %9253 = vmatprep.subr.bf16.mxu0 %v7346
    %9254 = vmatpush2.bf16.msra.mxu0 %v7345
    %9255 = vmatprep.subr.bf16.mxu0 %v7336
    %9256 = vmatpush2.bf16.msra.mxu0 %v7335
    %9257 = vmatprep.subr.bf16.mxu0 %v7326
    %9258 = vmatpush2.bf16.msra.mxu0 %v7325
    %9259 = vmatprep.subr.bf16.mxu0 %v7316
    %9260 = vmatpush2.bf16.msra.mxu0 %v7315
    %9261 = vmatprep.subr.bf16.mxu0 %v7306
    %9262 = vmatpush2.bf16.msra.mxu0 %v7305
    %9263 = vmatprep.mubr.bf16.mxu0 %v3958
    %9264 = vmatmul.mubr.bf16.gmra.mxu0 %v3957
    %v9265 = vpop.f32.mrf.mxu0
    %v9266 = vadd.f32 %v4790, %v9265
    %v9267 = vpop.f32.mrf.mxu0
    %v9268 = vadd.f32 %v4794, %v9267
    %v9269 = vpop.f32.mrf.mxu0
    %v9270 = vpop.f32.mrf.mxu0
    %9271 = vdwg.mxu0
    %9272 = vmatprep.subr.bf16.mxu0 %v7456
    %9273 = vmatpush1.bf16.msra.mxu0 %v7455
    %9274 = vmatprep.subr.bf16.mxu0 %v7446
    %9275 = vmatpush1.bf16.msra.mxu0 %v7445
    %9276 = vmatprep.subr.bf16.mxu0 %v7436
    %9277 = vmatpush1.bf16.msra.mxu0 %v7435
    %9278 = vmatprep.subr.bf16.mxu0 %v7426
    %9279 = vmatpush1.bf16.msra.mxu0 %v7425
    %9280 = vmatprep.subr.bf16.mxu0 %v7416
    %9281 = vmatpush1.bf16.msra.mxu0 %v7415
    %9282 = vmatprep.subr.bf16.mxu0 %v7406
    %9283 = vmatpush1.bf16.msra.mxu0 %v7405
    %9284 = vmatprep.subr.bf16.mxu0 %v7396
    %9285 = vmatpush1.bf16.msra.mxu0 %v7395
    %9286 = vmatprep.subr.bf16.mxu0 %v7386
    %9287 = vmatpush1.bf16.msra.mxu0 %v7385
    %9288 = vmatprep.subr.bf16.mxu0 %v7536
    %9289 = vmatpush2.bf16.msra.mxu0 %v7535
    %9290 = vmatprep.subr.bf16.mxu0 %v7526
    %9291 = vmatpush2.bf16.msra.mxu0 %v7525
    %9292 = vmatprep.subr.bf16.mxu0 %v7516
    %9293 = vmatpush2.bf16.msra.mxu0 %v7515
    %9294 = vmatprep.subr.bf16.mxu0 %v7506
    %9295 = vmatpush2.bf16.msra.mxu0 %v7505
    %9296 = vmatprep.subr.bf16.mxu0 %v7496
    %9297 = vmatpush2.bf16.msra.mxu0 %v7495
    %9298 = vmatprep.subr.bf16.mxu0 %v7486
    %9299 = vmatpush2.bf16.msra.mxu0 %v7485
    %9300 = vmatprep.subr.bf16.mxu0 %v7476
    %9301 = vmatpush2.bf16.msra.mxu0 %v7475
    %9302 = vmatprep.subr.bf16.mxu0 %v7466
    %9303 = vmatpush2.bf16.msra.mxu0 %v7465
    %9304 = vmatprep.mubr.bf16.mxu0 %v3960
    %9305 = vmatmul.mubr.bf16.gmra.mxu0 %v3959
    %v9306 = vpop.f32.mrf.mxu0
    %v9307 = vadd.f32 %v9266, %v9306
    %v9308 = vpop.f32.mrf.mxu0
    %v9309 = vadd.f32 %v9268, %v9308
    %v9310 = vpop.f32.mrf.mxu0
    %v9311 = vpop.f32.mrf.mxu0
    %9312 = vdwg.mxu0
    %9313 = vmatprep.subr.bf16.mxu0 %v7616
    %9314 = vmatpush1.bf16.msra.mxu0 %v7615
    %9315 = vmatprep.subr.bf16.mxu0 %v7606
    %9316 = vmatpush1.bf16.msra.mxu0 %v7605
    %9317 = vmatprep.subr.bf16.mxu0 %v7596
    %9318 = vmatpush1.bf16.msra.mxu0 %v7595
    %9319 = vmatprep.subr.bf16.mxu0 %v7586
    %9320 = vmatpush1.bf16.msra.mxu0 %v7585
    %9321 = vmatprep.subr.bf16.mxu0 %v7576
    %9322 = vmatpush1.bf16.msra.mxu0 %v7575
    %9323 = vmatprep.subr.bf16.mxu0 %v7566
    %9324 = vmatpush1.bf16.msra.mxu0 %v7565
    %9325 = vmatprep.subr.bf16.mxu0 %v7556
    %9326 = vmatpush1.bf16.msra.mxu0 %v7555
    %9327 = vmatprep.subr.bf16.mxu0 %v7546
    %9328 = vmatpush1.bf16.msra.mxu0 %v7545
    %9329 = vmatprep.subr.bf16.mxu0 %v7696
    %9330 = vmatpush2.bf16.msra.mxu0 %v7695
    %9331 = vmatprep.subr.bf16.mxu0 %v7686
    %9332 = vmatpush2.bf16.msra.mxu0 %v7685
    %9333 = vmatprep.subr.bf16.mxu0 %v7676
    %9334 = vmatpush2.bf16.msra.mxu0 %v7675
    %9335 = vmatprep.subr.bf16.mxu0 %v7666
    %9336 = vmatpush2.bf16.msra.mxu0 %v7665
    %9337 = vmatprep.subr.bf16.mxu0 %v7656
    %9338 = vmatpush2.bf16.msra.mxu0 %v7655
    %9339 = vmatprep.subr.bf16.mxu0 %v7646
    %9340 = vmatpush2.bf16.msra.mxu0 %v7645
    %9341 = vmatprep.subr.bf16.mxu0 %v7636
    %9342 = vmatpush2.bf16.msra.mxu0 %v7635
    %9343 = vmatprep.subr.bf16.mxu0 %v7626
    %9344 = vmatpush2.bf16.msra.mxu0 %v7625
    %9345 = vmatprep.mubr.bf16.mxu0 %v3962
    %9346 = vmatmul.mubr.bf16.gmra.mxu0 %v3961
    %v9347 = vpop.f32.mrf.mxu0
    %v9348 = vadd.f32 %v9307, %v9347
    %v9349 = vpop.f32.mrf.mxu0
    %v9350 = vadd.f32 %v9309, %v9349
    %v9351 = vpop.f32.mrf.mxu0
    %v9352 = vpop.f32.mrf.mxu0
    %9353 = vdwg.mxu0
    %9354 = vmatprep.subr.bf16.mxu0 %v7776
    %9355 = vmatpush1.bf16.msra.mxu0 %v7775
    %9356 = vmatprep.subr.bf16.mxu0 %v7766
    %9357 = vmatpush1.bf16.msra.mxu0 %v7765
    %9358 = vmatprep.subr.bf16.mxu0 %v7756
    %9359 = vmatpush1.bf16.msra.mxu0 %v7755
    %9360 = vmatprep.subr.bf16.mxu0 %v7746
    %9361 = vmatpush1.bf16.msra.mxu0 %v7745
    %9362 = vmatprep.subr.bf16.mxu0 %v7736
    %9363 = vmatpush1.bf16.msra.mxu0 %v7735
    %9364 = vmatprep.subr.bf16.mxu0 %v7726
    %9365 = vmatpush1.bf16.msra.mxu0 %v7725
    %9366 = vmatprep.subr.bf16.mxu0 %v7716
    %9367 = vmatpush1.bf16.msra.mxu0 %v7715
    %9368 = vmatprep.subr.bf16.mxu0 %v7706
    %9369 = vmatpush1.bf16.msra.mxu0 %v7705
    %9370 = vmatprep.subr.bf16.mxu0 %v7856
    %9371 = vmatpush2.bf16.msra.mxu0 %v7855
    %9372 = vmatprep.subr.bf16.mxu0 %v7846
    %9373 = vmatpush2.bf16.msra.mxu0 %v7845
    %9374 = vmatprep.subr.bf16.mxu0 %v7836
    %9375 = vmatpush2.bf16.msra.mxu0 %v7835
    %9376 = vmatprep.subr.bf16.mxu0 %v7826
    %9377 = vmatpush2.bf16.msra.mxu0 %v7825
    %9378 = vmatprep.subr.bf16.mxu0 %v7816
    %9379 = vmatpush2.bf16.msra.mxu0 %v7815
    %9380 = vmatprep.subr.bf16.mxu0 %v7806
    %9381 = vmatpush2.bf16.msra.mxu0 %v7805
    %9382 = vmatprep.subr.bf16.mxu0 %v7796
    %9383 = vmatpush2.bf16.msra.mxu0 %v7795
    %9384 = vmatprep.subr.bf16.mxu0 %v7786
    %9385 = vmatpush2.bf16.msra.mxu0 %v7785
    %9386 = vmatprep.mubr.bf16.mxu0 %v3964
    %9387 = vmatmul.mubr.bf16.gmra.mxu0 %v3963
    %v9388 = vpop.f32.mrf.mxu0
    %v9389 = vadd.f32 %v9348, %v9388
    %v9390 = vpop.f32.mrf.mxu0
    %v9391 = vadd.f32 %v9350, %v9390
    %v9392 = vpop.f32.mrf.mxu0
    %v9393 = vpop.f32.mrf.mxu0
    %9394 = vdwg.mxu0
    %9395 = vmatprep.subr.bf16.mxu0 %v7936
    %9396 = vmatpush1.bf16.msra.mxu0 %v7935
    %9397 = vmatprep.subr.bf16.mxu0 %v7926
    %9398 = vmatpush1.bf16.msra.mxu0 %v7925
    %9399 = vmatprep.subr.bf16.mxu0 %v7916
    %9400 = vmatpush1.bf16.msra.mxu0 %v7915
    %9401 = vmatprep.subr.bf16.mxu0 %v7906
    %9402 = vmatpush1.bf16.msra.mxu0 %v7905
    %9403 = vmatprep.subr.bf16.mxu0 %v7896
    %9404 = vmatpush1.bf16.msra.mxu0 %v7895
    %9405 = vmatprep.subr.bf16.mxu0 %v7886
    %9406 = vmatpush1.bf16.msra.mxu0 %v7885
    %9407 = vmatprep.subr.bf16.mxu0 %v7876
    %9408 = vmatpush1.bf16.msra.mxu0 %v7875
    %9409 = vmatprep.subr.bf16.mxu0 %v7866
    %9410 = vmatpush1.bf16.msra.mxu0 %v7865
    %9411 = vmatprep.subr.bf16.mxu0 %v8016
    %9412 = vmatpush2.bf16.msra.mxu0 %v8015
    %9413 = vmatprep.subr.bf16.mxu0 %v8006
    %9414 = vmatpush2.bf16.msra.mxu0 %v8005
    %9415 = vmatprep.subr.bf16.mxu0 %v7996
    %9416 = vmatpush2.bf16.msra.mxu0 %v7995
    %9417 = vmatprep.subr.bf16.mxu0 %v7986
    %9418 = vmatpush2.bf16.msra.mxu0 %v7985
    %9419 = vmatprep.subr.bf16.mxu0 %v7976
    %9420 = vmatpush2.bf16.msra.mxu0 %v7975
    %9421 = vmatprep.subr.bf16.mxu0 %v7966
    %9422 = vmatpush2.bf16.msra.mxu0 %v7965
    %9423 = vmatprep.subr.bf16.mxu0 %v7956
    %9424 = vmatpush2.bf16.msra.mxu0 %v7955
    %9425 = vmatprep.subr.bf16.mxu0 %v7946
    %9426 = vmatpush2.bf16.msra.mxu0 %v7945
    %9427 = vmatprep.mubr.bf16.mxu0 %v3966
    %9428 = vmatmul.mubr.bf16.gmra.mxu0 %v3965
    %v9429 = vpop.f32.mrf.mxu0
    %v9430 = vadd.f32 %v9389, %v9429
    %v9431 = vpop.f32.mrf.mxu0
    %v9432 = vadd.f32 %v9391, %v9431
    %v9433 = vpop.f32.mrf.mxu0
    %v9434 = vpop.f32.mrf.mxu0
    %9435 = vdwg.mxu0
    %9436 = vmatprep.subr.bf16.mxu0 %v7298
    %9437 = vmatpush1.bf16.msra.mxu0 %v7297
    %9438 = vmatprep.subr.bf16.mxu0 %v7288
    %9439 = vmatpush1.bf16.msra.mxu0 %v7287
    %9440 = vmatprep.subr.bf16.mxu0 %v7278
    %9441 = vmatpush1.bf16.msra.mxu0 %v7277
    %9442 = vmatprep.subr.bf16.mxu0 %v7268
    %9443 = vmatpush1.bf16.msra.mxu0 %v7267
    %9444 = vmatprep.subr.bf16.mxu0 %v7258
    %9445 = vmatpush1.bf16.msra.mxu0 %v7257
    %9446 = vmatprep.subr.bf16.mxu0 %v7248
    %9447 = vmatpush1.bf16.msra.mxu0 %v7247
    %9448 = vmatprep.subr.bf16.mxu0 %v7238
    %9449 = vmatpush1.bf16.msra.mxu0 %v7237
    %9450 = vmatprep.subr.bf16.mxu0 %v7228
    %9451 = vmatpush1.bf16.msra.mxu0 %v7227
    %9452 = vmatprep.subr.bf16.mxu0 %v7378
    %9453 = vmatpush2.bf16.msra.mxu0 %v7377
    %9454 = vmatprep.subr.bf16.mxu0 %v7368
    %9455 = vmatpush2.bf16.msra.mxu0 %v7367
    %9456 = vmatprep.subr.bf16.mxu0 %v7358
    %9457 = vmatpush2.bf16.msra.mxu0 %v7357
    %9458 = vmatprep.subr.bf16.mxu0 %v7348
    %9459 = vmatpush2.bf16.msra.mxu0 %v7347
    %9460 = vmatprep.subr.bf16.mxu0 %v7338
    %9461 = vmatpush2.bf16.msra.mxu0 %v7337
    %9462 = vmatprep.subr.bf16.mxu0 %v7328
    %9463 = vmatpush2.bf16.msra.mxu0 %v7327
    %9464 = vmatprep.subr.bf16.mxu0 %v7318
    %9465 = vmatpush2.bf16.msra.mxu0 %v7317
    %9466 = vmatprep.subr.bf16.mxu0 %v7308
    %9467 = vmatpush2.bf16.msra.mxu0 %v7307
    %9468 = vmatprep.mubr.bf16.mxu0 %v3958
    %9469 = vmatmul.mubr.bf16.gmra.mxu0 %v3957
    %v9470 = vpop.f32.mrf.mxu0
    %v9471 = vadd.f32 %v4798, %v9470
    %v9472 = vpop.f32.mrf.mxu0
    %v9473 = vadd.f32 %v4802, %v9472
    %v9474 = vpop.f32.mrf.mxu0
    %v9475 = vpop.f32.mrf.mxu0
    %9476 = vdwg.mxu0
    %9477 = vmatprep.subr.bf16.mxu0 %v7458
    %9478 = vmatpush1.bf16.msra.mxu0 %v7457
    %9479 = vmatprep.subr.bf16.mxu0 %v7448
    %9480 = vmatpush1.bf16.msra.mxu0 %v7447
    %9481 = vmatprep.subr.bf16.mxu0 %v7438
    %9482 = vmatpush1.bf16.msra.mxu0 %v7437
    %9483 = vmatprep.subr.bf16.mxu0 %v7428
    %9484 = vmatpush1.bf16.msra.mxu0 %v7427
    %9485 = vmatprep.subr.bf16.mxu0 %v7418
    %9486 = vmatpush1.bf16.msra.mxu0 %v7417
    %9487 = vmatprep.subr.bf16.mxu0 %v7408
    %9488 = vmatpush1.bf16.msra.mxu0 %v7407
    %9489 = vmatprep.subr.bf16.mxu0 %v7398
    %9490 = vmatpush1.bf16.msra.mxu0 %v7397
    %9491 = vmatprep.subr.bf16.mxu0 %v7388
    %9492 = vmatpush1.bf16.msra.mxu0 %v7387
    %9493 = vmatprep.subr.bf16.mxu0 %v7538
    %9494 = vmatpush2.bf16.msra.mxu0 %v7537
    %9495 = vmatprep.subr.bf16.mxu0 %v7528
    %9496 = vmatpush2.bf16.msra.mxu0 %v7527
    %9497 = vmatprep.subr.bf16.mxu0 %v7518
    %9498 = vmatpush2.bf16.msra.mxu0 %v7517
    %9499 = vmatprep.subr.bf16.mxu0 %v7508
    %9500 = vmatpush2.bf16.msra.mxu0 %v7507
    %9501 = vmatprep.subr.bf16.mxu0 %v7498
    %9502 = vmatpush2.bf16.msra.mxu0 %v7497
    %9503 = vmatprep.subr.bf16.mxu0 %v7488
    %9504 = vmatpush2.bf16.msra.mxu0 %v7487
    %9505 = vmatprep.subr.bf16.mxu0 %v7478
    %9506 = vmatpush2.bf16.msra.mxu0 %v7477
    %9507 = vmatprep.subr.bf16.mxu0 %v7468
    %9508 = vmatpush2.bf16.msra.mxu0 %v7467
    %9509 = vmatprep.mubr.bf16.mxu0 %v3960
    %9510 = vmatmul.mubr.bf16.gmra.mxu0 %v3959
    %v9511 = vpop.f32.mrf.mxu0
    %v9512 = vadd.f32 %v9471, %v9511
    %v9513 = vpop.f32.mrf.mxu0
    %v9514 = vadd.f32 %v9473, %v9513
    %v9515 = vpop.f32.mrf.mxu0
    %v9516 = vpop.f32.mrf.mxu0
    %9517 = vdwg.mxu0
    %9518 = vmatprep.subr.bf16.mxu0 %v7618
    %9519 = vmatpush1.bf16.msra.mxu0 %v7617
    %9520 = vmatprep.subr.bf16.mxu0 %v7608
    %9521 = vmatpush1.bf16.msra.mxu0 %v7607
    %9522 = vmatprep.subr.bf16.mxu0 %v7598
    %9523 = vmatpush1.bf16.msra.mxu0 %v7597
    %9524 = vmatprep.subr.bf16.mxu0 %v7588
    %9525 = vmatpush1.bf16.msra.mxu0 %v7587
    %9526 = vmatprep.subr.bf16.mxu0 %v7578
    %9527 = vmatpush1.bf16.msra.mxu0 %v7577
    %9528 = vmatprep.subr.bf16.mxu0 %v7568
    %9529 = vmatpush1.bf16.msra.mxu0 %v7567
    %9530 = vmatprep.subr.bf16.mxu0 %v7558
    %9531 = vmatpush1.bf16.msra.mxu0 %v7557
    %9532 = vmatprep.subr.bf16.mxu0 %v7548
    %9533 = vmatpush1.bf16.msra.mxu0 %v7547
    %9534 = vmatprep.subr.bf16.mxu0 %v7698
    %9535 = vmatpush2.bf16.msra.mxu0 %v7697
    %9536 = vmatprep.subr.bf16.mxu0 %v7688
    %9537 = vmatpush2.bf16.msra.mxu0 %v7687
    %9538 = vmatprep.subr.bf16.mxu0 %v7678
    %9539 = vmatpush2.bf16.msra.mxu0 %v7677
    %9540 = vmatprep.subr.bf16.mxu0 %v7668
    %9541 = vmatpush2.bf16.msra.mxu0 %v7667
    %9542 = vmatprep.subr.bf16.mxu0 %v7658
    %9543 = vmatpush2.bf16.msra.mxu0 %v7657
    %9544 = vmatprep.subr.bf16.mxu0 %v7648
    %9545 = vmatpush2.bf16.msra.mxu0 %v7647
    %9546 = vmatprep.subr.bf16.mxu0 %v7638
    %9547 = vmatpush2.bf16.msra.mxu0 %v7637
    %9548 = vmatprep.subr.bf16.mxu0 %v7628
    %9549 = vmatpush2.bf16.msra.mxu0 %v7627
    %9550 = vmatprep.mubr.bf16.mxu0 %v3962
    %9551 = vmatmul.mubr.bf16.gmra.mxu0 %v3961
    %v9552 = vpop.f32.mrf.mxu0
    %v9553 = vadd.f32 %v9512, %v9552
    %v9554 = vpop.f32.mrf.mxu0
    %v9555 = vadd.f32 %v9514, %v9554
    %v9556 = vpop.f32.mrf.mxu0
    %v9557 = vpop.f32.mrf.mxu0
    %9558 = vdwg.mxu0
    %9559 = vmatprep.subr.bf16.mxu0 %v7778
    %9560 = vmatpush1.bf16.msra.mxu0 %v7777
    %9561 = vmatprep.subr.bf16.mxu0 %v7768
    %9562 = vmatpush1.bf16.msra.mxu0 %v7767
    %9563 = vmatprep.subr.bf16.mxu0 %v7758
    %9564 = vmatpush1.bf16.msra.mxu0 %v7757
    %9565 = vmatprep.subr.bf16.mxu0 %v7748
    %9566 = vmatpush1.bf16.msra.mxu0 %v7747
    %9567 = vmatprep.subr.bf16.mxu0 %v7738
    %9568 = vmatpush1.bf16.msra.mxu0 %v7737
    %9569 = vmatprep.subr.bf16.mxu0 %v7728
    %9570 = vmatpush1.bf16.msra.mxu0 %v7727
    %9571 = vmatprep.subr.bf16.mxu0 %v7718
    %9572 = vmatpush1.bf16.msra.mxu0 %v7717
    %9573 = vmatprep.subr.bf16.mxu0 %v7708
    %9574 = vmatpush1.bf16.msra.mxu0 %v7707
    %9575 = vmatprep.subr.bf16.mxu0 %v7858
    %9576 = vmatpush2.bf16.msra.mxu0 %v7857
    %9577 = vmatprep.subr.bf16.mxu0 %v7848
    %9578 = vmatpush2.bf16.msra.mxu0 %v7847
    %9579 = vmatprep.subr.bf16.mxu0 %v7838
    %9580 = vmatpush2.bf16.msra.mxu0 %v7837
    %9581 = vmatprep.subr.bf16.mxu0 %v7828
    %9582 = vmatpush2.bf16.msra.mxu0 %v7827
    %9583 = vmatprep.subr.bf16.mxu0 %v7818
    %9584 = vmatpush2.bf16.msra.mxu0 %v7817
    %9585 = vmatprep.subr.bf16.mxu0 %v7808
    %9586 = vmatpush2.bf16.msra.mxu0 %v7807
    %9587 = vmatprep.subr.bf16.mxu0 %v7798
    %9588 = vmatpush2.bf16.msra.mxu0 %v7797
    %9589 = vmatprep.subr.bf16.mxu0 %v7788
    %9590 = vmatpush2.bf16.msra.mxu0 %v7787
    %9591 = vmatprep.mubr.bf16.mxu0 %v3964
    %9592 = vmatmul.mubr.bf16.gmra.mxu0 %v3963
    %v9593 = vpop.f32.mrf.mxu0
    %v9594 = vadd.f32 %v9553, %v9593
    %v9595 = vpop.f32.mrf.mxu0
    %v9596 = vadd.f32 %v9555, %v9595
    %v9597 = vpop.f32.mrf.mxu0
    %v9598 = vpop.f32.mrf.mxu0
    %9599 = vdwg.mxu0
    %9600 = vmatprep.subr.bf16.mxu0 %v7938
    %9601 = vmatpush1.bf16.msra.mxu0 %v7937
    %9602 = vmatprep.subr.bf16.mxu0 %v7928
    %9603 = vmatpush1.bf16.msra.mxu0 %v7927
    %9604 = vmatprep.subr.bf16.mxu0 %v7918
    %9605 = vmatpush1.bf16.msra.mxu0 %v7917
    %9606 = vmatprep.subr.bf16.mxu0 %v7908
    %9607 = vmatpush1.bf16.msra.mxu0 %v7907
    %9608 = vmatprep.subr.bf16.mxu0 %v7898
    %9609 = vmatpush1.bf16.msra.mxu0 %v7897
    %9610 = vmatprep.subr.bf16.mxu0 %v7888
    %9611 = vmatpush1.bf16.msra.mxu0 %v7887
    %9612 = vmatprep.subr.bf16.mxu0 %v7878
    %9613 = vmatpush1.bf16.msra.mxu0 %v7877
    %9614 = vmatprep.subr.bf16.mxu0 %v7868
    %9615 = vmatpush1.bf16.msra.mxu0 %v7867
    %9616 = vmatprep.subr.bf16.mxu0 %v8018
    %9617 = vmatpush2.bf16.msra.mxu0 %v8017
    %9618 = vmatprep.subr.bf16.mxu0 %v8008
    %9619 = vmatpush2.bf16.msra.mxu0 %v8007
    %9620 = vmatprep.subr.bf16.mxu0 %v7998
    %9621 = vmatpush2.bf16.msra.mxu0 %v7997
    %9622 = vmatprep.subr.bf16.mxu0 %v7988
    %9623 = vmatpush2.bf16.msra.mxu0 %v7987
    %9624 = vmatprep.subr.bf16.mxu0 %v7978
    %9625 = vmatpush2.bf16.msra.mxu0 %v7977
    %9626 = vmatprep.subr.bf16.mxu0 %v7968
    %9627 = vmatpush2.bf16.msra.mxu0 %v7967
    %9628 = vmatprep.subr.bf16.mxu0 %v7958
    %9629 = vmatpush2.bf16.msra.mxu0 %v7957
    %9630 = vmatprep.subr.bf16.mxu0 %v7948
    %9631 = vmatpush2.bf16.msra.mxu0 %v7947
    %9632 = vmatprep.mubr.bf16.mxu0 %v3966
    %9633 = vmatmul.mubr.bf16.gmra.mxu0 %v3965
    %v9634 = vpop.f32.mrf.mxu0
    %v9635 = vadd.f32 %v9594, %v9634
    %v9636 = vpop.f32.mrf.mxu0
    %v9637 = vadd.f32 %v9596, %v9636
    %v9638 = vpop.f32.mrf.mxu0
    %v9639 = vpop.f32.mrf.mxu0
    %9640 = vdwg.mxu0
    %9641 = vmatprep.subr.bf16.mxu0 %v7300
    %9642 = vmatpush1.bf16.msra.mxu0 %v7299
    %9643 = vmatprep.subr.bf16.mxu0 %v7290
    %9644 = vmatpush1.bf16.msra.mxu0 %v7289
    %9645 = vmatprep.subr.bf16.mxu0 %v7280
    %9646 = vmatpush1.bf16.msra.mxu0 %v7279
    %9647 = vmatprep.subr.bf16.mxu0 %v7270
    %9648 = vmatpush1.bf16.msra.mxu0 %v7269
    %9649 = vmatprep.subr.bf16.mxu0 %v7260
    %9650 = vmatpush1.bf16.msra.mxu0 %v7259
    %9651 = vmatprep.subr.bf16.mxu0 %v7250
    %9652 = vmatpush1.bf16.msra.mxu0 %v7249
    %9653 = vmatprep.subr.bf16.mxu0 %v7240
    %9654 = vmatpush1.bf16.msra.mxu0 %v7239
    %9655 = vmatprep.subr.bf16.mxu0 %v7230
    %9656 = vmatpush1.bf16.msra.mxu0 %v7229
    %9657 = vmatprep.subr.bf16.mxu0 %v7380
    %9658 = vmatpush2.bf16.msra.mxu0 %v7379
    %9659 = vmatprep.subr.bf16.mxu0 %v7370
    %9660 = vmatpush2.bf16.msra.mxu0 %v7369
    %9661 = vmatprep.subr.bf16.mxu0 %v7360
    %9662 = vmatpush2.bf16.msra.mxu0 %v7359
    %9663 = vmatprep.subr.bf16.mxu0 %v7350
    %9664 = vmatpush2.bf16.msra.mxu0 %v7349
    %9665 = vmatprep.subr.bf16.mxu0 %v7340
    %9666 = vmatpush2.bf16.msra.mxu0 %v7339
    %9667 = vmatprep.subr.bf16.mxu0 %v7330
    %9668 = vmatpush2.bf16.msra.mxu0 %v7329
    %9669 = vmatprep.subr.bf16.mxu0 %v7320
    %9670 = vmatpush2.bf16.msra.mxu0 %v7319
    %9671 = vmatprep.subr.bf16.mxu0 %v7310
    %9672 = vmatpush2.bf16.msra.mxu0 %v7309
    %9673 = vmatprep.mubr.bf16.mxu0 %v3958
    %9674 = vmatmul.mubr.bf16.gmra.mxu0 %v3957
    %v9675 = vpop.f32.mrf.mxu0
    %v9676 = vadd.f32 %v4806, %v9675
    %v9677 = vpop.f32.mrf.mxu0
    %v9678 = vadd.f32 %v4810, %v9677
    %v9679 = vpop.f32.mrf.mxu0
    %v9680 = vpop.f32.mrf.mxu0
    %9681 = vdwg.mxu0
    %9682 = vmatprep.subr.bf16.mxu0 %v7460
    %9683 = vmatpush1.bf16.msra.mxu0 %v7459
    %9684 = vmatprep.subr.bf16.mxu0 %v7450
    %9685 = vmatpush1.bf16.msra.mxu0 %v7449
    %9686 = vmatprep.subr.bf16.mxu0 %v7440
    %9687 = vmatpush1.bf16.msra.mxu0 %v7439
    %9688 = vmatprep.subr.bf16.mxu0 %v7430
    %9689 = vmatpush1.bf16.msra.mxu0 %v7429
    %9690 = vmatprep.subr.bf16.mxu0 %v7420
    %9691 = vmatpush1.bf16.msra.mxu0 %v7419
    %9692 = vmatprep.subr.bf16.mxu0 %v7410
    %9693 = vmatpush1.bf16.msra.mxu0 %v7409
    %9694 = vmatprep.subr.bf16.mxu0 %v7400
    %9695 = vmatpush1.bf16.msra.mxu0 %v7399
    %9696 = vmatprep.subr.bf16.mxu0 %v7390
    %9697 = vmatpush1.bf16.msra.mxu0 %v7389
    %9698 = vmatprep.subr.bf16.mxu0 %v7540
    %9699 = vmatpush2.bf16.msra.mxu0 %v7539
    %9700 = vmatprep.subr.bf16.mxu0 %v7530
    %9701 = vmatpush2.bf16.msra.mxu0 %v7529
    %9702 = vmatprep.subr.bf16.mxu0 %v7520
    %9703 = vmatpush2.bf16.msra.mxu0 %v7519
    %9704 = vmatprep.subr.bf16.mxu0 %v7510
    %9705 = vmatpush2.bf16.msra.mxu0 %v7509
    %9706 = vmatprep.subr.bf16.mxu0 %v7500
    %9707 = vmatpush2.bf16.msra.mxu0 %v7499
    %9708 = vmatprep.subr.bf16.mxu0 %v7490
    %9709 = vmatpush2.bf16.msra.mxu0 %v7489
    %9710 = vmatprep.subr.bf16.mxu0 %v7480
    %9711 = vmatpush2.bf16.msra.mxu0 %v7479
    %9712 = vmatprep.subr.bf16.mxu0 %v7470
    %9713 = vmatpush2.bf16.msra.mxu0 %v7469
    %9714 = vmatprep.mubr.bf16.mxu0 %v3960
    %9715 = vmatmul.mubr.bf16.gmra.mxu0 %v3959
    %v9716 = vpop.f32.mrf.mxu0
    %v9717 = vadd.f32 %v9676, %v9716
    %v9718 = vpop.f32.mrf.mxu0
    %v9719 = vadd.f32 %v9678, %v9718
    %v9720 = vpop.f32.mrf.mxu0
    %v9721 = vpop.f32.mrf.mxu0
    %9722 = vdwg.mxu0
    %9723 = vmatprep.subr.bf16.mxu0 %v7620
    %9724 = vmatpush1.bf16.msra.mxu0 %v7619
    %9725 = vmatprep.subr.bf16.mxu0 %v7610
    %9726 = vmatpush1.bf16.msra.mxu0 %v7609
    %9727 = vmatprep.subr.bf16.mxu0 %v7600
    %9728 = vmatpush1.bf16.msra.mxu0 %v7599
    %9729 = vmatprep.subr.bf16.mxu0 %v7590
    %9730 = vmatpush1.bf16.msra.mxu0 %v7589
    %9731 = vmatprep.subr.bf16.mxu0 %v7580
    %9732 = vmatpush1.bf16.msra.mxu0 %v7579
    %9733 = vmatprep.subr.bf16.mxu0 %v7570
    %9734 = vmatpush1.bf16.msra.mxu0 %v7569
    %9735 = vmatprep.subr.bf16.mxu0 %v7560
    %9736 = vmatpush1.bf16.msra.mxu0 %v7559
    %9737 = vmatprep.subr.bf16.mxu0 %v7550
    %9738 = vmatpush1.bf16.msra.mxu0 %v7549
    %9739 = vmatprep.subr.bf16.mxu0 %v7700
    %9740 = vmatpush2.bf16.msra.mxu0 %v7699
    %9741 = vmatprep.subr.bf16.mxu0 %v7690
    %9742 = vmatpush2.bf16.msra.mxu0 %v7689
    %9743 = vmatprep.subr.bf16.mxu0 %v7680
    %9744 = vmatpush2.bf16.msra.mxu0 %v7679
    %9745 = vmatprep.subr.bf16.mxu0 %v7670
    %9746 = vmatpush2.bf16.msra.mxu0 %v7669
    %9747 = vmatprep.subr.bf16.mxu0 %v7660
    %9748 = vmatpush2.bf16.msra.mxu0 %v7659
    %9749 = vmatprep.subr.bf16.mxu0 %v7650
    %9750 = vmatpush2.bf16.msra.mxu0 %v7649
    %9751 = vmatprep.subr.bf16.mxu0 %v7640
    %9752 = vmatpush2.bf16.msra.mxu0 %v7639
    %9753 = vmatprep.subr.bf16.mxu0 %v7630
    %9754 = vmatpush2.bf16.msra.mxu0 %v7629
    %9755 = vmatprep.mubr.bf16.mxu0 %v3962
    %9756 = vmatmul.mubr.bf16.gmra.mxu0 %v3961
    %v9757 = vpop.f32.mrf.mxu0
    %v9758 = vadd.f32 %v9717, %v9757
    %v9759 = vpop.f32.mrf.mxu0
    %v9760 = vadd.f32 %v9719, %v9759
    %v9761 = vpop.f32.mrf.mxu0
    %v9762 = vpop.f32.mrf.mxu0
    %9763 = vdwg.mxu0
    %9764 = vmatprep.subr.bf16.mxu0 %v7780
    %9765 = vmatpush1.bf16.msra.mxu0 %v7779
    %9766 = vmatprep.subr.bf16.mxu0 %v7770
    %9767 = vmatpush1.bf16.msra.mxu0 %v7769
    %9768 = vmatprep.subr.bf16.mxu0 %v7760
    %9769 = vmatpush1.bf16.msra.mxu0 %v7759
    %9770 = vmatprep.subr.bf16.mxu0 %v7750
    %9771 = vmatpush1.bf16.msra.mxu0 %v7749
    %9772 = vmatprep.subr.bf16.mxu0 %v7740
    %9773 = vmatpush1.bf16.msra.mxu0 %v7739
    %9774 = vmatprep.subr.bf16.mxu0 %v7730
    %9775 = vmatpush1.bf16.msra.mxu0 %v7729
    %9776 = vmatprep.subr.bf16.mxu0 %v7720
    %9777 = vmatpush1.bf16.msra.mxu0 %v7719
    %9778 = vmatprep.subr.bf16.mxu0 %v7710
    %9779 = vmatpush1.bf16.msra.mxu0 %v7709
    %9780 = vmatprep.subr.bf16.mxu0 %v7860
    %9781 = vmatpush2.bf16.msra.mxu0 %v7859
    %9782 = vmatprep.subr.bf16.mxu0 %v7850
    %9783 = vmatpush2.bf16.msra.mxu0 %v7849
    %9784 = vmatprep.subr.bf16.mxu0 %v7840
    %9785 = vmatpush2.bf16.msra.mxu0 %v7839
    %9786 = vmatprep.subr.bf16.mxu0 %v7830
    %9787 = vmatpush2.bf16.msra.mxu0 %v7829
    %9788 = vmatprep.subr.bf16.mxu0 %v7820
    %9789 = vmatpush2.bf16.msra.mxu0 %v7819
    %9790 = vmatprep.subr.bf16.mxu0 %v7810
    %9791 = vmatpush2.bf16.msra.mxu0 %v7809
    %9792 = vmatprep.subr.bf16.mxu0 %v7800
    %9793 = vmatpush2.bf16.msra.mxu0 %v7799
    %9794 = vmatprep.subr.bf16.mxu0 %v7790
    %9795 = vmatpush2.bf16.msra.mxu0 %v7789
    %9796 = vmatprep.mubr.bf16.mxu0 %v3964
    %9797 = vmatmul.mubr.bf16.gmra.mxu0 %v3963
    %v9798 = vpop.f32.mrf.mxu0
    %v9799 = vadd.f32 %v9758, %v9798
    %v9800 = vpop.f32.mrf.mxu0
    %v9801 = vadd.f32 %v9760, %v9800
    %v9802 = vpop.f32.mrf.mxu0
    %v9803 = vpop.f32.mrf.mxu0
    %9804 = vdwg.mxu0
    %9805 = vmatprep.subr.bf16.mxu0 %v7940
    %9806 = vmatpush1.bf16.msra.mxu0 %v7939
    %9807 = vmatprep.subr.bf16.mxu0 %v7930
    %9808 = vmatpush1.bf16.msra.mxu0 %v7929
    %9809 = vmatprep.subr.bf16.mxu0 %v7920
    %9810 = vmatpush1.bf16.msra.mxu0 %v7919
    %9811 = vmatprep.subr.bf16.mxu0 %v7910
    %9812 = vmatpush1.bf16.msra.mxu0 %v7909
    %9813 = vmatprep.subr.bf16.mxu0 %v7900
    %9814 = vmatpush1.bf16.msra.mxu0 %v7899
    %9815 = vmatprep.subr.bf16.mxu0 %v7890
    %9816 = vmatpush1.bf16.msra.mxu0 %v7889
    %9817 = vmatprep.subr.bf16.mxu0 %v7880
    %9818 = vmatpush1.bf16.msra.mxu0 %v7879
    %9819 = vmatprep.subr.bf16.mxu0 %v7870
    %9820 = vmatpush1.bf16.msra.mxu0 %v7869
    %9821 = vmatprep.subr.bf16.mxu0 %v8020
    %9822 = vmatpush2.bf16.msra.mxu0 %v8019
    %9823 = vmatprep.subr.bf16.mxu0 %v8010
    %9824 = vmatpush2.bf16.msra.mxu0 %v8009
    %9825 = vmatprep.subr.bf16.mxu0 %v8000
    %9826 = vmatpush2.bf16.msra.mxu0 %v7999
    %9827 = vmatprep.subr.bf16.mxu0 %v7990
    %9828 = vmatpush2.bf16.msra.mxu0 %v7989
    %9829 = vmatprep.subr.bf16.mxu0 %v7980
    %9830 = vmatpush2.bf16.msra.mxu0 %v7979
    %9831 = vmatprep.subr.bf16.mxu0 %v7970
    %9832 = vmatpush2.bf16.msra.mxu0 %v7969
    %9833 = vmatprep.subr.bf16.mxu0 %v7960
    %9834 = vmatpush2.bf16.msra.mxu0 %v7959
    %9835 = vmatprep.subr.bf16.mxu0 %v7950
    %9836 = vmatpush2.bf16.msra.mxu0 %v7949
    %9837 = vmatprep.mubr.bf16.mxu0 %v3966
    %9838 = vmatmul.mubr.bf16.gmra.mxu0 %v3965
    %v9839 = vpop.f32.mrf.mxu0
    %v9840 = vadd.f32 %v9799, %v9839
    %v9841 = vpop.f32.mrf.mxu0
    %v9842 = vadd.f32 %v9801, %v9841
    %v9843 = vpop.f32.mrf.mxu0
    %v9844 = vpop.f32.mrf.mxu0
    %9845 = vdwg.mxu0
    %v9846 = vmax.f32 %v9020, 0.0
    %v9847 = vmax.f32 %v9022, 0.0
    %v9848 = vmax.f32 %v9225, 0.0
    %v9849 = vmax.f32 %v9227, 0.0
    %v9850 = vmax.f32 %v9430, 0.0
    %v9851 = vmax.f32 %v9432, 0.0
    %v9852 = vmax.f32 %v9635, 0.0
    %v9853 = vmax.f32 %v9637, 0.0
    %v9854 = vmax.f32 %v9840, 0.0
    %v9855 = vmax.f32 %v9842, 0.0
    %v9856 = vpack.c.bf16 %v9846, %v9846
    %v9857 = vpack.c.bf16 %v9847, %v9847
    %v9858 = vpack.c.bf16 %v9848, %v9848
    %v9859 = vpack.c.bf16 %v9849, %v9849
    %v9860 = vpack.c.bf16 %v9850, %v9850
    %v9861 = vpack.c.bf16 %v9851, %v9851
    %v9862 = vpack.c.bf16 %v9852, %v9852
    %v9863 = vpack.c.bf16 %v9853, %v9853
    %v9864 = vpack.c.bf16 %v9854, %v9854
    %v9865 = vpack.c.bf16 %v9855, %v9855
    %v9866 = vld [vmem:[#allocation11] sm:$0xf]
    %v9867 = vld [vmem:[#allocation11 + $0x4] sm:$0xf]
    %v9868 = vld [vmem:[#allocation11 + $0x8] sm:$0xf]
    %v9869 = vld [vmem:[#allocation11 + $0xc] sm:$0xf]
    %v9870 = vld [vmem:[#allocation11 + $0x10] sm:$0xf]
    %v9871 = vld [vmem:[#allocation11 + $0x14] sm:$0xf]
    %v9872 = vld [vmem:[#allocation11 + $0x18] sm:$0xf]
    %v9873 = vld [vmem:[#allocation11 + $0x1c] sm:$0xf]
    %v9874 = vld [vmem:[#allocation11 + $0x20] sm:$0xf]
    %v9875 = vld [vmem:[#allocation11 + $0x24] sm:$0xf]
    %v9876 = vld [vmem:[#allocation11 + $0x28] sm:$0xf]
    %v9877 = vld [vmem:[#allocation11 + $0x2c] sm:$0xf]
    %v9878 = vld [vmem:[#allocation11 + $0x30] sm:$0xf]
    %v9879 = vld [vmem:[#allocation11 + $0x34] sm:$0xf]
    %v9880 = vld [vmem:[#allocation11 + $0x38] sm:$0xf]
    %v9881 = vld [vmem:[#allocation11 + $0x3c] sm:$0xf]
    %v9882 = vld [vmem:[#allocation11 + $0x40] sm:$0xf]
    %v9883 = vld [vmem:[#allocation11 + $0x44] sm:$0xf]
    %v9884 = vld [vmem:[#allocation11 + $0x48] sm:$0xf]
    %v9885 = vld [vmem:[#allocation11 + $0x4c] sm:$0xf]
    %v9886 = vld [vmem:[#allocation11 + $0x50] sm:$0xf]
    %v9887 = vld [vmem:[#allocation11 + $0x54] sm:$0xf]
    %v9888 = vld [vmem:[#allocation11 + $0x58] sm:$0xf]
    %v9889 = vld [vmem:[#allocation11 + $0x5c] sm:$0xf]
    %v9890 = vld [vmem:[#allocation11 + $0x60] sm:$0xf]
    %v9891 = vld [vmem:[#allocation11 + $0x64] sm:$0xf]
    %v9892 = vld [vmem:[#allocation11 + $0x68] sm:$0xf]
    %v9893 = vld [vmem:[#allocation11 + $0x6c] sm:$0xf]
    %v9894 = vld [vmem:[#allocation11 + $0x70] sm:$0xf]
    %v9895 = vld [vmem:[#allocation11 + $0x74] sm:$0xf]
    %v9896 = vld [vmem:[#allocation11 + $0x78] sm:$0xf]
    %v9897 = vld [vmem:[#allocation11 + $0x7c] sm:$0xf]
    %v9898 = vld [vmem:[#allocation11 + $0x80] sm:$0xf]
    %v9899 = vld [vmem:[#allocation11 + $0x84] sm:$0xf]
    %v9900 = vld [vmem:[#allocation11 + $0x88] sm:$0xf]
    %v9901 = vld [vmem:[#allocation11 + $0x8c] sm:$0xf]
    %v9902 = vld [vmem:[#allocation11 + $0x90] sm:$0xf]
    %v9903 = vld [vmem:[#allocation11 + $0x94] sm:$0xf]
    %v9904 = vld [vmem:[#allocation11 + $0x98] sm:$0xf]
    %v9905 = vld [vmem:[#allocation11 + $0x9c] sm:$0xf]
    %v9906 = vld [vmem:[#allocation11 + $0xa0] sm:$0xf]
    %v9907 = vld [vmem:[#allocation11 + $0xa4] sm:$0xf]
    %v9908 = vld [vmem:[#allocation11 + $0xa8] sm:$0xf]
    %v9909 = vld [vmem:[#allocation11 + $0xac] sm:$0xf]
    %v9910 = vld [vmem:[#allocation11 + $0xb0] sm:$0xf]
    %v9911 = vld [vmem:[#allocation11 + $0xb4] sm:$0xf]
    %v9912 = vld [vmem:[#allocation11 + $0xb8] sm:$0xf]
    %v9913 = vld [vmem:[#allocation11 + $0xbc] sm:$0xf]
    %v9914 = vld [vmem:[#allocation11 + $0xc0] sm:$0xf]
    %v9915 = vld [vmem:[#allocation11 + $0xc4] sm:$0xf]
    %v9916 = vld [vmem:[#allocation11 + $0xc8] sm:$0xf]
    %v9917 = vld [vmem:[#allocation11 + $0xcc] sm:$0xf]
    %v9918 = vld [vmem:[#allocation11 + $0xd0] sm:$0xf]
    %v9919 = vld [vmem:[#allocation11 + $0xd4] sm:$0xf]
    %v9920 = vld [vmem:[#allocation11 + $0xd8] sm:$0xf]
    %v9921 = vld [vmem:[#allocation11 + $0xdc] sm:$0xf]
    %v9922 = vld [vmem:[#allocation11 + $0xe0] sm:$0xf]
    %v9923 = vld [vmem:[#allocation11 + $0xe4] sm:$0xf]
    %v9924 = vld [vmem:[#allocation11 + $0xe8] sm:$0xf]
    %v9925 = vld [vmem:[#allocation11 + $0xec] sm:$0xf]
    %v9926 = vld [vmem:[#allocation11 + $0xf0] sm:$0xf]
    %v9927 = vld [vmem:[#allocation11 + $0xf4] sm:$0xf]
    %v9928 = vld [vmem:[#allocation11 + $0xf8] sm:$0xf]
    %v9929 = vld [vmem:[#allocation11 + $0xfc] sm:$0xf]
    %v9930 = vld [vmem:[#allocation11 + $0x100] sm:$0xf]
    %v9931 = vld [vmem:[#allocation11 + $0x104] sm:$0xf]
    %v9932 = vld [vmem:[#allocation11 + $0x108] sm:$0xf]
    %v9933 = vld [vmem:[#allocation11 + $0x10c] sm:$0xf]
    %v9934 = vld [vmem:[#allocation11 + $0x110] sm:$0xf]
    %v9935 = vld [vmem:[#allocation11 + $0x114] sm:$0xf]
    %v9936 = vld [vmem:[#allocation11 + $0x118] sm:$0xf]
    %v9937 = vld [vmem:[#allocation11 + $0x11c] sm:$0xf]
    %v9938 = vld [vmem:[#allocation11 + $0x120] sm:$0xf]
    %v9939 = vld [vmem:[#allocation11 + $0x124] sm:$0xf]
    %v9940 = vld [vmem:[#allocation11 + $0x128] sm:$0xf]
    %v9941 = vld [vmem:[#allocation11 + $0x12c] sm:$0xf]
    %v9942 = vld [vmem:[#allocation11 + $0x130] sm:$0xf]
    %v9943 = vld [vmem:[#allocation11 + $0x134] sm:$0xf]
    %v9944 = vld [vmem:[#allocation11 + $0x138] sm:$0xf]
    %v9945 = vld [vmem:[#allocation11 + $0x13c] sm:$0xf]
    %v9946 = vld [vmem:[#allocation11 + $0x140] sm:$0xf]
    %v9947 = vld [vmem:[#allocation11 + $0x144] sm:$0xf]
    %v9948 = vld [vmem:[#allocation11 + $0x148] sm:$0xf]
    %v9949 = vld [vmem:[#allocation11 + $0x14c] sm:$0xf]
    %v9950 = vld [vmem:[#allocation11 + $0x150] sm:$0xf]
    %v9951 = vld [vmem:[#allocation11 + $0x154] sm:$0xf]
    %v9952 = vld [vmem:[#allocation11 + $0x158] sm:$0xf]
    %v9953 = vld [vmem:[#allocation11 + $0x15c] sm:$0xf]
    %v9954 = vld [vmem:[#allocation11 + $0x160] sm:$0xf]
    %v9955 = vld [vmem:[#allocation11 + $0x164] sm:$0xf]
    %v9956 = vld [vmem:[#allocation11 + $0x168] sm:$0xf]
    %v9957 = vld [vmem:[#allocation11 + $0x16c] sm:$0xf]
    %v9958 = vld [vmem:[#allocation11 + $0x170] sm:$0xf]
    %v9959 = vld [vmem:[#allocation11 + $0x174] sm:$0xf]
    %v9960 = vld [vmem:[#allocation11 + $0x178] sm:$0xf]
    %v9961 = vld [vmem:[#allocation11 + $0x17c] sm:$0xf]
    %v9962 = vld [vmem:[#allocation11 + $0x180] sm:$0xf]
    %v9963 = vld [vmem:[#allocation11 + $0x184] sm:$0xf]
    %v9964 = vld [vmem:[#allocation11 + $0x188] sm:$0xf]
    %v9965 = vld [vmem:[#allocation11 + $0x18c] sm:$0xf]
    %v9966 = vld [vmem:[#allocation11 + $0x190] sm:$0xf]
    %v9967 = vld [vmem:[#allocation11 + $0x194] sm:$0xf]
    %v9968 = vld [vmem:[#allocation11 + $0x198] sm:$0xf]
    %v9969 = vld [vmem:[#allocation11 + $0x19c] sm:$0xf]
    %v9970 = vld [vmem:[#allocation11 + $0x1a0] sm:$0xf]
    %v9971 = vld [vmem:[#allocation11 + $0x1a4] sm:$0xf]
    %v9972 = vld [vmem:[#allocation11 + $0x1a8] sm:$0xf]
    %v9973 = vld [vmem:[#allocation11 + $0x1ac] sm:$0xf]
    %v9974 = vld [vmem:[#allocation11 + $0x1b0] sm:$0xf]
    %v9975 = vld [vmem:[#allocation11 + $0x1b4] sm:$0xf]
    %v9976 = vld [vmem:[#allocation11 + $0x1b8] sm:$0xf]
    %v9977 = vld [vmem:[#allocation11 + $0x1bc] sm:$0xf]
    %v9978 = vld [vmem:[#allocation11 + $0x1c0] sm:$0xf]
    %v9979 = vld [vmem:[#allocation11 + $0x1c4] sm:$0xf]
    %v9980 = vld [vmem:[#allocation11 + $0x1c8] sm:$0xf]
    %v9981 = vld [vmem:[#allocation11 + $0x1cc] sm:$0xf]
    %v9982 = vld [vmem:[#allocation11 + $0x1d0] sm:$0xf]
    %v9983 = vld [vmem:[#allocation11 + $0x1d4] sm:$0xf]
    %v9984 = vld [vmem:[#allocation11 + $0x1d8] sm:$0xf]
    %v9985 = vld [vmem:[#allocation11 + $0x1dc] sm:$0xf]
    %v9986 = vld [vmem:[#allocation11 + $0x1e0] sm:$0xf]
    %v9987 = vld [vmem:[#allocation11 + $0x1e4] sm:$0xf]
    %v9988 = vld [vmem:[#allocation11 + $0x1e8] sm:$0xf]
    %v9989 = vld [vmem:[#allocation11 + $0x1ec] sm:$0xf]
    %v9990 = vld [vmem:[#allocation11 + $0x1f0] sm:$0xf]
    %v9991 = vld [vmem:[#allocation11 + $0x1f4] sm:$0xf]
    %v9992 = vld [vmem:[#allocation11 + $0x1f8] sm:$0xf]
    %v9993 = vld [vmem:[#allocation11 + $0x1fc] sm:$0xf]
    %v9994 = vld [vmem:[#allocation11 + $0x200] sm:$0xf]
    %v9995 = vld [vmem:[#allocation11 + $0x204] sm:$0xf]
    %v9996 = vld [vmem:[#allocation11 + $0x208] sm:$0xf]
    %v9997 = vld [vmem:[#allocation11 + $0x20c] sm:$0xf]
    %v9998 = vld [vmem:[#allocation11 + $0x210] sm:$0xf]
    %v9999 = vld [vmem:[#allocation11 + $0x214] sm:$0xf]
    %v10000 = vld [vmem:[#allocation11 + $0x218] sm:$0xf]
    %v10001 = vld [vmem:[#allocation11 + $0x21c] sm:$0xf]
    %v10002 = vld [vmem:[#allocation11 + $0x220] sm:$0xf]
    %v10003 = vld [vmem:[#allocation11 + $0x224] sm:$0xf]
    %v10004 = vld [vmem:[#allocation11 + $0x228] sm:$0xf]
    %v10005 = vld [vmem:[#allocation11 + $0x22c] sm:$0xf]
    %v10006 = vld [vmem:[#allocation11 + $0x230] sm:$0xf]
    %v10007 = vld [vmem:[#allocation11 + $0x234] sm:$0xf]
    %v10008 = vld [vmem:[#allocation11 + $0x238] sm:$0xf]
    %v10009 = vld [vmem:[#allocation11 + $0x23c] sm:$0xf]
    %v10010 = vld [vmem:[#allocation11 + $0x240] sm:$0xf]
    %v10011 = vld [vmem:[#allocation11 + $0x244] sm:$0xf]
    %v10012 = vld [vmem:[#allocation11 + $0x248] sm:$0xf]
    %v10013 = vld [vmem:[#allocation11 + $0x24c] sm:$0xf]
    %v10014 = vld [vmem:[#allocation11 + $0x250] sm:$0xf]
    %v10015 = vld [vmem:[#allocation11 + $0x254] sm:$0xf]
    %v10016 = vld [vmem:[#allocation11 + $0x258] sm:$0xf]
    %v10017 = vld [vmem:[#allocation11 + $0x25c] sm:$0xf]
    %v10018 = vld [vmem:[#allocation11 + $0x260] sm:$0xf]
    %v10019 = vld [vmem:[#allocation11 + $0x264] sm:$0xf]
    %v10020 = vld [vmem:[#allocation11 + $0x268] sm:$0xf]
    %v10021 = vld [vmem:[#allocation11 + $0x26c] sm:$0xf]
    %v10022 = vld [vmem:[#allocation11 + $0x270] sm:$0xf]
    %v10023 = vld [vmem:[#allocation11 + $0x274] sm:$0xf]
    %v10024 = vld [vmem:[#allocation11 + $0x278] sm:$0xf]
    %v10025 = vld [vmem:[#allocation11 + $0x27c] sm:$0xf]
    %v10026 = vld [vmem:[#allocation13] sm:$0x1]
    %v10028 = vlaneseq
    %v10029 = vshrl.u32 %v10028, 7
    %v10030 = vsub.s32 0, %v10029
    %v10031 = vrot.slane %v10026, %v10030
    %v10193 = vunpack.c.l.b16 %v9866
    %v10194 = vunpack.c.l.b16 %v9867
    %v10195 = vunpack.c.l.b16 %v9868
    %v10196 = vunpack.c.l.b16 %v9869
    %v10197 = vunpack.c.l.b16 %v9870
    %v10198 = vunpack.c.l.b16 %v9871
    %v10199 = vunpack.c.l.b16 %v9872
    %v10200 = vunpack.c.l.b16 %v9873
    %v10201 = vunpack.c.l.b16 %v9874
    %v10202 = vunpack.c.l.b16 %v9875
    %v10203 = vunpack.c.l.b16 %v9876
    %v10204 = vunpack.c.l.b16 %v9877
    %v10205 = vunpack.c.l.b16 %v9878
    %v10206 = vunpack.c.l.b16 %v9879
    %v10207 = vunpack.c.l.b16 %v9880
    %v10208 = vunpack.c.l.b16 %v9881
    %v10209 = vunpack.c.l.b16 %v9882
    %v10210 = vunpack.c.l.b16 %v9883
    %v10211 = vunpack.c.l.b16 %v9884
    %v10212 = vunpack.c.l.b16 %v9885
    %v10213 = vunpack.c.l.b16 %v9886
    %v10214 = vunpack.c.l.b16 %v9887
    %v10215 = vunpack.c.l.b16 %v9888
    %v10216 = vunpack.c.l.b16 %v9889
    %v10217 = vunpack.c.l.b16 %v9890
    %v10218 = vunpack.c.l.b16 %v9891
    %v10219 = vunpack.c.l.b16 %v9892
    %v10220 = vunpack.c.l.b16 %v9893
    %v10221 = vunpack.c.l.b16 %v9894
    %v10222 = vunpack.c.l.b16 %v9895
    %v10223 = vunpack.c.l.b16 %v9896
    %v10224 = vunpack.c.l.b16 %v9897
    %v10225 = vunpack.c.l.b16 %v9898
    %v10226 = vunpack.c.l.b16 %v9899
    %v10227 = vunpack.c.l.b16 %v9900
    %v10228 = vunpack.c.l.b16 %v9901
    %v10229 = vunpack.c.l.b16 %v9902
    %v10230 = vunpack.c.l.b16 %v9903
    %v10231 = vunpack.c.l.b16 %v9904
    %v10232 = vunpack.c.l.b16 %v9905
    %v10233 = vunpack.c.l.b16 %v9906
    %v10234 = vunpack.c.l.b16 %v9907
    %v10235 = vunpack.c.l.b16 %v9908
    %v10236 = vunpack.c.l.b16 %v9909
    %v10237 = vunpack.c.l.b16 %v9910
    %v10238 = vunpack.c.l.b16 %v9911
    %v10239 = vunpack.c.l.b16 %v9912
    %v10240 = vunpack.c.l.b16 %v9913
    %v10241 = vunpack.c.l.b16 %v9914
    %v10242 = vunpack.c.l.b16 %v9915
    %v10243 = vunpack.c.l.b16 %v9916
    %v10244 = vunpack.c.l.b16 %v9917
    %v10245 = vunpack.c.l.b16 %v9918
    %v10246 = vunpack.c.l.b16 %v9919
    %v10247 = vunpack.c.l.b16 %v9920
    %v10248 = vunpack.c.l.b16 %v9921
    %v10249 = vunpack.c.l.b16 %v9922
    %v10250 = vunpack.c.l.b16 %v9923
    %v10251 = vunpack.c.l.b16 %v9924
    %v10252 = vunpack.c.l.b16 %v9925
    %v10253 = vunpack.c.l.b16 %v9926
    %v10254 = vunpack.c.l.b16 %v9927
    %v10255 = vunpack.c.l.b16 %v9928
    %v10256 = vunpack.c.l.b16 %v9929
    %v10257 = vunpack.c.l.b16 %v9930
    %v10258 = vunpack.c.l.b16 %v9931
    %v10259 = vunpack.c.l.b16 %v9932
    %v10260 = vunpack.c.l.b16 %v9933
    %v10261 = vunpack.c.l.b16 %v9934
    %v10262 = vunpack.c.l.b16 %v9935
    %v10263 = vunpack.c.l.b16 %v9936
    %v10264 = vunpack.c.l.b16 %v9937
    %v10265 = vunpack.c.l.b16 %v9938
    %v10266 = vunpack.c.l.b16 %v9939
    %v10267 = vunpack.c.l.b16 %v9940
    %v10268 = vunpack.c.l.b16 %v9941
    %v10269 = vunpack.c.l.b16 %v9942
    %v10270 = vunpack.c.l.b16 %v9943
    %v10271 = vunpack.c.l.b16 %v9944
    %v10272 = vunpack.c.l.b16 %v9945
    %v10273 = vunpack.c.l.b16 %v9946
    %v10274 = vunpack.c.l.b16 %v9947
    %v10275 = vunpack.c.l.b16 %v9948
    %v10276 = vunpack.c.l.b16 %v9949
    %v10277 = vunpack.c.l.b16 %v9950
    %v10278 = vunpack.c.l.b16 %v9951
    %v10279 = vunpack.c.l.b16 %v9952
    %v10280 = vunpack.c.l.b16 %v9953
    %v10281 = vunpack.c.l.b16 %v9954
    %v10282 = vunpack.c.l.b16 %v9955
    %v10283 = vunpack.c.l.b16 %v9956
    %v10284 = vunpack.c.l.b16 %v9957
    %v10285 = vunpack.c.l.b16 %v9958
    %v10286 = vunpack.c.l.b16 %v9959
    %v10287 = vunpack.c.l.b16 %v9960
    %v10288 = vunpack.c.l.b16 %v9961
    %v10289 = vunpack.c.l.b16 %v9962
    %v10290 = vunpack.c.l.b16 %v9963
    %v10291 = vunpack.c.l.b16 %v9964
    %v10292 = vunpack.c.l.b16 %v9965
    %v10293 = vunpack.c.l.b16 %v9966
    %v10294 = vunpack.c.l.b16 %v9967
    %v10295 = vunpack.c.l.b16 %v9968
    %v10296 = vunpack.c.l.b16 %v9969
    %v10297 = vunpack.c.l.b16 %v9970
    %v10298 = vunpack.c.l.b16 %v9971
    %v10299 = vunpack.c.l.b16 %v9972
    %v10300 = vunpack.c.l.b16 %v9973
    %v10301 = vunpack.c.l.b16 %v9974
    %v10302 = vunpack.c.l.b16 %v9975
    %v10303 = vunpack.c.l.b16 %v9976
    %v10304 = vunpack.c.l.b16 %v9977
    %v10305 = vunpack.c.l.b16 %v9978
    %v10306 = vunpack.c.l.b16 %v9979
    %v10307 = vunpack.c.l.b16 %v9980
    %v10308 = vunpack.c.l.b16 %v9981
    %v10309 = vunpack.c.l.b16 %v9982
    %v10310 = vunpack.c.l.b16 %v9983
    %v10311 = vunpack.c.l.b16 %v9984
    %v10312 = vunpack.c.l.b16 %v9985
    %v10313 = vunpack.c.l.b16 %v9986
    %v10314 = vunpack.c.l.b16 %v9987
    %v10315 = vunpack.c.l.b16 %v9988
    %v10316 = vunpack.c.l.b16 %v9989
    %v10317 = vunpack.c.l.b16 %v9990
    %v10318 = vunpack.c.l.b16 %v9991
    %v10319 = vunpack.c.l.b16 %v9992
    %v10320 = vunpack.c.l.b16 %v9993
    %v10321 = vunpack.c.l.b16 %v9994
    %v10322 = vunpack.c.l.b16 %v9995
    %v10323 = vunpack.c.l.b16 %v9996
    %v10324 = vunpack.c.l.b16 %v9997
    %v10325 = vunpack.c.l.b16 %v9998
    %v10326 = vunpack.c.l.b16 %v9999
    %v10327 = vunpack.c.l.b16 %v10000
    %v10328 = vunpack.c.l.b16 %v10001
    %v10329 = vunpack.c.l.b16 %v10002
    %v10330 = vunpack.c.l.b16 %v10003
    %v10331 = vunpack.c.l.b16 %v10004
    %v10332 = vunpack.c.l.b16 %v10005
    %v10333 = vunpack.c.l.b16 %v10006
    %v10334 = vunpack.c.l.b16 %v10007
    %v10335 = vunpack.c.l.b16 %v10008
    %v10336 = vunpack.c.l.b16 %v10009
    %v10337 = vunpack.c.l.b16 %v10010
    %v10338 = vunpack.c.l.b16 %v10011
    %v10339 = vunpack.c.l.b16 %v10012
    %v10340 = vunpack.c.l.b16 %v10013
    %v10341 = vunpack.c.l.b16 %v10014
    %v10342 = vunpack.c.l.b16 %v10015
    %v10343 = vunpack.c.l.b16 %v10016
    %v10344 = vunpack.c.l.b16 %v10017
    %v10345 = vunpack.c.l.b16 %v10018
    %v10346 = vunpack.c.l.b16 %v10019
    %v10347 = vunpack.c.l.b16 %v10020
    %v10348 = vunpack.c.l.b16 %v10021
    %v10349 = vunpack.c.l.b16 %v10022
    %v10350 = vunpack.c.l.b16 %v10023
    %v10351 = vunpack.c.l.b16 %v10024
    %v10352 = vunpack.c.l.b16 %v10025
    %v10353 = vpack.c.b16 %v10194, %v10193
    %v10354 = vpack.c.b16 %v10196, %v10195
    %v10355 = vpack.c.b16 %v10198, %v10197
    %v10356 = vpack.c.b16 %v10200, %v10199
    %v10357 = vpack.c.b16 %v10202, %v10201
    %v10358 = vpack.c.b16 %v10204, %v10203
    %v10359 = vpack.c.b16 %v10206, %v10205
    %v10360 = vpack.c.b16 %v10208, %v10207
    %v10361 = vpack.c.b16 %v10210, %v10209
    %v10362 = vpack.c.b16 %v10212, %v10211
    %v10363 = vpack.c.b16 %v10214, %v10213
    %v10364 = vpack.c.b16 %v10216, %v10215
    %v10365 = vpack.c.b16 %v10218, %v10217
    %v10366 = vpack.c.b16 %v10220, %v10219
    %v10367 = vpack.c.b16 %v10222, %v10221
    %v10368 = vpack.c.b16 %v10224, %v10223
    %v10369 = vpack.c.b16 %v10226, %v10225
    %v10370 = vpack.c.b16 %v10228, %v10227
    %v10371 = vpack.c.b16 %v10230, %v10229
    %v10372 = vpack.c.b16 %v10232, %v10231
    %v10373 = vpack.c.b16 %v10234, %v10233
    %v10374 = vpack.c.b16 %v10236, %v10235
    %v10375 = vpack.c.b16 %v10238, %v10237
    %v10376 = vpack.c.b16 %v10240, %v10239
    %v10377 = vpack.c.b16 %v10242, %v10241
    %v10378 = vpack.c.b16 %v10244, %v10243
    %v10379 = vpack.c.b16 %v10246, %v10245
    %v10380 = vpack.c.b16 %v10248, %v10247
    %v10381 = vpack.c.b16 %v10250, %v10249
    %v10382 = vpack.c.b16 %v10252, %v10251
    %v10383 = vpack.c.b16 %v10254, %v10253
    %v10384 = vpack.c.b16 %v10256, %v10255
    %v10385 = vpack.c.b16 %v10258, %v10257
    %v10386 = vpack.c.b16 %v10260, %v10259
    %v10387 = vpack.c.b16 %v10262, %v10261
    %v10388 = vpack.c.b16 %v10264, %v10263
    %v10389 = vpack.c.b16 %v10266, %v10265
    %v10390 = vpack.c.b16 %v10268, %v10267
    %v10391 = vpack.c.b16 %v10270, %v10269
    %v10392 = vpack.c.b16 %v10272, %v10271
    %v10393 = vpack.c.b16 %v10274, %v10273
    %v10394 = vpack.c.b16 %v10276, %v10275
    %v10395 = vpack.c.b16 %v10278, %v10277
    %v10396 = vpack.c.b16 %v10280, %v10279
    %v10397 = vpack.c.b16 %v10282, %v10281
    %v10398 = vpack.c.b16 %v10284, %v10283
    %v10399 = vpack.c.b16 %v10286, %v10285
    %v10400 = vpack.c.b16 %v10288, %v10287
    %v10401 = vpack.c.b16 %v10290, %v10289
    %v10402 = vpack.c.b16 %v10292, %v10291
    %v10403 = vpack.c.b16 %v10294, %v10293
    %v10404 = vpack.c.b16 %v10296, %v10295
    %v10405 = vpack.c.b16 %v10298, %v10297
    %v10406 = vpack.c.b16 %v10300, %v10299
    %v10407 = vpack.c.b16 %v10302, %v10301
    %v10408 = vpack.c.b16 %v10304, %v10303
    %v10409 = vpack.c.b16 %v10306, %v10305
    %v10410 = vpack.c.b16 %v10308, %v10307
    %v10411 = vpack.c.b16 %v10310, %v10309
    %v10412 = vpack.c.b16 %v10312, %v10311
    %v10413 = vpack.c.b16 %v10314, %v10313
    %v10414 = vpack.c.b16 %v10316, %v10315
    %v10415 = vpack.c.b16 %v10318, %v10317
    %v10416 = vpack.c.b16 %v10320, %v10319
    %v10417 = vpack.c.b16 %v10322, %v10321
    %v10418 = vpack.c.b16 %v10324, %v10323
    %v10419 = vpack.c.b16 %v10326, %v10325
    %v10420 = vpack.c.b16 %v10328, %v10327
    %v10421 = vpack.c.b16 %v10330, %v10329
    %v10422 = vpack.c.b16 %v10332, %v10331
    %v10423 = vpack.c.b16 %v10334, %v10333
    %v10424 = vpack.c.b16 %v10336, %v10335
    %v10425 = vpack.c.b16 %v10338, %v10337
    %v10426 = vpack.c.b16 %v10340, %v10339
    %v10427 = vpack.c.b16 %v10342, %v10341
    %v10428 = vpack.c.b16 %v10344, %v10343
    %v10429 = vpack.c.b16 %v10346, %v10345
    %v10430 = vpack.c.b16 %v10348, %v10347
    %v10431 = vpack.c.b16 %v10350, %v10349
    %v10432 = vpack.c.b16 %v10352, %v10351
    %10513 = vmatprep.subr.bf16.mxu0 0
    %10514 = vmatpush1.bf16.msra.mxu0 %v10360
    %10515 = vmatprep.subr.bf16.mxu0 0
    %10516 = vmatpush1.bf16.msra.mxu0 %v10359
    %10517 = vmatprep.subr.bf16.mxu0 0
    %10518 = vmatpush1.bf16.msra.mxu0 %v10358
    %10519 = vmatprep.subr.bf16.mxu0 0
    %10520 = vmatpush1.bf16.msra.mxu0 %v10357
    %10521 = vmatprep.subr.bf16.mxu0 0
    %10522 = vmatpush1.bf16.msra.mxu0 %v10356
    %10523 = vmatprep.subr.bf16.mxu0 0
    %10524 = vmatpush1.bf16.msra.mxu0 %v10355
    %10525 = vmatprep.subr.bf16.mxu0 0
    %10526 = vmatpush1.bf16.msra.mxu0 %v10354
    %10527 = vmatprep.subr.bf16.mxu0 0
    %10528 = vmatpush1.bf16.msra.mxu0 %v10353
    %10529 = vmatprep.subr.bf16.mxu0 0
    %10530 = vmatpush2.bf16.msra.mxu0 %v10368
    %10531 = vmatprep.subr.bf16.mxu0 0
    %10532 = vmatpush2.bf16.msra.mxu0 %v10367
    %10533 = vmatprep.subr.bf16.mxu0 0
    %10534 = vmatpush2.bf16.msra.mxu0 %v10366
    %10535 = vmatprep.subr.bf16.mxu0 0
    %10536 = vmatpush2.bf16.msra.mxu0 %v10365
    %10537 = vmatprep.subr.bf16.mxu0 0
    %10538 = vmatpush2.bf16.msra.mxu0 %v10364
    %10539 = vmatprep.subr.bf16.mxu0 0
    %10540 = vmatpush2.bf16.msra.mxu0 %v10363
    %10541 = vmatprep.subr.bf16.mxu0 0
    %10542 = vmatpush2.bf16.msra.mxu0 %v10362
    %10543 = vmatprep.subr.bf16.mxu0 0
    %10544 = vmatpush2.bf16.msra.mxu0 %v10361
    %10545 = vmatprep.mubr.bf16.mxu0 %v9857
    %10546 = vmatmul.mubr.bf16.gmra.mxu0 %v9856
    %v10547 = vpop.f32.mrf.mxu0
    %v10548 = vadd.f32 %v10031, %v10547
    %v10549 = vpop.f32.mrf.mxu0
    %v10550 = vpop.f32.mrf.mxu0
    %v10551 = vpop.f32.mrf.mxu0
    %10552 = vdwg.mxu0
    %10553 = vmatprep.subr.bf16.mxu0 0
    %10554 = vmatpush1.bf16.msra.mxu0 %v10376
    %10555 = vmatprep.subr.bf16.mxu0 0
    %10556 = vmatpush1.bf16.msra.mxu0 %v10375
    %10557 = vmatprep.subr.bf16.mxu0 0
    %10558 = vmatpush1.bf16.msra.mxu0 %v10374
    %10559 = vmatprep.subr.bf16.mxu0 0
    %10560 = vmatpush1.bf16.msra.mxu0 %v10373
    %10561 = vmatprep.subr.bf16.mxu0 0
    %10562 = vmatpush1.bf16.msra.mxu0 %v10372
    %10563 = vmatprep.subr.bf16.mxu0 0
    %10564 = vmatpush1.bf16.msra.mxu0 %v10371
    %10565 = vmatprep.subr.bf16.mxu0 0
    %10566 = vmatpush1.bf16.msra.mxu0 %v10370
    %10567 = vmatprep.subr.bf16.mxu0 0
    %10568 = vmatpush1.bf16.msra.mxu0 %v10369
    %10569 = vmatprep.subr.bf16.mxu0 0
    %10570 = vmatpush2.bf16.msra.mxu0 %v10384
    %10571 = vmatprep.subr.bf16.mxu0 0
    %10572 = vmatpush2.bf16.msra.mxu0 %v10383
    %10573 = vmatprep.subr.bf16.mxu0 0
    %10574 = vmatpush2.bf16.msra.mxu0 %v10382
    %10575 = vmatprep.subr.bf16.mxu0 0
    %10576 = vmatpush2.bf16.msra.mxu0 %v10381
    %10577 = vmatprep.subr.bf16.mxu0 0
    %10578 = vmatpush2.bf16.msra.mxu0 %v10380
    %10579 = vmatprep.subr.bf16.mxu0 0
    %10580 = vmatpush2.bf16.msra.mxu0 %v10379
    %10581 = vmatprep.subr.bf16.mxu0 0
    %10582 = vmatpush2.bf16.msra.mxu0 %v10378
    %10583 = vmatprep.subr.bf16.mxu0 0
    %10584 = vmatpush2.bf16.msra.mxu0 %v10377
    %10585 = vmatprep.mubr.bf16.mxu0 %v9859
    %10586 = vmatmul.mubr.bf16.gmra.mxu0 %v9858
    %v10587 = vpop.f32.mrf.mxu0
    %v10588 = vadd.f32 %v10548, %v10587
    %v10589 = vpop.f32.mrf.mxu0
    %v10590 = vpop.f32.mrf.mxu0
    %v10591 = vpop.f32.mrf.mxu0
    %10592 = vdwg.mxu0
    %10593 = vmatprep.subr.bf16.mxu0 0
    %10594 = vmatpush1.bf16.msra.mxu0 %v10392
    %10595 = vmatprep.subr.bf16.mxu0 0
    %10596 = vmatpush1.bf16.msra.mxu0 %v10391
    %10597 = vmatprep.subr.bf16.mxu0 0
    %10598 = vmatpush1.bf16.msra.mxu0 %v10390
    %10599 = vmatprep.subr.bf16.mxu0 0
    %10600 = vmatpush1.bf16.msra.mxu0 %v10389
    %10601 = vmatprep.subr.bf16.mxu0 0
    %10602 = vmatpush1.bf16.msra.mxu0 %v10388
    %10603 = vmatprep.subr.bf16.mxu0 0
    %10604 = vmatpush1.bf16.msra.mxu0 %v10387
    %10605 = vmatprep.subr.bf16.mxu0 0
    %10606 = vmatpush1.bf16.msra.mxu0 %v10386
    %10607 = vmatprep.subr.bf16.mxu0 0
    %10608 = vmatpush1.bf16.msra.mxu0 %v10385
    %10609 = vmatprep.subr.bf16.mxu0 0
    %10610 = vmatpush2.bf16.msra.mxu0 %v10400
    %10611 = vmatprep.subr.bf16.mxu0 0
    %10612 = vmatpush2.bf16.msra.mxu0 %v10399
    %10613 = vmatprep.subr.bf16.mxu0 0
    %10614 = vmatpush2.bf16.msra.mxu0 %v10398
    %10615 = vmatprep.subr.bf16.mxu0 0
    %10616 = vmatpush2.bf16.msra.mxu0 %v10397
    %10617 = vmatprep.subr.bf16.mxu0 0
    %10618 = vmatpush2.bf16.msra.mxu0 %v10396
    %10619 = vmatprep.subr.bf16.mxu0 0
    %10620 = vmatpush2.bf16.msra.mxu0 %v10395
    %10621 = vmatprep.subr.bf16.mxu0 0
    %10622 = vmatpush2.bf16.msra.mxu0 %v10394
    %10623 = vmatprep.subr.bf16.mxu0 0
    %10624 = vmatpush2.bf16.msra.mxu0 %v10393
    %10625 = vmatprep.mubr.bf16.mxu0 %v9861
    %10626 = vmatmul.mubr.bf16.gmra.mxu0 %v9860
    %v10627 = vpop.f32.mrf.mxu0
    %v10628 = vadd.f32 %v10588, %v10627
    %v10629 = vpop.f32.mrf.mxu0
    %v10630 = vpop.f32.mrf.mxu0
    %v10631 = vpop.f32.mrf.mxu0
    %10632 = vdwg.mxu0
    %10633 = vmatprep.subr.bf16.mxu0 0
    %10634 = vmatpush1.bf16.msra.mxu0 %v10408
    %10635 = vmatprep.subr.bf16.mxu0 0
    %10636 = vmatpush1.bf16.msra.mxu0 %v10407
    %10637 = vmatprep.subr.bf16.mxu0 0
    %10638 = vmatpush1.bf16.msra.mxu0 %v10406
    %10639 = vmatprep.subr.bf16.mxu0 0
    %10640 = vmatpush1.bf16.msra.mxu0 %v10405
    %10641 = vmatprep.subr.bf16.mxu0 0
    %10642 = vmatpush1.bf16.msra.mxu0 %v10404
    %10643 = vmatprep.subr.bf16.mxu0 0
    %10644 = vmatpush1.bf16.msra.mxu0 %v10403
    %10645 = vmatprep.subr.bf16.mxu0 0
    %10646 = vmatpush1.bf16.msra.mxu0 %v10402
    %10647 = vmatprep.subr.bf16.mxu0 0
    %10648 = vmatpush1.bf16.msra.mxu0 %v10401
    %10649 = vmatprep.subr.bf16.mxu0 0
    %10650 = vmatpush2.bf16.msra.mxu0 %v10416
    %10651 = vmatprep.subr.bf16.mxu0 0
    %10652 = vmatpush2.bf16.msra.mxu0 %v10415
    %10653 = vmatprep.subr.bf16.mxu0 0
    %10654 = vmatpush2.bf16.msra.mxu0 %v10414
    %10655 = vmatprep.subr.bf16.mxu0 0
    %10656 = vmatpush2.bf16.msra.mxu0 %v10413
    %10657 = vmatprep.subr.bf16.mxu0 0
    %10658 = vmatpush2.bf16.msra.mxu0 %v10412
    %10659 = vmatprep.subr.bf16.mxu0 0
    %10660 = vmatpush2.bf16.msra.mxu0 %v10411
    %10661 = vmatprep.subr.bf16.mxu0 0
    %10662 = vmatpush2.bf16.msra.mxu0 %v10410
    %10663 = vmatprep.subr.bf16.mxu0 0
    %10664 = vmatpush2.bf16.msra.mxu0 %v10409
    %10665 = vmatprep.mubr.bf16.mxu0 %v9863
    %10666 = vmatmul.mubr.bf16.gmra.mxu0 %v9862
    %v10667 = vpop.f32.mrf.mxu0
    %v10668 = vadd.f32 %v10628, %v10667
    %v10669 = vpop.f32.mrf.mxu0
    %v10670 = vpop.f32.mrf.mxu0
    %v10671 = vpop.f32.mrf.mxu0
    %10672 = vdwg.mxu0
    %10673 = vmatprep.subr.bf16.mxu0 0
    %10674 = vmatpush1.bf16.msra.mxu0 %v10424
    %10675 = vmatprep.subr.bf16.mxu0 0
    %10676 = vmatpush1.bf16.msra.mxu0 %v10423
    %10677 = vmatprep.subr.bf16.mxu0 0
    %10678 = vmatpush1.bf16.msra.mxu0 %v10422
    %10679 = vmatprep.subr.bf16.mxu0 0
    %10680 = vmatpush1.bf16.msra.mxu0 %v10421
    %10681 = vmatprep.subr.bf16.mxu0 0
    %10682 = vmatpush1.bf16.msra.mxu0 %v10420
    %10683 = vmatprep.subr.bf16.mxu0 0
    %10684 = vmatpush1.bf16.msra.mxu0 %v10419
    %10685 = vmatprep.subr.bf16.mxu0 0
    %10686 = vmatpush1.bf16.msra.mxu0 %v10418
    %10687 = vmatprep.subr.bf16.mxu0 0
    %10688 = vmatpush1.bf16.msra.mxu0 %v10417
    %10689 = vmatprep.subr.bf16.mxu0 0
    %10690 = vmatpush2.bf16.msra.mxu0 %v10432
    %10691 = vmatprep.subr.bf16.mxu0 0
    %10692 = vmatpush2.bf16.msra.mxu0 %v10431
    %10693 = vmatprep.subr.bf16.mxu0 0
    %10694 = vmatpush2.bf16.msra.mxu0 %v10430
    %10695 = vmatprep.subr.bf16.mxu0 0
    %10696 = vmatpush2.bf16.msra.mxu0 %v10429
    %10697 = vmatprep.subr.bf16.mxu0 0
    %10698 = vmatpush2.bf16.msra.mxu0 %v10428
    %10699 = vmatprep.subr.bf16.mxu0 0
    %10700 = vmatpush2.bf16.msra.mxu0 %v10427
    %10701 = vmatprep.subr.bf16.mxu0 0
    %10702 = vmatpush2.bf16.msra.mxu0 %v10426
    %10703 = vmatprep.subr.bf16.mxu0 0
    %10704 = vmatpush2.bf16.msra.mxu0 %v10425
    %10705 = vmatprep.mubr.bf16.mxu0 %v9865
    %10706 = vmatmul.mubr.bf16.gmra.mxu0 %v9864
    %v10707 = vpop.f32.mrf.mxu0
    %v10708 = vadd.f32 %v10668, %v10707
    %v10709 = vpop.f32.mrf.mxu0
    %v10710 = vpop.f32.mrf.mxu0
    %v10711 = vpop.f32.mrf.mxu0
    %10712 = vdwg.mxu0
    %10713 = vst [vmem:[#allocation14] sm:$0xff] %v10708
    // Predicated region
    $region58: #{tpu_custom_call.1} parent=1 // pred_check
      _
    $region59: #{tpu_custom_call.1} parent=1 // pred_check_branch
      %10715 = sbr.rel (0) target = $region61
    $region60: #{tpu_custom_call.1} parent=1 // pred_region
      %s10717 = ssub.s32 128, 128
      %10718 = vsyncadd [#allocation4], %s10717
      %s10720 = sshll.u32 [#allocation14], 4
      %s10721 = int_to_ptr.vmem [resolvable:$true] %s10720
      %10723 = dma.vmem_to_hbm [thread:$0]  %s10721, 128, %s7, [#allocation4]
    $region61: #{tpu_custom_call.1} parent=1 // pred_fallthru
      _
    // Predicated region
    $region62: #{tpu_custom_call.1} parent=1 // pred_check
      _
    $region63: #{tpu_custom_call.1} parent=1 // pred_check_branch
      %10725 = sbr.rel (0) target = $region65
    $region64: #{tpu_custom_call.1} parent=1 // pred_region
      %10726 = dma.done [#allocation4], 128
    $region65: #{tpu_custom_call.1} parent=1 // pred_fallthru
      _
    %10727 = vsyncpa [#allocation3], 1
    %10728 = vsyncpa [#allocation6], 1
    %10729 = vsyncpa [#allocation9], 1
    %10730 = vsyncpa [#allocation12], 1
    %10731 = vsyncpa [#allocation4], 1

</llo_original>
